<compile_context>
chip_gen: v7x
topology: tpu7x:2x2x1
jax: 0.10.0
libtpu: 0.0.40
codegen_flags: <defaults>
</compile_context>

<pallas_src>
import jax
import jax.numpy as jnp
from jax import lax
from jax.experimental import pallas as pl
from jax.experimental.pallas import tpu as pltpu

# ----------------------------- hyper-parameters -------------------------------
N_CLASS = 2                 # MMF_KANMixer(num_classes=2, ...)
STEM_CH = 64                # resnext50 stem output channels
STEM_PAD = 128              # lane-padded stem channels
FEAT_CH = 256               # "layer1" output channels (== mixer channels)
DIM = 128                   # mixer hidden dim
TOKEN_HIDDEN = 32
CHANNEL_HIDDEN = 256
DEPTH = 2
KAN_CENTERS = (-1.5, -0.5, 0.5, 1.5)
KAN_INV_H = 1.0
N_TOK = 8                   # tokens per sample after fusing both modalities (2 * (8//4)**2)
KIM = 7 * 7 * 3 + 1         # 148 im2col columns (+1 validity/bias column)


# =============================== Pallas kernels ================================

def _sigmoid(x):
    # EUP-friendly sigmoid: 0.5*(tanh(x/2)+1) keeps the divide off the VALU.
    return 0.5 * (jnp.tanh(0.5 * x) + 1.0)


def _kan_feats(x, axis):
    """FastKAN activation branches [silu(x), rbf_0(x)..rbf_3(x)] stacked along `axis`."""
    feats = [x * _sigmoid(x)]
    for c in KAN_CENTERS:
        feats.append(jnp.exp(-jnp.square((x - c) * KAN_INV_H)))
    return jnp.concatenate(feats, axis=axis)


def _ln(x, g, b, eps=1e-5):
    mu = jnp.mean(x, axis=-1, keepdims=True)
    xc = x - mu
    var = jnp.mean(xc * xc, axis=-1, keepdims=True)
    return xc * lax.rsqrt(var + eps) * g + b


def _backbone_kernel(cols_ref, stem_w_ref, proj_w_ref, proj_b_ref,
                     pe_w_ref, pe_b_ref, tok_ref):
    """Fused stem conv + BN(folded) + 3x3/2 maxpool + ReLU + 1x1 proj + ReLU + patch embed.

    cols_ref:   (1, 9*R, 148) bf16  R = B*64 pooled pixels; rows ordered (window, slot, b, ph, pw)
    stem_w_ref: (1, 148, 128) bf16  cols 64..127 zero; row 147 = BN-folded bias (paired w/ flag)
    proj_w_ref: (1, 128, 256) bf16  rows 64..127 zero
    proj_b_ref: (1, 1, 256)  f32
    pe_w_ref:   (1, 4096, 128) bf16 slot-major rows (16 x 256)
    pe_b_ref:   (1, 1, 128)  f32
    tok_ref:    (1, B*4, 128) f32   token rows ordered (b, patch)
    """
    nine_r = cols_ref.shape[1]
    r = nine_r // 9
    g = r // 16

    # conv7x7/s2 (+ folded BN) for all 9 pool-window offsets as ONE long-M GEMM.
    y = jnp.dot(cols_ref[0], stem_w_ref[0], preferred_element_type=jnp.float32)   # (9R, 128)

    # 3x3/s2 maxpool fused with ReLU.  Padded window positions were zeroed in the wrapper,
    # so they contribute exactly 0 — equivalent to exclusion ONLY because the ReLU
    # (max with 0) is part of the same max.  Keep the pool and the ReLU together.
    pooled = jnp.maximum(jnp.max(y.reshape(9, r, STEM_PAD), axis=0), 0.0)          # (R, 128)

    # 1x1 projection 64->256 + ReLU.
    # TODO(synk): stands in for the pretrained ResNeXt50 layer1 (grouped-conv bottlenecks).
    z = jnp.dot(pooled.astype(jnp.bfloat16), proj_w_ref[0],
                preferred_element_type=jnp.float32) + proj_b_ref[0]
    z = jnp.maximum(z, 0.0)                                    # (R, 256), rows (slot, b, ph, pw)

    # patch embed as ONE long-K GEMM: lane-concat the 16 slot slabs -> (g, 16*256).
    zw = jnp.concatenate([z[s * g:(s + 1) * g] for s in range(16)], axis=1)        # (g, 4096)
    tok = jnp.dot(zw.astype(jnp.bfloat16), pe_w_ref[0],
                  preferred_element_type=jnp.float32) + pe_b_ref[0]
    tok_ref[0] = tok.astype(tok_ref.dtype)


def _mixer_kernel(tok_ref, ln_ref, m1_ref, b1_ref, m2_ref, b2_ref,
                  w1_ref, c1_ref, w2_ref, c2_ref, lnf_ref, hw_ref, hb_ref, out_ref):
    """One sample's KAN-Mixer: DEPTH x (token mix + channel mix) + final LN + mean-pool + head.

    tok_ref: (1, 8, 128) — this sample's 8 fused tokens (modality-major); D=128 stays on lanes.
    Token mixing is a left multiplication with all 5 KAN activation branches stacked along K.
    """
    x = tok_ref[0].astype(jnp.float32)                                    # (8, 128)
    for d in range(DEPTH):
        # ----- token mixing (contraction over token rows) -----
        y = _ln(x, ln_ref[d, 0:1, :], ln_ref[d, 1:2, :])
        a = _kan_feats(y, axis=0).astype(jnp.bfloat16)                    # (40, 128)
        h = jnp.dot(m1_ref[d], a, preferred_element_type=jnp.float32) + b1_ref[d]
        a = _kan_feats(h, axis=0).astype(jnp.bfloat16)                    # (160, 128)
        t = jnp.dot(m2_ref[d], a, preferred_element_type=jnp.float32) + b2_ref[d]
        x = x + t
        # ----- channel mixing (stacked-K KAN GEMMs) -----
        y = _ln(x, ln_ref[d, 2:3, :], ln_ref[d, 3:4, :])
        a = _kan_feats(y, axis=1).astype(jnp.bfloat16)                    # (8, 640)
        h = jnp.dot(a, w1_ref[d], preferred_element_type=jnp.float32) + c1_ref[d]
        a = _kan_feats(h, axis=1).astype(jnp.bfloat16)                    # (8, 1280)
        c = jnp.dot(a, w2_ref[d], preferred_element_type=jnp.float32) + c2_ref[d]
        x = x + c
    # final LN + head (linear commutes with the mean-pool) + mean over tokens
    y = _ln(x, lnf_ref[0:1, :], lnf_ref[1:2, :])
    hy = jnp.dot(y.astype(jnp.bfloat16), hw_ref[...], preferred_element_type=jnp.float32)
    logits = jnp.mean(hy, axis=0, keepdims=True) + hb_ref[...]            # (1, 128) lane-padded
    out_ref[0] = jnp.broadcast_to(logits, (N_TOK, DIM)).astype(out_ref.dtype)


# =============================== kernel wrappers ===============================

def run_backbone(cols, p):
    """cols: (2, 9*B*64, 148) bf16; p: per-modality stacked weights. -> tokens (2, B*4, 128)."""
    nm, rows9, kk = cols.shape
    g = rows9 // 9 // 16
    return pl.pallas_call(
        _backbone_kernel,
        out_shape=jax.ShapeDtypeStruct((nm, g, DIM), jnp.float32),
        grid=(nm,),
        in_specs=[
            pl.BlockSpec((1, rows9, kk), lambda m: (m, 0, 0)),
            pl.BlockSpec((1, KIM, STEM_PAD), lambda m: (m, 0, 0)),
            pl.BlockSpec((1, STEM_PAD, FEAT_CH), lambda m: (m, 0, 0)),
            pl.BlockSpec((1, 1, FEAT_CH), lambda m: (m, 0, 0)),
            pl.BlockSpec((1, 16 * FEAT_CH, DIM), lambda m: (m, 0, 0)),
            pl.BlockSpec((1, 1, DIM), lambda m: (m, 0, 0)),
        ],
        out_specs=pl.BlockSpec((1, g, DIM), lambda m: (m, 0, 0)),
        compiler_params=pltpu.CompilerParams(dimension_semantics=("parallel",)),
    )(cols, p["stem_w"], p["proj_w"], p["proj_b"], p["pe_w"], p["pe_b"])


def _shared_spec(shape):
    nd = len(shape)
    return pl.BlockSpec(shape, lambda b, _nd=nd: (0,) * _nd)


def run_mixer(tokens, p):
    """tokens: (B, 8, 128) f32; p: mixer params (batch-independent). -> (B, 8, 128) padded."""
    bsz = tokens.shape[0]
    weights = [p["ln"], p["m1"], p["b1"], p["m2"], p["b2"],
               p["w1"], p["c1"], p["w2"], p["c2"],
               p["lnf"], p["head_w"], p["head_b"]]
    return pl.pallas_call(
        _mixer_kernel,
        out_shape=jax.ShapeDtypeStruct((bsz, N_TOK, DIM), jnp.float32),
        grid=(bsz,),
        in_specs=[pl.BlockSpec((1, N_TOK, DIM), lambda b: (b, 0, 0))]
                 + [_shared_spec(w.shape) for w in weights],
        out_specs=pl.BlockSpec((1, N_TOK, DIM), lambda b: (b, 0, 0)),
        compiler_params=pltpu.CompilerParams(dimension_semantics=("parallel",)),
    )(tokens, *weights)


# ================================ wrapper (XLA) ================================

def _build_cols(x_nchw):
    """im2col for conv7x7/s2(pad3) at every 3x3/s2(pad1) maxpool window position.

    Uses ONE lax.conv_general_dilated_patches call per modality (instead of 49 strided
    slices + concat).  Returns (9*B*64, 148) bf16: major axis = pool-window offset (dy,dx);
    within a window, rows ordered (slot=(pi,pj), batch b, patch ph, patch pw); last column
    is a validity/bias flag (0 for pool-padding positions -> their conv output is exactly 0).
    """
    bsz = x_nchw.shape[0]
    # 7x7 patches at the 17x17 "extended" conv grid (conv position h' = a-1, a in 0..16).
    patches = lax.conv_general_dilated_patches(
        x_nchw, filter_shape=(7, 7), window_strides=(2, 2),
        padding=((5, 2), (5, 2)),
        dimension_numbers=("NCHW", "OIHW", "NCHW"))                     # (B, 147, 17, 17)
    cols17 = jnp.transpose(patches, (0, 2, 3, 1))                       # (B, 17, 17, 147)
    a = jnp.arange(17)
    valid = ((a[:, None] > 0) & (a[None, :] > 0)).astype(jnp.float32)   # a==0 -> conv pos -1
    cols17 = cols17 * valid[None, :, :, None]
    flag = jnp.broadcast_to(valid[None, :, :, None], (bsz, 17, 17, 1))
    cols17 = jnp.concatenate([cols17, flag], axis=-1).astype(jnp.bfloat16)   # (B,17,17,148)
    outs = []
    for dy in range(3):
        for dx in range(3):
            v = cols17[:, dy:dy + 16:2, dx:dx + 16:2, :]                # (B,8,8,148) = (b,i,j,:)
            v = v.reshape(bsz, 2, 4, 2, 4, KIM)                         # (b,ph,pi,pw,pj,:)
            v = jnp.transpose(v, (2, 4, 0, 1, 3, 5))                    # (pi,pj,b,ph,pw,:)
            outs.append(v.reshape(bsz * 64, KIM))
    return jnp.concatenate(outs, axis=0)                                # (9*B*64, 148) bf16


def forward(img, sv, params):
    bsz = img.shape[0]
    cols = jnp.stack([_build_cols(img), _build_cols(sv)], axis=0)       # (2, 9*B*64, 148) bf16
    tokens = run_backbone(cols, params["backbone"])                     # (2, B*4, 128) f32
    tok = tokens.reshape(2, bsz, 4, DIM).transpose(1, 0, 2, 3).reshape(bsz, N_TOK, DIM)
    logits = run_mixer(tok, params["mixer"])[:, 0, :N_CLASS]            # (B, 2)
    return logits, logits                                               # module returns (img, img)


# ============================= deterministic init ==============================

def init_params(key):
    """Builds kernel-layout parameters (bf16 GEMM weights, f32 biases/LN).  Batch-independent."""
    keys = iter(jax.random.split(key, 64))

    def nrm(shape, fan_in):
        return jax.random.normal(next(keys), shape, jnp.float32) / jnp.sqrt(float(fan_in))

    # ------------------------------ backbones -----------------------------------
    def init_backbone():
        w7 = nrm((147, STEM_CH), 147)
        gamma = 1.0 + 0.1 * jax.random.normal(next(keys), (STEM_CH,), jnp.float32)
        beta = 0.1 * jax.random.normal(next(keys), (STEM_CH,), jnp.float32)
        scale = gamma / jnp.sqrt(1.0 + 1e-5)                 # BN fold (running mean=0, var=1)
        stem = jnp.concatenate([w7 * scale[None, :], beta[None, :]], axis=0)     # (148, 64)
        stem_w = jnp.pad(stem, ((0, 0), (0, STEM_PAD - STEM_CH)))                # (148, 128)
        proj = nrm((STEM_CH, FEAT_CH), STEM_CH)
        proj_w = jnp.pad(proj, ((0, STEM_PAD - STEM_CH), (0, 0)))                # (128, 256)
        pe_w = nrm((16, FEAT_CH, DIM), 16 * FEAT_CH).reshape(16 * FEAT_CH, DIM)  # (4096, 128)
        return dict(
            stem_w=stem_w.astype(jnp.bfloat16),
            proj_w=proj_w.astype(jnp.bfloat16),
            proj_b=jnp.zeros((1, FEAT_CH), jnp.float32),
            pe_w=pe_w.astype(jnp.bfloat16),
            pe_b=jnp.zeros((1, DIM), jnp.float32),
        )

    bb0, bb1 = init_backbone(), init_backbone()
    backbone = {k: jnp.stack([bb0[k], bb1[k]], axis=0) for k in bb0}

    # -------------------------------- mixer --------------------------------------
    def init_block():
        t1 = [nrm((N_TOK, TOKEN_HIDDEN), N_TOK)] + \
             [nrm((N_TOK, TOKEN_HIDDEN), N_TOK * 4) for _ in range(4)]
        t2 = [nrm((TOKEN_HIDDEN, N_TOK), TOKEN_HIDDEN)] + \
             [nrm((TOKEN_HIDDEN, N_TOK), TOKEN_HIDDEN * 4) for _ in range(4)]
        cw1 = [nrm((DIM, CHANNEL_HIDDEN), DIM)] + \
              [nrm((DIM, CHANNEL_HIDDEN), DIM * 4) for _ in range(4)]
        cw2 = [nrm((CHANNEL_HIDDEN, DIM), CHANNEL_HIDDEN)] + \
              [nrm((CHANNEL_HIDDEN, DIM), CHANNEL_HIDDEN * 4) for _ in range(4)]
        return dict(
            ln=jnp.stack([jnp.ones((DIM,)), jnp.zeros((DIM,)),
                          jnp.ones((DIM,)), jnp.zeros((DIM,))], axis=0),          # (4, 128)
            m1=jnp.concatenate([w.T for w in t1], axis=1).astype(jnp.bfloat16),   # (32, 40)
            b1=jnp.zeros((TOKEN_HIDDEN, 1), jnp.float32),
            m2=jnp.concatenate([w.T for w in t2], axis=1).astype(jnp.bfloat16),   # (8, 160)
            b2=jnp.zeros((N_TOK, 1), jnp.float32),
            w1=jnp.concatenate(cw1, axis=0).astype(jnp.bfloat16),                 # (640, 256)
            c1=jnp.zeros((1, CHANNEL_HIDDEN), jnp.float32),
            w2=jnp.concatenate(cw2, axis=0).astype(jnp.bfloat16),                 # (1280, 128)
            c2=jnp.zeros((1, DIM), jnp.float32),
        )

    blocks = [init_block() for _ in range(DEPTH)]
    mixer = {k: jnp.stack([blk[k] for blk in blocks], axis=0) for k in blocks[0]}
    mixer["lnf"] = jnp.stack([jnp.ones((DIM,)), jnp.zeros((DIM,))], axis=0)       # (2, 128)
    head_w = nrm((DIM, N_CLASS), DIM)
    mixer["head_w"] = jnp.concatenate(
        [head_w, jnp.zeros((DIM, DIM - N_CLASS), jnp.float32)], axis=1).astype(jnp.bfloat16)
    mixer["head_b"] = jnp.zeros((1, DIM), jnp.float32)
    return dict(backbone=backbone, mixer=mixer)


# ==================================== main =====================================

if __name__ == "__main__":
    key = jax.random.PRNGKey(0)
    k_img, k_sv, k_par = jax.random.split(key, 3)
    # layout: NCHW inputs (PyTorch convention); converted to im2col inside the wrapper.
    img = jax.random.normal(k_img, (2, 3, 32, 32), jnp.float32)
    sv = jax.random.normal(k_sv, (2, 3, 32, 32), jnp.float32)
    params = init_params(k_par)

    fwd = jax.jit(forward)
    out1, out2 = fwd(img, sv, params)
    jax.block_until_ready((out1, out2))
    assert out1.shape == (2, N_CLASS) and out2.shape == (2, N_CLASS)
    assert bool(jnp.all(jnp.isfinite(out1)))
    print("KERNEL_OK")
</pallas_src>

<mosaic_0001>
module attributes {stable_mosaic.version = 11 : i64} {
  func.func @_backbone_kernel(%arg0: i32, %arg1: memref<1x1152x148xbf16, #tpu.memory_space<vmem>>, %arg2: memref<1x148x128xbf16, #tpu.memory_space<vmem>>, %arg3: memref<1x128x256xbf16, #tpu.memory_space<vmem>>, %arg4: memref<1x1x256xf32, #tpu.memory_space<vmem>>, %arg5: memref<1x4096x128xbf16, #tpu.memory_space<vmem>>, %arg6: memref<1x1x128xf32, #tpu.memory_space<vmem>>, %arg7: memref<1x8x128xf32, #tpu.memory_space<vmem>>) attributes {dimension_semantics = [#tpu.dimension_semantics<parallel>], iteration_bounds = array<i64: 2>, scalar_prefetch = 0 : i64, scratch_operands = 0 : i64, tpu.core_type = #tpu.core_type<tc>, window_params = [{transform_indices = @transform_0, window_bounds = array<i64: 1, 1152, 148>}, {transform_indices = @transform_1, window_bounds = array<i64: 1, 148, 128>}, {transform_indices = @transform_2, window_bounds = array<i64: 1, 128, 256>}, {transform_indices = @transform_3, window_bounds = array<i64: 1, 1, 256>}, {transform_indices = @transform_4, window_bounds = array<i64: 1, 4096, 128>}, {transform_indices = @transform_5, window_bounds = array<i64: 1, 1, 128>}, {transform_indices = @transform_6, window_bounds = array<i64: 1, 8, 128>}]} {
    %c0 = arith.constant 0 : index
    %c0_0 = arith.constant 0 : index
    %c0_1 = arith.constant 0 : index
    %0 = vector.load %arg1[%c0, %c0_0, %c0_1] : memref<1x1152x148xbf16, #tpu.memory_space<vmem>>, vector<1x1152x148xbf16>
    %1 = vector.shape_cast %0 : vector<1x1152x148xbf16> to vector<1152x148xbf16>
    %c0_2 = arith.constant 0 : index
    %c0_3 = arith.constant 0 : index
    %c0_4 = arith.constant 0 : index
    %2 = vector.load %arg2[%c0_2, %c0_3, %c0_4] : memref<1x148x128xbf16, #tpu.memory_space<vmem>>, vector<1x148x128xbf16>
    %3 = vector.shape_cast %2 : vector<1x148x128xbf16> to vector<148x128xbf16>
    %cst = arith.constant dense<0.000000e+00> : vector<1152x128xf32>
    %4 = tpu.matmul %1, %3, %cst {dimension_numbers = #tpu.dot_dimension_numbers<[1], [0], [0], [1], [0, 0, 1, 1], [], []>} : vector<1152x148xbf16>, vector<148x128xbf16>, vector<1152x128xf32> -> vector<1152x128xf32>
    %5 = vector.shape_cast %4 : vector<1152x128xf32> to vector<9x128x128xf32>
    %cst_5 = arith.constant dense<0xFF800000> : vector<128x128xf32>
    %6 = vector.multi_reduction <maximumf>, %5, %cst_5 [0] : vector<9x128x128xf32> to vector<128x128xf32>
    %cst_6 = arith.constant 0.000000e+00 : f32
    %7 = vector.broadcast %cst_6 : f32 to vector<128x128xf32>
    %8 = arith.maximumf %6, %7 : vector<128x128xf32>
    %9 = arith.truncf %8 : vector<128x128xf32> to vector<128x128xbf16>
    %c0_7 = arith.constant 0 : index
    %c0_8 = arith.constant 0 : index
    %c0_9 = arith.constant 0 : index
    %10 = vector.load %arg3[%c0_7, %c0_8, %c0_9] : memref<1x128x256xbf16, #tpu.memory_space<vmem>>, vector<1x128x256xbf16>
    %11 = vector.shape_cast %10 : vector<1x128x256xbf16> to vector<128x256xbf16>
    %cst_10 = arith.constant dense<0.000000e+00> : vector<128x256xf32>
    %12 = tpu.matmul %9, %11, %cst_10 {dimension_numbers = #tpu.dot_dimension_numbers<[1], [0], [0], [1], [0, 0, 1, 1], [], []>} : vector<128x128xbf16>, vector<128x256xbf16>, vector<128x256xf32> -> vector<128x256xf32>
    %c0_11 = arith.constant 0 : index
    %c0_12 = arith.constant 0 : index
    %c0_13 = arith.constant 0 : index
    %13 = vector.load %arg4[%c0_11, %c0_12, %c0_13] : memref<1x1x256xf32, #tpu.memory_space<vmem>>, vector<1x1x256xf32>
    %14 = vector.shape_cast %13 : vector<1x1x256xf32> to vector<1x256xf32>
    %15 = vector.broadcast %14 : vector<1x256xf32> to vector<128x256xf32>
    %16 = arith.addf %12, %15 : vector<128x256xf32>
    %cst_14 = arith.constant 0.000000e+00 : f32
    %17 = vector.broadcast %cst_14 : f32 to vector<128x256xf32>
    %18 = arith.maximumf %16, %17 : vector<128x256xf32>
    %19 = vector.extract_strided_slice %18 {offsets = [0, 0], sizes = [8, 256], strides = [1, 1]} : vector<128x256xf32> to vector<8x256xf32>
    %20 = vector.extract_strided_slice %18 {offsets = [8, 0], sizes = [8, 256], strides = [1, 1]} : vector<128x256xf32> to vector<8x256xf32>
    %21 = vector.extract_strided_slice %18 {offsets = [16, 0], sizes = [8, 256], strides = [1, 1]} : vector<128x256xf32> to vector<8x256xf32>
    %22 = vector.extract_strided_slice %18 {offsets = [24, 0], sizes = [8, 256], strides = [1, 1]} : vector<128x256xf32> to vector<8x256xf32>
    %23 = vector.extract_strided_slice %18 {offsets = [32, 0], sizes = [8, 256], strides = [1, 1]} : vector<128x256xf32> to vector<8x256xf32>
    %24 = vector.extract_strided_slice %18 {offsets = [40, 0], sizes = [8, 256], strides = [1, 1]} : vector<128x256xf32> to vector<8x256xf32>
    %25 = vector.extract_strided_slice %18 {offsets = [48, 0], sizes = [8, 256], strides = [1, 1]} : vector<128x256xf32> to vector<8x256xf32>
    %26 = vector.extract_strided_slice %18 {offsets = [56, 0], sizes = [8, 256], strides = [1, 1]} : vector<128x256xf32> to vector<8x256xf32>
    %27 = vector.extract_strided_slice %18 {offsets = [64, 0], sizes = [8, 256], strides = [1, 1]} : vector<128x256xf32> to vector<8x256xf32>
    %28 = vector.extract_strided_slice %18 {offsets = [72, 0], sizes = [8, 256], strides = [1, 1]} : vector<128x256xf32> to vector<8x256xf32>
    %29 = vector.extract_strided_slice %18 {offsets = [80, 0], sizes = [8, 256], strides = [1, 1]} : vector<128x256xf32> to vector<8x256xf32>
    %30 = vector.extract_strided_slice %18 {offsets = [88, 0], sizes = [8, 256], strides = [1, 1]} : vector<128x256xf32> to vector<8x256xf32>
    %31 = vector.extract_strided_slice %18 {offsets = [96, 0], sizes = [8, 256], strides = [1, 1]} : vector<128x256xf32> to vector<8x256xf32>
    %32 = vector.extract_strided_slice %18 {offsets = [104, 0], sizes = [8, 256], strides = [1, 1]} : vector<128x256xf32> to vector<8x256xf32>
    %33 = vector.extract_strided_slice %18 {offsets = [112, 0], sizes = [8, 256], strides = [1, 1]} : vector<128x256xf32> to vector<8x256xf32>
    %34 = vector.extract_strided_slice %18 {offsets = [120, 0], sizes = [8, 256], strides = [1, 1]} : vector<128x256xf32> to vector<8x256xf32>
    %35 = tpu.concatenate %19, %20, %21, %22, %23, %24, %25, %26, %27, %28, %29, %30, %31, %32, %33, %34 in 1 : vector<8x256xf32>, vector<8x256xf32>, vector<8x256xf32>, vector<8x256xf32>, vector<8x256xf32>, vector<8x256xf32>, vector<8x256xf32>, vector<8x256xf32>, vector<8x256xf32>, vector<8x256xf32>, vector<8x256xf32>, vector<8x256xf32>, vector<8x256xf32>, vector<8x256xf32>, vector<8x256xf32>, vector<8x256xf32> -> vector<8x4096xf32>
    %36 = arith.truncf %35 : vector<8x4096xf32> to vector<8x4096xbf16>
    %c0_15 = arith.constant 0 : index
    %c0_16 = arith.constant 0 : index
    %c0_17 = arith.constant 0 : index
    %37 = vector.load %arg5[%c0_15, %c0_16, %c0_17] : memref<1x4096x128xbf16, #tpu.memory_space<vmem>>, vector<1x4096x128xbf16>
    %38 = vector.shape_cast %37 : vector<1x4096x128xbf16> to vector<4096x128xbf16>
    %cst_18 = arith.constant dense<0.000000e+00> : vector<8x128xf32>
    %39 = tpu.matmul %36, %38, %cst_18 {dimension_numbers = #tpu.dot_dimension_numbers<[1], [0], [0], [1], [0, 0, 1, 1], [], []>} : vector<8x4096xbf16>, vector<4096x128xbf16>, vector<8x128xf32> -> vector<8x128xf32>
    %c0_19 = arith.constant 0 : index
    %c0_20 = arith.constant 0 : index
    %c0_21 = arith.constant 0 : index
    %40 = vector.load %arg6[%c0_19, %c0_20, %c0_21] : memref<1x1x128xf32, #tpu.memory_space<vmem>>, vector<1x1x128xf32>
    %41 = vector.shape_cast %40 : vector<1x1x128xf32> to vector<1x128xf32>
    %42 = vector.broadcast %41 : vector<1x128xf32> to vector<8x128xf32>
    %43 = arith.addf %39, %42 : vector<8x128xf32>
    %c0_22 = arith.constant 0 : index
    %c0_23 = arith.constant 0 : index
    %c0_24 = arith.constant 0 : index
    %44 = vector.load %arg7[%c0_22, %c0_23, %c0_24] : memref<1x8x128xf32, #tpu.memory_space<vmem>>, vector<1x8x128xf32>
    %45 = vector.shape_cast %44 : vector<1x8x128xf32> to vector<8x128xf32>
    %46 = vector.shape_cast %43 : vector<8x128xf32> to vector<1x8x128xf32>
    tpu.vector_store %arg7[%c0_22, %c0_23, %c0_24], %46 {strides = array<i32>} : memref<1x8x128xf32, #tpu.memory_space<vmem>>, vector<1x8x128xf32>,
    return
  }
  func.func @transform_0(%arg0: i32) -> (i32, i32, i32) {
    %c0_i32 = arith.constant 0 : i32
    %c0_i32_0 = arith.constant 0 : i32
    %c0_i32_1 = arith.constant 0 : i32
    return %arg0, %c0_i32, %c0_i32_0 : i32, i32, i32
  }
  func.func @transform_1(%arg0: i32) -> (i32, i32, i32) {
    %c0_i32 = arith.constant 0 : i32
    %c0_i32_0 = arith.constant 0 : i32
    %c0_i32_1 = arith.constant 0 : i32
    return %arg0, %c0_i32, %c0_i32_0 : i32, i32, i32
  }
  func.func @transform_2(%arg0: i32) -> (i32, i32, i32) {
    %c0_i32 = arith.constant 0 : i32
    %c0_i32_0 = arith.constant 0 : i32
    %c0_i32_1 = arith.constant 0 : i32
    return %arg0, %c0_i32, %c0_i32_0 : i32, i32, i32
  }
  func.func @transform_3(%arg0: i32) -> (i32, i32, i32) {
    %c0_i32 = arith.constant 0 : i32
    %c0_i32_0 = arith.constant 0 : i32
    %c0_i32_1 = arith.constant 0 : i32
    return %arg0, %c0_i32, %c0_i32_0 : i32, i32, i32
  }
  func.func @transform_4(%arg0: i32) -> (i32, i32, i32) {
    %c0_i32 = arith.constant 0 : i32
    %c0_i32_0 = arith.constant 0 : i32
    %c0_i32_1 = arith.constant 0 : i32
    return %arg0, %c0_i32, %c0_i32_0 : i32, i32, i32
  }
  func.func @transform_5(%arg0: i32) -> (i32, i32, i32) {
    %c0_i32 = arith.constant 0 : i32
    %c0_i32_0 = arith.constant 0 : i32
    %c0_i32_1 = arith.constant 0 : i32
    return %arg0, %c0_i32, %c0_i32_0 : i32, i32, i32
  }
  func.func @transform_6(%arg0: i32) -> (i32, i32, i32) {
    %c0_i32 = arith.constant 0 : i32
    %c0_i32_0 = arith.constant 0 : i32
    %c0_i32_1 = arith.constant 0 : i32
    return %arg0, %c0_i32, %c0_i32_0 : i32, i32, i32
  }
}

module attributes {stable_mosaic.version = 11 : i64} {
  func.func @_mixer_kernel(%arg0: i32, %arg1: memref<1x8x128xf32, #tpu.memory_space<vmem>>, %arg2: memref<2x4x128xf32, #tpu.memory_space<vmem>>, %arg3: memref<2x32x40xbf16, #tpu.memory_space<vmem>>, %arg4: memref<2x32x1xf32, #tpu.memory_space<vmem>>, %arg5: memref<2x8x160xbf16, #tpu.memory_space<vmem>>, %arg6: memref<2x8x1xf32, #tpu.memory_space<vmem>>, %arg7: memref<2x640x256xbf16, #tpu.memory_space<vmem>>, %arg8: memref<2x1x256xf32, #tpu.memory_space<vmem>>, %arg9: memref<2x1280x128xbf16, #tpu.memory_space<vmem>>, %arg10: memref<2x1x128xf32, #tpu.memory_space<vmem>>, %arg11: memref<2x128xf32, #tpu.memory_space<vmem>>, %arg12: memref<128x128xbf16, #tpu.memory_space<vmem>>, %arg13: memref<1x128xf32, #tpu.memory_space<vmem>>, %arg14: memref<1x8x128xf32, #tpu.memory_space<vmem>>) attributes {dimension_semantics = [#tpu.dimension_semantics<parallel>], iteration_bounds = array<i64: 2>, scalar_prefetch = 0 : i64, scratch_operands = 0 : i64, tpu.core_type = #tpu.core_type<tc>, window_params = [{transform_indices = @transform_0, window_bounds = array<i64: 1, 8, 128>}, {pipeline_mode = #tpu.pipeline_mode<synchronous>, transform_indices = @transform_1, window_bounds = array<i64: 2, 4, 128>}, {pipeline_mode = #tpu.pipeline_mode<synchronous>, transform_indices = @transform_2, window_bounds = array<i64: 2, 32, 40>}, {pipeline_mode = #tpu.pipeline_mode<synchronous>, transform_indices = @transform_3, window_bounds = array<i64: 2, 32, 1>}, {pipeline_mode = #tpu.pipeline_mode<synchronous>, transform_indices = @transform_4, window_bounds = array<i64: 2, 8, 160>}, {pipeline_mode = #tpu.pipeline_mode<synchronous>, transform_indices = @transform_5, window_bounds = array<i64: 2, 8, 1>}, {pipeline_mode = #tpu.pipeline_mode<synchronous>, transform_indices = @transform_6, window_bounds = array<i64: 2, 640, 256>}, {pipeline_mode = #tpu.pipeline_mode<synchronous>, transform_indices = @transform_7, window_bounds = array<i64: 2, 1, 256>}, {pipeline_mode = #tpu.pipeline_mode<synchronous>, transform_indices = @transform_8, window_bounds = array<i64: 2, 1280, 128>}, {pipeline_mode = #tpu.pipeline_mode<synchronous>, transform_indices = @transform_9, window_bounds = array<i64: 2, 1, 128>}, {pipeline_mode = #tpu.pipeline_mode<synchronous>, transform_indices = @transform_10, window_bounds = array<i64: 2, 128>}, {pipeline_mode = #tpu.pipeline_mode<synchronous>, transform_indices = @transform_11, window_bounds = array<i64: 128, 128>}, {pipeline_mode = #tpu.pipeline_mode<synchronous>, transform_indices = @transform_12, window_bounds = array<i64: 1, 128>}, {transform_indices = @transform_13, window_bounds = array<i64: 1, 8, 128>}]} {
    %c0 = arith.constant 0 : index
    %c0_0 = arith.constant 0 : index
    %c0_1 = arith.constant 0 : index
    %0 = vector.load %arg1[%c0, %c0_0, %c0_1] : memref<1x8x128xf32, #tpu.memory_space<vmem>>, vector<1x8x128xf32>
    %1 = vector.shape_cast %0 : vector<1x8x128xf32> to vector<8x128xf32>
    %c0_2 = arith.constant 0 : index
    %c0_3 = arith.constant 0 : index
    %c0_4 = arith.constant 0 : index
    %2 = vector.load %arg2[%c0_2, %c0_3, %c0_4] : memref<2x4x128xf32, #tpu.memory_space<vmem>>, vector<1x1x128xf32>
    %3 = vector.shape_cast %2 : vector<1x1x128xf32> to vector<1x128xf32>
    %c0_5 = arith.constant 0 : index
    %c1 = arith.constant 1 : index
    %c0_6 = arith.constant 0 : index
    %4 = vector.load %arg2[%c0_5, %c1, %c0_6] : memref<2x4x128xf32, #tpu.memory_space<vmem>>, vector<1x1x128xf32>
    %5 = vector.shape_cast %4 : vector<1x1x128xf32> to vector<1x128xf32>
    %cst = arith.constant dense<0.000000e+00> : vector<8xf32>
    %6 = vector.multi_reduction <add>, %1, %cst [1] : vector<8x128xf32> to vector<8xf32>
    %7 = vector.shape_cast %6 : vector<8xf32> to vector<8x1xf32>
    %cst_7 = arith.constant 1.280000e+02 : f32
    %8 = vector.broadcast %cst_7 : f32 to vector<8x1xf32>
    %9 = arith.divf %7, %8 : vector<8x1xf32>
    %10 = vector.broadcast %9 : vector<8x1xf32> to vector<8x128xf32>
    %11 = arith.subf %1, %10 : vector<8x128xf32>
    %12 = arith.mulf %11, %11 : vector<8x128xf32>
    %cst_8 = arith.constant dense<0.000000e+00> : vector<8xf32>
    %13 = vector.multi_reduction <add>, %12, %cst_8 [1] : vector<8x128xf32> to vector<8xf32>
    %14 = vector.shape_cast %13 : vector<8xf32> to vector<8x1xf32>
    %cst_9 = arith.constant 1.280000e+02 : f32
    %15 = vector.broadcast %cst_9 : f32 to vector<8x1xf32>
    %16 = arith.divf %14, %15 : vector<8x1xf32>
    %cst_10 = arith.constant 9.99999974E-6 : f32
    %17 = vector.broadcast %cst_10 : f32 to vector<8x1xf32>
    %18 = arith.addf %16, %17 : vector<8x1xf32>
    %19 = math.rsqrt %18 : vector<8x1xf32>
    %20 = vector.broadcast %19 : vector<8x1xf32> to vector<8x128xf32>
    %21 = arith.mulf %11, %20 : vector<8x128xf32>
    %22 = vector.broadcast %3 : vector<1x128xf32> to vector<8x128xf32>
    %23 = arith.mulf %21, %22 : vector<8x128xf32>
    %24 = vector.broadcast %5 : vector<1x128xf32> to vector<8x128xf32>
    %25 = arith.addf %23, %24 : vector<8x128xf32>
    %cst_11 = arith.constant 5.000000e-01 : f32
    %26 = vector.broadcast %cst_11 : f32 to vector<8x128xf32>
    %27 = arith.mulf %26, %25 : vector<8x128xf32>
    %28 = math.tanh %27 : vector<8x128xf32>
    %cst_12 = arith.constant 1.000000e+00 : f32
    %29 = vector.broadcast %cst_12 : f32 to vector<8x128xf32>
    %30 = arith.addf %28, %29 : vector<8x128xf32>
    %cst_13 = arith.constant 5.000000e-01 : f32
    %31 = vector.broadcast %cst_13 : f32 to vector<8x128xf32>
    %32 = arith.mulf %31, %30 : vector<8x128xf32>
    %33 = arith.mulf %25, %32 : vector<8x128xf32>
    %cst_14 = arith.constant -1.500000e+00 : f32
    %34 = vector.broadcast %cst_14 : f32 to vector<8x128xf32>
    %35 = arith.subf %25, %34 : vector<8x128xf32>
    %cst_15 = arith.constant 1.000000e+00 : f32
    %36 = vector.broadcast %cst_15 : f32 to vector<8x128xf32>
    %37 = arith.mulf %35, %36 : vector<8x128xf32>
    %38 = arith.mulf %37, %37 : vector<8x128xf32>
    %cst_16 = arith.constant 0.000000e+00 : f32
    %39 = vector.broadcast %cst_16 : f32 to vector<8x128xf32>
    %40 = arith.subf %39, %38 : vector<8x128xf32>
    %41 = math.exp %40 : vector<8x128xf32>
    %cst_17 = arith.constant -5.000000e-01 : f32
    %42 = vector.broadcast %cst_17 : f32 to vector<8x128xf32>
    %43 = arith.subf %25, %42 : vector<8x128xf32>
    %cst_18 = arith.constant 1.000000e+00 : f32
    %44 = vector.broadcast %cst_18 : f32 to vector<8x128xf32>
    %45 = arith.mulf %43, %44 : vector<8x128xf32>
    %46 = arith.mulf %45, %45 : vector<8x128xf32>
    %cst_19 = arith.constant 0.000000e+00 : f32
    %47 = vector.broadcast %cst_19 : f32 to vector<8x128xf32>
    %48 = arith.subf %47, %46 : vector<8x128xf32>
    %49 = math.exp %48 : vector<8x128xf32>
    %cst_20 = arith.constant 5.000000e-01 : f32
    %50 = vector.broadcast %cst_20 : f32 to vector<8x128xf32>
    %51 = arith.subf %25, %50 : vector<8x128xf32>
    %cst_21 = arith.constant 1.000000e+00 : f32
    %52 = vector.broadcast %cst_21 : f32 to vector<8x128xf32>
    %53 = arith.mulf %51, %52 : vector<8x128xf32>
    %54 = arith.mulf %53, %53 : vector<8x128xf32>
    %cst_22 = arith.constant 0.000000e+00 : f32
    %55 = vector.broadcast %cst_22 : f32 to vector<8x128xf32>
    %56 = arith.subf %55, %54 : vector<8x128xf32>
    %57 = math.exp %56 : vector<8x128xf32>
    %cst_23 = arith.constant 1.500000e+00 : f32
    %58 = vector.broadcast %cst_23 : f32 to vector<8x128xf32>
    %59 = arith.subf %25, %58 : vector<8x128xf32>
    %cst_24 = arith.constant 1.000000e+00 : f32
    %60 = vector.broadcast %cst_24 : f32 to vector<8x128xf32>
    %61 = arith.mulf %59, %60 : vector<8x128xf32>
    %62 = arith.mulf %61, %61 : vector<8x128xf32>
    %cst_25 = arith.constant 0.000000e+00 : f32
    %63 = vector.broadcast %cst_25 : f32 to vector<8x128xf32>
    %64 = arith.subf %63, %62 : vector<8x128xf32>
    %65 = math.exp %64 : vector<8x128xf32>
    %66 = tpu.concatenate %33, %41, %49, %57, %65 in 0 : vector<8x128xf32>, vector<8x128xf32>, vector<8x128xf32>, vector<8x128xf32>, vector<8x128xf32> -> vector<40x128xf32>
    %67 = arith.truncf %66 : vector<40x128xf32> to vector<40x128xbf16>
    %c0_26 = arith.constant 0 : index
    %c0_27 = arith.constant 0 : index
    %c0_28 = arith.constant 0 : index
    %68 = vector.load %arg3[%c0_26, %c0_27, %c0_28] : memref<2x32x40xbf16, #tpu.memory_space<vmem>>, vector<1x32x40xbf16>
    %69 = vector.shape_cast %68 : vector<1x32x40xbf16> to vector<32x40xbf16>
    %cst_29 = arith.constant dense<0.000000e+00> : vector<32x128xf32>
    %70 = tpu.matmul %69, %67, %cst_29 {dimension_numbers = #tpu.dot_dimension_numbers<[1], [0], [0], [1], [0, 0, 1, 1], [], []>} : vector<32x40xbf16>, vector<40x128xbf16>, vector<32x128xf32> -> vector<32x128xf32>
    %c0_30 = arith.constant 0 : index
    %c0_31 = arith.constant 0 : index
    %c0_32 = arith.constant 0 : index
    %71 = vector.load %arg4[%c0_30, %c0_31, %c0_32] : memref<2x32x1xf32, #tpu.memory_space<vmem>>, vector<1x32x1xf32>
    %72 = vector.shape_cast %71 : vector<1x32x1xf32> to vector<32x1xf32>
    %73 = vector.broadcast %72 : vector<32x1xf32> to vector<32x128xf32>
    %74 = arith.addf %70, %73 : vector<32x128xf32>
    %cst_33 = arith.constant 5.000000e-01 : f32
    %75 = vector.broadcast %cst_33 : f32 to vector<32x128xf32>
    %76 = arith.mulf %75, %74 : vector<32x128xf32>
    %77 = math.tanh %76 : vector<32x128xf32>
    %cst_34 = arith.constant 1.000000e+00 : f32
    %78 = vector.broadcast %cst_34 : f32 to vector<32x128xf32>
    %79 = arith.addf %77, %78 : vector<32x128xf32>
    %cst_35 = arith.constant 5.000000e-01 : f32
    %80 = vector.broadcast %cst_35 : f32 to vector<32x128xf32>
    %81 = arith.mulf %80, %79 : vector<32x128xf32>
    %82 = arith.mulf %74, %81 : vector<32x128xf32>
    %cst_36 = arith.constant -1.500000e+00 : f32
    %83 = vector.broadcast %cst_36 : f32 to vector<32x128xf32>
    %84 = arith.subf %74, %83 : vector<32x128xf32>
    %cst_37 = arith.constant 1.000000e+00 : f32
    %85 = vector.broadcast %cst_37 : f32 to vector<32x128xf32>
    %86 = arith.mulf %84, %85 : vector<32x128xf32>
    %87 = arith.mulf %86, %86 : vector<32x128xf32>
    %cst_38 = arith.constant 0.000000e+00 : f32
    %88 = vector.broadcast %cst_38 : f32 to vector<32x128xf32>
    %89 = arith.subf %88, %87 : vector<32x128xf32>
    %90 = math.exp %89 : vector<32x128xf32>
    %cst_39 = arith.constant -5.000000e-01 : f32
    %91 = vector.broadcast %cst_39 : f32 to vector<32x128xf32>
    %92 = arith.subf %74, %91 : vector<32x128xf32>
    %cst_40 = arith.constant 1.000000e+00 : f32
    %93 = vector.broadcast %cst_40 : f32 to vector<32x128xf32>
    %94 = arith.mulf %92, %93 : vector<32x128xf32>
    %95 = arith.mulf %94, %94 : vector<32x128xf32>
    %cst_41 = arith.constant 0.000000e+00 : f32
    %96 = vector.broadcast %cst_41 : f32 to vector<32x128xf32>
    %97 = arith.subf %96, %95 : vector<32x128xf32>
    %98 = math.exp %97 : vector<32x128xf32>
    %cst_42 = arith.constant 5.000000e-01 : f32
    %99 = vector.broadcast %cst_42 : f32 to vector<32x128xf32>
    %100 = arith.subf %74, %99 : vector<32x128xf32>
    %cst_43 = arith.constant 1.000000e+00 : f32
    %101 = vector.broadcast %cst_43 : f32 to vector<32x128xf32>
    %102 = arith.mulf %100, %101 : vector<32x128xf32>
    %103 = arith.mulf %102, %102 : vector<32x128xf32>
    %cst_44 = arith.constant 0.000000e+00 : f32
    %104 = vector.broadcast %cst_44 : f32 to vector<32x128xf32>
    %105 = arith.subf %104, %103 : vector<32x128xf32>
    %106 = math.exp %105 : vector<32x128xf32>
    %cst_45 = arith.constant 1.500000e+00 : f32
    %107 = vector.broadcast %cst_45 : f32 to vector<32x128xf32>
    %108 = arith.subf %74, %107 : vector<32x128xf32>
    %cst_46 = arith.constant 1.000000e+00 : f32
    %109 = vector.broadcast %cst_46 : f32 to vector<32x128xf32>
    %110 = arith.mulf %108, %109 : vector<32x128xf32>
    %111 = arith.mulf %110, %110 : vector<32x128xf32>
    %cst_47 = arith.constant 0.000000e+00 : f32
    %112 = vector.broadcast %cst_47 : f32 to vector<32x128xf32>
    %113 = arith.subf %112, %111 : vector<32x128xf32>
    %114 = math.exp %113 : vector<32x128xf32>
    %115 = tpu.concatenate %82, %90, %98, %106, %114 in 0 : vector<32x128xf32>, vector<32x128xf32>, vector<32x128xf32>, vector<32x128xf32>, vector<32x128xf32> -> vector<160x128xf32>
    %116 = arith.truncf %115 : vector<160x128xf32> to vector<160x128xbf16>
    %c0_48 = arith.constant 0 : index
    %c0_49 = arith.constant 0 : index
    %c0_50 = arith.constant 0 : index
    %117 = vector.load %arg5[%c0_48, %c0_49, %c0_50] : memref<2x8x160xbf16, #tpu.memory_space<vmem>>, vector<1x8x160xbf16>
    %118 = vector.shape_cast %117 : vector<1x8x160xbf16> to vector<8x160xbf16>
    %cst_51 = arith.constant dense<0.000000e+00> : vector<8x128xf32>
    %119 = tpu.matmul %118, %116, %cst_51 {dimension_numbers = #tpu.dot_dimension_numbers<[1], [0], [0], [1], [0, 0, 1, 1], [], []>} : vector<8x160xbf16>, vector<160x128xbf16>, vector<8x128xf32> -> vector<8x128xf32>
    %c0_52 = arith.constant 0 : index
    %c0_53 = arith.constant 0 : index
    %c0_54 = arith.constant 0 : index
    %120 = vector.load %arg6[%c0_52, %c0_53, %c0_54] : memref<2x8x1xf32, #tpu.memory_space<vmem>>, vector<1x8x1xf32>
    %121 = vector.shape_cast %120 : vector<1x8x1xf32> to vector<8x1xf32>
    %122 = vector.broadcast %121 : vector<8x1xf32> to vector<8x128xf32>
    %123 = arith.addf %119, %122 : vector<8x128xf32>
    %124 = arith.addf %1, %123 : vector<8x128xf32>
    %c0_55 = arith.constant 0 : index
    %c2 = arith.constant 2 : index
    %c0_56 = arith.constant 0 : index
    %125 = vector.load %arg2[%c0_55, %c2, %c0_56] : memref<2x4x128xf32, #tpu.memory_space<vmem>>, vector<1x1x128xf32>
    %126 = vector.shape_cast %125 : vector<1x1x128xf32> to vector<1x128xf32>
    %c0_57 = arith.constant 0 : index
    %c3 = arith.constant 3 : index
    %c0_58 = arith.constant 0 : index
    %127 = vector.load %arg2[%c0_57, %c3, %c0_58] : memref<2x4x128xf32, #tpu.memory_space<vmem>>, vector<1x1x128xf32>
    %128 = vector.shape_cast %127 : vector<1x1x128xf32> to vector<1x128xf32>
    %cst_59 = arith.constant dense<0.000000e+00> : vector<8xf32>
    %129 = vector.multi_reduction <add>, %124, %cst_59 [1] : vector<8x128xf32> to vector<8xf32>
    %130 = vector.shape_cast %129 : vector<8xf32> to vector<8x1xf32>
    %cst_60 = arith.constant 1.280000e+02 : f32
    %131 = vector.broadcast %cst_60 : f32 to vector<8x1xf32>
    %132 = arith.divf %130, %131 : vector<8x1xf32>
    %133 = vector.broadcast %132 : vector<8x1xf32> to vector<8x128xf32>
    %134 = arith.subf %124, %133 : vector<8x128xf32>
    %135 = arith.mulf %134, %134 : vector<8x128xf32>
    %cst_61 = arith.constant dense<0.000000e+00> : vector<8xf32>
    %136 = vector.multi_reduction <add>, %135, %cst_61 [1] : vector<8x128xf32> to vector<8xf32>
    %137 = vector.shape_cast %136 : vector<8xf32> to vector<8x1xf32>
    %cst_62 = arith.constant 1.280000e+02 : f32
    %138 = vector.broadcast %cst_62 : f32 to vector<8x1xf32>
    %139 = arith.divf %137, %138 : vector<8x1xf32>
    %cst_63 = arith.constant 9.99999974E-6 : f32
    %140 = vector.broadcast %cst_63 : f32 to vector<8x1xf32>
    %141 = arith.addf %139, %140 : vector<8x1xf32>
    %142 = math.rsqrt %141 : vector<8x1xf32>
    %143 = vector.broadcast %142 : vector<8x1xf32> to vector<8x128xf32>
    %144 = arith.mulf %134, %143 : vector<8x128xf32>
    %145 = vector.broadcast %126 : vector<1x128xf32> to vector<8x128xf32>
    %146 = arith.mulf %144, %145 : vector<8x128xf32>
    %147 = vector.broadcast %128 : vector<1x128xf32> to vector<8x128xf32>
    %148 = arith.addf %146, %147 : vector<8x128xf32>
    %cst_64 = arith.constant 5.000000e-01 : f32
    %149 = vector.broadcast %cst_64 : f32 to vector<8x128xf32>
    %150 = arith.mulf %149, %148 : vector<8x128xf32>
    %151 = math.tanh %150 : vector<8x128xf32>
    %cst_65 = arith.constant 1.000000e+00 : f32
    %152 = vector.broadcast %cst_65 : f32 to vector<8x128xf32>
    %153 = arith.addf %151, %152 : vector<8x128xf32>
    %cst_66 = arith.constant 5.000000e-01 : f32
    %154 = vector.broadcast %cst_66 : f32 to vector<8x128xf32>
    %155 = arith.mulf %154, %153 : vector<8x128xf32>
    %156 = arith.mulf %148, %155 : vector<8x128xf32>
    %cst_67 = arith.constant -1.500000e+00 : f32
    %157 = vector.broadcast %cst_67 : f32 to vector<8x128xf32>
    %158 = arith.subf %148, %157 : vector<8x128xf32>
    %cst_68 = arith.constant 1.000000e+00 : f32
    %159 = vector.broadcast %cst_68 : f32 to vector<8x128xf32>
    %160 = arith.mulf %158, %159 : vector<8x128xf32>
    %161 = arith.mulf %160, %160 : vector<8x128xf32>
    %cst_69 = arith.constant 0.000000e+00 : f32
    %162 = vector.broadcast %cst_69 : f32 to vector<8x128xf32>
    %163 = arith.subf %162, %161 : vector<8x128xf32>
    %164 = math.exp %163 : vector<8x128xf32>
    %cst_70 = arith.constant -5.000000e-01 : f32
    %165 = vector.broadcast %cst_70 : f32 to vector<8x128xf32>
    %166 = arith.subf %148, %165 : vector<8x128xf32>
    %cst_71 = arith.constant 1.000000e+00 : f32
    %167 = vector.broadcast %cst_71 : f32 to vector<8x128xf32>
    %168 = arith.mulf %166, %167 : vector<8x128xf32>
    %169 = arith.mulf %168, %168 : vector<8x128xf32>
    %cst_72 = arith.constant 0.000000e+00 : f32
    %170 = vector.broadcast %cst_72 : f32 to vector<8x128xf32>
    %171 = arith.subf %170, %169 : vector<8x128xf32>
    %172 = math.exp %171 : vector<8x128xf32>
    %cst_73 = arith.constant 5.000000e-01 : f32
    %173 = vector.broadcast %cst_73 : f32 to vector<8x128xf32>
    %174 = arith.subf %148, %173 : vector<8x128xf32>
    %cst_74 = arith.constant 1.000000e+00 : f32
    %175 = vector.broadcast %cst_74 : f32 to vector<8x128xf32>
    %176 = arith.mulf %174, %175 : vector<8x128xf32>
    %177 = arith.mulf %176, %176 : vector<8x128xf32>
    %cst_75 = arith.constant 0.000000e+00 : f32
    %178 = vector.broadcast %cst_75 : f32 to vector<8x128xf32>
    %179 = arith.subf %178, %177 : vector<8x128xf32>
    %180 = math.exp %179 : vector<8x128xf32>
    %cst_76 = arith.constant 1.500000e+00 : f32
    %181 = vector.broadcast %cst_76 : f32 to vector<8x128xf32>
    %182 = arith.subf %148, %181 : vector<8x128xf32>
    %cst_77 = arith.constant 1.000000e+00 : f32
    %183 = vector.broadcast %cst_77 : f32 to vector<8x128xf32>
    %184 = arith.mulf %182, %183 : vector<8x128xf32>
    %185 = arith.mulf %184, %184 : vector<8x128xf32>
    %cst_78 = arith.constant 0.000000e+00 : f32
    %186 = vector.broadcast %cst_78 : f32 to vector<8x128xf32>
    %187 = arith.subf %186, %185 : vector<8x128xf32>
    %188 = math.exp %187 : vector<8x128xf32>
    %189 = tpu.concatenate %156, %164, %172, %180, %188 in 1 : vector<8x128xf32>, vector<8x128xf32>, vector<8x128xf32>, vector<8x128xf32>, vector<8x128xf32> -> vector<8x640xf32>
    %190 = arith.truncf %189 : vector<8x640xf32> to vector<8x640xbf16>
    %c0_79 = arith.constant 0 : index
    %c0_80 = arith.constant 0 : index
    %c0_81 = arith.constant 0 : index
    %191 = vector.load %arg7[%c0_79, %c0_80, %c0_81] : memref<2x640x256xbf16, #tpu.memory_space<vmem>>, vector<1x640x256xbf16>
    %192 = vector.shape_cast %191 : vector<1x640x256xbf16> to vector<640x256xbf16>
    %cst_82 = arith.constant dense<0.000000e+00> : vector<8x256xf32>
    %193 = tpu.matmul %190, %192, %cst_82 {dimension_numbers = #tpu.dot_dimension_numbers<[1], [0], [0], [1], [0, 0, 1, 1], [], []>} : vector<8x640xbf16>, vector<640x256xbf16>, vector<8x256xf32> -> vector<8x256xf32>
    %c0_83 = arith.constant 0 : index
    %c0_84 = arith.constant 0 : index
    %c0_85 = arith.constant 0 : index
    %194 = vector.load %arg8[%c0_83, %c0_84, %c0_85] : memref<2x1x256xf32, #tpu.memory_space<vmem>>, vector<1x1x256xf32>
    %195 = vector.shape_cast %194 : vector<1x1x256xf32> to vector<1x256xf32>
    %196 = vector.broadcast %195 : vector<1x256xf32> to vector<8x256xf32>
    %197 = arith.addf %193, %196 : vector<8x256xf32>
    %cst_86 = arith.constant 5.000000e-01 : f32
    %198 = vector.broadcast %cst_86 : f32 to vector<8x256xf32>
    %199 = arith.mulf %198, %197 : vector<8x256xf32>
    %200 = math.tanh %199 : vector<8x256xf32>
    %cst_87 = arith.constant 1.000000e+00 : f32
    %201 = vector.broadcast %cst_87 : f32 to vector<8x256xf32>
    %202 = arith.addf %200, %201 : vector<8x256xf32>
    %cst_88 = arith.constant 5.000000e-01 : f32
    %203 = vector.broadcast %cst_88 : f32 to vector<8x256xf32>
    %204 = arith.mulf %203, %202 : vector<8x256xf32>
    %205 = arith.mulf %197, %204 : vector<8x256xf32>
    %cst_89 = arith.constant -1.500000e+00 : f32
    %206 = vector.broadcast %cst_89 : f32 to vector<8x256xf32>
    %207 = arith.subf %197, %206 : vector<8x256xf32>
    %cst_90 = arith.constant 1.000000e+00 : f32
    %208 = vector.broadcast %cst_90 : f32 to vector<8x256xf32>
    %209 = arith.mulf %207, %208 : vector<8x256xf32>
    %210 = arith.mulf %209, %209 : vector<8x256xf32>
    %cst_91 = arith.constant 0.000000e+00 : f32
    %211 = vector.broadcast %cst_91 : f32 to vector<8x256xf32>
    %212 = arith.subf %211, %210 : vector<8x256xf32>
    %213 = math.exp %212 : vector<8x256xf32>
    %cst_92 = arith.constant -5.000000e-01 : f32
    %214 = vector.broadcast %cst_92 : f32 to vector<8x256xf32>
    %215 = arith.subf %197, %214 : vector<8x256xf32>
    %cst_93 = arith.constant 1.000000e+00 : f32
    %216 = vector.broadcast %cst_93 : f32 to vector<8x256xf32>
    %217 = arith.mulf %215, %216 : vector<8x256xf32>
    %218 = arith.mulf %217, %217 : vector<8x256xf32>
    %cst_94 = arith.constant 0.000000e+00 : f32
    %219 = vector.broadcast %cst_94 : f32 to vector<8x256xf32>
    %220 = arith.subf %219, %218 : vector<8x256xf32>
    %221 = math.exp %220 : vector<8x256xf32>
    %cst_95 = arith.constant 5.000000e-01 : f32
    %222 = vector.broadcast %cst_95 : f32 to vector<8x256xf32>
    %223 = arith.subf %197, %222 : vector<8x256xf32>
    %cst_96 = arith.constant 1.000000e+00 : f32
    %224 = vector.broadcast %cst_96 : f32 to vector<8x256xf32>
    %225 = arith.mulf %223, %224 : vector<8x256xf32>
    %226 = arith.mulf %225, %225 : vector<8x256xf32>
    %cst_97 = arith.constant 0.000000e+00 : f32
    %227 = vector.broadcast %cst_97 : f32 to vector<8x256xf32>
    %228 = arith.subf %227, %226 : vector<8x256xf32>
    %229 = math.exp %228 : vector<8x256xf32>
    %cst_98 = arith.constant 1.500000e+00 : f32
    %230 = vector.broadcast %cst_98 : f32 to vector<8x256xf32>
    %231 = arith.subf %197, %230 : vector<8x256xf32>
    %cst_99 = arith.constant 1.000000e+00 : f32
    %232 = vector.broadcast %cst_99 : f32 to vector<8x256xf32>
    %233 = arith.mulf %231, %232 : vector<8x256xf32>
    %234 = arith.mulf %233, %233 : vector<8x256xf32>
    %cst_100 = arith.constant 0.000000e+00 : f32
    %235 = vector.broadcast %cst_100 : f32 to vector<8x256xf32>
    %236 = arith.subf %235, %234 : vector<8x256xf32>
    %237 = math.exp %236 : vector<8x256xf32>
    %238 = tpu.concatenate %205, %213, %221, %229, %237 in 1 : vector<8x256xf32>, vector<8x256xf32>, vector<8x256xf32>, vector<8x256xf32>, vector<8x256xf32> -> vector<8x1280xf32>
    %239 = arith.truncf %238 : vector<8x1280xf32> to vector<8x1280xbf16>
    %c0_101 = arith.constant 0 : index
    %c0_102 = arith.constant 0 : index
    %c0_103 = arith.constant 0 : index
    %240 = vector.load %arg9[%c0_101, %c0_102, %c0_103] : memref<2x1280x128xbf16, #tpu.memory_space<vmem>>, vector<1x1280x128xbf16>
    %241 = vector.shape_cast %240 : vector<1x1280x128xbf16> to vector<1280x128xbf16>
    %cst_104 = arith.constant dense<0.000000e+00> : vector<8x128xf32>
    %242 = tpu.matmul %239, %241, %cst_104 {dimension_numbers = #tpu.dot_dimension_numbers<[1], [0], [0], [1], [0, 0, 1, 1], [], []>} : vector<8x1280xbf16>, vector<1280x128xbf16>, vector<8x128xf32> -> vector<8x128xf32>
    %c0_105 = arith.constant 0 : index
    %c0_106 = arith.constant 0 : index
    %c0_107 = arith.constant 0 : index
    %243 = vector.load %arg10[%c0_105, %c0_106, %c0_107] : memref<2x1x128xf32, #tpu.memory_space<vmem>>, vector<1x1x128xf32>
    %244 = vector.shape_cast %243 : vector<1x1x128xf32> to vector<1x128xf32>
    %245 = vector.broadcast %244 : vector<1x128xf32> to vector<8x128xf32>
    %246 = arith.addf %242, %245 : vector<8x128xf32>
    %247 = arith.addf %124, %246 : vector<8x128xf32>
    %c1_108 = arith.constant 1 : index
    %c0_109 = arith.constant 0 : index
    %c0_110 = arith.constant 0 : index
    %248 = vector.load %arg2[%c1_108, %c0_109, %c0_110] : memref<2x4x128xf32, #tpu.memory_space<vmem>>, vector<1x1x128xf32>
    %249 = vector.shape_cast %248 : vector<1x1x128xf32> to vector<1x128xf32>
    %c1_111 = arith.constant 1 : index
    %c1_112 = arith.constant 1 : index
    %c0_113 = arith.constant 0 : index
    %250 = vector.load %arg2[%c1_111, %c1_112, %c0_113] : memref<2x4x128xf32, #tpu.memory_space<vmem>>, vector<1x1x128xf32>
    %251 = vector.shape_cast %250 : vector<1x1x128xf32> to vector<1x128xf32>
    %cst_114 = arith.constant dense<0.000000e+00> : vector<8xf32>
    %252 = vector.multi_reduction <add>, %247, %cst_114 [1] : vector<8x128xf32> to vector<8xf32>
    %253 = vector.shape_cast %252 : vector<8xf32> to vector<8x1xf32>
    %cst_115 = arith.constant 1.280000e+02 : f32
    %254 = vector.broadcast %cst_115 : f32 to vector<8x1xf32>
    %255 = arith.divf %253, %254 : vector<8x1xf32>
    %256 = vector.broadcast %255 : vector<8x1xf32> to vector<8x128xf32>
    %257 = arith.subf %247, %256 : vector<8x128xf32>
    %258 = arith.mulf %257, %257 : vector<8x128xf32>
    %cst_116 = arith.constant dense<0.000000e+00> : vector<8xf32>
    %259 = vector.multi_reduction <add>, %258, %cst_116 [1] : vector<8x128xf32> to vector<8xf32>
    %260 = vector.shape_cast %259 : vector<8xf32> to vector<8x1xf32>
    %cst_117 = arith.constant 1.280000e+02 : f32
    %261 = vector.broadcast %cst_117 : f32 to vector<8x1xf32>
    %262 = arith.divf %260, %261 : vector<8x1xf32>
    %cst_118 = arith.constant 9.99999974E-6 : f32
    %263 = vector.broadcast %cst_118 : f32 to vector<8x1xf32>
    %264 = arith.addf %262, %263 : vector<8x1xf32>
    %265 = math.rsqrt %264 : vector<8x1xf32>
    %266 = vector.broadcast %265 : vector<8x1xf32> to vector<8x128xf32>
    %267 = arith.mulf %257, %266 : vector<8x128xf32>
    %268 = vector.broadcast %249 : vector<1x128xf32> to vector<8x128xf32>
    %269 = arith.mulf %267, %268 : vector<8x128xf32>
    %270 = vector.broadcast %251 : vector<1x128xf32> to vector<8x128xf32>
    %271 = arith.addf %269, %270 : vector<8x128xf32>
    %cst_119 = arith.constant 5.000000e-01 : f32
    %272 = vector.broadcast %cst_119 : f32 to vector<8x128xf32>
    %273 = arith.mulf %272, %271 : vector<8x128xf32>
    %274 = math.tanh %273 : vector<8x128xf32>
    %cst_120 = arith.constant 1.000000e+00 : f32
    %275 = vector.broadcast %cst_120 : f32 to vector<8x128xf32>
    %276 = arith.addf %274, %275 : vector<8x128xf32>
    %cst_121 = arith.constant 5.000000e-01 : f32
    %277 = vector.broadcast %cst_121 : f32 to vector<8x128xf32>
    %278 = arith.mulf %277, %276 : vector<8x128xf32>
    %279 = arith.mulf %271, %278 : vector<8x128xf32>
    %cst_122 = arith.constant -1.500000e+00 : f32
    %280 = vector.broadcast %cst_122 : f32 to vector<8x128xf32>
    %281 = arith.subf %271, %280 : vector<8x128xf32>
    %cst_123 = arith.constant 1.000000e+00 : f32
    %282 = vector.broadcast %cst_123 : f32 to vector<8x128xf32>
    %283 = arith.mulf %281, %282 : vector<8x128xf32>
    %284 = arith.mulf %283, %283 : vector<8x128xf32>
    %cst_124 = arith.constant 0.000000e+00 : f32
    %285 = vector.broadcast %cst_124 : f32 to vector<8x128xf32>
    %286 = arith.subf %285, %284 : vector<8x128xf32>
    %287 = math.exp %286 : vector<8x128xf32>
    %cst_125 = arith.constant -5.000000e-01 : f32
    %288 = vector.broadcast %cst_125 : f32 to vector<8x128xf32>
    %289 = arith.subf %271, %288 : vector<8x128xf32>
    %cst_126 = arith.constant 1.000000e+00 : f32
    %290 = vector.broadcast %cst_126 : f32 to vector<8x128xf32>
    %291 = arith.mulf %289, %290 : vector<8x128xf32>
    %292 = arith.mulf %291, %291 : vector<8x128xf32>
    %cst_127 = arith.constant 0.000000e+00 : f32
    %293 = vector.broadcast %cst_127 : f32 to vector<8x128xf32>
    %294 = arith.subf %293, %292 : vector<8x128xf32>
    %295 = math.exp %294 : vector<8x128xf32>
    %cst_128 = arith.constant 5.000000e-01 : f32
    %296 = vector.broadcast %cst_128 : f32 to vector<8x128xf32>
    %297 = arith.subf %271, %296 : vector<8x128xf32>
    %cst_129 = arith.constant 1.000000e+00 : f32
    %298 = vector.broadcast %cst_129 : f32 to vector<8x128xf32>
    %299 = arith.mulf %297, %298 : vector<8x128xf32>
    %300 = arith.mulf %299, %299 : vector<8x128xf32>
    %cst_130 = arith.constant 0.000000e+00 : f32
    %301 = vector.broadcast %cst_130 : f32 to vector<8x128xf32>
    %302 = arith.subf %301, %300 : vector<8x128xf32>
    %303 = math.exp %302 : vector<8x128xf32>
    %cst_131 = arith.constant 1.500000e+00 : f32
    %304 = vector.broadcast %cst_131 : f32 to vector<8x128xf32>
    %305 = arith.subf %271, %304 : vector<8x128xf32>
    %cst_132 = arith.constant 1.000000e+00 : f32
    %306 = vector.broadcast %cst_132 : f32 to vector<8x128xf32>
    %307 = arith.mulf %305, %306 : vector<8x128xf32>
    %308 = arith.mulf %307, %307 : vector<8x128xf32>
    %cst_133 = arith.constant 0.000000e+00 : f32
    %309 = vector.broadcast %cst_133 : f32 to vector<8x128xf32>
    %310 = arith.subf %309, %308 : vector<8x128xf32>
    %311 = math.exp %310 : vector<8x128xf32>
    %312 = tpu.concatenate %279, %287, %295, %303, %311 in 0 : vector<8x128xf32>, vector<8x128xf32>, vector<8x128xf32>, vector<8x128xf32>, vector<8x128xf32> -> vector<40x128xf32>
    %313 = arith.truncf %312 : vector<40x128xf32> to vector<40x128xbf16>
    %c1_134 = arith.constant 1 : index
    %c0_135 = arith.constant 0 : index
    %c0_136 = arith.constant 0 : index
    %314 = vector.load %arg3[%c1_134, %c0_135, %c0_136] : memref<2x32x40xbf16, #tpu.memory_space<vmem>>, vector<1x32x40xbf16>
    %315 = vector.shape_cast %314 : vector<1x32x40xbf16> to vector<32x40xbf16>
    %cst_137 = arith.constant dense<0.000000e+00> : vector<32x128xf32>
    %316 = tpu.matmul %315, %313, %cst_137 {dimension_numbers = #tpu.dot_dimension_numbers<[1], [0], [0], [1], [0, 0, 1, 1], [], []>} : vector<32x40xbf16>, vector<40x128xbf16>, vector<32x128xf32> -> vector<32x128xf32>
    %c1_138 = arith.constant 1 : index
    %c0_139 = arith.constant 0 : index
    %c0_140 = arith.constant 0 : index
    %317 = vector.load %arg4[%c1_138, %c0_139, %c0_140] : memref<2x32x1xf32, #tpu.memory_space<vmem>>, vector<1x32x1xf32>
    %318 = vector.shape_cast %317 : vector<1x32x1xf32> to vector<32x1xf32>
    %319 = vector.broadcast %318 : vector<32x1xf32> to vector<32x128xf32>
    %320 = arith.addf %316, %319 : vector<32x128xf32>
    %cst_141 = arith.constant 5.000000e-01 : f32
    %321 = vector.broadcast %cst_141 : f32 to vector<32x128xf32>
    %322 = arith.mulf %321, %320 : vector<32x128xf32>
    %323 = math.tanh %322 : vector<32x128xf32>
    %cst_142 = arith.constant 1.000000e+00 : f32
    %324 = vector.broadcast %cst_142 : f32 to vector<32x128xf32>
    %325 = arith.addf %323, %324 : vector<32x128xf32>
    %cst_143 = arith.constant 5.000000e-01 : f32
    %326 = vector.broadcast %cst_143 : f32 to vector<32x128xf32>
    %327 = arith.mulf %326, %325 : vector<32x128xf32>
    %328 = arith.mulf %320, %327 : vector<32x128xf32>
    %cst_144 = arith.constant -1.500000e+00 : f32
    %329 = vector.broadcast %cst_144 : f32 to vector<32x128xf32>
    %330 = arith.subf %320, %329 : vector<32x128xf32>
    %cst_145 = arith.constant 1.000000e+00 : f32
    %331 = vector.broadcast %cst_145 : f32 to vector<32x128xf32>
    %332 = arith.mulf %330, %331 : vector<32x128xf32>
    %333 = arith.mulf %332, %332 : vector<32x128xf32>
    %cst_146 = arith.constant 0.000000e+00 : f32
    %334 = vector.broadcast %cst_146 : f32 to vector<32x128xf32>
    %335 = arith.subf %334, %333 : vector<32x128xf32>
    %336 = math.exp %335 : vector<32x128xf32>
    %cst_147 = arith.constant -5.000000e-01 : f32
    %337 = vector.broadcast %cst_147 : f32 to vector<32x128xf32>
    %338 = arith.subf %320, %337 : vector<32x128xf32>
    %cst_148 = arith.constant 1.000000e+00 : f32
    %339 = vector.broadcast %cst_148 : f32 to vector<32x128xf32>
    %340 = arith.mulf %338, %339 : vector<32x128xf32>
    %341 = arith.mulf %340, %340 : vector<32x128xf32>
    %cst_149 = arith.constant 0.000000e+00 : f32
    %342 = vector.broadcast %cst_149 : f32 to vector<32x128xf32>
    %343 = arith.subf %342, %341 : vector<32x128xf32>
    %344 = math.exp %343 : vector<32x128xf32>
    %cst_150 = arith.constant 5.000000e-01 : f32
    %345 = vector.broadcast %cst_150 : f32 to vector<32x128xf32>
    %346 = arith.subf %320, %345 : vector<32x128xf32>
    %cst_151 = arith.constant 1.000000e+00 : f32
    %347 = vector.broadcast %cst_151 : f32 to vector<32x128xf32>
    %348 = arith.mulf %346, %347 : vector<32x128xf32>
    %349 = arith.mulf %348, %348 : vector<32x128xf32>
    %cst_152 = arith.constant 0.000000e+00 : f32
    %350 = vector.broadcast %cst_152 : f32 to vector<32x128xf32>
    %351 = arith.subf %350, %349 : vector<32x128xf32>
    %352 = math.exp %351 : vector<32x128xf32>
    %cst_153 = arith.constant 1.500000e+00 : f32
    %353 = vector.broadcast %cst_153 : f32 to vector<32x128xf32>
    %354 = arith.subf %320, %353 : vector<32x128xf32>
    %cst_154 = arith.constant 1.000000e+00 : f32
    %355 = vector.broadcast %cst_154 : f32 to vector<32x128xf32>
    %356 = arith.mulf %354, %355 : vector<32x128xf32>
    %357 = arith.mulf %356, %356 : vector<32x128xf32>
    %cst_155 = arith.constant 0.000000e+00 : f32
    %358 = vector.broadcast %cst_155 : f32 to vector<32x128xf32>
    %359 = arith.subf %358, %357 : vector<32x128xf32>
    %360 = math.exp %359 : vector<32x128xf32>
    %361 = tpu.concatenate %328, %336, %344, %352, %360 in 0 : vector<32x128xf32>, vector<32x128xf32>, vector<32x128xf32>, vector<32x128xf32>, vector<32x128xf32> -> vector<160x128xf32>
    %362 = arith.truncf %361 : vector<160x128xf32> to vector<160x128xbf16>
    %c1_156 = arith.constant 1 : index
    %c0_157 = arith.constant 0 : index
    %c0_158 = arith.constant 0 : index
    %363 = vector.load %arg5[%c1_156, %c0_157, %c0_158] : memref<2x8x160xbf16, #tpu.memory_space<vmem>>, vector<1x8x160xbf16>
    %364 = vector.shape_cast %363 : vector<1x8x160xbf16> to vector<8x160xbf16>
    %cst_159 = arith.constant dense<0.000000e+00> : vector<8x128xf32>
    %365 = tpu.matmul %364, %362, %cst_159 {dimension_numbers = #tpu.dot_dimension_numbers<[1], [0], [0], [1], [0, 0, 1, 1], [], []>} : vector<8x160xbf16>, vector<160x128xbf16>, vector<8x128xf32> -> vector<8x128xf32>
    %c1_160 = arith.constant 1 : index
    %c0_161 = arith.constant 0 : index
    %c0_162 = arith.constant 0 : index
    %366 = vector.load %arg6[%c1_160, %c0_161, %c0_162] : memref<2x8x1xf32, #tpu.memory_space<vmem>>, vector<1x8x1xf32>
    %367 = vector.shape_cast %366 : vector<1x8x1xf32> to vector<8x1xf32>
    %368 = vector.broadcast %367 : vector<8x1xf32> to vector<8x128xf32>
    %369 = arith.addf %365, %368 : vector<8x128xf32>
    %370 = arith.addf %247, %369 : vector<8x128xf32>
    %c1_163 = arith.constant 1 : index
    %c2_164 = arith.constant 2 : index
    %c0_165 = arith.constant 0 : index
    %371 = vector.load %arg2[%c1_163, %c2_164, %c0_165] : memref<2x4x128xf32, #tpu.memory_space<vmem>>, vector<1x1x128xf32>
    %372 = vector.shape_cast %371 : vector<1x1x128xf32> to vector<1x128xf32>
    %c1_166 = arith.constant 1 : index
    %c3_167 = arith.constant 3 : index
    %c0_168 = arith.constant 0 : index
    %373 = vector.load %arg2[%c1_166, %c3_167, %c0_168] : memref<2x4x128xf32, #tpu.memory_space<vmem>>, vector<1x1x128xf32>
    %374 = vector.shape_cast %373 : vector<1x1x128xf32> to vector<1x128xf32>
    %cst_169 = arith.constant dense<0.000000e+00> : vector<8xf32>
    %375 = vector.multi_reduction <add>, %370, %cst_169 [1] : vector<8x128xf32> to vector<8xf32>
    %376 = vector.shape_cast %375 : vector<8xf32> to vector<8x1xf32>
    %cst_170 = arith.constant 1.280000e+02 : f32
    %377 = vector.broadcast %cst_170 : f32 to vector<8x1xf32>
    %378 = arith.divf %376, %377 : vector<8x1xf32>
    %379 = vector.broadcast %378 : vector<8x1xf32> to vector<8x128xf32>
    %380 = arith.subf %370, %379 : vector<8x128xf32>
    %381 = arith.mulf %380, %380 : vector<8x128xf32>
    %cst_171 = arith.constant dense<0.000000e+00> : vector<8xf32>
    %382 = vector.multi_reduction <add>, %381, %cst_171 [1] : vector<8x128xf32> to vector<8xf32>
    %383 = vector.shape_cast %382 : vector<8xf32> to vector<8x1xf32>
    %cst_172 = arith.constant 1.280000e+02 : f32
    %384 = vector.broadcast %cst_172 : f32 to vector<8x1xf32>
    %385 = arith.divf %383, %384 : vector<8x1xf32>
    %cst_173 = arith.constant 9.99999974E-6 : f32
    %386 = vector.broadcast %cst_173 : f32 to vector<8x1xf32>
    %387 = arith.addf %385, %386 : vector<8x1xf32>
    %388 = math.rsqrt %387 : vector<8x1xf32>
    %389 = vector.broadcast %388 : vector<8x1xf32> to vector<8x128xf32>
    %390 = arith.mulf %380, %389 : vector<8x128xf32>
    %391 = vector.broadcast %372 : vector<1x128xf32> to vector<8x128xf32>
    %392 = arith.mulf %390, %391 : vector<8x128xf32>
    %393 = vector.broadcast %374 : vector<1x128xf32> to vector<8x128xf32>
    %394 = arith.addf %392, %393 : vector<8x128xf32>
    %cst_174 = arith.constant 5.000000e-01 : f32
    %395 = vector.broadcast %cst_174 : f32 to vector<8x128xf32>
    %396 = arith.mulf %395, %394 : vector<8x128xf32>
    %397 = math.tanh %396 : vector<8x128xf32>
    %cst_175 = arith.constant 1.000000e+00 : f32
    %398 = vector.broadcast %cst_175 : f32 to vector<8x128xf32>
    %399 = arith.addf %397, %398 : vector<8x128xf32>
    %cst_176 = arith.constant 5.000000e-01 : f32
    %400 = vector.broadcast %cst_176 : f32 to vector<8x128xf32>
    %401 = arith.mulf %400, %399 : vector<8x128xf32>
    %402 = arith.mulf %394, %401 : vector<8x128xf32>
    %cst_177 = arith.constant -1.500000e+00 : f32
    %403 = vector.broadcast %cst_177 : f32 to vector<8x128xf32>
    %404 = arith.subf %394, %403 : vector<8x128xf32>
    %cst_178 = arith.constant 1.000000e+00 : f32
    %405 = vector.broadcast %cst_178 : f32 to vector<8x128xf32>
    %406 = arith.mulf %404, %405 : vector<8x128xf32>
    %407 = arith.mulf %406, %406 : vector<8x128xf32>
    %cst_179 = arith.constant 0.000000e+00 : f32
    %408 = vector.broadcast %cst_179 : f32 to vector<8x128xf32>
    %409 = arith.subf %408, %407 : vector<8x128xf32>
    %410 = math.exp %409 : vector<8x128xf32>
    %cst_180 = arith.constant -5.000000e-01 : f32
    %411 = vector.broadcast %cst_180 : f32 to vector<8x128xf32>
    %412 = arith.subf %394, %411 : vector<8x128xf32>
    %cst_181 = arith.constant 1.000000e+00 : f32
    %413 = vector.broadcast %cst_181 : f32 to vector<8x128xf32>
    %414 = arith.mulf %412, %413 : vector<8x128xf32>
    %415 = arith.mulf %414, %414 : vector<8x128xf32>
    %cst_182 = arith.constant 0.000000e+00 : f32
    %416 = vector.broadcast %cst_182 : f32 to vector<8x128xf32>
    %417 = arith.subf %416, %415 : vector<8x128xf32>
    %418 = math.exp %417 : vector<8x128xf32>
    %cst_183 = arith.constant 5.000000e-01 : f32
    %419 = vector.broadcast %cst_183 : f32 to vector<8x128xf32>
    %420 = arith.subf %394, %419 : vector<8x128xf32>
    %cst_184 = arith.constant 1.000000e+00 : f32
    %421 = vector.broadcast %cst_184 : f32 to vector<8x128xf32>
    %422 = arith.mulf %420, %421 : vector<8x128xf32>
    %423 = arith.mulf %422, %422 : vector<8x128xf32>
    %cst_185 = arith.constant 0.000000e+00 : f32
    %424 = vector.broadcast %cst_185 : f32 to vector<8x128xf32>
    %425 = arith.subf %424, %423 : vector<8x128xf32>
    %426 = math.exp %425 : vector<8x128xf32>
    %cst_186 = arith.constant 1.500000e+00 : f32
    %427 = vector.broadcast %cst_186 : f32 to vector<8x128xf32>
    %428 = arith.subf %394, %427 : vector<8x128xf32>
    %cst_187 = arith.constant 1.000000e+00 : f32
    %429 = vector.broadcast %cst_187 : f32 to vector<8x128xf32>
    %430 = arith.mulf %428, %429 : vector<8x128xf32>
    %431 = arith.mulf %430, %430 : vector<8x128xf32>
    %cst_188 = arith.constant 0.000000e+00 : f32
    %432 = vector.broadcast %cst_188 : f32 to vector<8x128xf32>
    %433 = arith.subf %432, %431 : vector<8x128xf32>
    %434 = math.exp %433 : vector<8x128xf32>
    %435 = tpu.concatenate %402, %410, %418, %426, %434 in 1 : vector<8x128xf32>, vector<8x128xf32>, vector<8x128xf32>, vector<8x128xf32>, vector<8x128xf32> -> vector<8x640xf32>
    %436 = arith.truncf %435 : vector<8x640xf32> to vector<8x640xbf16>
    %c1_189 = arith.constant 1 : index
    %c0_190 = arith.constant 0 : index
    %c0_191 = arith.constant 0 : index
    %437 = vector.load %arg7[%c1_189, %c0_190, %c0_191] : memref<2x640x256xbf16, #tpu.memory_space<vmem>>, vector<1x640x256xbf16>
    %438 = vector.shape_cast %437 : vector<1x640x256xbf16> to vector<640x256xbf16>
    %cst_192 = arith.constant dense<0.000000e+00> : vector<8x256xf32>
    %439 = tpu.matmul %436, %438, %cst_192 {dimension_numbers = #tpu.dot_dimension_numbers<[1], [0], [0], [1], [0, 0, 1, 1], [], []>} : vector<8x640xbf16>, vector<640x256xbf16>, vector<8x256xf32> -> vector<8x256xf32>
    %c1_193 = arith.constant 1 : index
    %c0_194 = arith.constant 0 : index
    %c0_195 = arith.constant 0 : index
    %440 = vector.load %arg8[%c1_193, %c0_194, %c0_195] : memref<2x1x256xf32, #tpu.memory_space<vmem>>, vector<1x1x256xf32>
    %441 = vector.shape_cast %440 : vector<1x1x256xf32> to vector<1x256xf32>
    %442 = vector.broadcast %441 : vector<1x256xf32> to vector<8x256xf32>
    %443 = arith.addf %439, %442 : vector<8x256xf32>
    %cst_196 = arith.constant 5.000000e-01 : f32
    %444 = vector.broadcast %cst_196 : f32 to vector<8x256xf32>
    %445 = arith.mulf %444, %443 : vector<8x256xf32>
    %446 = math.tanh %445 : vector<8x256xf32>
    %cst_197 = arith.constant 1.000000e+00 : f32
    %447 = vector.broadcast %cst_197 : f32 to vector<8x256xf32>
    %448 = arith.addf %446, %447 : vector<8x256xf32>
    %cst_198 = arith.constant 5.000000e-01 : f32
    %449 = vector.broadcast %cst_198 : f32 to vector<8x256xf32>
    %450 = arith.mulf %449, %448 : vector<8x256xf32>
    %451 = arith.mulf %443, %450 : vector<8x256xf32>
    %cst_199 = arith.constant -1.500000e+00 : f32
    %452 = vector.broadcast %cst_199 : f32 to vector<8x256xf32>
    %453 = arith.subf %443, %452 : vector<8x256xf32>
    %cst_200 = arith.constant 1.000000e+00 : f32
    %454 = vector.broadcast %cst_200 : f32 to vector<8x256xf32>
    %455 = arith.mulf %453, %454 : vector<8x256xf32>
    %456 = arith.mulf %455, %455 : vector<8x256xf32>
    %cst_201 = arith.constant 0.000000e+00 : f32
    %457 = vector.broadcast %cst_201 : f32 to vector<8x256xf32>
    %458 = arith.subf %457, %456 : vector<8x256xf32>
    %459 = math.exp %458 : vector<8x256xf32>
    %cst_202 = arith.constant -5.000000e-01 : f32
    %460 = vector.broadcast %cst_202 : f32 to vector<8x256xf32>
    %461 = arith.subf %443, %460 : vector<8x256xf32>
    %cst_203 = arith.constant 1.000000e+00 : f32
    %462 = vector.broadcast %cst_203 : f32 to vector<8x256xf32>
    %463 = arith.mulf %461, %462 : vector<8x256xf32>
    %464 = arith.mulf %463, %463 : vector<8x256xf32>
    %cst_204 = arith.constant 0.000000e+00 : f32
    %465 = vector.broadcast %cst_204 : f32 to vector<8x256xf32>
    %466 = arith.subf %465, %464 : vector<8x256xf32>
    %467 = math.exp %466 : vector<8x256xf32>
    %cst_205 = arith.constant 5.000000e-01 : f32
    %468 = vector.broadcast %cst_205 : f32 to vector<8x256xf32>
    %469 = arith.subf %443, %468 : vector<8x256xf32>
    %cst_206 = arith.constant 1.000000e+00 : f32
    %470 = vector.broadcast %cst_206 : f32 to vector<8x256xf32>
    %471 = arith.mulf %469, %470 : vector<8x256xf32>
    %472 = arith.mulf %471, %471 : vector<8x256xf32>
    %cst_207 = arith.constant 0.000000e+00 : f32
    %473 = vector.broadcast %cst_207 : f32 to vector<8x256xf32>
    %474 = arith.subf %473, %472 : vector<8x256xf32>
    %475 = math.exp %474 : vector<8x256xf32>
    %cst_208 = arith.constant 1.500000e+00 : f32
    %476 = vector.broadcast %cst_208 : f32 to vector<8x256xf32>
    %477 = arith.subf %443, %476 : vector<8x256xf32>
    %cst_209 = arith.constant 1.000000e+00 : f32
    %478 = vector.broadcast %cst_209 : f32 to vector<8x256xf32>
    %479 = arith.mulf %477, %478 : vector<8x256xf32>
    %480 = arith.mulf %479, %479 : vector<8x256xf32>
    %cst_210 = arith.constant 0.000000e+00 : f32
    %481 = vector.broadcast %cst_210 : f32 to vector<8x256xf32>
    %482 = arith.subf %481, %480 : vector<8x256xf32>
    %483 = math.exp %482 : vector<8x256xf32>
    %484 = tpu.concatenate %451, %459, %467, %475, %483 in 1 : vector<8x256xf32>, vector<8x256xf32>, vector<8x256xf32>, vector<8x256xf32>, vector<8x256xf32> -> vector<8x1280xf32>
    %485 = arith.truncf %484 : vector<8x1280xf32> to vector<8x1280xbf16>
    %c1_211 = arith.constant 1 : index
    %c0_212 = arith.constant 0 : index
    %c0_213 = arith.constant 0 : index
    %486 = vector.load %arg9[%c1_211, %c0_212, %c0_213] : memref<2x1280x128xbf16, #tpu.memory_space<vmem>>, vector<1x1280x128xbf16>
    %487 = vector.shape_cast %486 : vector<1x1280x128xbf16> to vector<1280x128xbf16>
    %cst_214 = arith.constant dense<0.000000e+00> : vector<8x128xf32>
    %488 = tpu.matmul %485, %487, %cst_214 {dimension_numbers = #tpu.dot_dimension_numbers<[1], [0], [0], [1], [0, 0, 1, 1], [], []>} : vector<8x1280xbf16>, vector<1280x128xbf16>, vector<8x128xf32> -> vector<8x128xf32>
    %c1_215 = arith.constant 1 : index
    %c0_216 = arith.constant 0 : index
    %c0_217 = arith.constant 0 : index
    %489 = vector.load %arg10[%c1_215, %c0_216, %c0_217] : memref<2x1x128xf32, #tpu.memory_space<vmem>>, vector<1x1x128xf32>
    %490 = vector.shape_cast %489 : vector<1x1x128xf32> to vector<1x128xf32>
    %491 = vector.broadcast %490 : vector<1x128xf32> to vector<8x128xf32>
    %492 = arith.addf %488, %491 : vector<8x128xf32>
    %493 = arith.addf %370, %492 : vector<8x128xf32>
    %c0_218 = arith.constant 0 : index
    %c0_219 = arith.constant 0 : index
    %494 = vector.load %arg11[%c0_218, %c0_219] : memref<2x128xf32, #tpu.memory_space<vmem>>, vector<1x128xf32>
    %c1_220 = arith.constant 1 : index
    %c0_221 = arith.constant 0 : index
    %495 = vector.load %arg11[%c1_220, %c0_221] : memref<2x128xf32, #tpu.memory_space<vmem>>, vector<1x128xf32>
    %cst_222 = arith.constant dense<0.000000e+00> : vector<8xf32>
    %496 = vector.multi_reduction <add>, %493, %cst_222 [1] : vector<8x128xf32> to vector<8xf32>
    %497 = vector.shape_cast %496 : vector<8xf32> to vector<8x1xf32>
    %cst_223 = arith.constant 1.280000e+02 : f32
    %498 = vector.broadcast %cst_223 : f32 to vector<8x1xf32>
    %499 = arith.divf %497, %498 : vector<8x1xf32>
    %500 = vector.broadcast %499 : vector<8x1xf32> to vector<8x128xf32>
    %501 = arith.subf %493, %500 : vector<8x128xf32>
    %502 = arith.mulf %501, %501 : vector<8x128xf32>
    %cst_224 = arith.constant dense<0.000000e+00> : vector<8xf32>
    %503 = vector.multi_reduction <add>, %502, %cst_224 [1] : vector<8x128xf32> to vector<8xf32>
    %504 = vector.shape_cast %503 : vector<8xf32> to vector<8x1xf32>
    %cst_225 = arith.constant 1.280000e+02 : f32
    %505 = vector.broadcast %cst_225 : f32 to vector<8x1xf32>
    %506 = arith.divf %504, %505 : vector<8x1xf32>
    %cst_226 = arith.constant 9.99999974E-6 : f32
    %507 = vector.broadcast %cst_226 : f32 to vector<8x1xf32>
    %508 = arith.addf %506, %507 : vector<8x1xf32>
    %509 = math.rsqrt %508 : vector<8x1xf32>
    %510 = vector.broadcast %509 : vector<8x1xf32> to vector<8x128xf32>
    %511 = arith.mulf %501, %510 : vector<8x128xf32>
    %512 = vector.broadcast %494 : vector<1x128xf32> to vector<8x128xf32>
    %513 = arith.mulf %511, %512 : vector<8x128xf32>
    %514 = vector.broadcast %495 : vector<1x128xf32> to vector<8x128xf32>
    %515 = arith.addf %513, %514 : vector<8x128xf32>
    %516 = arith.truncf %515 : vector<8x128xf32> to vector<8x128xbf16>
    %c0_227 = arith.constant 0 : index
    %c0_228 = arith.constant 0 : index
    %517 = vector.load %arg12[%c0_227, %c0_228] : memref<128x128xbf16, #tpu.memory_space<vmem>>, vector<128x128xbf16>
    %cst_229 = arith.constant dense<0.000000e+00> : vector<8x128xf32>
    %518 = tpu.matmul %516, %517, %cst_229 {dimension_numbers = #tpu.dot_dimension_numbers<[1], [0], [0], [1], [0, 0, 1, 1], [], []>} : vector<8x128xbf16>, vector<128x128xbf16>, vector<8x128xf32> -> vector<8x128xf32>
    %cst_230 = arith.constant dense<0.000000e+00> : vector<128xf32>
    %519 = vector.multi_reduction <add>, %518, %cst_230 [0] : vector<8x128xf32> to vector<128xf32>
    %520 = vector.shape_cast %519 : vector<128xf32> to vector<1x128xf32>
    %cst_231 = arith.constant 8.000000e+00 : f32
    %521 = vector.broadcast %cst_231 : f32 to vector<1x128xf32>
    %522 = arith.divf %520, %521 : vector<1x128xf32>
    %c0_232 = arith.constant 0 : index
    %c0_233 = arith.constant 0 : index
    %523 = vector.load %arg13[%c0_232, %c0_233] : memref<1x128xf32, #tpu.memory_space<vmem>>, vector<1x128xf32>
    %524 = arith.addf %522, %523 : vector<1x128xf32>
    %525 = vector.shape_cast %524 : vector<1x128xf32> to vector<1x128xf32>
    %526 = vector.broadcast %525 : vector<1x128xf32> to vector<8x128xf32>
    %c0_234 = arith.constant 0 : index
    %c0_235 = arith.constant 0 : index
    %c0_236 = arith.constant 0 : index
    %527 = vector.load %arg14[%c0_234, %c0_235, %c0_236] : memref<1x8x128xf32, #tpu.memory_space<vmem>>, vector<1x8x128xf32>
    %528 = vector.shape_cast %527 : vector<1x8x128xf32> to vector<8x128xf32>
    %529 = vector.shape_cast %526 : vector<8x128xf32> to vector<1x8x128xf32>
    tpu.vector_store %arg14[%c0_234, %c0_235, %c0_236], %529 {strides = array<i32>} : memref<1x8x128xf32, #tpu.memory_space<vmem>>, vector<1x8x128xf32>,
    return
  }
  func.func @transform_0(%arg0: i32) -> (i32, i32, i32) {
    %c0_i32 = arith.constant 0 : i32
    %c0_i32_0 = arith.constant 0 : i32
    %c0_i32_1 = arith.constant 0 : i32
    return %arg0, %c0_i32, %c0_i32_0 : i32, i32, i32
  }
  func.func @transform_1(%arg0: i32) -> (i32, i32, i32) {
    %c0_i32 = arith.constant 0 : i32
    %c0_i32_0 = arith.constant 0 : i32
    %c0_i32_1 = arith.constant 0 : i32
    %c0_i32_2 = arith.constant 0 : i32
    return %c0_i32, %c0_i32_0, %c0_i32_1 : i32, i32, i32
  }
  func.func @transform_2(%arg0: i32) -> (i32, i32, i32) {
    %c0_i32 = arith.constant 0 : i32
    %c0_i32_0 = arith.constant 0 : i32
    %c0_i32_1 = arith.constant 0 : i32
    %c0_i32_2 = arith.constant 0 : i32
    return %c0_i32, %c0_i32_0, %c0_i32_1 : i32, i32, i32
  }
  func.func @transform_3(%arg0: i32) -> (i32, i32, i32) {
    %c0_i32 = arith.constant 0 : i32
    %c0_i32_0 = arith.constant 0 : i32
    %c0_i32_1 = arith.constant 0 : i32
    %c0_i32_2 = arith.constant 0 : i32
    return %c0_i32, %c0_i32_0, %c0_i32_1 : i32, i32, i32
  }
  func.func @transform_4(%arg0: i32) -> (i32, i32, i32) {
    %c0_i32 = arith.constant 0 : i32
    %c0_i32_0 = arith.constant 0 : i32
    %c0_i32_1 = arith.constant 0 : i32
    %c0_i32_2 = arith.constant 0 : i32
    return %c0_i32, %c0_i32_0, %c0_i32_1 : i32, i32, i32
  }
  func.func @transform_5(%arg0: i32) -> (i32, i32, i32) {
    %c0_i32 = arith.constant 0 : i32
    %c0_i32_0 = arith.constant 0 : i32
    %c0_i32_1 = arith.constant 0 : i32
    %c0_i32_2 = arith.constant 0 : i32
    return %c0_i32, %c0_i32_0, %c0_i32_1 : i32, i32, i32
  }
  func.func @transform_6(%arg0: i32) -> (i32, i32, i32) {
    %c0_i32 = arith.constant 0 : i32
    %c0_i32_0 = arith.constant 0 : i32
    %c0_i32_1 = arith.constant 0 : i32
    %c0_i32_2 = arith.constant 0 : i32
    return %c0_i32, %c0_i32_0, %c0_i32_1 : i32, i32, i32
  }
  func.func @transform_7(%arg0: i32) -> (i32, i32, i32) {
    %c0_i32 = arith.constant 0 : i32
    %c0_i32_0 = arith.constant 0 : i32
    %c0_i32_1 = arith.constant 0 : i32
    %c0_i32_2 = arith.constant 0 : i32
    return %c0_i32, %c0_i32_0, %c0_i32_1 : i32, i32, i32
  }
  func.func @transform_8(%arg0: i32) -> (i32, i32, i32) {
    %c0_i32 = arith.constant 0 : i32
    %c0_i32_0 = arith.constant 0 : i32
    %c0_i32_1 = arith.constant 0 : i32
    %c0_i32_2 = arith.constant 0 : i32
    return %c0_i32, %c0_i32_0, %c0_i32_1 : i32, i32, i32
  }
  func.func @transform_9(%arg0: i32) -> (i32, i32, i32) {
    %c0_i32 = arith.constant 0 : i32
    %c0_i32_0 = arith.constant 0 : i32
    %c0_i32_1 = arith.constant 0 : i32
    %c0_i32_2 = arith.constant 0 : i32
    return %c0_i32, %c0_i32_0, %c0_i32_1 : i32, i32, i32
  }
  func.func @transform_10(%arg0: i32) -> (i32, i32) {
    %c0_i32 = arith.constant 0 : i32
    %c0_i32_0 = arith.constant 0 : i32
    %c0_i32_1 = arith.constant 0 : i32
    return %c0_i32, %c0_i32_0 : i32, i32
  }
  func.func @transform_11(%arg0: i32) -> (i32, i32) {
    %c0_i32 = arith.constant 0 : i32
    %c0_i32_0 = arith.constant 0 : i32
    %c0_i32_1 = arith.constant 0 : i32
    return %c0_i32, %c0_i32_0 : i32, i32
  }
  func.func @transform_12(%arg0: i32) -> (i32, i32) {
    %c0_i32 = arith.constant 0 : i32
    %c0_i32_0 = arith.constant 0 : i32
    %c0_i32_1 = arith.constant 0 : i32
    return %c0_i32, %c0_i32_0 : i32, i32
  }
  func.func @transform_13(%arg0: i32) -> (i32, i32, i32) {
    %c0_i32 = arith.constant 0 : i32
    %c0_i32_0 = arith.constant 0 : i32
    %c0_i32_1 = arith.constant 0 : i32
    return %arg0, %c0_i32, %c0_i32_0 : i32, i32, i32
  }
}

</mosaic_0001>

<llo_original>
// kernel: forward.2
$region0: #{forward.2}
  #allocation0 [shape = 'u32[]', space=smem, size = 0x4, offset = 0x4, fixed_abs, tag = 'smem constant byte address 0x4 - core index']
  #allocation1 [shape = 'u32[144,128]{1,0:T(1,128)}', space=vmem, size = 0x12000, scoped, tag = 'internal scratch']
  %s0 = inlined_call_operand.vmem [shape: bf16[2,1152,148], index: 0, kind: input, shape index: {}]
  %s1 = inlined_call_operand.vmem [shape: bf16[2,148,128], index: 1, kind: input, shape index: {}]
  %s2 = inlined_call_operand.vmem [shape: bf16[2,128,256], index: 2, kind: input, shape index: {}]
  %s3 = inlined_call_operand.vmem [shape: f32[2,1,256], index: 3, kind: input, shape index: {}]
  %s4 = inlined_call_operand.vmem [shape: bf16[2,4096,128], index: 4, kind: input, shape index: {}]
  %s5 = inlined_call_operand.vmem [shape: f32[2,1,128], index: 5, kind: input, shape index: {}]
  %s6 = inlined_call_operand.vmem [shape: f32[2,8,128], index: 6, kind: output, shape index: {}]
  %s7 = sld [smem:[#allocation0]]
  $region57: #{forward.2} parent=0
    _
  %s9 = ssub.s32 1, %s7
  %s10 = scalar_select 0, %s9, %s7
  loop: start=0, step=1, limit=4
  $region2: #{forward.2} parent=0 // loop_pre_header
    _
  $region3: #{forward.2} parent=0 // loop_header
    %s12 = sphi 0, %s16
    %p13 = scmp.ge.s32.totalorder %s12, 4
    %s22 = sphi 0, %s24
    %s25 = sphi 0, %s22
    %s26 = sphi 0, %s25
    %s42 = sphi 0, %s26
    %s48 = sphi 0, %s50
    %s51 = sphi 0, %s48
    %s52 = sphi 0, %s51
    %s68 = sphi 0, %s52
    %s74 = sphi 0, %s76
    %s77 = sphi 0, %s74
    %s78 = sphi 0, %s77
    %s94 = sphi 0, %s78
    %s100 = sphi 0, %s102
    %s103 = sphi 0, %s100
    %s104 = sphi 0, %s103
    %s120 = sphi 0, %s104
    %s126 = sphi 0, %s128
    %s129 = sphi 0, %s126
    %s130 = sphi 0, %s129
    %s146 = sphi 0, %s130
    %s152 = sphi 0, %s154
    %s155 = sphi 0, %s152
    %s156 = sphi 0, %s155
    %s172 = sphi 0, %s156
    %s178 = sphi 0, %s180
    %s181 = sphi 0, %s178
    %s182 = sphi 0, %s181
    %s198 = sphi 0, %s182
  $region4: #{forward.2} parent=0 // loop_header_branch
    %15 = sbr.rel (%p13) target = $region8
  $region5: #{forward.2} parent=0 // loop_body
    %s17 = ssub.s32 %s12, 1
    %s18 = ssub.s32 %s12, 2
    %s19 = sadd.s32 %s12, 1
    %s20 = ssub.s32 %s12, %s19
    %p21 = scmp.eq.s32.totalorder %s20, 0
    %s23 = sadd.s32 %s22, 1
    %s24 = scalar_select %p21, %s22, %s23
    %p27 = pneg %p21
    %p28 = scmp.eq.s32.totalorder %s12, 1
    %p29 = por %p27, %p28
    %p30 = scmp.ne.s32.totalorder %s22, %s25
    %p31 = scmp.eq.s32.totalorder %s12, 0
    %p32 = por %p30, %p31
    %p33 = scmp.ne.s32.totalorder %s22, %s25
    %p34 = scmp.eq.s32.totalorder %s17, 1
    %p35 = por %p33, %p34
    %p36 = scmp.ne.s32.totalorder %s25, %s26
    %p37 = scmp.eq.s32.totalorder %s17, 0
    %p38 = por %p36, %p37
    %p39 = scmp.ne.s32.totalorder %s25, %s26
    %p40 = scmp.eq.s32.totalorder %s18, 1
    %p41 = por %p39, %p40
    %p43 = scmp.ne.s32.totalorder %s26, %s42
    %p44 = scmp.eq.s32.totalorder %s18, 0
    %p45 = por %p43, %p44
    %s46 = ssub.s32 %s12, %s19
    %p47 = scmp.eq.s32.totalorder %s46, 0
    %s49 = sadd.s32 %s48, 1
    %s50 = scalar_select %p47, %s48, %s49
    %p53 = pneg %p47
    %p54 = scmp.eq.s32.totalorder %s12, 1
    %p55 = por %p53, %p54
    %p56 = scmp.ne.s32.totalorder %s48, %s51
    %p57 = scmp.eq.s32.totalorder %s12, 0
    %p58 = por %p56, %p57
    %p59 = scmp.ne.s32.totalorder %s48, %s51
    %p60 = scmp.eq.s32.totalorder %s17, 1
    %p61 = por %p59, %p60
    %p62 = scmp.ne.s32.totalorder %s51, %s52
    %p63 = scmp.eq.s32.totalorder %s17, 0
    %p64 = por %p62, %p63
    %p65 = scmp.ne.s32.totalorder %s51, %s52
    %p66 = scmp.eq.s32.totalorder %s18, 1
    %p67 = por %p65, %p66
    %p69 = scmp.ne.s32.totalorder %s52, %s68
    %p70 = scmp.eq.s32.totalorder %s18, 0
    %p71 = por %p69, %p70
    %s72 = ssub.s32 %s12, %s19
    %p73 = scmp.eq.s32.totalorder %s72, 0
    %s75 = sadd.s32 %s74, 1
    %s76 = scalar_select %p73, %s74, %s75
    %p79 = pneg %p73
    %p80 = scmp.eq.s32.totalorder %s12, 1
    %p81 = por %p79, %p80
    %p82 = scmp.ne.s32.totalorder %s74, %s77
    %p83 = scmp.eq.s32.totalorder %s12, 0
    %p84 = por %p82, %p83
    %p85 = scmp.ne.s32.totalorder %s74, %s77
    %p86 = scmp.eq.s32.totalorder %s17, 1
    %p87 = por %p85, %p86
    %p88 = scmp.ne.s32.totalorder %s77, %s78
    %p89 = scmp.eq.s32.totalorder %s17, 0
    %p90 = por %p88, %p89
    %p91 = scmp.ne.s32.totalorder %s77, %s78
    %p92 = scmp.eq.s32.totalorder %s18, 1
    %p93 = por %p91, %p92
    %p95 = scmp.ne.s32.totalorder %s78, %s94
    %p96 = scmp.eq.s32.totalorder %s18, 0
    %p97 = por %p95, %p96
    %s98 = ssub.s32 %s12, %s19
    %p99 = scmp.eq.s32.totalorder %s98, 0
    %s101 = sadd.s32 %s100, 1
    %s102 = scalar_select %p99, %s100, %s101
    %p105 = pneg %p99
    %p106 = scmp.eq.s32.totalorder %s12, 1
    %p107 = por %p105, %p106
    %p108 = scmp.ne.s32.totalorder %s100, %s103
    %p109 = scmp.eq.s32.totalorder %s12, 0
    %p110 = por %p108, %p109
    %p111 = scmp.ne.s32.totalorder %s100, %s103
    %p112 = scmp.eq.s32.totalorder %s17, 1
    %p113 = por %p111, %p112
    %p114 = scmp.ne.s32.totalorder %s103, %s104
    %p115 = scmp.eq.s32.totalorder %s17, 0
    %p116 = por %p114, %p115
    %p117 = scmp.ne.s32.totalorder %s103, %s104
    %p118 = scmp.eq.s32.totalorder %s18, 1
    %p119 = por %p117, %p118
    %p121 = scmp.ne.s32.totalorder %s104, %s120
    %p122 = scmp.eq.s32.totalorder %s18, 0
    %p123 = por %p121, %p122
    %s124 = ssub.s32 %s12, %s19
    %p125 = scmp.eq.s32.totalorder %s124, 0
    %s127 = sadd.s32 %s126, 1
    %s128 = scalar_select %p125, %s126, %s127
    %p131 = pneg %p125
    %p132 = scmp.eq.s32.totalorder %s12, 1
    %p133 = por %p131, %p132
    %p134 = scmp.ne.s32.totalorder %s126, %s129
    %p135 = scmp.eq.s32.totalorder %s12, 0
    %p136 = por %p134, %p135
    %p137 = scmp.ne.s32.totalorder %s126, %s129
    %p138 = scmp.eq.s32.totalorder %s17, 1
    %p139 = por %p137, %p138
    %p140 = scmp.ne.s32.totalorder %s129, %s130
    %p141 = scmp.eq.s32.totalorder %s17, 0
    %p142 = por %p140, %p141
    %p143 = scmp.ne.s32.totalorder %s129, %s130
    %p144 = scmp.eq.s32.totalorder %s18, 1
    %p145 = por %p143, %p144
    %p147 = scmp.ne.s32.totalorder %s130, %s146
    %p148 = scmp.eq.s32.totalorder %s18, 0
    %p149 = por %p147, %p148
    %s150 = ssub.s32 %s12, %s19
    %p151 = scmp.eq.s32.totalorder %s150, 0
    %s153 = sadd.s32 %s152, 1
    %s154 = scalar_select %p151, %s152, %s153
    %p157 = pneg %p151
    %p158 = scmp.eq.s32.totalorder %s12, 1
    %p159 = por %p157, %p158
    %p160 = scmp.ne.s32.totalorder %s152, %s155
    %p161 = scmp.eq.s32.totalorder %s12, 0
    %p162 = por %p160, %p161
    %p163 = scmp.ne.s32.totalorder %s152, %s155
    %p164 = scmp.eq.s32.totalorder %s17, 1
    %p165 = por %p163, %p164
    %p166 = scmp.ne.s32.totalorder %s155, %s156
    %p167 = scmp.eq.s32.totalorder %s17, 0
    %p168 = por %p166, %p167
    %p169 = scmp.ne.s32.totalorder %s155, %s156
    %p170 = scmp.eq.s32.totalorder %s18, 1
    %p171 = por %p169, %p170
    %p173 = scmp.ne.s32.totalorder %s156, %s172
    %p174 = scmp.eq.s32.totalorder %s18, 0
    %p175 = por %p173, %p174
    %s176 = ssub.s32 %s12, %s19
    %p177 = scmp.eq.s32.totalorder %s176, 0
    %s179 = sadd.s32 %s178, 1
    %s180 = scalar_select %p177, %s178, %s179
    %p183 = pneg %p177
    %p184 = scmp.eq.s32.totalorder %s12, 1
    %p185 = por %p183, %p184
    %p186 = scmp.ne.s32.totalorder %s178, %s181
    %p187 = scmp.eq.s32.totalorder %s12, 0
    %p188 = por %p186, %p187
    %p189 = scmp.ne.s32.totalorder %s178, %s181
    %p190 = scmp.eq.s32.totalorder %s17, 1
    %p191 = por %p189, %p190
    %p192 = scmp.ne.s32.totalorder %s181, %s182
    %p193 = scmp.eq.s32.totalorder %s17, 0
    %p194 = por %p192, %p193
    %p195 = scmp.ne.s32.totalorder %s181, %s182
    %p196 = scmp.eq.s32.totalorder %s18, 1
    %p197 = por %p195, %p196
    %p199 = scmp.ne.s32.totalorder %s182, %s198
    %p200 = scmp.eq.s32.totalorder %s18, 0
    %p201 = por %p199, %p200
    %p202 = scmp.le.s32.totalorder 1, %s12
    %p203 = scmp.lt.s32.totalorder %s12, 3
    %p204 = pnand %p202, %p203
    %p205 = pneg %p204
    // Predicated region
    $region9: #{forward.2} parent=5 // pred_check
      _
    $region10: #{forward.2} parent=5 // pred_check_branch
      %207 = sbr.rel (%p204) target = $region12
    $region11: #{forward.2} parent=5 // pred_region
      %s208 = ssub.s32 %s12, 1
    $region12: #{forward.2} parent=5 // pred_fallthru
      _
    %p209 = scmp.lt.s32.totalorder %s12, 2
    // Predicated region
    $region13: #{forward.2} parent=5 // pred_check
      %p210 = pneg %p209
    $region14: #{forward.2} parent=5 // pred_check_branch
      %212 = sbr.rel (%p210) target = $region16
    $region15: #{forward.2} parent=5 // pred_region
      // Predicated region
      $region17: #{forward.2} parent=15 // pred_check
        %p213 = pneg %p32
      $region18: #{forward.2} parent=15 // pred_check_branch
        %215 = sbr.rel (%p213) target = $region20
      $region19: #{forward.2} parent=15 // pred_region
        %p216 = scmp.lt.s32.totalorder %s12, 1
        %s217 = scalar_select %p216, %s12, 1
        %s218 = smul.addr %s217, 288
        %s219 = smul.addr %s218, 4
        %s220 = scalar_lea.vmem %s0, %s219
      $region20: #{forward.2} parent=15 // pred_fallthru
        _
      // Predicated region
      $region21: #{forward.2} parent=15 // pred_check
        %p221 = pneg %p58
      $region22: #{forward.2} parent=15 // pred_check_branch
        %223 = sbr.rel (%p221) target = $region24
      $region23: #{forward.2} parent=15 // pred_region
        %p224 = scmp.lt.s32.totalorder %s12, 1
        %s225 = scalar_select %p224, %s12, 1
        %s226 = smul.addr %s225, 19
        %s227 = smul.addr %s226, 4
        %s228 = scalar_lea.vmem %s1, %s227
      $region24: #{forward.2} parent=15 // pred_fallthru
        _
      // Predicated region
      $region25: #{forward.2} parent=15 // pred_check
        %p229 = pneg %p84
      $region26: #{forward.2} parent=15 // pred_check_branch
        %231 = sbr.rel (%p229) target = $region28
      $region27: #{forward.2} parent=15 // pred_region
        %p232 = scmp.lt.s32.totalorder %s12, 1
        %s233 = scalar_select %p232, %s12, 1
        %s234 = smul.addr %s233, 32
        %s235 = smul.addr %s234, 4
        %s236 = scalar_lea.vmem %s2, %s235
      $region28: #{forward.2} parent=15 // pred_fallthru
        _
      // Predicated region
      $region29: #{forward.2} parent=15 // pred_check
        %p237 = pneg %p110
      $region30: #{forward.2} parent=15 // pred_check_branch
        %239 = sbr.rel (%p237) target = $region32
      $region31: #{forward.2} parent=15 // pred_region
        %p240 = scmp.lt.s32.totalorder %s12, 1
        %s241 = scalar_select %p240, %s12, 1
        %s242 = smul.addr %s241, 2
        %s243 = scalar_lea.vmem %s3, %s242
      $region32: #{forward.2} parent=15 // pred_fallthru
        _
      // Predicated region
      $region33: #{forward.2} parent=15 // pred_check
        %p244 = pneg %p136
      $region34: #{forward.2} parent=15 // pred_check_branch
        %246 = sbr.rel (%p244) target = $region36
      $region35: #{forward.2} parent=15 // pred_region
        %p247 = scmp.lt.s32.totalorder %s12, 1
        %s248 = scalar_select %p247, %s12, 1
        %s249 = smul.addr %s248, 512
        %s250 = smul.addr %s249, 4
        %s251 = scalar_lea.vmem %s4, %s250
      $region36: #{forward.2} parent=15 // pred_fallthru
        _
      // Predicated region
      $region37: #{forward.2} parent=15 // pred_check
        %p252 = pneg %p162
      $region38: #{forward.2} parent=15 // pred_check_branch
        %254 = sbr.rel (%p252) target = $region40
      $region39: #{forward.2} parent=15 // pred_region
        %p255 = scmp.lt.s32.totalorder %s12, 1
        %s256 = scalar_select %p255, %s12, 1
        %s257 = scalar_lea.vmem %s5, %s256
      $region40: #{forward.2} parent=15 // pred_fallthru
        _
    $region16: #{forward.2} parent=5 // pred_fallthru
      _
    %p258 = scmp.le.s32.totalorder 1, %s12
    %p259 = scmp.lt.s32.totalorder %s12, 3
    %p260 = pnand %p258, %p259
    %p261 = pneg %p260
    // Predicated region
    $region41: #{forward.2} parent=5 // pred_check
      _
    $region42: #{forward.2} parent=5 // pred_check_branch
      %263 = sbr.rel (%p260) target = $region44
    $region43: #{forward.2} parent=5 // pred_region
      %s264 = ssub.s32 %s12, 1
      %p265 = scmp.lt.s32.totalorder %s17, 1
      %s266 = scalar_select %p265, %s17, 1
      %s267 = smul.addr %s266, 288
      %s268 = smul.addr %s267, 4
      %s269 = scalar_lea.vmem %s0, %s268
      %p270 = pneg %p38
      %p271 = pneg %p35
      %p272 = scmp.lt.s32.totalorder %s17, 1
      %s273 = scalar_select %p272, %s17, 1
      %s274 = smul.addr %s273, 19
      %s275 = smul.addr %s274, 4
      %s276 = scalar_lea.vmem %s1, %s275
      %p277 = pneg %p64
      %p278 = pneg %p61
      %p279 = scmp.lt.s32.totalorder %s17, 1
      %s280 = scalar_select %p279, %s17, 1
      %s281 = smul.addr %s280, 32
      %s282 = smul.addr %s281, 4
      %s283 = scalar_lea.vmem %s2, %s282
      %p284 = pneg %p90
      %p285 = pneg %p87
      %p286 = scmp.lt.s32.totalorder %s17, 1
      %s287 = scalar_select %p286, %s17, 1
      %s288 = smul.addr %s287, 2
      %s289 = scalar_lea.vmem %s3, %s288
      %p290 = pneg %p116
      %p291 = pneg %p113
      %p292 = scmp.lt.s32.totalorder %s17, 1
      %s293 = scalar_select %p292, %s17, 1
      %s294 = smul.addr %s293, 512
      %s295 = smul.addr %s294, 4
      %s296 = scalar_lea.vmem %s4, %s295
      %p297 = pneg %p142
      %p298 = pneg %p139
      %p299 = scmp.lt.s32.totalorder %s17, 1
      %s300 = scalar_select %p299, %s17, 1
      %s301 = scalar_lea.vmem %s5, %s300
      %p302 = pneg %p168
      %p303 = pneg %p165
      %p304 = pneg %p194
      %p305 = pneg %p191
      %p306 = scmp.lt.s32.totalorder %s17, 1
      %s307 = scalar_select %p306, %s17, 1
      %s308 = smul.addr %s307, 8
      %s309 = scalar_lea.vmem %s6, %s308
      %p310 = scmp.lt.s32.totalorder %s17, 1
      %s311 = scalar_select %p310, %s17, 1
      %s312 = smul.addr %s311, 288
      %s313 = smul.addr %s312, 4
      %s314 = scalar_lea.vmem %s0, %s313
      %p315 = scmp.lt.s32.totalorder %s17, 1
      %s316 = scalar_select %p315, %s17, 1
      %s317 = smul.addr %s316, 19
      %s318 = smul.addr %s317, 4
      %s319 = scalar_lea.vmem %s1, %s318
      %p320 = scmp.lt.s32.totalorder %s17, 1
      %s321 = scalar_select %p320, %s17, 1
      %s322 = smul.addr %s321, 32
      %s323 = smul.addr %s322, 4
      %s324 = scalar_lea.vmem %s2, %s323
      %p325 = scmp.lt.s32.totalorder %s17, 1
      %s326 = scalar_select %p325, %s17, 1
      %s327 = smul.addr %s326, 2
      %s328 = scalar_lea.vmem %s3, %s327
      %p329 = scmp.lt.s32.totalorder %s17, 1
      %s330 = scalar_select %p329, %s17, 1
      %s331 = smul.addr %s330, 512
      %s332 = smul.addr %s331, 4
      %s333 = scalar_lea.vmem %s4, %s332
      %p334 = scmp.lt.s32.totalorder %s17, 1
      %s335 = scalar_select %p334, %s17, 1
      %s336 = scalar_lea.vmem %s5, %s335
      %p337 = scmp.lt.s32.totalorder %s17, 1
      %s338 = scalar_select %p337, %s17, 1
      %s339 = smul.addr %s338, 8
      %s340 = scalar_lea.vmem %s6, %s339
      %v342 = vld [vmem:[%s314] sm:$0xff]
      %v343 = vld [vmem:[%s314 + $0x8] sm:$0xff]
      %v344 = vld [vmem:[%s314 + $0x10] sm:$0xff]
      %v345 = vld [vmem:[%s314 + $0x18] sm:$0xff]
      %v346 = vld [vmem:[%s314 + $0x20] sm:$0xff]
      %v347 = vld [vmem:[%s314 + $0x28] sm:$0xff]
      %v348 = vld [vmem:[%s314 + $0x30] sm:$0xff]
      %v349 = vld [vmem:[%s314 + $0x38] sm:$0xff]
      %v350 = vld [vmem:[%s314 + $0x40] sm:$0xff]
      %v351 = vld [vmem:[%s314 + $0x48] sm:$0xff]
      %v352 = vld [vmem:[%s314 + $0x50] sm:$0xff]
      %v353 = vld [vmem:[%s314 + $0x58] sm:$0xff]
      %v354 = vld [vmem:[%s314 + $0x60] sm:$0xff]
      %v355 = vld [vmem:[%s314 + $0x68] sm:$0xff]
      %v356 = vld [vmem:[%s314 + $0x70] sm:$0xff]
      %v357 = vld [vmem:[%s314 + $0x78] sm:$0xff]
      %v358 = vld [vmem:[%s314 + $0x80] sm:$0xff]
      %v359 = vld [vmem:[%s314 + $0x88] sm:$0xff]
      %v360 = vld [vmem:[%s314 + $0x90] sm:$0xff]
      %v361 = vld [vmem:[%s314 + $0x98] sm:$0xff]
      %v362 = vld [vmem:[%s314 + $0xa0] sm:$0xff]
      %v363 = vld [vmem:[%s314 + $0xa8] sm:$0xff]
      %v364 = vld [vmem:[%s314 + $0xb0] sm:$0xff]
      %v365 = vld [vmem:[%s314 + $0xb8] sm:$0xff]
      %v366 = vld [vmem:[%s314 + $0xc0] sm:$0xff]
      %v367 = vld [vmem:[%s314 + $0xc8] sm:$0xff]
      %v368 = vld [vmem:[%s314 + $0xd0] sm:$0xff]
      %v369 = vld [vmem:[%s314 + $0xd8] sm:$0xff]
      %v370 = vld [vmem:[%s314 + $0xe0] sm:$0xff]
      %v371 = vld [vmem:[%s314 + $0xe8] sm:$0xff]
      %v372 = vld [vmem:[%s314 + $0xf0] sm:$0xff]
      %v373 = vld [vmem:[%s314 + $0xf8] sm:$0xff]
      %v374 = vld [vmem:[%s314 + $0x100] sm:$0xff]
      %v375 = vld [vmem:[%s314 + $0x108] sm:$0xff]
      %v376 = vld [vmem:[%s314 + $0x110] sm:$0xff]
      %v377 = vld [vmem:[%s314 + $0x118] sm:$0xff]
      %v378 = vld [vmem:[%s314 + $0x120] sm:$0xff]
      %v379 = vld [vmem:[%s314 + $0x128] sm:$0xff]
      %v380 = vld [vmem:[%s314 + $0x130] sm:$0xff]
      %v381 = vld [vmem:[%s314 + $0x138] sm:$0xff]
      %v382 = vld [vmem:[%s314 + $0x140] sm:$0xff]
      %v383 = vld [vmem:[%s314 + $0x148] sm:$0xff]
      %v384 = vld [vmem:[%s314 + $0x150] sm:$0xff]
      %v385 = vld [vmem:[%s314 + $0x158] sm:$0xff]
      %v386 = vld [vmem:[%s314 + $0x160] sm:$0xff]
      %v387 = vld [vmem:[%s314 + $0x168] sm:$0xff]
      %v388 = vld [vmem:[%s314 + $0x170] sm:$0xff]
      %v389 = vld [vmem:[%s314 + $0x178] sm:$0xff]
      %v390 = vld [vmem:[%s314 + $0x180] sm:$0xff]
      %v391 = vld [vmem:[%s314 + $0x188] sm:$0xff]
      %v392 = vld [vmem:[%s314 + $0x190] sm:$0xff]
      %v393 = vld [vmem:[%s314 + $0x198] sm:$0xff]
      %v394 = vld [vmem:[%s314 + $0x1a0] sm:$0xff]
      %v395 = vld [vmem:[%s314 + $0x1a8] sm:$0xff]
      %v396 = vld [vmem:[%s314 + $0x1b0] sm:$0xff]
      %v397 = vld [vmem:[%s314 + $0x1b8] sm:$0xff]
      %v398 = vld [vmem:[%s314 + $0x1c0] sm:$0xff]
      %v399 = vld [vmem:[%s314 + $0x1c8] sm:$0xff]
      %v400 = vld [vmem:[%s314 + $0x1d0] sm:$0xff]
      %v401 = vld [vmem:[%s314 + $0x1d8] sm:$0xff]
      %v402 = vld [vmem:[%s314 + $0x1e0] sm:$0xff]
      %v403 = vld [vmem:[%s314 + $0x1e8] sm:$0xff]
      %v404 = vld [vmem:[%s314 + $0x1f0] sm:$0xff]
      %v405 = vld [vmem:[%s314 + $0x1f8] sm:$0xff]
      %v406 = vld [vmem:[%s314 + $0x200] sm:$0xff]
      %v407 = vld [vmem:[%s314 + $0x208] sm:$0xff]
      %v408 = vld [vmem:[%s314 + $0x210] sm:$0xff]
      %v409 = vld [vmem:[%s314 + $0x218] sm:$0xff]
      %v410 = vld [vmem:[%s314 + $0x220] sm:$0xff]
      %v411 = vld [vmem:[%s314 + $0x228] sm:$0xff]
      %v412 = vld [vmem:[%s314 + $0x230] sm:$0xff]
      %v413 = vld [vmem:[%s314 + $0x238] sm:$0xff]
      %v414 = vld [vmem:[%s314 + $0x240] sm:$0xff]
      %v415 = vld [vmem:[%s314 + $0x248] sm:$0xff]
      %v416 = vld [vmem:[%s314 + $0x250] sm:$0xff]
      %v417 = vld [vmem:[%s314 + $0x258] sm:$0xff]
      %v418 = vld [vmem:[%s314 + $0x260] sm:$0xff]
      %v419 = vld [vmem:[%s314 + $0x268] sm:$0xff]
      %v420 = vld [vmem:[%s314 + $0x270] sm:$0xff]
      %v421 = vld [vmem:[%s314 + $0x278] sm:$0xff]
      %v422 = vld [vmem:[%s314 + $0x280] sm:$0xff]
      %v423 = vld [vmem:[%s314 + $0x288] sm:$0xff]
      %v424 = vld [vmem:[%s314 + $0x290] sm:$0xff]
      %v425 = vld [vmem:[%s314 + $0x298] sm:$0xff]
      %v426 = vld [vmem:[%s314 + $0x2a0] sm:$0xff]
      %v427 = vld [vmem:[%s314 + $0x2a8] sm:$0xff]
      %v428 = vld [vmem:[%s314 + $0x2b0] sm:$0xff]
      %v429 = vld [vmem:[%s314 + $0x2b8] sm:$0xff]
      %v430 = vld [vmem:[%s314 + $0x2c0] sm:$0xff]
      %v431 = vld [vmem:[%s314 + $0x2c8] sm:$0xff]
      %v432 = vld [vmem:[%s314 + $0x2d0] sm:$0xff]
      %v433 = vld [vmem:[%s314 + $0x2d8] sm:$0xff]
      %v434 = vld [vmem:[%s314 + $0x2e0] sm:$0xff]
      %v435 = vld [vmem:[%s314 + $0x2e8] sm:$0xff]
      %v436 = vld [vmem:[%s314 + $0x2f0] sm:$0xff]
      %v437 = vld [vmem:[%s314 + $0x2f8] sm:$0xff]
      %v438 = vld [vmem:[%s314 + $0x300] sm:$0xff]
      %v439 = vld [vmem:[%s314 + $0x308] sm:$0xff]
      %v440 = vld [vmem:[%s314 + $0x310] sm:$0xff]
      %v441 = vld [vmem:[%s314 + $0x318] sm:$0xff]
      %v442 = vld [vmem:[%s314 + $0x320] sm:$0xff]
      %v443 = vld [vmem:[%s314 + $0x328] sm:$0xff]
      %v444 = vld [vmem:[%s314 + $0x330] sm:$0xff]
      %v445 = vld [vmem:[%s314 + $0x338] sm:$0xff]
      %v446 = vld [vmem:[%s314 + $0x340] sm:$0xff]
      %v447 = vld [vmem:[%s314 + $0x348] sm:$0xff]
      %v448 = vld [vmem:[%s314 + $0x350] sm:$0xff]
      %v449 = vld [vmem:[%s314 + $0x358] sm:$0xff]
      %v450 = vld [vmem:[%s314 + $0x360] sm:$0xff]
      %v451 = vld [vmem:[%s314 + $0x368] sm:$0xff]
      %v452 = vld [vmem:[%s314 + $0x370] sm:$0xff]
      %v453 = vld [vmem:[%s314 + $0x378] sm:$0xff]
      %v454 = vld [vmem:[%s314 + $0x380] sm:$0xff]
      %v455 = vld [vmem:[%s314 + $0x388] sm:$0xff]
      %v456 = vld [vmem:[%s314 + $0x390] sm:$0xff]
      %v457 = vld [vmem:[%s314 + $0x398] sm:$0xff]
      %v458 = vld [vmem:[%s314 + $0x3a0] sm:$0xff]
      %v459 = vld [vmem:[%s314 + $0x3a8] sm:$0xff]
      %v460 = vld [vmem:[%s314 + $0x3b0] sm:$0xff]
      %v461 = vld [vmem:[%s314 + $0x3b8] sm:$0xff]
      %v462 = vld [vmem:[%s314 + $0x3c0] sm:$0xff]
      %v463 = vld [vmem:[%s314 + $0x3c8] sm:$0xff]
      %v464 = vld [vmem:[%s314 + $0x3d0] sm:$0xff]
      %v465 = vld [vmem:[%s314 + $0x3d8] sm:$0xff]
      %v466 = vld [vmem:[%s314 + $0x3e0] sm:$0xff]
      %v467 = vld [vmem:[%s314 + $0x3e8] sm:$0xff]
      %v468 = vld [vmem:[%s314 + $0x3f0] sm:$0xff]
      %v469 = vld [vmem:[%s314 + $0x3f8] sm:$0xff]
      %v470 = vld [vmem:[%s314 + $0x400] sm:$0xff]
      %v471 = vld [vmem:[%s314 + $0x408] sm:$0xff]
      %v472 = vld [vmem:[%s314 + $0x410] sm:$0xff]
      %v473 = vld [vmem:[%s314 + $0x418] sm:$0xff]
      %v474 = vld [vmem:[%s314 + $0x420] sm:$0xff]
      %v475 = vld [vmem:[%s314 + $0x428] sm:$0xff]
      %v476 = vld [vmem:[%s314 + $0x430] sm:$0xff]
      %v477 = vld [vmem:[%s314 + $0x438] sm:$0xff]
      %v478 = vld [vmem:[%s314 + $0x440] sm:$0xff]
      %v479 = vld [vmem:[%s314 + $0x448] sm:$0xff]
      %v480 = vld [vmem:[%s314 + $0x450] sm:$0xff]
      %v481 = vld [vmem:[%s314 + $0x458] sm:$0xff]
      %v482 = vld [vmem:[%s314 + $0x460] sm:$0xff]
      %v483 = vld [vmem:[%s314 + $0x468] sm:$0xff]
      %v484 = vld [vmem:[%s314 + $0x470] sm:$0xff]
      %v485 = vld [vmem:[%s314 + $0x478] sm:$0xff]
      %v486 = vld [vmem:[%s319] sm:$0xf]
      %v487 = vld [vmem:[%s319 + $0x4] sm:$0xf]
      %v488 = vld [vmem:[%s319 + $0x8] sm:$0xf]
      %v489 = vld [vmem:[%s319 + $0xc] sm:$0xf]
      %v490 = vld [vmem:[%s319 + $0x10] sm:$0xf]
      %v491 = vld [vmem:[%s319 + $0x14] sm:$0xf]
      %v492 = vld [vmem:[%s319 + $0x18] sm:$0xf]
      %v493 = vld [vmem:[%s319 + $0x1c] sm:$0xf]
      %v494 = vld [vmem:[%s319 + $0x20] sm:$0xf]
      %v495 = vld [vmem:[%s319 + $0x24] sm:$0xf]
      %v496 = vld [vmem:[%s319 + $0x28] sm:$0xf]
      %v497 = vld [vmem:[%s319 + $0x2c] sm:$0xf]
      %v498 = vld [vmem:[%s319 + $0x30] sm:$0xf]
      %v499 = vld [vmem:[%s319 + $0x34] sm:$0xf]
      %v500 = vld [vmem:[%s319 + $0x38] sm:$0xf]
      %v501 = vld [vmem:[%s319 + $0x3c] sm:$0xf]
      %v502 = vld [vmem:[%s319 + $0x40] sm:$0xf]
      %v503 = vld [vmem:[%s319 + $0x44] sm:$0xf]
      %v504 = vld [vmem:[%s319 + $0x48] sm:$0x3]
      %v649 = vunpack.c.l.b16 %v342
      %v650 = vunpack.c.h.b16 %v342
      %v651 = vunpack.c.l.b16 %v343
      %v652 = vunpack.c.h.b16 %v343
      %v653 = vunpack.c.l.b16 %v344
      %v654 = vunpack.c.h.b16 %v344
      %v655 = vunpack.c.l.b16 %v345
      %v656 = vunpack.c.h.b16 %v345
      %v657 = vunpack.c.l.b16 %v346
      %v658 = vunpack.c.h.b16 %v346
      %v659 = vunpack.c.l.b16 %v347
      %v660 = vunpack.c.h.b16 %v347
      %v661 = vunpack.c.l.b16 %v348
      %v662 = vunpack.c.h.b16 %v348
      %v663 = vunpack.c.l.b16 %v349
      %v664 = vunpack.c.h.b16 %v349
      %v665 = vunpack.c.l.b16 %v350
      %v666 = vunpack.c.h.b16 %v350
      %v667 = vunpack.c.l.b16 %v351
      %v668 = vunpack.c.h.b16 %v351
      %v669 = vunpack.c.l.b16 %v352
      %v670 = vunpack.c.h.b16 %v352
      %v671 = vunpack.c.l.b16 %v353
      %v672 = vunpack.c.h.b16 %v353
      %v673 = vunpack.c.l.b16 %v354
      %v674 = vunpack.c.h.b16 %v354
      %v675 = vunpack.c.l.b16 %v355
      %v676 = vunpack.c.h.b16 %v355
      %v677 = vunpack.c.l.b16 %v356
      %v678 = vunpack.c.h.b16 %v356
      %v679 = vunpack.c.l.b16 %v357
      %v680 = vunpack.c.h.b16 %v357
      %v681 = vunpack.c.l.b16 %v358
      %v682 = vunpack.c.h.b16 %v358
      %v683 = vunpack.c.l.b16 %v359
      %v684 = vunpack.c.h.b16 %v359
      %v685 = vunpack.c.l.b16 %v360
      %v686 = vunpack.c.h.b16 %v360
      %v687 = vunpack.c.l.b16 %v361
      %v688 = vunpack.c.h.b16 %v361
      %v689 = vunpack.c.l.b16 %v362
      %v690 = vunpack.c.h.b16 %v362
      %v691 = vunpack.c.l.b16 %v363
      %v692 = vunpack.c.h.b16 %v363
      %v693 = vunpack.c.l.b16 %v364
      %v694 = vunpack.c.h.b16 %v364
      %v695 = vunpack.c.l.b16 %v365
      %v696 = vunpack.c.h.b16 %v365
      %v697 = vunpack.c.l.b16 %v366
      %v698 = vunpack.c.h.b16 %v366
      %v699 = vunpack.c.l.b16 %v367
      %v700 = vunpack.c.h.b16 %v367
      %v701 = vunpack.c.l.b16 %v368
      %v702 = vunpack.c.h.b16 %v368
      %v703 = vunpack.c.l.b16 %v369
      %v704 = vunpack.c.h.b16 %v369
      %v705 = vunpack.c.l.b16 %v370
      %v706 = vunpack.c.h.b16 %v370
      %v707 = vunpack.c.l.b16 %v371
      %v708 = vunpack.c.h.b16 %v371
      %v709 = vunpack.c.l.b16 %v372
      %v710 = vunpack.c.h.b16 %v372
      %v711 = vunpack.c.l.b16 %v373
      %v712 = vunpack.c.h.b16 %v373
      %v713 = vunpack.c.l.b16 %v374
      %v714 = vunpack.c.h.b16 %v374
      %v715 = vunpack.c.l.b16 %v375
      %v716 = vunpack.c.h.b16 %v375
      %v717 = vunpack.c.l.b16 %v376
      %v718 = vunpack.c.h.b16 %v376
      %v719 = vunpack.c.l.b16 %v377
      %v720 = vunpack.c.h.b16 %v377
      %v721 = vunpack.c.l.b16 %v378
      %v722 = vunpack.c.h.b16 %v378
      %v723 = vunpack.c.l.b16 %v379
      %v724 = vunpack.c.h.b16 %v379
      %v725 = vunpack.c.l.b16 %v380
      %v726 = vunpack.c.h.b16 %v380
      %v727 = vunpack.c.l.b16 %v381
      %v728 = vunpack.c.h.b16 %v381
      %v729 = vunpack.c.l.b16 %v382
      %v730 = vunpack.c.h.b16 %v382
      %v731 = vunpack.c.l.b16 %v383
      %v732 = vunpack.c.h.b16 %v383
      %v733 = vunpack.c.l.b16 %v384
      %v734 = vunpack.c.h.b16 %v384
      %v735 = vunpack.c.l.b16 %v385
      %v736 = vunpack.c.h.b16 %v385
      %v737 = vunpack.c.l.b16 %v386
      %v738 = vunpack.c.h.b16 %v386
      %v739 = vunpack.c.l.b16 %v387
      %v740 = vunpack.c.h.b16 %v387
      %v741 = vunpack.c.l.b16 %v388
      %v742 = vunpack.c.h.b16 %v388
      %v743 = vunpack.c.l.b16 %v389
      %v744 = vunpack.c.h.b16 %v389
      %v745 = vunpack.c.l.b16 %v390
      %v746 = vunpack.c.h.b16 %v390
      %v747 = vunpack.c.l.b16 %v391
      %v748 = vunpack.c.h.b16 %v391
      %v749 = vunpack.c.l.b16 %v392
      %v750 = vunpack.c.h.b16 %v392
      %v751 = vunpack.c.l.b16 %v393
      %v752 = vunpack.c.h.b16 %v393
      %v753 = vunpack.c.l.b16 %v394
      %v754 = vunpack.c.h.b16 %v394
      %v755 = vunpack.c.l.b16 %v395
      %v756 = vunpack.c.h.b16 %v395
      %v757 = vunpack.c.l.b16 %v396
      %v758 = vunpack.c.h.b16 %v396
      %v759 = vunpack.c.l.b16 %v397
      %v760 = vunpack.c.h.b16 %v397
      %v761 = vunpack.c.l.b16 %v398
      %v762 = vunpack.c.h.b16 %v398
      %v763 = vunpack.c.l.b16 %v399
      %v764 = vunpack.c.h.b16 %v399
      %v765 = vunpack.c.l.b16 %v400
      %v766 = vunpack.c.h.b16 %v400
      %v767 = vunpack.c.l.b16 %v401
      %v768 = vunpack.c.h.b16 %v401
      %v769 = vunpack.c.l.b16 %v402
      %v770 = vunpack.c.h.b16 %v402
      %v771 = vunpack.c.l.b16 %v403
      %v772 = vunpack.c.h.b16 %v403
      %v773 = vunpack.c.l.b16 %v404
      %v774 = vunpack.c.h.b16 %v404
      %v775 = vunpack.c.l.b16 %v405
      %v776 = vunpack.c.h.b16 %v405
      %v777 = vunpack.c.l.b16 %v406
      %v778 = vunpack.c.h.b16 %v406
      %v779 = vunpack.c.l.b16 %v407
      %v780 = vunpack.c.h.b16 %v407
      %v781 = vunpack.c.l.b16 %v408
      %v782 = vunpack.c.h.b16 %v408
      %v783 = vunpack.c.l.b16 %v409
      %v784 = vunpack.c.h.b16 %v409
      %v785 = vunpack.c.l.b16 %v410
      %v786 = vunpack.c.h.b16 %v410
      %v787 = vunpack.c.l.b16 %v411
      %v788 = vunpack.c.h.b16 %v411
      %v789 = vunpack.c.l.b16 %v412
      %v790 = vunpack.c.h.b16 %v412
      %v791 = vunpack.c.l.b16 %v413
      %v792 = vunpack.c.h.b16 %v413
      %v793 = vunpack.c.l.b16 %v414
      %v794 = vunpack.c.h.b16 %v414
      %v795 = vunpack.c.l.b16 %v415
      %v796 = vunpack.c.h.b16 %v415
      %v797 = vunpack.c.l.b16 %v416
      %v798 = vunpack.c.h.b16 %v416
      %v799 = vunpack.c.l.b16 %v417
      %v800 = vunpack.c.h.b16 %v417
      %v801 = vunpack.c.l.b16 %v418
      %v802 = vunpack.c.h.b16 %v418
      %v803 = vunpack.c.l.b16 %v419
      %v804 = vunpack.c.h.b16 %v419
      %v805 = vunpack.c.l.b16 %v420
      %v806 = vunpack.c.h.b16 %v420
      %v807 = vunpack.c.l.b16 %v421
      %v808 = vunpack.c.h.b16 %v421
      %v809 = vunpack.c.l.b16 %v422
      %v810 = vunpack.c.h.b16 %v422
      %v811 = vunpack.c.l.b16 %v423
      %v812 = vunpack.c.h.b16 %v423
      %v813 = vunpack.c.l.b16 %v424
      %v814 = vunpack.c.h.b16 %v424
      %v815 = vunpack.c.l.b16 %v425
      %v816 = vunpack.c.h.b16 %v425
      %v817 = vunpack.c.l.b16 %v426
      %v818 = vunpack.c.h.b16 %v426
      %v819 = vunpack.c.l.b16 %v427
      %v820 = vunpack.c.h.b16 %v427
      %v821 = vunpack.c.l.b16 %v428
      %v822 = vunpack.c.h.b16 %v428
      %v823 = vunpack.c.l.b16 %v429
      %v824 = vunpack.c.h.b16 %v429
      %v825 = vunpack.c.l.b16 %v430
      %v826 = vunpack.c.h.b16 %v430
      %v827 = vunpack.c.l.b16 %v431
      %v828 = vunpack.c.h.b16 %v431
      %v829 = vunpack.c.l.b16 %v432
      %v830 = vunpack.c.h.b16 %v432
      %v831 = vunpack.c.l.b16 %v433
      %v832 = vunpack.c.h.b16 %v433
      %v833 = vunpack.c.l.b16 %v434
      %v834 = vunpack.c.h.b16 %v434
      %v835 = vunpack.c.l.b16 %v435
      %v836 = vunpack.c.h.b16 %v435
      %v837 = vunpack.c.l.b16 %v436
      %v838 = vunpack.c.h.b16 %v436
      %v839 = vunpack.c.l.b16 %v437
      %v840 = vunpack.c.h.b16 %v437
      %v841 = vunpack.c.l.b16 %v438
      %v842 = vunpack.c.h.b16 %v438
      %v843 = vunpack.c.l.b16 %v439
      %v844 = vunpack.c.h.b16 %v439
      %v845 = vunpack.c.l.b16 %v440
      %v846 = vunpack.c.h.b16 %v440
      %v847 = vunpack.c.l.b16 %v441
      %v848 = vunpack.c.h.b16 %v441
      %v849 = vunpack.c.l.b16 %v442
      %v850 = vunpack.c.h.b16 %v442
      %v851 = vunpack.c.l.b16 %v443
      %v852 = vunpack.c.h.b16 %v443
      %v853 = vunpack.c.l.b16 %v444
      %v854 = vunpack.c.h.b16 %v444
      %v855 = vunpack.c.l.b16 %v445
      %v856 = vunpack.c.h.b16 %v445
      %v857 = vunpack.c.l.b16 %v446
      %v858 = vunpack.c.h.b16 %v446
      %v859 = vunpack.c.l.b16 %v447
      %v860 = vunpack.c.h.b16 %v447
      %v861 = vunpack.c.l.b16 %v448
      %v862 = vunpack.c.h.b16 %v448
      %v863 = vunpack.c.l.b16 %v449
      %v864 = vunpack.c.h.b16 %v449
      %v865 = vunpack.c.l.b16 %v450
      %v866 = vunpack.c.h.b16 %v450
      %v867 = vunpack.c.l.b16 %v451
      %v868 = vunpack.c.h.b16 %v451
      %v869 = vunpack.c.l.b16 %v452
      %v870 = vunpack.c.h.b16 %v452
      %v871 = vunpack.c.l.b16 %v453
      %v872 = vunpack.c.h.b16 %v453
      %v873 = vunpack.c.l.b16 %v454
      %v874 = vunpack.c.h.b16 %v454
      %v875 = vunpack.c.l.b16 %v455
      %v876 = vunpack.c.h.b16 %v455
      %v877 = vunpack.c.l.b16 %v456
      %v878 = vunpack.c.h.b16 %v456
      %v879 = vunpack.c.l.b16 %v457
      %v880 = vunpack.c.h.b16 %v457
      %v881 = vunpack.c.l.b16 %v458
      %v882 = vunpack.c.h.b16 %v458
      %v883 = vunpack.c.l.b16 %v459
      %v884 = vunpack.c.h.b16 %v459
      %v885 = vunpack.c.l.b16 %v460
      %v886 = vunpack.c.h.b16 %v460
      %v887 = vunpack.c.l.b16 %v461
      %v888 = vunpack.c.h.b16 %v461
      %v889 = vunpack.c.l.b16 %v462
      %v890 = vunpack.c.h.b16 %v462
      %v891 = vunpack.c.l.b16 %v463
      %v892 = vunpack.c.h.b16 %v463
      %v893 = vunpack.c.l.b16 %v464
      %v894 = vunpack.c.h.b16 %v464
      %v895 = vunpack.c.l.b16 %v465
      %v896 = vunpack.c.h.b16 %v465
      %v897 = vunpack.c.l.b16 %v466
      %v898 = vunpack.c.h.b16 %v466
      %v899 = vunpack.c.l.b16 %v467
      %v900 = vunpack.c.h.b16 %v467
      %v901 = vunpack.c.l.b16 %v468
      %v902 = vunpack.c.h.b16 %v468
      %v903 = vunpack.c.l.b16 %v469
      %v904 = vunpack.c.h.b16 %v469
      %v905 = vunpack.c.l.b16 %v470
      %v906 = vunpack.c.h.b16 %v470
      %v907 = vunpack.c.l.b16 %v471
      %v908 = vunpack.c.h.b16 %v471
      %v909 = vunpack.c.l.b16 %v472
      %v910 = vunpack.c.h.b16 %v472
      %v911 = vunpack.c.l.b16 %v473
      %v912 = vunpack.c.h.b16 %v473
      %v913 = vunpack.c.l.b16 %v474
      %v914 = vunpack.c.h.b16 %v474
      %v915 = vunpack.c.l.b16 %v475
      %v916 = vunpack.c.h.b16 %v475
      %v917 = vunpack.c.l.b16 %v476
      %v918 = vunpack.c.h.b16 %v476
      %v919 = vunpack.c.l.b16 %v477
      %v920 = vunpack.c.h.b16 %v477
      %v921 = vunpack.c.l.b16 %v478
      %v922 = vunpack.c.h.b16 %v478
      %v923 = vunpack.c.l.b16 %v479
      %v924 = vunpack.c.h.b16 %v479
      %v925 = vunpack.c.l.b16 %v480
      %v926 = vunpack.c.h.b16 %v480
      %v927 = vunpack.c.l.b16 %v481
      %v928 = vunpack.c.h.b16 %v481
      %v929 = vunpack.c.l.b16 %v482
      %v930 = vunpack.c.h.b16 %v482
      %v931 = vunpack.c.l.b16 %v483
      %v932 = vunpack.c.h.b16 %v483
      %v933 = vunpack.c.l.b16 %v484
      %v934 = vunpack.c.h.b16 %v484
      %v935 = vunpack.c.l.b16 %v485
      %v936 = vunpack.c.h.b16 %v485
      %v937 = vpack.c.b16 %v651, %v649
      %v938 = vpack.c.b16 %v652, %v650
      %v939 = vpack.c.b16 %v655, %v653
      %v940 = vpack.c.b16 %v656, %v654
      %v941 = vpack.c.b16 %v659, %v657
      %v942 = vpack.c.b16 %v660, %v658
      %v943 = vpack.c.b16 %v663, %v661
      %v944 = vpack.c.b16 %v664, %v662
      %v945 = vpack.c.b16 %v667, %v665
      %v946 = vpack.c.b16 %v668, %v666
      %v947 = vpack.c.b16 %v671, %v669
      %v948 = vpack.c.b16 %v672, %v670
      %v949 = vpack.c.b16 %v675, %v673
      %v950 = vpack.c.b16 %v676, %v674
      %v951 = vpack.c.b16 %v679, %v677
      %v952 = vpack.c.b16 %v680, %v678
      %v953 = vpack.c.b16 %v683, %v681
      %v954 = vpack.c.b16 %v684, %v682
      %v955 = vpack.c.b16 %v687, %v685
      %v956 = vpack.c.b16 %v688, %v686
      %v957 = vpack.c.b16 %v691, %v689
      %v958 = vpack.c.b16 %v692, %v690
      %v959 = vpack.c.b16 %v695, %v693
      %v960 = vpack.c.b16 %v696, %v694
      %v961 = vpack.c.b16 %v699, %v697
      %v962 = vpack.c.b16 %v700, %v698
      %v963 = vpack.c.b16 %v703, %v701
      %v964 = vpack.c.b16 %v704, %v702
      %v965 = vpack.c.b16 %v707, %v705
      %v966 = vpack.c.b16 %v708, %v706
      %v967 = vpack.c.b16 %v711, %v709
      %v968 = vpack.c.b16 %v712, %v710
      %v969 = vpack.c.b16 %v715, %v713
      %v970 = vpack.c.b16 %v716, %v714
      %v971 = vpack.c.b16 %v719, %v717
      %v972 = vpack.c.b16 %v720, %v718
      %v973 = vpack.c.b16 %v723, %v721
      %v974 = vpack.c.b16 %v724, %v722
      %v975 = vpack.c.b16 %v727, %v725
      %v976 = vpack.c.b16 %v728, %v726
      %v977 = vpack.c.b16 %v731, %v729
      %v978 = vpack.c.b16 %v732, %v730
      %v979 = vpack.c.b16 %v735, %v733
      %v980 = vpack.c.b16 %v736, %v734
      %v981 = vpack.c.b16 %v739, %v737
      %v982 = vpack.c.b16 %v740, %v738
      %v983 = vpack.c.b16 %v743, %v741
      %v984 = vpack.c.b16 %v744, %v742
      %v985 = vpack.c.b16 %v747, %v745
      %v986 = vpack.c.b16 %v748, %v746
      %v987 = vpack.c.b16 %v751, %v749
      %v988 = vpack.c.b16 %v752, %v750
      %v989 = vpack.c.b16 %v755, %v753
      %v990 = vpack.c.b16 %v756, %v754
      %v991 = vpack.c.b16 %v759, %v757
      %v992 = vpack.c.b16 %v760, %v758
      %v993 = vpack.c.b16 %v763, %v761
      %v994 = vpack.c.b16 %v764, %v762
      %v995 = vpack.c.b16 %v767, %v765
      %v996 = vpack.c.b16 %v768, %v766
      %v997 = vpack.c.b16 %v771, %v769
      %v998 = vpack.c.b16 %v772, %v770
      %v999 = vpack.c.b16 %v775, %v773
      %v1000 = vpack.c.b16 %v776, %v774
      %v1001 = vpack.c.b16 %v779, %v777
      %v1002 = vpack.c.b16 %v780, %v778
      %v1003 = vpack.c.b16 %v783, %v781
      %v1004 = vpack.c.b16 %v784, %v782
      %v1005 = vpack.c.b16 %v787, %v785
      %v1006 = vpack.c.b16 %v788, %v786
      %v1007 = vpack.c.b16 %v791, %v789
      %v1008 = vpack.c.b16 %v792, %v790
      %v1009 = vpack.c.b16 %v795, %v793
      %v1010 = vpack.c.b16 %v796, %v794
      %v1011 = vpack.c.b16 %v799, %v797
      %v1012 = vpack.c.b16 %v800, %v798
      %v1013 = vpack.c.b16 %v803, %v801
      %v1014 = vpack.c.b16 %v804, %v802
      %v1015 = vpack.c.b16 %v807, %v805
      %v1016 = vpack.c.b16 %v808, %v806
      %v1017 = vpack.c.b16 %v811, %v809
      %v1018 = vpack.c.b16 %v812, %v810
      %v1019 = vpack.c.b16 %v815, %v813
      %v1020 = vpack.c.b16 %v816, %v814
      %v1021 = vpack.c.b16 %v819, %v817
      %v1022 = vpack.c.b16 %v820, %v818
      %v1023 = vpack.c.b16 %v823, %v821
      %v1024 = vpack.c.b16 %v824, %v822
      %v1025 = vpack.c.b16 %v827, %v825
      %v1026 = vpack.c.b16 %v828, %v826
      %v1027 = vpack.c.b16 %v831, %v829
      %v1028 = vpack.c.b16 %v832, %v830
      %v1029 = vpack.c.b16 %v835, %v833
      %v1030 = vpack.c.b16 %v836, %v834
      %v1031 = vpack.c.b16 %v839, %v837
      %v1032 = vpack.c.b16 %v840, %v838
      %v1033 = vpack.c.b16 %v843, %v841
      %v1034 = vpack.c.b16 %v844, %v842
      %v1035 = vpack.c.b16 %v847, %v845
      %v1036 = vpack.c.b16 %v848, %v846
      %v1037 = vpack.c.b16 %v851, %v849
      %v1038 = vpack.c.b16 %v852, %v850
      %v1039 = vpack.c.b16 %v855, %v853
      %v1040 = vpack.c.b16 %v856, %v854
      %v1041 = vpack.c.b16 %v859, %v857
      %v1042 = vpack.c.b16 %v860, %v858
      %v1043 = vpack.c.b16 %v863, %v861
      %v1044 = vpack.c.b16 %v864, %v862
      %v1045 = vpack.c.b16 %v867, %v865
      %v1046 = vpack.c.b16 %v868, %v866
      %v1047 = vpack.c.b16 %v871, %v869
      %v1048 = vpack.c.b16 %v872, %v870
      %v1049 = vpack.c.b16 %v875, %v873
      %v1050 = vpack.c.b16 %v876, %v874
      %v1051 = vpack.c.b16 %v879, %v877
      %v1052 = vpack.c.b16 %v880, %v878
      %v1053 = vpack.c.b16 %v883, %v881
      %v1054 = vpack.c.b16 %v884, %v882
      %v1055 = vpack.c.b16 %v887, %v885
      %v1056 = vpack.c.b16 %v888, %v886
      %v1057 = vpack.c.b16 %v891, %v889
      %v1058 = vpack.c.b16 %v892, %v890
      %v1059 = vpack.c.b16 %v895, %v893
      %v1060 = vpack.c.b16 %v896, %v894
      %v1061 = vpack.c.b16 %v899, %v897
      %v1062 = vpack.c.b16 %v900, %v898
      %v1063 = vpack.c.b16 %v903, %v901
      %v1064 = vpack.c.b16 %v904, %v902
      %v1065 = vpack.c.b16 %v907, %v905
      %v1066 = vpack.c.b16 %v908, %v906
      %v1067 = vpack.c.b16 %v911, %v909
      %v1068 = vpack.c.b16 %v912, %v910
      %v1069 = vpack.c.b16 %v915, %v913
      %v1070 = vpack.c.b16 %v916, %v914
      %v1071 = vpack.c.b16 %v919, %v917
      %v1072 = vpack.c.b16 %v920, %v918
      %v1073 = vpack.c.b16 %v923, %v921
      %v1074 = vpack.c.b16 %v924, %v922
      %v1075 = vpack.c.b16 %v927, %v925
      %v1076 = vpack.c.b16 %v928, %v926
      %v1077 = vpack.c.b16 %v931, %v929
      %v1078 = vpack.c.b16 %v932, %v930
      %v1079 = vpack.c.b16 %v935, %v933
      %v1080 = vpack.c.b16 %v936, %v934
      %v1172 = vunpack.c.l.b16 %v486
      %v1173 = vunpack.c.l.b16 %v487
      %v1174 = vunpack.c.l.b16 %v488
      %v1175 = vunpack.c.l.b16 %v489
      %v1176 = vunpack.c.l.b16 %v490
      %v1177 = vunpack.c.l.b16 %v491
      %v1178 = vunpack.c.l.b16 %v492
      %v1179 = vunpack.c.l.b16 %v493
      %v1180 = vunpack.c.l.b16 %v494
      %v1181 = vunpack.c.l.b16 %v495
      %v1182 = vunpack.c.l.b16 %v496
      %v1183 = vunpack.c.l.b16 %v497
      %v1184 = vunpack.c.l.b16 %v498
      %v1185 = vunpack.c.l.b16 %v499
      %v1186 = vunpack.c.l.b16 %v500
      %v1187 = vunpack.c.l.b16 %v501
      %v1188 = vunpack.c.l.b16 %v502
      %v1189 = vunpack.c.l.b16 %v503
      %v1190 = vunpack.c.l.b16 %v504
      %v1191 = vpack.c.b16 %v1173, %v1172
      %v1192 = vpack.c.b16 %v1175, %v1174
      %v1193 = vpack.c.b16 %v1177, %v1176
      %v1194 = vpack.c.b16 %v1179, %v1178
      %v1195 = vpack.c.b16 %v1181, %v1180
      %v1196 = vpack.c.b16 %v1183, %v1182
      %v1197 = vpack.c.b16 %v1185, %v1184
      %v1198 = vpack.c.b16 %v1187, %v1186
      %v1199 = vpack.c.b16 %v1189, %v1188
      %v1200 = vpack.c.b16 %v1190, %v1190
      %vm1210 = vcmask 162816
      %v1212 = vsel %vm1210, %v938, 0
      %v1215 = vsel %vm1210, %v940, 0
      %v1218 = vsel %vm1210, %v942, 0
      %v1221 = vsel %vm1210, %v944, 0
      %v1224 = vsel %vm1210, %v946, 0
      %v1227 = vsel %vm1210, %v948, 0
      %v1230 = vsel %vm1210, %v950, 0
      %v1233 = vsel %vm1210, %v952, 0
      %v1236 = vsel %vm1210, %v954, 0
      %v1239 = vsel %vm1210, %v956, 0
      %v1242 = vsel %vm1210, %v958, 0
      %v1245 = vsel %vm1210, %v960, 0
      %v1248 = vsel %vm1210, %v962, 0
      %v1251 = vsel %vm1210, %v964, 0
      %v1254 = vsel %vm1210, %v966, 0
      %v1257 = vsel %vm1210, %v968, 0
      %v1260 = vsel %vm1210, %v970, 0
      %v1263 = vsel %vm1210, %v972, 0
      %v1266 = vsel %vm1210, %v974, 0
      %v1269 = vsel %vm1210, %v976, 0
      %v1272 = vsel %vm1210, %v978, 0
      %v1275 = vsel %vm1210, %v980, 0
      %v1278 = vsel %vm1210, %v982, 0
      %v1281 = vsel %vm1210, %v984, 0
      %v1284 = vsel %vm1210, %v986, 0
      %v1287 = vsel %vm1210, %v988, 0
      %v1290 = vsel %vm1210, %v990, 0
      %v1293 = vsel %vm1210, %v992, 0
      %v1296 = vsel %vm1210, %v994, 0
      %v1299 = vsel %vm1210, %v996, 0
      %v1302 = vsel %vm1210, %v998, 0
      %v1305 = vsel %vm1210, %v1000, 0
      %v1308 = vsel %vm1210, %v1002, 0
      %v1311 = vsel %vm1210, %v1004, 0
      %v1314 = vsel %vm1210, %v1006, 0
      %v1317 = vsel %vm1210, %v1008, 0
      %v1320 = vsel %vm1210, %v1010, 0
      %v1323 = vsel %vm1210, %v1012, 0
      %v1326 = vsel %vm1210, %v1014, 0
      %v1329 = vsel %vm1210, %v1016, 0
      %v1332 = vsel %vm1210, %v1018, 0
      %v1335 = vsel %vm1210, %v1020, 0
      %v1338 = vsel %vm1210, %v1022, 0
      %v1341 = vsel %vm1210, %v1024, 0
      %v1344 = vsel %vm1210, %v1026, 0
      %v1347 = vsel %vm1210, %v1028, 0
      %v1350 = vsel %vm1210, %v1030, 0
      %v1353 = vsel %vm1210, %v1032, 0
      %v1356 = vsel %vm1210, %v1034, 0
      %v1359 = vsel %vm1210, %v1036, 0
      %v1362 = vsel %vm1210, %v1038, 0
      %v1365 = vsel %vm1210, %v1040, 0
      %v1368 = vsel %vm1210, %v1042, 0
      %v1371 = vsel %vm1210, %v1044, 0
      %v1374 = vsel %vm1210, %v1046, 0
      %v1377 = vsel %vm1210, %v1048, 0
      %v1380 = vsel %vm1210, %v1050, 0
      %v1383 = vsel %vm1210, %v1052, 0
      %v1386 = vsel %vm1210, %v1054, 0
      %v1389 = vsel %vm1210, %v1056, 0
      %v1392 = vsel %vm1210, %v1058, 0
      %v1395 = vsel %vm1210, %v1060, 0
      %v1398 = vsel %vm1210, %v1062, 0
      %v1401 = vsel %vm1210, %v1064, 0
      %v1404 = vsel %vm1210, %v1066, 0
      %v1407 = vsel %vm1210, %v1068, 0
      %v1410 = vsel %vm1210, %v1070, 0
      %v1413 = vsel %vm1210, %v1072, 0
      %v1416 = vsel %vm1210, %v1074, 0
      %v1419 = vsel %vm1210, %v1076, 0
      %v1422 = vsel %vm1210, %v1078, 0
      %v1425 = vsel %vm1210, %v1080, 0
      %vm1427 = vcmask 1041408
      %v1429 = vsel %vm1427, %v1200, 0
      %1431 = vmatprep.subr.bf16.mxu0 0
      %1432 = vmatpush1.bf16.msra.mxu0 %v1191
      %1433 = vmatprep.subr.bf16.mxu0 0
      %1434 = vmatpush1.bf16.msra.mxu0 %v1192
      %1435 = vmatprep.subr.bf16.mxu0 0
      %1436 = vmatpush1.bf16.msra.mxu0 %v1193
      %1437 = vmatprep.subr.bf16.mxu0 0
      %1438 = vmatpush1.bf16.msra.mxu0 %v1194
      %1439 = vmatprep.subr.bf16.mxu0 0
      %1440 = vmatpush1.bf16.msra.mxu0 %v1195
      %1441 = vmatprep.subr.bf16.mxu0 0
      %1442 = vmatpush1.bf16.msra.mxu0 %v1196
      %1443 = vmatprep.subr.bf16.mxu0 0
      %1444 = vmatpush1.bf16.msra.mxu0 %v1197
      %1445 = vmatprep.subr.bf16.mxu0 0
      %1446 = vmatpush1.bf16.msra.mxu0 %v1198
      %1447 = vmatprep.subr.bf16.mxu0 0
      %1448 = vmatpush1.bf16.msra.mxu0 %v1199
      %1449 = vmatprep.subr.bf16.mxu0 0
      %1450 = vmatpush1.bf16.msra.mxu0 %v1429
      %1451 = vmatprep.subr.bf16.mxu0 0
      %1452 = vmatpush1.bf16.msra.mxu0 0
      %1453 = vmatprep.subr.bf16.mxu0 0
      %1454 = vmatpush1.bf16.msra.mxu0 0
      %1455 = vmatprep.subr.bf16.mxu0 0
      %1456 = vmatpush1.bf16.msra.mxu0 0
      %1457 = vmatprep.subr.bf16.mxu0 0
      %1458 = vmatpush1.bf16.msra.mxu0 0
      %1459 = vmatprep.subr.bf16.mxu0 0
      %1460 = vmatpush1.bf16.msra.mxu0 0
      %1461 = vmatprep.subr.bf16.mxu0 0
      %1462 = vmatpush1.bf16.msra.mxu0 0
      %1463 = vmatprep.mubr.bf16.mxu0 %v1212
      %1464 = vmatmul.mubr.bf16.gmra.mrb[0].mxu0 %v937
      %v1465 = vpop.f32.mrb[0].mxu0
      %v1466 = vadd.f32 0.0, %v1465
      %v1467 = vpop.f32.mrb[0].mxu0
      %v1468 = vpop.f32.mrb[0].mxu0
      %v1469 = vadd.f32 0.0, %v1468
      %v1470 = vpop.f32.mrb[0].mxu0
      %1471 = vmatprep.mubr.bf16.mxu0 %v1215
      %1472 = vmatmul.mubr.bf16.gmra.mrb[0].mxu0 %v939
      %v1473 = vpop.f32.mrb[0].mxu0
      %v1474 = vadd.f32 0.0, %v1473
      %v1475 = vpop.f32.mrb[0].mxu0
      %v1476 = vpop.f32.mrb[0].mxu0
      %v1477 = vadd.f32 0.0, %v1476
      %v1478 = vpop.f32.mrb[0].mxu0
      %1479 = vmatprep.mubr.bf16.mxu0 %v1218
      %1480 = vmatmul.mubr.bf16.gmra.mrb[0].mxu0 %v941
      %v1481 = vpop.f32.mrb[0].mxu0
      %v1482 = vadd.f32 0.0, %v1481
      %v1483 = vpop.f32.mrb[0].mxu0
      %v1484 = vpop.f32.mrb[0].mxu0
      %v1485 = vadd.f32 0.0, %v1484
      %v1486 = vpop.f32.mrb[0].mxu0
      %1487 = vmatprep.mubr.bf16.mxu0 %v1221
      %1488 = vmatmul.mubr.bf16.gmra.mrb[0].mxu0 %v943
      %v1489 = vpop.f32.mrb[0].mxu0
      %v1490 = vadd.f32 0.0, %v1489
      %v1491 = vpop.f32.mrb[0].mxu0
      %v1492 = vpop.f32.mrb[0].mxu0
      %v1493 = vadd.f32 0.0, %v1492
      %v1494 = vpop.f32.mrb[0].mxu0
      %1495 = vmatprep.mubr.bf16.mxu0 %v1224
      %1496 = vmatmul.mubr.bf16.gmra.mrb[0].mxu0 %v945
      %v1497 = vpop.f32.mrb[0].mxu0
      %v1498 = vadd.f32 0.0, %v1497
      %v1499 = vpop.f32.mrb[0].mxu0
      %v1500 = vpop.f32.mrb[0].mxu0
      %v1501 = vadd.f32 0.0, %v1500
      %v1502 = vpop.f32.mrb[0].mxu0
      %1503 = vmatprep.mubr.bf16.mxu0 %v1227
      %1504 = vmatmul.mubr.bf16.gmra.mrb[0].mxu0 %v947
      %v1505 = vpop.f32.mrb[0].mxu0
      %v1506 = vadd.f32 0.0, %v1505
      %v1507 = vpop.f32.mrb[0].mxu0
      %v1508 = vpop.f32.mrb[0].mxu0
      %v1509 = vadd.f32 0.0, %v1508
      %v1510 = vpop.f32.mrb[0].mxu0
      %1511 = vmatprep.mubr.bf16.mxu0 %v1230
      %1512 = vmatmul.mubr.bf16.gmra.mrb[0].mxu0 %v949
      %v1513 = vpop.f32.mrb[0].mxu0
      %v1514 = vadd.f32 0.0, %v1513
      %v1515 = vpop.f32.mrb[0].mxu0
      %v1516 = vpop.f32.mrb[0].mxu0
      %v1517 = vadd.f32 0.0, %v1516
      %v1518 = vpop.f32.mrb[0].mxu0
      %1519 = vmatprep.mubr.bf16.mxu0 %v1233
      %1520 = vmatmul.mubr.bf16.gmra.mrb[0].mxu0 %v951
      %v1521 = vpop.f32.mrb[0].mxu0
      %v1522 = vadd.f32 0.0, %v1521
      %v1523 = vpop.f32.mrb[0].mxu0
      %v1524 = vpop.f32.mrb[0].mxu0
      %v1525 = vadd.f32 0.0, %v1524
      %v1526 = vpop.f32.mrb[0].mxu0
      %1527 = vmatprep.mubr.bf16.mxu0 %v1236
      %1528 = vmatmul.mubr.bf16.gmra.mrb[0].mxu0 %v953
      %v1529 = vpop.f32.mrb[0].mxu0
      %v1530 = vadd.f32 0.0, %v1529
      %v1531 = vpop.f32.mrb[0].mxu0
      %v1532 = vpop.f32.mrb[0].mxu0
      %v1533 = vadd.f32 0.0, %v1532
      %v1534 = vpop.f32.mrb[0].mxu0
      %1535 = vmatprep.mubr.bf16.mxu0 %v1239
      %1536 = vmatmul.mubr.bf16.gmra.mrb[0].mxu0 %v955
      %v1537 = vpop.f32.mrb[0].mxu0
      %v1538 = vadd.f32 0.0, %v1537
      %v1539 = vpop.f32.mrb[0].mxu0
      %v1540 = vpop.f32.mrb[0].mxu0
      %v1541 = vadd.f32 0.0, %v1540
      %v1542 = vpop.f32.mrb[0].mxu0
      %1543 = vmatprep.mubr.bf16.mxu0 %v1242
      %1544 = vmatmul.mubr.bf16.gmra.mrb[0].mxu0 %v957
      %v1545 = vpop.f32.mrb[0].mxu0
      %v1546 = vadd.f32 0.0, %v1545
      %v1547 = vpop.f32.mrb[0].mxu0
      %v1548 = vpop.f32.mrb[0].mxu0
      %v1549 = vadd.f32 0.0, %v1548
      %v1550 = vpop.f32.mrb[0].mxu0
      %1551 = vmatprep.mubr.bf16.mxu0 %v1245
      %1552 = vmatmul.mubr.bf16.gmra.mrb[0].mxu0 %v959
      %v1553 = vpop.f32.mrb[0].mxu0
      %v1554 = vadd.f32 0.0, %v1553
      %v1555 = vpop.f32.mrb[0].mxu0
      %v1556 = vpop.f32.mrb[0].mxu0
      %v1557 = vadd.f32 0.0, %v1556
      %v1558 = vpop.f32.mrb[0].mxu0
      %1559 = vmatprep.mubr.bf16.mxu0 %v1248
      %1560 = vmatmul.mubr.bf16.gmra.mrb[0].mxu0 %v961
      %v1561 = vpop.f32.mrb[0].mxu0
      %v1562 = vadd.f32 0.0, %v1561
      %v1563 = vpop.f32.mrb[0].mxu0
      %v1564 = vpop.f32.mrb[0].mxu0
      %v1565 = vadd.f32 0.0, %v1564
      %v1566 = vpop.f32.mrb[0].mxu0
      %1567 = vmatprep.mubr.bf16.mxu0 %v1251
      %1568 = vmatmul.mubr.bf16.gmra.mrb[0].mxu0 %v963
      %v1569 = vpop.f32.mrb[0].mxu0
      %v1570 = vadd.f32 0.0, %v1569
      %v1571 = vpop.f32.mrb[0].mxu0
      %v1572 = vpop.f32.mrb[0].mxu0
      %v1573 = vadd.f32 0.0, %v1572
      %v1574 = vpop.f32.mrb[0].mxu0
      %1575 = vmatprep.mubr.bf16.mxu0 %v1254
      %1576 = vmatmul.mubr.bf16.gmra.mrb[0].mxu0 %v965
      %v1577 = vpop.f32.mrb[0].mxu0
      %v1578 = vadd.f32 0.0, %v1577
      %v1579 = vpop.f32.mrb[0].mxu0
      %v1580 = vpop.f32.mrb[0].mxu0
      %v1581 = vadd.f32 0.0, %v1580
      %v1582 = vpop.f32.mrb[0].mxu0
      %1583 = vmatprep.mubr.bf16.mxu0 %v1257
      %1584 = vmatmul.mubr.bf16.gmra.mrb[0].mxu0 %v967
      %v1585 = vpop.f32.mrb[0].mxu0
      %v1586 = vadd.f32 0.0, %v1585
      %v1587 = vpop.f32.mrb[0].mxu0
      %v1588 = vpop.f32.mrb[0].mxu0
      %v1589 = vadd.f32 0.0, %v1588
      %v1590 = vpop.f32.mrb[0].mxu0
      %1591 = vmatprep.mubr.bf16.mxu0 %v1260
      %1592 = vmatmul.mubr.bf16.gmra.mrb[0].mxu0 %v969
      %v1593 = vpop.f32.mrb[0].mxu0
      %v1594 = vadd.f32 0.0, %v1593
      %v1595 = vpop.f32.mrb[0].mxu0
      %v1596 = vpop.f32.mrb[0].mxu0
      %v1597 = vadd.f32 0.0, %v1596
      %v1598 = vpop.f32.mrb[0].mxu0
      %1599 = vmatprep.mubr.bf16.mxu0 %v1263
      %1600 = vmatmul.mubr.bf16.gmra.mrb[0].mxu0 %v971
      %v1601 = vpop.f32.mrb[0].mxu0
      %v1602 = vadd.f32 0.0, %v1601
      %v1603 = vpop.f32.mrb[0].mxu0
      %v1604 = vpop.f32.mrb[0].mxu0
      %v1605 = vadd.f32 0.0, %v1604
      %v1606 = vpop.f32.mrb[0].mxu0
      %1607 = vmatprep.mubr.bf16.mxu0 %v1266
      %1608 = vmatmul.mubr.bf16.gmra.mrb[0].mxu0 %v973
      %v1609 = vpop.f32.mrb[0].mxu0
      %v1610 = vadd.f32 0.0, %v1609
      %v1611 = vpop.f32.mrb[0].mxu0
      %v1612 = vpop.f32.mrb[0].mxu0
      %v1613 = vadd.f32 0.0, %v1612
      %v1614 = vpop.f32.mrb[0].mxu0
      %1615 = vmatprep.mubr.bf16.mxu0 %v1269
      %1616 = vmatmul.mubr.bf16.gmra.mrb[0].mxu0 %v975
      %v1617 = vpop.f32.mrb[0].mxu0
      %v1618 = vadd.f32 0.0, %v1617
      %v1619 = vpop.f32.mrb[0].mxu0
      %v1620 = vpop.f32.mrb[0].mxu0
      %v1621 = vadd.f32 0.0, %v1620
      %v1622 = vpop.f32.mrb[0].mxu0
      %1623 = vmatprep.mubr.bf16.mxu0 %v1272
      %1624 = vmatmul.mubr.bf16.gmra.mrb[0].mxu0 %v977
      %v1625 = vpop.f32.mrb[0].mxu0
      %v1626 = vadd.f32 0.0, %v1625
      %v1627 = vpop.f32.mrb[0].mxu0
      %v1628 = vpop.f32.mrb[0].mxu0
      %v1629 = vadd.f32 0.0, %v1628
      %v1630 = vpop.f32.mrb[0].mxu0
      %1631 = vmatprep.mubr.bf16.mxu0 %v1275
      %1632 = vmatmul.mubr.bf16.gmra.mrb[0].mxu0 %v979
      %v1633 = vpop.f32.mrb[0].mxu0
      %v1634 = vadd.f32 0.0, %v1633
      %v1635 = vpop.f32.mrb[0].mxu0
      %v1636 = vpop.f32.mrb[0].mxu0
      %v1637 = vadd.f32 0.0, %v1636
      %v1638 = vpop.f32.mrb[0].mxu0
      %1639 = vmatprep.mubr.bf16.mxu0 %v1278
      %1640 = vmatmul.mubr.bf16.gmra.mrb[0].mxu0 %v981
      %v1641 = vpop.f32.mrb[0].mxu0
      %v1642 = vadd.f32 0.0, %v1641
      %v1643 = vpop.f32.mrb[0].mxu0
      %v1644 = vpop.f32.mrb[0].mxu0
      %v1645 = vadd.f32 0.0, %v1644
      %v1646 = vpop.f32.mrb[0].mxu0
      %1647 = vmatprep.mubr.bf16.mxu0 %v1281
      %1648 = vmatmul.mubr.bf16.gmra.mrb[0].mxu0 %v983
      %v1649 = vpop.f32.mrb[0].mxu0
      %v1650 = vadd.f32 0.0, %v1649
      %v1651 = vpop.f32.mrb[0].mxu0
      %v1652 = vpop.f32.mrb[0].mxu0
      %v1653 = vadd.f32 0.0, %v1652
      %v1654 = vpop.f32.mrb[0].mxu0
      %1655 = vmatprep.mubr.bf16.mxu0 %v1284
      %1656 = vmatmul.mubr.bf16.gmra.mrb[0].mxu0 %v985
      %v1657 = vpop.f32.mrb[0].mxu0
      %v1658 = vadd.f32 0.0, %v1657
      %v1659 = vpop.f32.mrb[0].mxu0
      %v1660 = vpop.f32.mrb[0].mxu0
      %v1661 = vadd.f32 0.0, %v1660
      %v1662 = vpop.f32.mrb[0].mxu0
      %1663 = vmatprep.mubr.bf16.mxu0 %v1287
      %1664 = vmatmul.mubr.bf16.gmra.mrb[0].mxu0 %v987
      %v1665 = vpop.f32.mrb[0].mxu0
      %v1666 = vadd.f32 0.0, %v1665
      %v1667 = vpop.f32.mrb[0].mxu0
      %v1668 = vpop.f32.mrb[0].mxu0
      %v1669 = vadd.f32 0.0, %v1668
      %v1670 = vpop.f32.mrb[0].mxu0
      %1671 = vmatprep.mubr.bf16.mxu0 %v1290
      %1672 = vmatmul.mubr.bf16.gmra.mrb[0].mxu0 %v989
      %v1673 = vpop.f32.mrb[0].mxu0
      %v1674 = vadd.f32 0.0, %v1673
      %v1675 = vpop.f32.mrb[0].mxu0
      %v1676 = vpop.f32.mrb[0].mxu0
      %v1677 = vadd.f32 0.0, %v1676
      %v1678 = vpop.f32.mrb[0].mxu0
      %1679 = vmatprep.mubr.bf16.mxu0 %v1293
      %1680 = vmatmul.mubr.bf16.gmra.mrb[0].mxu0 %v991
      %v1681 = vpop.f32.mrb[0].mxu0
      %v1682 = vadd.f32 0.0, %v1681
      %v1683 = vpop.f32.mrb[0].mxu0
      %v1684 = vpop.f32.mrb[0].mxu0
      %v1685 = vadd.f32 0.0, %v1684
      %v1686 = vpop.f32.mrb[0].mxu0
      %1687 = vmatprep.mubr.bf16.mxu0 %v1296
      %1688 = vmatmul.mubr.bf16.gmra.mrb[0].mxu0 %v993
      %v1689 = vpop.f32.mrb[0].mxu0
      %v1690 = vadd.f32 0.0, %v1689
      %v1691 = vpop.f32.mrb[0].mxu0
      %v1692 = vpop.f32.mrb[0].mxu0
      %v1693 = vadd.f32 0.0, %v1692
      %v1694 = vpop.f32.mrb[0].mxu0
      %1695 = vmatprep.mubr.bf16.mxu0 %v1299
      %1696 = vmatmul.mubr.bf16.gmra.mrb[0].mxu0 %v995
      %v1697 = vpop.f32.mrb[0].mxu0
      %v1698 = vadd.f32 0.0, %v1697
      %v1699 = vpop.f32.mrb[0].mxu0
      %v1700 = vpop.f32.mrb[0].mxu0
      %v1701 = vadd.f32 0.0, %v1700
      %v1702 = vpop.f32.mrb[0].mxu0
      %1703 = vmatprep.mubr.bf16.mxu0 %v1302
      %1704 = vmatmul.mubr.bf16.gmra.mrb[0].mxu0 %v997
      %v1705 = vpop.f32.mrb[0].mxu0
      %v1706 = vadd.f32 0.0, %v1705
      %v1707 = vpop.f32.mrb[0].mxu0
      %v1708 = vpop.f32.mrb[0].mxu0
      %v1709 = vadd.f32 0.0, %v1708
      %v1710 = vpop.f32.mrb[0].mxu0
      %1711 = vmatprep.mubr.bf16.mxu0 %v1305
      %1712 = vmatmul.mubr.bf16.gmra.mrb[0].mxu0 %v999
      %v1713 = vpop.f32.mrb[0].mxu0
      %v1714 = vadd.f32 0.0, %v1713
      %v1715 = vpop.f32.mrb[0].mxu0
      %v1716 = vpop.f32.mrb[0].mxu0
      %v1717 = vadd.f32 0.0, %v1716
      %v1718 = vpop.f32.mrb[0].mxu0
      %1719 = vmatprep.mubr.bf16.mxu0 %v1308
      %1720 = vmatmul.mubr.bf16.gmra.mrb[0].mxu0 %v1001
      %v1721 = vpop.f32.mrb[0].mxu0
      %v1722 = vadd.f32 0.0, %v1721
      %v1723 = vpop.f32.mrb[0].mxu0
      %v1724 = vpop.f32.mrb[0].mxu0
      %v1725 = vadd.f32 0.0, %v1724
      %v1726 = vpop.f32.mrb[0].mxu0
      %1727 = vmatprep.mubr.bf16.mxu0 %v1311
      %1728 = vmatmul.mubr.bf16.gmra.mrb[0].mxu0 %v1003
      %v1729 = vpop.f32.mrb[0].mxu0
      %v1730 = vadd.f32 0.0, %v1729
      %v1731 = vpop.f32.mrb[0].mxu0
      %v1732 = vpop.f32.mrb[0].mxu0
      %v1733 = vadd.f32 0.0, %v1732
      %v1734 = vpop.f32.mrb[0].mxu0
      %1735 = vmatprep.mubr.bf16.mxu0 %v1314
      %1736 = vmatmul.mubr.bf16.gmra.mrb[0].mxu0 %v1005
      %v1737 = vpop.f32.mrb[0].mxu0
      %v1738 = vadd.f32 0.0, %v1737
      %v1739 = vpop.f32.mrb[0].mxu0
      %v1740 = vpop.f32.mrb[0].mxu0
      %v1741 = vadd.f32 0.0, %v1740
      %v1742 = vpop.f32.mrb[0].mxu0
      %1743 = vmatprep.mubr.bf16.mxu0 %v1317
      %1744 = vmatmul.mubr.bf16.gmra.mrb[0].mxu0 %v1007
      %v1745 = vpop.f32.mrb[0].mxu0
      %v1746 = vadd.f32 0.0, %v1745
      %v1747 = vpop.f32.mrb[0].mxu0
      %v1748 = vpop.f32.mrb[0].mxu0
      %v1749 = vadd.f32 0.0, %v1748
      %v1750 = vpop.f32.mrb[0].mxu0
      %1751 = vmatprep.mubr.bf16.mxu0 %v1320
      %1752 = vmatmul.mubr.bf16.gmra.mrb[0].mxu0 %v1009
      %v1753 = vpop.f32.mrb[0].mxu0
      %v1754 = vadd.f32 0.0, %v1753
      %v1755 = vpop.f32.mrb[0].mxu0
      %v1756 = vpop.f32.mrb[0].mxu0
      %v1757 = vadd.f32 0.0, %v1756
      %v1758 = vpop.f32.mrb[0].mxu0
      %1759 = vmatprep.mubr.bf16.mxu0 %v1323
      %1760 = vmatmul.mubr.bf16.gmra.mrb[0].mxu0 %v1011
      %v1761 = vpop.f32.mrb[0].mxu0
      %v1762 = vadd.f32 0.0, %v1761
      %v1763 = vpop.f32.mrb[0].mxu0
      %v1764 = vpop.f32.mrb[0].mxu0
      %v1765 = vadd.f32 0.0, %v1764
      %v1766 = vpop.f32.mrb[0].mxu0
      %1767 = vmatprep.mubr.bf16.mxu0 %v1326
      %1768 = vmatmul.mubr.bf16.gmra.mrb[0].mxu0 %v1013
      %v1769 = vpop.f32.mrb[0].mxu0
      %v1770 = vadd.f32 0.0, %v1769
      %v1771 = vpop.f32.mrb[0].mxu0
      %v1772 = vpop.f32.mrb[0].mxu0
      %v1773 = vadd.f32 0.0, %v1772
      %v1774 = vpop.f32.mrb[0].mxu0
      %1775 = vmatprep.mubr.bf16.mxu0 %v1329
      %1776 = vmatmul.mubr.bf16.gmra.mrb[0].mxu0 %v1015
      %v1777 = vpop.f32.mrb[0].mxu0
      %v1778 = vadd.f32 0.0, %v1777
      %v1779 = vpop.f32.mrb[0].mxu0
      %v1780 = vpop.f32.mrb[0].mxu0
      %v1781 = vadd.f32 0.0, %v1780
      %v1782 = vpop.f32.mrb[0].mxu0
      %1783 = vmatprep.mubr.bf16.mxu0 %v1332
      %1784 = vmatmul.mubr.bf16.gmra.mrb[0].mxu0 %v1017
      %v1785 = vpop.f32.mrb[0].mxu0
      %v1786 = vadd.f32 0.0, %v1785
      %v1787 = vpop.f32.mrb[0].mxu0
      %v1788 = vpop.f32.mrb[0].mxu0
      %v1789 = vadd.f32 0.0, %v1788
      %v1790 = vpop.f32.mrb[0].mxu0
      %1791 = vmatprep.mubr.bf16.mxu0 %v1335
      %1792 = vmatmul.mubr.bf16.gmra.mrb[0].mxu0 %v1019
      %v1793 = vpop.f32.mrb[0].mxu0
      %v1794 = vadd.f32 0.0, %v1793
      %v1795 = vpop.f32.mrb[0].mxu0
      %v1796 = vpop.f32.mrb[0].mxu0
      %v1797 = vadd.f32 0.0, %v1796
      %v1798 = vpop.f32.mrb[0].mxu0
      %1799 = vmatprep.mubr.bf16.mxu0 %v1338
      %1800 = vmatmul.mubr.bf16.gmra.mrb[0].mxu0 %v1021
      %v1801 = vpop.f32.mrb[0].mxu0
      %v1802 = vadd.f32 0.0, %v1801
      %v1803 = vpop.f32.mrb[0].mxu0
      %v1804 = vpop.f32.mrb[0].mxu0
      %v1805 = vadd.f32 0.0, %v1804
      %v1806 = vpop.f32.mrb[0].mxu0
      %1807 = vmatprep.mubr.bf16.mxu0 %v1341
      %1808 = vmatmul.mubr.bf16.gmra.mrb[0].mxu0 %v1023
      %v1809 = vpop.f32.mrb[0].mxu0
      %v1810 = vadd.f32 0.0, %v1809
      %v1811 = vpop.f32.mrb[0].mxu0
      %v1812 = vpop.f32.mrb[0].mxu0
      %v1813 = vadd.f32 0.0, %v1812
      %v1814 = vpop.f32.mrb[0].mxu0
      %1815 = vmatprep.mubr.bf16.mxu0 %v1344
      %1816 = vmatmul.mubr.bf16.gmra.mrb[0].mxu0 %v1025
      %v1817 = vpop.f32.mrb[0].mxu0
      %v1818 = vadd.f32 0.0, %v1817
      %v1819 = vpop.f32.mrb[0].mxu0
      %v1820 = vpop.f32.mrb[0].mxu0
      %v1821 = vadd.f32 0.0, %v1820
      %v1822 = vpop.f32.mrb[0].mxu0
      %1823 = vmatprep.mubr.bf16.mxu0 %v1347
      %1824 = vmatmul.mubr.bf16.gmra.mrb[0].mxu0 %v1027
      %v1825 = vpop.f32.mrb[0].mxu0
      %v1826 = vadd.f32 0.0, %v1825
      %v1827 = vpop.f32.mrb[0].mxu0
      %v1828 = vpop.f32.mrb[0].mxu0
      %v1829 = vadd.f32 0.0, %v1828
      %v1830 = vpop.f32.mrb[0].mxu0
      %1831 = vmatprep.mubr.bf16.mxu0 %v1350
      %1832 = vmatmul.mubr.bf16.gmra.mrb[0].mxu0 %v1029
      %v1833 = vpop.f32.mrb[0].mxu0
      %v1834 = vadd.f32 0.0, %v1833
      %v1835 = vpop.f32.mrb[0].mxu0
      %v1836 = vpop.f32.mrb[0].mxu0
      %v1837 = vadd.f32 0.0, %v1836
      %v1838 = vpop.f32.mrb[0].mxu0
      %1839 = vmatprep.mubr.bf16.mxu0 %v1353
      %1840 = vmatmul.mubr.bf16.gmra.mrb[0].mxu0 %v1031
      %v1841 = vpop.f32.mrb[0].mxu0
      %v1842 = vadd.f32 0.0, %v1841
      %v1843 = vpop.f32.mrb[0].mxu0
      %v1844 = vpop.f32.mrb[0].mxu0
      %v1845 = vadd.f32 0.0, %v1844
      %v1846 = vpop.f32.mrb[0].mxu0
      %1847 = vmatprep.mubr.bf16.mxu0 %v1356
      %1848 = vmatmul.mubr.bf16.gmra.mrb[0].mxu0 %v1033
      %v1849 = vpop.f32.mrb[0].mxu0
      %v1850 = vadd.f32 0.0, %v1849
      %v1851 = vpop.f32.mrb[0].mxu0
      %v1852 = vpop.f32.mrb[0].mxu0
      %v1853 = vadd.f32 0.0, %v1852
      %v1854 = vpop.f32.mrb[0].mxu0
      %1855 = vmatprep.mubr.bf16.mxu0 %v1359
      %1856 = vmatmul.mubr.bf16.gmra.mrb[0].mxu0 %v1035
      %v1857 = vpop.f32.mrb[0].mxu0
      %v1858 = vadd.f32 0.0, %v1857
      %v1859 = vpop.f32.mrb[0].mxu0
      %v1860 = vpop.f32.mrb[0].mxu0
      %v1861 = vadd.f32 0.0, %v1860
      %v1862 = vpop.f32.mrb[0].mxu0
      %1863 = vmatprep.mubr.bf16.mxu0 %v1362
      %1864 = vmatmul.mubr.bf16.gmra.mrb[0].mxu0 %v1037
      %v1865 = vpop.f32.mrb[0].mxu0
      %v1866 = vadd.f32 0.0, %v1865
      %v1867 = vpop.f32.mrb[0].mxu0
      %v1868 = vpop.f32.mrb[0].mxu0
      %v1869 = vadd.f32 0.0, %v1868
      %v1870 = vpop.f32.mrb[0].mxu0
      %1871 = vmatprep.mubr.bf16.mxu0 %v1365
      %1872 = vmatmul.mubr.bf16.gmra.mrb[0].mxu0 %v1039
      %v1873 = vpop.f32.mrb[0].mxu0
      %v1874 = vadd.f32 0.0, %v1873
      %v1875 = vpop.f32.mrb[0].mxu0
      %v1876 = vpop.f32.mrb[0].mxu0
      %v1877 = vadd.f32 0.0, %v1876
      %v1878 = vpop.f32.mrb[0].mxu0
      %1879 = vmatprep.mubr.bf16.mxu0 %v1368
      %1880 = vmatmul.mubr.bf16.gmra.mrb[0].mxu0 %v1041
      %v1881 = vpop.f32.mrb[0].mxu0
      %v1882 = vadd.f32 0.0, %v1881
      %v1883 = vpop.f32.mrb[0].mxu0
      %v1884 = vpop.f32.mrb[0].mxu0
      %v1885 = vadd.f32 0.0, %v1884
      %v1886 = vpop.f32.mrb[0].mxu0
      %1887 = vmatprep.mubr.bf16.mxu0 %v1371
      %1888 = vmatmul.mubr.bf16.gmra.mrb[0].mxu0 %v1043
      %v1889 = vpop.f32.mrb[0].mxu0
      %v1890 = vadd.f32 0.0, %v1889
      %v1891 = vpop.f32.mrb[0].mxu0
      %v1892 = vpop.f32.mrb[0].mxu0
      %v1893 = vadd.f32 0.0, %v1892
      %v1894 = vpop.f32.mrb[0].mxu0
      %1895 = vmatprep.mubr.bf16.mxu0 %v1374
      %1896 = vmatmul.mubr.bf16.gmra.mrb[0].mxu0 %v1045
      %v1897 = vpop.f32.mrb[0].mxu0
      %v1898 = vadd.f32 0.0, %v1897
      %v1899 = vpop.f32.mrb[0].mxu0
      %v1900 = vpop.f32.mrb[0].mxu0
      %v1901 = vadd.f32 0.0, %v1900
      %v1902 = vpop.f32.mrb[0].mxu0
      %1903 = vmatprep.mubr.bf16.mxu0 %v1377
      %1904 = vmatmul.mubr.bf16.gmra.mrb[0].mxu0 %v1047
      %v1905 = vpop.f32.mrb[0].mxu0
      %v1906 = vadd.f32 0.0, %v1905
      %v1907 = vpop.f32.mrb[0].mxu0
      %v1908 = vpop.f32.mrb[0].mxu0
      %v1909 = vadd.f32 0.0, %v1908
      %v1910 = vpop.f32.mrb[0].mxu0
      %1911 = vmatprep.mubr.bf16.mxu0 %v1380
      %1912 = vmatmul.mubr.bf16.gmra.mrb[0].mxu0 %v1049
      %v1913 = vpop.f32.mrb[0].mxu0
      %v1914 = vadd.f32 0.0, %v1913
      %v1915 = vpop.f32.mrb[0].mxu0
      %v1916 = vpop.f32.mrb[0].mxu0
      %v1917 = vadd.f32 0.0, %v1916
      %v1918 = vpop.f32.mrb[0].mxu0
      %1919 = vmatprep.mubr.bf16.mxu0 %v1383
      %1920 = vmatmul.mubr.bf16.gmra.mrb[0].mxu0 %v1051
      %v1921 = vpop.f32.mrb[0].mxu0
      %v1922 = vadd.f32 0.0, %v1921
      %v1923 = vpop.f32.mrb[0].mxu0
      %v1924 = vpop.f32.mrb[0].mxu0
      %v1925 = vadd.f32 0.0, %v1924
      %v1926 = vpop.f32.mrb[0].mxu0
      %1927 = vmatprep.mubr.bf16.mxu0 %v1386
      %1928 = vmatmul.mubr.bf16.gmra.mrb[0].mxu0 %v1053
      %v1929 = vpop.f32.mrb[0].mxu0
      %v1930 = vadd.f32 0.0, %v1929
      %v1931 = vpop.f32.mrb[0].mxu0
      %v1932 = vpop.f32.mrb[0].mxu0
      %v1933 = vadd.f32 0.0, %v1932
      %v1934 = vpop.f32.mrb[0].mxu0
      %1935 = vmatprep.mubr.bf16.mxu0 %v1389
      %1936 = vmatmul.mubr.bf16.gmra.mrb[0].mxu0 %v1055
      %v1937 = vpop.f32.mrb[0].mxu0
      %v1938 = vadd.f32 0.0, %v1937
      %v1939 = vpop.f32.mrb[0].mxu0
      %v1940 = vpop.f32.mrb[0].mxu0
      %v1941 = vadd.f32 0.0, %v1940
      %v1942 = vpop.f32.mrb[0].mxu0
      %1943 = vmatprep.mubr.bf16.mxu0 %v1392
      %1944 = vmatmul.mubr.bf16.gmra.mrb[0].mxu0 %v1057
      %v1945 = vpop.f32.mrb[0].mxu0
      %v1946 = vadd.f32 0.0, %v1945
      %v1947 = vpop.f32.mrb[0].mxu0
      %v1948 = vpop.f32.mrb[0].mxu0
      %v1949 = vadd.f32 0.0, %v1948
      %v1950 = vpop.f32.mrb[0].mxu0
      %1951 = vmatprep.mubr.bf16.mxu0 %v1395
      %1952 = vmatmul.mubr.bf16.gmra.mrb[0].mxu0 %v1059
      %v1953 = vpop.f32.mrb[0].mxu0
      %v1954 = vadd.f32 0.0, %v1953
      %v1955 = vpop.f32.mrb[0].mxu0
      %v1956 = vpop.f32.mrb[0].mxu0
      %v1957 = vadd.f32 0.0, %v1956
      %v1958 = vpop.f32.mrb[0].mxu0
      %1959 = vmatprep.mubr.bf16.mxu0 %v1398
      %1960 = vmatmul.mubr.bf16.gmra.mrb[0].mxu0 %v1061
      %v1961 = vpop.f32.mrb[0].mxu0
      %v1962 = vadd.f32 0.0, %v1961
      %v1963 = vpop.f32.mrb[0].mxu0
      %v1964 = vpop.f32.mrb[0].mxu0
      %v1965 = vadd.f32 0.0, %v1964
      %v1966 = vpop.f32.mrb[0].mxu0
      %1967 = vmatprep.mubr.bf16.mxu0 %v1401
      %1968 = vmatmul.mubr.bf16.gmra.mrb[0].mxu0 %v1063
      %v1969 = vpop.f32.mrb[0].mxu0
      %v1970 = vadd.f32 0.0, %v1969
      %v1971 = vpop.f32.mrb[0].mxu0
      %v1972 = vpop.f32.mrb[0].mxu0
      %v1973 = vadd.f32 0.0, %v1972
      %v1974 = vpop.f32.mrb[0].mxu0
      %1975 = vmatprep.mubr.bf16.mxu0 %v1404
      %1976 = vmatmul.mubr.bf16.gmra.mrb[0].mxu0 %v1065
      %v1977 = vpop.f32.mrb[0].mxu0
      %v1978 = vadd.f32 0.0, %v1977
      %v1979 = vpop.f32.mrb[0].mxu0
      %v1980 = vpop.f32.mrb[0].mxu0
      %v1981 = vadd.f32 0.0, %v1980
      %v1982 = vpop.f32.mrb[0].mxu0
      %1983 = vmatprep.mubr.bf16.mxu0 %v1407
      %1984 = vmatmul.mubr.bf16.gmra.mrb[0].mxu0 %v1067
      %v1985 = vpop.f32.mrb[0].mxu0
      %v1986 = vadd.f32 0.0, %v1985
      %v1987 = vpop.f32.mrb[0].mxu0
      %v1988 = vpop.f32.mrb[0].mxu0
      %v1989 = vadd.f32 0.0, %v1988
      %v1990 = vpop.f32.mrb[0].mxu0
      %1991 = vmatprep.mubr.bf16.mxu0 %v1410
      %1992 = vmatmul.mubr.bf16.gmra.mrb[0].mxu0 %v1069
      %v1993 = vpop.f32.mrb[0].mxu0
      %v1994 = vadd.f32 0.0, %v1993
      %v1995 = vpop.f32.mrb[0].mxu0
      %v1996 = vpop.f32.mrb[0].mxu0
      %v1997 = vadd.f32 0.0, %v1996
      %v1998 = vpop.f32.mrb[0].mxu0
      %1999 = vmatprep.mubr.bf16.mxu0 %v1413
      %2000 = vmatmul.mubr.bf16.gmra.mrb[0].mxu0 %v1071
      %v2001 = vpop.f32.mrb[0].mxu0
      %v2002 = vadd.f32 0.0, %v2001
      %v2003 = vpop.f32.mrb[0].mxu0
      %v2004 = vpop.f32.mrb[0].mxu0
      %v2005 = vadd.f32 0.0, %v2004
      %v2006 = vpop.f32.mrb[0].mxu0
      %2007 = vmatprep.mubr.bf16.mxu0 %v1416
      %2008 = vmatmul.mubr.bf16.gmra.mrb[0].mxu0 %v1073
      %v2009 = vpop.f32.mrb[0].mxu0
      %v2010 = vadd.f32 0.0, %v2009
      %v2011 = vpop.f32.mrb[0].mxu0
      %v2012 = vpop.f32.mrb[0].mxu0
      %v2013 = vadd.f32 0.0, %v2012
      %v2014 = vpop.f32.mrb[0].mxu0
      %2015 = vmatprep.mubr.bf16.mxu0 %v1419
      %2016 = vmatmul.mubr.bf16.gmra.mrb[0].mxu0 %v1075
      %v2017 = vpop.f32.mrb[0].mxu0
      %v2018 = vadd.f32 0.0, %v2017
      %v2019 = vpop.f32.mrb[0].mxu0
      %v2020 = vpop.f32.mrb[0].mxu0
      %v2021 = vadd.f32 0.0, %v2020
      %v2022 = vpop.f32.mrb[0].mxu0
      %2023 = vmatprep.mubr.bf16.mxu0 %v1422
      %2024 = vmatmul.mubr.bf16.gmra.mrb[0].mxu0 %v1077
      %v2025 = vpop.f32.mrb[0].mxu0
      %v2026 = vadd.f32 0.0, %v2025
      %v2027 = vpop.f32.mrb[0].mxu0
      %v2028 = vpop.f32.mrb[0].mxu0
      %v2029 = vadd.f32 0.0, %v2028
      %v2030 = vpop.f32.mrb[0].mxu0
      %2031 = vmatprep.mubr.bf16.mxu0 %v1425
      %2032 = vmatmul.mubr.bf16.gmra.mrb[0].mxu0 %v1079
      %v2033 = vpop.f32.mrb[0].mxu0
      %v2034 = vadd.f32 0.0, %v2033
      %v2035 = vpop.f32.mrb[0].mxu0
      %v2036 = vpop.f32.mrb[0].mxu0
      %v2037 = vadd.f32 0.0, %v2036
      %v2038 = vpop.f32.mrb[0].mxu0
      %2039 = vdwg.mxu0
      %v2040 = vmax.f32 %v1466, %v1530
      %v2041 = vmax.f32 %v2040, %v1594
      %v2042 = vmax.f32 %v2041, %v1658
      %v2043 = vmax.f32 %v2042, %v1722
      %v2044 = vmax.f32 %v2043, %v1786
      %v2045 = vmax.f32 %v2044, %v1850
      %v2046 = vmax.f32 %v2045, %v1914
      %v2047 = vmax.f32 %v2046, %v1978
      %v2048 = vmax.f32 %v1469, %v1533
      %v2049 = vmax.f32 %v2048, %v1597
      %v2050 = vmax.f32 %v2049, %v1661
      %v2051 = vmax.f32 %v2050, %v1725
      %v2052 = vmax.f32 %v2051, %v1789
      %v2053 = vmax.f32 %v2052, %v1853
      %v2054 = vmax.f32 %v2053, %v1917
      %v2055 = vmax.f32 %v2054, %v1981
      %v2056 = vmax.f32 %v1474, %v1538
      %v2057 = vmax.f32 %v2056, %v1602
      %v2058 = vmax.f32 %v2057, %v1666
      %v2059 = vmax.f32 %v2058, %v1730
      %v2060 = vmax.f32 %v2059, %v1794
      %v2061 = vmax.f32 %v2060, %v1858
      %v2062 = vmax.f32 %v2061, %v1922
      %v2063 = vmax.f32 %v2062, %v1986
      %v2064 = vmax.f32 %v1477, %v1541
      %v2065 = vmax.f32 %v2064, %v1605
      %v2066 = vmax.f32 %v2065, %v1669
      %v2067 = vmax.f32 %v2066, %v1733
      %v2068 = vmax.f32 %v2067, %v1797
      %v2069 = vmax.f32 %v2068, %v1861
      %v2070 = vmax.f32 %v2069, %v1925
      %v2071 = vmax.f32 %v2070, %v1989
      %v2072 = vmax.f32 %v1482, %v1546
      %v2073 = vmax.f32 %v2072, %v1610
      %v2074 = vmax.f32 %v2073, %v1674
      %v2075 = vmax.f32 %v2074, %v1738
      %v2076 = vmax.f32 %v2075, %v1802
      %v2077 = vmax.f32 %v2076, %v1866
      %v2078 = vmax.f32 %v2077, %v1930
      %v2079 = vmax.f32 %v2078, %v1994
      %v2080 = vmax.f32 %v1485, %v1549
      %v2081 = vmax.f32 %v2080, %v1613
      %v2082 = vmax.f32 %v2081, %v1677
      %v2083 = vmax.f32 %v2082, %v1741
      %v2084 = vmax.f32 %v2083, %v1805
      %v2085 = vmax.f32 %v2084, %v1869
      %v2086 = vmax.f32 %v2085, %v1933
      %v2087 = vmax.f32 %v2086, %v1997
      %v2088 = vmax.f32 %v1490, %v1554
      %v2089 = vmax.f32 %v2088, %v1618
      %v2090 = vmax.f32 %v2089, %v1682
      %v2091 = vmax.f32 %v2090, %v1746
      %v2092 = vmax.f32 %v2091, %v1810
      %v2093 = vmax.f32 %v2092, %v1874
      %v2094 = vmax.f32 %v2093, %v1938
      %v2095 = vmax.f32 %v2094, %v2002
      %v2096 = vmax.f32 %v1493, %v1557
      %v2097 = vmax.f32 %v2096, %v1621
      %v2098 = vmax.f32 %v2097, %v1685
      %v2099 = vmax.f32 %v2098, %v1749
      %v2100 = vmax.f32 %v2099, %v1813
      %v2101 = vmax.f32 %v2100, %v1877
      %v2102 = vmax.f32 %v2101, %v1941
      %v2103 = vmax.f32 %v2102, %v2005
      %v2104 = vmax.f32 %v1498, %v1562
      %v2105 = vmax.f32 %v2104, %v1626
      %v2106 = vmax.f32 %v2105, %v1690
      %v2107 = vmax.f32 %v2106, %v1754
      %v2108 = vmax.f32 %v2107, %v1818
      %v2109 = vmax.f32 %v2108, %v1882
      %v2110 = vmax.f32 %v2109, %v1946
      %v2111 = vmax.f32 %v2110, %v2010
      %v2112 = vmax.f32 %v1501, %v1565
      %v2113 = vmax.f32 %v2112, %v1629
      %v2114 = vmax.f32 %v2113, %v1693
      %v2115 = vmax.f32 %v2114, %v1757
      %v2116 = vmax.f32 %v2115, %v1821
      %v2117 = vmax.f32 %v2116, %v1885
      %v2118 = vmax.f32 %v2117, %v1949
      %v2119 = vmax.f32 %v2118, %v2013
      %v2120 = vmax.f32 %v1506, %v1570
      %v2121 = vmax.f32 %v2120, %v1634
      %v2122 = vmax.f32 %v2121, %v1698
      %v2123 = vmax.f32 %v2122, %v1762
      %v2124 = vmax.f32 %v2123, %v1826
      %v2125 = vmax.f32 %v2124, %v1890
      %v2126 = vmax.f32 %v2125, %v1954
      %v2127 = vmax.f32 %v2126, %v2018
      %v2128 = vmax.f32 %v1509, %v1573
      %v2129 = vmax.f32 %v2128, %v1637
      %v2130 = vmax.f32 %v2129, %v1701
      %v2131 = vmax.f32 %v2130, %v1765
      %v2132 = vmax.f32 %v2131, %v1829
      %v2133 = vmax.f32 %v2132, %v1893
      %v2134 = vmax.f32 %v2133, %v1957
      %v2135 = vmax.f32 %v2134, %v2021
      %v2136 = vmax.f32 %v1514, %v1578
      %v2137 = vmax.f32 %v2136, %v1642
      %v2138 = vmax.f32 %v2137, %v1706
      %v2139 = vmax.f32 %v2138, %v1770
      %v2140 = vmax.f32 %v2139, %v1834
      %v2141 = vmax.f32 %v2140, %v1898
      %v2142 = vmax.f32 %v2141, %v1962
      %v2143 = vmax.f32 %v2142, %v2026
      %v2144 = vmax.f32 %v1517, %v1581
      %v2145 = vmax.f32 %v2144, %v1645
      %v2146 = vmax.f32 %v2145, %v1709
      %v2147 = vmax.f32 %v2146, %v1773
      %v2148 = vmax.f32 %v2147, %v1837
      %v2149 = vmax.f32 %v2148, %v1901
      %v2150 = vmax.f32 %v2149, %v1965
      %v2151 = vmax.f32 %v2150, %v2029
      %v2152 = vmax.f32 %v1522, %v1586
      %v2153 = vmax.f32 %v2152, %v1650
      %v2154 = vmax.f32 %v2153, %v1714
      %v2155 = vmax.f32 %v2154, %v1778
      %v2156 = vmax.f32 %v2155, %v1842
      %v2157 = vmax.f32 %v2156, %v1906
      %v2158 = vmax.f32 %v2157, %v1970
      %v2159 = vmax.f32 %v2158, %v2034
      %v2160 = vmax.f32 %v1525, %v1589
      %v2161 = vmax.f32 %v2160, %v1653
      %v2162 = vmax.f32 %v2161, %v1717
      %v2163 = vmax.f32 %v2162, %v1781
      %v2164 = vmax.f32 %v2163, %v1845
      %v2165 = vmax.f32 %v2164, %v1909
      %v2166 = vmax.f32 %v2165, %v1973
      %v2167 = vmax.f32 %v2166, %v2037
      %v2168 = vmax.f32 %v2047, 0.0
      %v2169 = vmax.f32 %v2055, 0.0
      %v2170 = vmax.f32 %v2063, 0.0
      %v2171 = vmax.f32 %v2071, 0.0
      %v2172 = vmax.f32 %v2079, 0.0
      %v2173 = vmax.f32 %v2087, 0.0
      %v2174 = vmax.f32 %v2095, 0.0
      %v2175 = vmax.f32 %v2103, 0.0
      %v2176 = vmax.f32 %v2111, 0.0
      %v2177 = vmax.f32 %v2119, 0.0
      %v2178 = vmax.f32 %v2127, 0.0
      %v2179 = vmax.f32 %v2135, 0.0
      %v2180 = vmax.f32 %v2143, 0.0
      %v2181 = vmax.f32 %v2151, 0.0
      %v2182 = vmax.f32 %v2159, 0.0
      %v2183 = vmax.f32 %v2167, 0.0
      %v2184 = vpack.c.bf16 %v2169, %v2168
      %v2185 = vpack.c.bf16 %v2171, %v2170
      %v2186 = vpack.c.bf16 %v2173, %v2172
      %v2187 = vpack.c.bf16 %v2175, %v2174
      %v2188 = vpack.c.bf16 %v2177, %v2176
      %v2189 = vpack.c.bf16 %v2179, %v2178
      %v2190 = vpack.c.bf16 %v2181, %v2180
      %v2191 = vpack.c.bf16 %v2183, %v2182
      %v2192 = vld [vmem:[%s324] sm:$0xff]
      %v2193 = vld [vmem:[%s324 + $0x8] sm:$0xff]
      %v2194 = vld [vmem:[%s324 + $0x10] sm:$0xff]
      %v2195 = vld [vmem:[%s324 + $0x18] sm:$0xff]
      %v2196 = vld [vmem:[%s324 + $0x20] sm:$0xff]
      %v2197 = vld [vmem:[%s324 + $0x28] sm:$0xff]
      %v2198 = vld [vmem:[%s324 + $0x30] sm:$0xff]
      %v2199 = vld [vmem:[%s324 + $0x38] sm:$0xff]
      %v2200 = vld [vmem:[%s324 + $0x40] sm:$0xff]
      %v2201 = vld [vmem:[%s324 + $0x48] sm:$0xff]
      %v2202 = vld [vmem:[%s324 + $0x50] sm:$0xff]
      %v2203 = vld [vmem:[%s324 + $0x58] sm:$0xff]
      %v2204 = vld [vmem:[%s324 + $0x60] sm:$0xff]
      %v2205 = vld [vmem:[%s324 + $0x68] sm:$0xff]
      %v2206 = vld [vmem:[%s324 + $0x70] sm:$0xff]
      %v2207 = vld [vmem:[%s324 + $0x78] sm:$0xff]
      %v2208 = vld [vmem:[%s328] sm:$0x3]
      %v2210 = vlaneseq
      %v2211 = vshrl.u32 %v2210, 7
      %v2212 = vsub.s32 0, %v2211
      %v2213 = vrot.slane %v2208, %v2212
      %v2214 = vlaneseq
      %v2215 = vshrl.u32 %v2214, 7
      %v2216 = vsub.s32 1, %v2215
      %v2217 = vrot.slane %v2208, %v2216
      %v2236 = vunpack.c.l.b16 %v2192
      %v2237 = vunpack.c.h.b16 %v2192
      %v2238 = vunpack.c.l.b16 %v2193
      %v2239 = vunpack.c.h.b16 %v2193
      %v2240 = vunpack.c.l.b16 %v2194
      %v2241 = vunpack.c.h.b16 %v2194
      %v2242 = vunpack.c.l.b16 %v2195
      %v2243 = vunpack.c.h.b16 %v2195
      %v2244 = vunpack.c.l.b16 %v2196
      %v2245 = vunpack.c.h.b16 %v2196
      %v2246 = vunpack.c.l.b16 %v2197
      %v2247 = vunpack.c.h.b16 %v2197
      %v2248 = vunpack.c.l.b16 %v2198
      %v2249 = vunpack.c.h.b16 %v2198
      %v2250 = vunpack.c.l.b16 %v2199
      %v2251 = vunpack.c.h.b16 %v2199
      %v2252 = vunpack.c.l.b16 %v2200
      %v2253 = vunpack.c.h.b16 %v2200
      %v2254 = vunpack.c.l.b16 %v2201
      %v2255 = vunpack.c.h.b16 %v2201
      %v2256 = vunpack.c.l.b16 %v2202
      %v2257 = vunpack.c.h.b16 %v2202
      %v2258 = vunpack.c.l.b16 %v2203
      %v2259 = vunpack.c.h.b16 %v2203
      %v2260 = vunpack.c.l.b16 %v2204
      %v2261 = vunpack.c.h.b16 %v2204
      %v2262 = vunpack.c.l.b16 %v2205
      %v2263 = vunpack.c.h.b16 %v2205
      %v2264 = vunpack.c.l.b16 %v2206
      %v2265 = vunpack.c.h.b16 %v2206
      %v2266 = vunpack.c.l.b16 %v2207
      %v2267 = vunpack.c.h.b16 %v2207
      %v2268 = vpack.c.b16 %v2238, %v2236
      %v2269 = vpack.c.b16 %v2239, %v2237
      %v2270 = vpack.c.b16 %v2242, %v2240
      %v2271 = vpack.c.b16 %v2243, %v2241
      %v2272 = vpack.c.b16 %v2246, %v2244
      %v2273 = vpack.c.b16 %v2247, %v2245
      %v2274 = vpack.c.b16 %v2250, %v2248
      %v2275 = vpack.c.b16 %v2251, %v2249
      %v2276 = vpack.c.b16 %v2254, %v2252
      %v2277 = vpack.c.b16 %v2255, %v2253
      %v2278 = vpack.c.b16 %v2258, %v2256
      %v2279 = vpack.c.b16 %v2259, %v2257
      %v2280 = vpack.c.b16 %v2262, %v2260
      %v2281 = vpack.c.b16 %v2263, %v2261
      %v2282 = vpack.c.b16 %v2266, %v2264
      %v2283 = vpack.c.b16 %v2267, %v2265
      %2300 = vmatprep.subr.bf16.mxu0 %v2269
      %2301 = vmatpush1.bf16.msra.mxu0 %v2268
      %2302 = vmatprep.subr.bf16.mxu0 %v2271
      %2303 = vmatpush1.bf16.msra.mxu0 %v2270
      %2304 = vmatprep.subr.bf16.mxu0 %v2273
      %2305 = vmatpush1.bf16.msra.mxu0 %v2272
      %2306 = vmatprep.subr.bf16.mxu0 %v2275
      %2307 = vmatpush1.bf16.msra.mxu0 %v2274
      %2308 = vmatprep.subr.bf16.mxu0 %v2277
      %2309 = vmatpush1.bf16.msra.mxu0 %v2276
      %2310 = vmatprep.subr.bf16.mxu0 %v2279
      %2311 = vmatpush1.bf16.msra.mxu0 %v2278
      %2312 = vmatprep.subr.bf16.mxu0 %v2281
      %2313 = vmatpush1.bf16.msra.mxu0 %v2280
      %2314 = vmatprep.subr.bf16.mxu0 %v2283
      %2315 = vmatpush1.bf16.msra.mxu0 %v2282
      %2316 = vmatprep.subr.bf16.mxu0 0
      %2317 = vmatpush1.bf16.msra.mxu0 0
      %2318 = vmatprep.subr.bf16.mxu0 0
      %2319 = vmatpush1.bf16.msra.mxu0 0
      %2320 = vmatprep.subr.bf16.mxu0 0
      %2321 = vmatpush1.bf16.msra.mxu0 0
      %2322 = vmatprep.subr.bf16.mxu0 0
      %2323 = vmatpush1.bf16.msra.mxu0 0
      %2324 = vmatprep.subr.bf16.mxu0 0
      %2325 = vmatpush1.bf16.msra.mxu0 0
      %2326 = vmatprep.subr.bf16.mxu0 0
      %2327 = vmatpush1.bf16.msra.mxu0 0
      %2328 = vmatprep.subr.bf16.mxu0 0
      %2329 = vmatpush1.bf16.msra.mxu0 0
      %2330 = vmatprep.subr.bf16.mxu0 0
      %2331 = vmatpush1.bf16.msra.mxu0 0
      %2332 = vmatprep.mubr.bf16.mxu0 0
      %2333 = vmatmul.mubr.bf16.gmra.mrb[0].mxu0 %v2184
      %v2334 = vpop.f32.mrb[0].mxu0
      %v2335 = vadd.f32 %v2213, %v2334
      %v2336 = vpop.f32.mrb[0].mxu0
      %v2337 = vadd.f32 %v2217, %v2336
      %v2338 = vpop.f32.mrb[0].mxu0
      %v2339 = vadd.f32 %v2213, %v2338
      %v2340 = vpop.f32.mrb[0].mxu0
      %v2341 = vadd.f32 %v2217, %v2340
      %2342 = vmatprep.mubr.bf16.mxu0 0
      %2343 = vmatmul.mubr.bf16.gmra.mrb[0].mxu0 %v2185
      %v2344 = vpop.f32.mrb[0].mxu0
      %v2345 = vadd.f32 %v2213, %v2344
      %v2346 = vpop.f32.mrb[0].mxu0
      %v2347 = vadd.f32 %v2217, %v2346
      %v2348 = vpop.f32.mrb[0].mxu0
      %v2349 = vadd.f32 %v2213, %v2348
      %v2350 = vpop.f32.mrb[0].mxu0
      %v2351 = vadd.f32 %v2217, %v2350
      %2352 = vmatprep.mubr.bf16.mxu0 0
      %2353 = vmatmul.mubr.bf16.gmra.mrb[0].mxu0 %v2186
      %v2354 = vpop.f32.mrb[0].mxu0
      %v2355 = vadd.f32 %v2213, %v2354
      %v2356 = vpop.f32.mrb[0].mxu0
      %v2357 = vadd.f32 %v2217, %v2356
      %v2358 = vpop.f32.mrb[0].mxu0
      %v2359 = vadd.f32 %v2213, %v2358
      %v2360 = vpop.f32.mrb[0].mxu0
      %v2361 = vadd.f32 %v2217, %v2360
      %2362 = vmatprep.mubr.bf16.mxu0 0
      %2363 = vmatmul.mubr.bf16.gmra.mrb[0].mxu0 %v2187
      %v2364 = vpop.f32.mrb[0].mxu0
      %v2365 = vadd.f32 %v2213, %v2364
      %v2366 = vpop.f32.mrb[0].mxu0
      %v2367 = vadd.f32 %v2217, %v2366
      %v2368 = vpop.f32.mrb[0].mxu0
      %v2369 = vadd.f32 %v2213, %v2368
      %v2370 = vpop.f32.mrb[0].mxu0
      %v2371 = vadd.f32 %v2217, %v2370
      %2372 = vmatprep.mubr.bf16.mxu0 0
      %2373 = vmatmul.mubr.bf16.gmra.mrb[0].mxu0 %v2188
      %v2374 = vpop.f32.mrb[0].mxu0
      %v2375 = vadd.f32 %v2213, %v2374
      %v2376 = vpop.f32.mrb[0].mxu0
      %v2377 = vadd.f32 %v2217, %v2376
      %v2378 = vpop.f32.mrb[0].mxu0
      %v2379 = vadd.f32 %v2213, %v2378
      %v2380 = vpop.f32.mrb[0].mxu0
      %v2381 = vadd.f32 %v2217, %v2380
      %2382 = vmatprep.mubr.bf16.mxu0 0
      %2383 = vmatmul.mubr.bf16.gmra.mrb[0].mxu0 %v2189
      %v2384 = vpop.f32.mrb[0].mxu0
      %v2385 = vadd.f32 %v2213, %v2384
      %v2386 = vpop.f32.mrb[0].mxu0
      %v2387 = vadd.f32 %v2217, %v2386
      %v2388 = vpop.f32.mrb[0].mxu0
      %v2389 = vadd.f32 %v2213, %v2388
      %v2390 = vpop.f32.mrb[0].mxu0
      %v2391 = vadd.f32 %v2217, %v2390
      %2392 = vmatprep.mubr.bf16.mxu0 0
      %2393 = vmatmul.mubr.bf16.gmra.mrb[0].mxu0 %v2190
      %v2394 = vpop.f32.mrb[0].mxu0
      %v2395 = vadd.f32 %v2213, %v2394
      %v2396 = vpop.f32.mrb[0].mxu0
      %v2397 = vadd.f32 %v2217, %v2396
      %v2398 = vpop.f32.mrb[0].mxu0
      %v2399 = vadd.f32 %v2213, %v2398
      %v2400 = vpop.f32.mrb[0].mxu0
      %v2401 = vadd.f32 %v2217, %v2400
      %2402 = vmatprep.mubr.bf16.mxu0 0
      %2403 = vmatmul.mubr.bf16.gmra.mrb[0].mxu0 %v2191
      %v2404 = vpop.f32.mrb[0].mxu0
      %v2405 = vadd.f32 %v2213, %v2404
      %v2406 = vpop.f32.mrb[0].mxu0
      %v2407 = vadd.f32 %v2217, %v2406
      %v2408 = vpop.f32.mrb[0].mxu0
      %v2409 = vadd.f32 %v2213, %v2408
      %v2410 = vpop.f32.mrb[0].mxu0
      %v2411 = vadd.f32 %v2217, %v2410
      %2412 = vdwg.mxu0
      %v2413 = vmax.f32 %v2335, 0.0
      %v2414 = vmax.f32 %v2337, 0.0
      %v2415 = vmax.f32 %v2339, 0.0
      %v2416 = vmax.f32 %v2341, 0.0
      %v2417 = vmax.f32 %v2345, 0.0
      %v2418 = vmax.f32 %v2347, 0.0
      %v2419 = vmax.f32 %v2349, 0.0
      %v2420 = vmax.f32 %v2351, 0.0
      %v2421 = vmax.f32 %v2355, 0.0
      %v2422 = vmax.f32 %v2357, 0.0
      %v2423 = vmax.f32 %v2359, 0.0
      %v2424 = vmax.f32 %v2361, 0.0
      %v2425 = vmax.f32 %v2365, 0.0
      %v2426 = vmax.f32 %v2367, 0.0
      %v2427 = vmax.f32 %v2369, 0.0
      %v2428 = vmax.f32 %v2371, 0.0
      %v2429 = vmax.f32 %v2375, 0.0
      %v2430 = vmax.f32 %v2377, 0.0
      %v2431 = vmax.f32 %v2379, 0.0
      %v2432 = vmax.f32 %v2381, 0.0
      %v2433 = vmax.f32 %v2385, 0.0
      %v2434 = vmax.f32 %v2387, 0.0
      %v2435 = vmax.f32 %v2389, 0.0
      %v2436 = vmax.f32 %v2391, 0.0
      %v2437 = vmax.f32 %v2395, 0.0
      %v2438 = vmax.f32 %v2397, 0.0
      %v2439 = vmax.f32 %v2399, 0.0
      %v2440 = vmax.f32 %v2401, 0.0
      %v2441 = vmax.f32 %v2405, 0.0
      %v2442 = vmax.f32 %v2407, 0.0
      %v2443 = vmax.f32 %v2409, 0.0
      %v2444 = vmax.f32 %v2411, 0.0
      %v2445 = vpack.c.bf16 %v2413, %v2413
      %v2446 = vpack.c.bf16 %v2414, %v2414
      %v2447 = vpack.c.bf16 %v2415, %v2415
      %v2448 = vpack.c.bf16 %v2416, %v2416
      %v2449 = vpack.c.bf16 %v2417, %v2417
      %v2450 = vpack.c.bf16 %v2418, %v2418
      %v2451 = vpack.c.bf16 %v2419, %v2419
      %v2452 = vpack.c.bf16 %v2420, %v2420
      %v2453 = vpack.c.bf16 %v2421, %v2421
      %v2454 = vpack.c.bf16 %v2422, %v2422
      %v2455 = vpack.c.bf16 %v2423, %v2423
      %v2456 = vpack.c.bf16 %v2424, %v2424
      %v2457 = vpack.c.bf16 %v2425, %v2425
      %v2458 = vpack.c.bf16 %v2426, %v2426
      %v2459 = vpack.c.bf16 %v2427, %v2427
      %v2460 = vpack.c.bf16 %v2428, %v2428
      %v2461 = vpack.c.bf16 %v2429, %v2429
      %v2462 = vpack.c.bf16 %v2430, %v2430
      %v2463 = vpack.c.bf16 %v2431, %v2431
      %v2464 = vpack.c.bf16 %v2432, %v2432
      %v2465 = vpack.c.bf16 %v2433, %v2433
      %v2466 = vpack.c.bf16 %v2434, %v2434
      %v2467 = vpack.c.bf16 %v2435, %v2435
      %v2468 = vpack.c.bf16 %v2436, %v2436
      %v2469 = vpack.c.bf16 %v2437, %v2437
      %v2470 = vpack.c.bf16 %v2438, %v2438
      %v2471 = vpack.c.bf16 %v2439, %v2439
      %v2472 = vpack.c.bf16 %v2440, %v2440
      %v2473 = vpack.c.bf16 %v2441, %v2441
      %v2474 = vpack.c.bf16 %v2442, %v2442
      %v2475 = vpack.c.bf16 %v2443, %v2443
      %v2476 = vpack.c.bf16 %v2444, %v2444
      %v2477 = vld [vmem:[%s333] sm:$0xf]
      %v2478 = vld [vmem:[%s333 + $0x4] sm:$0xf]
      %v2479 = vld [vmem:[%s333 + $0x8] sm:$0xf]
      %v2480 = vld [vmem:[%s333 + $0xc] sm:$0xf]
      %v2481 = vld [vmem:[%s333 + $0x10] sm:$0xf]
      %v2482 = vld [vmem:[%s333 + $0x14] sm:$0xf]
      %v2483 = vld [vmem:[%s333 + $0x18] sm:$0xf]
      %v2484 = vld [vmem:[%s333 + $0x1c] sm:$0xf]
      %v2485 = vld [vmem:[%s333 + $0x20] sm:$0xf]
      %v2486 = vld [vmem:[%s333 + $0x24] sm:$0xf]
      %v2487 = vld [vmem:[%s333 + $0x28] sm:$0xf]
      %v2488 = vld [vmem:[%s333 + $0x2c] sm:$0xf]
      %v2489 = vld [vmem:[%s333 + $0x30] sm:$0xf]
      %v2490 = vld [vmem:[%s333 + $0x34] sm:$0xf]
      %v2491 = vld [vmem:[%s333 + $0x38] sm:$0xf]
      %v2492 = vld [vmem:[%s333 + $0x3c] sm:$0xf]
      %v2493 = vld [vmem:[%s333 + $0x40] sm:$0xf]
      %v2494 = vld [vmem:[%s333 + $0x44] sm:$0xf]
      %v2495 = vld [vmem:[%s333 + $0x48] sm:$0xf]
      %v2496 = vld [vmem:[%s333 + $0x4c] sm:$0xf]
      %v2497 = vld [vmem:[%s333 + $0x50] sm:$0xf]
      %v2498 = vld [vmem:[%s333 + $0x54] sm:$0xf]
      %v2499 = vld [vmem:[%s333 + $0x58] sm:$0xf]
      %v2500 = vld [vmem:[%s333 + $0x5c] sm:$0xf]
      %v2501 = vld [vmem:[%s333 + $0x60] sm:$0xf]
      %v2502 = vld [vmem:[%s333 + $0x64] sm:$0xf]
      %v2503 = vld [vmem:[%s333 + $0x68] sm:$0xf]
      %v2504 = vld [vmem:[%s333 + $0x6c] sm:$0xf]
      %v2505 = vld [vmem:[%s333 + $0x70] sm:$0xf]
      %v2506 = vld [vmem:[%s333 + $0x74] sm:$0xf]
      %v2507 = vld [vmem:[%s333 + $0x78] sm:$0xf]
      %v2508 = vld [vmem:[%s333 + $0x7c] sm:$0xf]
      %v2509 = vld [vmem:[%s333 + $0x80] sm:$0xf]
      %v2510 = vld [vmem:[%s333 + $0x84] sm:$0xf]
      %v2511 = vld [vmem:[%s333 + $0x88] sm:$0xf]
      %v2512 = vld [vmem:[%s333 + $0x8c] sm:$0xf]
      %v2513 = vld [vmem:[%s333 + $0x90] sm:$0xf]
      %v2514 = vld [vmem:[%s333 + $0x94] sm:$0xf]
      %v2515 = vld [vmem:[%s333 + $0x98] sm:$0xf]
      %v2516 = vld [vmem:[%s333 + $0x9c] sm:$0xf]
      %v2517 = vld [vmem:[%s333 + $0xa0] sm:$0xf]
      %v2518 = vld [vmem:[%s333 + $0xa4] sm:$0xf]
      %v2519 = vld [vmem:[%s333 + $0xa8] sm:$0xf]
      %v2520 = vld [vmem:[%s333 + $0xac] sm:$0xf]
      %v2521 = vld [vmem:[%s333 + $0xb0] sm:$0xf]
      %v2522 = vld [vmem:[%s333 + $0xb4] sm:$0xf]
      %v2523 = vld [vmem:[%s333 + $0xb8] sm:$0xf]
      %v2524 = vld [vmem:[%s333 + $0xbc] sm:$0xf]
      %v2525 = vld [vmem:[%s333 + $0xc0] sm:$0xf]
      %v2526 = vld [vmem:[%s333 + $0xc4] sm:$0xf]
      %v2527 = vld [vmem:[%s333 + $0xc8] sm:$0xf]
      %v2528 = vld [vmem:[%s333 + $0xcc] sm:$0xf]
      %v2529 = vld [vmem:[%s333 + $0xd0] sm:$0xf]
      %v2530 = vld [vmem:[%s333 + $0xd4] sm:$0xf]
      %v2531 = vld [vmem:[%s333 + $0xd8] sm:$0xf]
      %v2532 = vld [vmem:[%s333 + $0xdc] sm:$0xf]
      %v2533 = vld [vmem:[%s333 + $0xe0] sm:$0xf]
      %v2534 = vld [vmem:[%s333 + $0xe4] sm:$0xf]
      %v2535 = vld [vmem:[%s333 + $0xe8] sm:$0xf]
      %v2536 = vld [vmem:[%s333 + $0xec] sm:$0xf]
      %v2537 = vld [vmem:[%s333 + $0xf0] sm:$0xf]
      %v2538 = vld [vmem:[%s333 + $0xf4] sm:$0xf]
      %v2539 = vld [vmem:[%s333 + $0xf8] sm:$0xf]
      %v2540 = vld [vmem:[%s333 + $0xfc] sm:$0xf]
      %v2541 = vld [vmem:[%s333 + $0x100] sm:$0xf]
      %v2542 = vld [vmem:[%s333 + $0x104] sm:$0xf]
      %v2543 = vld [vmem:[%s333 + $0x108] sm:$0xf]
      %v2544 = vld [vmem:[%s333 + $0x10c] sm:$0xf]
      %v2545 = vld [vmem:[%s333 + $0x110] sm:$0xf]
      %v2546 = vld [vmem:[%s333 + $0x114] sm:$0xf]
      %v2547 = vld [vmem:[%s333 + $0x118] sm:$0xf]
      %v2548 = vld [vmem:[%s333 + $0x11c] sm:$0xf]
      %v2549 = vld [vmem:[%s333 + $0x120] sm:$0xf]
      %v2550 = vld [vmem:[%s333 + $0x124] sm:$0xf]
      %v2551 = vld [vmem:[%s333 + $0x128] sm:$0xf]
      %v2552 = vld [vmem:[%s333 + $0x12c] sm:$0xf]
      %v2553 = vld [vmem:[%s333 + $0x130] sm:$0xf]
      %v2554 = vld [vmem:[%s333 + $0x134] sm:$0xf]
      %v2555 = vld [vmem:[%s333 + $0x138] sm:$0xf]
      %v2556 = vld [vmem:[%s333 + $0x13c] sm:$0xf]
      %v2557 = vld [vmem:[%s333 + $0x140] sm:$0xf]
      %v2558 = vld [vmem:[%s333 + $0x144] sm:$0xf]
      %v2559 = vld [vmem:[%s333 + $0x148] sm:$0xf]
      %v2560 = vld [vmem:[%s333 + $0x14c] sm:$0xf]
      %v2561 = vld [vmem:[%s333 + $0x150] sm:$0xf]
      %v2562 = vld [vmem:[%s333 + $0x154] sm:$0xf]
      %v2563 = vld [vmem:[%s333 + $0x158] sm:$0xf]
      %v2564 = vld [vmem:[%s333 + $0x15c] sm:$0xf]
      %v2565 = vld [vmem:[%s333 + $0x160] sm:$0xf]
      %v2566 = vld [vmem:[%s333 + $0x164] sm:$0xf]
      %v2567 = vld [vmem:[%s333 + $0x168] sm:$0xf]
      %v2568 = vld [vmem:[%s333 + $0x16c] sm:$0xf]
      %v2569 = vld [vmem:[%s333 + $0x170] sm:$0xf]
      %v2570 = vld [vmem:[%s333 + $0x174] sm:$0xf]
      %v2571 = vld [vmem:[%s333 + $0x178] sm:$0xf]
      %v2572 = vld [vmem:[%s333 + $0x17c] sm:$0xf]
      %v2573 = vld [vmem:[%s333 + $0x180] sm:$0xf]
      %v2574 = vld [vmem:[%s333 + $0x184] sm:$0xf]
      %v2575 = vld [vmem:[%s333 + $0x188] sm:$0xf]
      %v2576 = vld [vmem:[%s333 + $0x18c] sm:$0xf]
      %v2577 = vld [vmem:[%s333 + $0x190] sm:$0xf]
      %v2578 = vld [vmem:[%s333 + $0x194] sm:$0xf]
      %v2579 = vld [vmem:[%s333 + $0x198] sm:$0xf]
      %v2580 = vld [vmem:[%s333 + $0x19c] sm:$0xf]
      %v2581 = vld [vmem:[%s333 + $0x1a0] sm:$0xf]
      %v2582 = vld [vmem:[%s333 + $0x1a4] sm:$0xf]
      %v2583 = vld [vmem:[%s333 + $0x1a8] sm:$0xf]
      %v2584 = vld [vmem:[%s333 + $0x1ac] sm:$0xf]
      %v2585 = vld [vmem:[%s333 + $0x1b0] sm:$0xf]
      %v2586 = vld [vmem:[%s333 + $0x1b4] sm:$0xf]
      %v2587 = vld [vmem:[%s333 + $0x1b8] sm:$0xf]
      %v2588 = vld [vmem:[%s333 + $0x1bc] sm:$0xf]
      %v2589 = vld [vmem:[%s333 + $0x1c0] sm:$0xf]
      %v2590 = vld [vmem:[%s333 + $0x1c4] sm:$0xf]
      %v2591 = vld [vmem:[%s333 + $0x1c8] sm:$0xf]
      %v2592 = vld [vmem:[%s333 + $0x1cc] sm:$0xf]
      %v2593 = vld [vmem:[%s333 + $0x1d0] sm:$0xf]
      %v2594 = vld [vmem:[%s333 + $0x1d4] sm:$0xf]
      %v2595 = vld [vmem:[%s333 + $0x1d8] sm:$0xf]
      %v2596 = vld [vmem:[%s333 + $0x1dc] sm:$0xf]
      %v2597 = vld [vmem:[%s333 + $0x1e0] sm:$0xf]
      %v2598 = vld [vmem:[%s333 + $0x1e4] sm:$0xf]
      %v2599 = vld [vmem:[%s333 + $0x1e8] sm:$0xf]
      %v2600 = vld [vmem:[%s333 + $0x1ec] sm:$0xf]
      %v2601 = vld [vmem:[%s333 + $0x1f0] sm:$0xf]
      %v2602 = vld [vmem:[%s333 + $0x1f4] sm:$0xf]
      %v2603 = vld [vmem:[%s333 + $0x1f8] sm:$0xf]
      %v2604 = vld [vmem:[%s333 + $0x1fc] sm:$0xf]
      %v2605 = vld [vmem:[%s333 + $0x200] sm:$0xf]
      %v2606 = vld [vmem:[%s333 + $0x204] sm:$0xf]
      %v2607 = vld [vmem:[%s333 + $0x208] sm:$0xf]
      %v2608 = vld [vmem:[%s333 + $0x20c] sm:$0xf]
      %v2609 = vld [vmem:[%s333 + $0x210] sm:$0xf]
      %v2610 = vld [vmem:[%s333 + $0x214] sm:$0xf]
      %v2611 = vld [vmem:[%s333 + $0x218] sm:$0xf]
      %v2612 = vld [vmem:[%s333 + $0x21c] sm:$0xf]
      %v2613 = vld [vmem:[%s333 + $0x220] sm:$0xf]
      %v2614 = vld [vmem:[%s333 + $0x224] sm:$0xf]
      %v2615 = vld [vmem:[%s333 + $0x228] sm:$0xf]
      %v2616 = vld [vmem:[%s333 + $0x22c] sm:$0xf]
      %v2617 = vld [vmem:[%s333 + $0x230] sm:$0xf]
      %v2618 = vld [vmem:[%s333 + $0x234] sm:$0xf]
      %v2619 = vld [vmem:[%s333 + $0x238] sm:$0xf]
      %v2620 = vld [vmem:[%s333 + $0x23c] sm:$0xf]
      %v2621 = vld [vmem:[%s333 + $0x240] sm:$0xf]
      %v2622 = vld [vmem:[%s333 + $0x244] sm:$0xf]
      %v2623 = vld [vmem:[%s333 + $0x248] sm:$0xf]
      %v2624 = vld [vmem:[%s333 + $0x24c] sm:$0xf]
      %v2625 = vld [vmem:[%s333 + $0x250] sm:$0xf]
      %v2626 = vld [vmem:[%s333 + $0x254] sm:$0xf]
      %v2627 = vld [vmem:[%s333 + $0x258] sm:$0xf]
      %v2628 = vld [vmem:[%s333 + $0x25c] sm:$0xf]
      %v2629 = vld [vmem:[%s333 + $0x260] sm:$0xf]
      %v2630 = vld [vmem:[%s333 + $0x264] sm:$0xf]
      %v2631 = vld [vmem:[%s333 + $0x268] sm:$0xf]
      %v2632 = vld [vmem:[%s333 + $0x26c] sm:$0xf]
      %v2633 = vld [vmem:[%s333 + $0x270] sm:$0xf]
      %v2634 = vld [vmem:[%s333 + $0x274] sm:$0xf]
      %v2635 = vld [vmem:[%s333 + $0x278] sm:$0xf]
      %v2636 = vld [vmem:[%s333 + $0x27c] sm:$0xf]
      %v2637 = vld [vmem:[%s333 + $0x280] sm:$0xf]
      %v2638 = vld [vmem:[%s333 + $0x284] sm:$0xf]
      %v2639 = vld [vmem:[%s333 + $0x288] sm:$0xf]
      %v2640 = vld [vmem:[%s333 + $0x28c] sm:$0xf]
      %v2641 = vld [vmem:[%s333 + $0x290] sm:$0xf]
      %v2642 = vld [vmem:[%s333 + $0x294] sm:$0xf]
      %v2643 = vld [vmem:[%s333 + $0x298] sm:$0xf]
      %v2644 = vld [vmem:[%s333 + $0x29c] sm:$0xf]
      %v2645 = vld [vmem:[%s333 + $0x2a0] sm:$0xf]
      %v2646 = vld [vmem:[%s333 + $0x2a4] sm:$0xf]
      %v2647 = vld [vmem:[%s333 + $0x2a8] sm:$0xf]
      %v2648 = vld [vmem:[%s333 + $0x2ac] sm:$0xf]
      %v2649 = vld [vmem:[%s333 + $0x2b0] sm:$0xf]
      %v2650 = vld [vmem:[%s333 + $0x2b4] sm:$0xf]
      %v2651 = vld [vmem:[%s333 + $0x2b8] sm:$0xf]
      %v2652 = vld [vmem:[%s333 + $0x2bc] sm:$0xf]
      %v2653 = vld [vmem:[%s333 + $0x2c0] sm:$0xf]
      %v2654 = vld [vmem:[%s333 + $0x2c4] sm:$0xf]
      %v2655 = vld [vmem:[%s333 + $0x2c8] sm:$0xf]
      %v2656 = vld [vmem:[%s333 + $0x2cc] sm:$0xf]
      %v2657 = vld [vmem:[%s333 + $0x2d0] sm:$0xf]
      %v2658 = vld [vmem:[%s333 + $0x2d4] sm:$0xf]
      %v2659 = vld [vmem:[%s333 + $0x2d8] sm:$0xf]
      %v2660 = vld [vmem:[%s333 + $0x2dc] sm:$0xf]
      %v2661 = vld [vmem:[%s333 + $0x2e0] sm:$0xf]
      %v2662 = vld [vmem:[%s333 + $0x2e4] sm:$0xf]
      %v2663 = vld [vmem:[%s333 + $0x2e8] sm:$0xf]
      %v2664 = vld [vmem:[%s333 + $0x2ec] sm:$0xf]
      %v2665 = vld [vmem:[%s333 + $0x2f0] sm:$0xf]
      %v2666 = vld [vmem:[%s333 + $0x2f4] sm:$0xf]
      %v2667 = vld [vmem:[%s333 + $0x2f8] sm:$0xf]
      %v2668 = vld [vmem:[%s333 + $0x2fc] sm:$0xf]
      %v2669 = vld [vmem:[%s333 + $0x300] sm:$0xf]
      %v2670 = vld [vmem:[%s333 + $0x304] sm:$0xf]
      %v2671 = vld [vmem:[%s333 + $0x308] sm:$0xf]
      %v2672 = vld [vmem:[%s333 + $0x30c] sm:$0xf]
      %v2673 = vld [vmem:[%s333 + $0x310] sm:$0xf]
      %v2674 = vld [vmem:[%s333 + $0x314] sm:$0xf]
      %v2675 = vld [vmem:[%s333 + $0x318] sm:$0xf]
      %v2676 = vld [vmem:[%s333 + $0x31c] sm:$0xf]
      %v2677 = vld [vmem:[%s333 + $0x320] sm:$0xf]
      %v2678 = vld [vmem:[%s333 + $0x324] sm:$0xf]
      %v2679 = vld [vmem:[%s333 + $0x328] sm:$0xf]
      %v2680 = vld [vmem:[%s333 + $0x32c] sm:$0xf]
      %v2681 = vld [vmem:[%s333 + $0x330] sm:$0xf]
      %v2682 = vld [vmem:[%s333 + $0x334] sm:$0xf]
      %v2683 = vld [vmem:[%s333 + $0x338] sm:$0xf]
      %v2684 = vld [vmem:[%s333 + $0x33c] sm:$0xf]
      %v2685 = vld [vmem:[%s333 + $0x340] sm:$0xf]
      %v2686 = vld [vmem:[%s333 + $0x344] sm:$0xf]
      %v2687 = vld [vmem:[%s333 + $0x348] sm:$0xf]
      %v2688 = vld [vmem:[%s333 + $0x34c] sm:$0xf]
      %v2689 = vld [vmem:[%s333 + $0x350] sm:$0xf]
      %v2690 = vld [vmem:[%s333 + $0x354] sm:$0xf]
      %v2691 = vld [vmem:[%s333 + $0x358] sm:$0xf]
      %v2692 = vld [vmem:[%s333 + $0x35c] sm:$0xf]
      %v2693 = vld [vmem:[%s333 + $0x360] sm:$0xf]
      %v2694 = vld [vmem:[%s333 + $0x364] sm:$0xf]
      %v2695 = vld [vmem:[%s333 + $0x368] sm:$0xf]
      %v2696 = vld [vmem:[%s333 + $0x36c] sm:$0xf]
      %v2697 = vld [vmem:[%s333 + $0x370] sm:$0xf]
      %v2698 = vld [vmem:[%s333 + $0x374] sm:$0xf]
      %v2699 = vld [vmem:[%s333 + $0x378] sm:$0xf]
      %v2700 = vld [vmem:[%s333 + $0x37c] sm:$0xf]
      %v2701 = vld [vmem:[%s333 + $0x380] sm:$0xf]
      %v2702 = vld [vmem:[%s333 + $0x384] sm:$0xf]
      %v2703 = vld [vmem:[%s333 + $0x388] sm:$0xf]
      %v2704 = vld [vmem:[%s333 + $0x38c] sm:$0xf]
      %v2705 = vld [vmem:[%s333 + $0x390] sm:$0xf]
      %v2706 = vld [vmem:[%s333 + $0x394] sm:$0xf]
      %v2707 = vld [vmem:[%s333 + $0x398] sm:$0xf]
      %v2708 = vld [vmem:[%s333 + $0x39c] sm:$0xf]
      %v2709 = vld [vmem:[%s333 + $0x3a0] sm:$0xf]
      %v2710 = vld [vmem:[%s333 + $0x3a4] sm:$0xf]
      %v2711 = vld [vmem:[%s333 + $0x3a8] sm:$0xf]
      %v2712 = vld [vmem:[%s333 + $0x3ac] sm:$0xf]
      %v2713 = vld [vmem:[%s333 + $0x3b0] sm:$0xf]
      %v2714 = vld [vmem:[%s333 + $0x3b4] sm:$0xf]
      %v2715 = vld [vmem:[%s333 + $0x3b8] sm:$0xf]
      %v2716 = vld [vmem:[%s333 + $0x3bc] sm:$0xf]
      %v2717 = vld [vmem:[%s333 + $0x3c0] sm:$0xf]
      %v2718 = vld [vmem:[%s333 + $0x3c4] sm:$0xf]
      %v2719 = vld [vmem:[%s333 + $0x3c8] sm:$0xf]
      %v2720 = vld [vmem:[%s333 + $0x3cc] sm:$0xf]
      %v2721 = vld [vmem:[%s333 + $0x3d0] sm:$0xf]
      %v2722 = vld [vmem:[%s333 + $0x3d4] sm:$0xf]
      %v2723 = vld [vmem:[%s333 + $0x3d8] sm:$0xf]
      %v2724 = vld [vmem:[%s333 + $0x3dc] sm:$0xf]
      %v2725 = vld [vmem:[%s333 + $0x3e0] sm:$0xf]
      %v2726 = vld [vmem:[%s333 + $0x3e4] sm:$0xf]
      %v2727 = vld [vmem:[%s333 + $0x3e8] sm:$0xf]
      %v2728 = vld [vmem:[%s333 + $0x3ec] sm:$0xf]
      %v2729 = vld [vmem:[%s333 + $0x3f0] sm:$0xf]
      %v2730 = vld [vmem:[%s333 + $0x3f4] sm:$0xf]
      %v2731 = vld [vmem:[%s333 + $0x3f8] sm:$0xf]
      %v2732 = vld [vmem:[%s333 + $0x3fc] sm:$0xf]
      %v2733 = vld [vmem:[%s333 + $0x400] sm:$0xf]
      %v2734 = vld [vmem:[%s333 + $0x404] sm:$0xf]
      %v2735 = vld [vmem:[%s333 + $0x408] sm:$0xf]
      %v2736 = vld [vmem:[%s333 + $0x40c] sm:$0xf]
      %v2737 = vld [vmem:[%s333 + $0x410] sm:$0xf]
      %v2738 = vld [vmem:[%s333 + $0x414] sm:$0xf]
      %v2739 = vld [vmem:[%s333 + $0x418] sm:$0xf]
      %v2740 = vld [vmem:[%s333 + $0x41c] sm:$0xf]
      %v2741 = vld [vmem:[%s333 + $0x420] sm:$0xf]
      %v2742 = vld [vmem:[%s333 + $0x424] sm:$0xf]
      %v2743 = vld [vmem:[%s333 + $0x428] sm:$0xf]
      %v2744 = vld [vmem:[%s333 + $0x42c] sm:$0xf]
      %v2745 = vld [vmem:[%s333 + $0x430] sm:$0xf]
      %v2746 = vld [vmem:[%s333 + $0x434] sm:$0xf]
      %v2747 = vld [vmem:[%s333 + $0x438] sm:$0xf]
      %v2748 = vld [vmem:[%s333 + $0x43c] sm:$0xf]
      %v2749 = vld [vmem:[%s333 + $0x440] sm:$0xf]
      %v2750 = vld [vmem:[%s333 + $0x444] sm:$0xf]
      %v2751 = vld [vmem:[%s333 + $0x448] sm:$0xf]
      %v2752 = vld [vmem:[%s333 + $0x44c] sm:$0xf]
      %v2753 = vld [vmem:[%s333 + $0x450] sm:$0xf]
      %v2754 = vld [vmem:[%s333 + $0x454] sm:$0xf]
      %v2755 = vld [vmem:[%s333 + $0x458] sm:$0xf]
      %v2756 = vld [vmem:[%s333 + $0x45c] sm:$0xf]
      %v2757 = vld [vmem:[%s333 + $0x460] sm:$0xf]
      %v2758 = vld [vmem:[%s333 + $0x464] sm:$0xf]
      %v2759 = vld [vmem:[%s333 + $0x468] sm:$0xf]
      %v2760 = vld [vmem:[%s333 + $0x46c] sm:$0xf]
      %v2761 = vld [vmem:[%s333 + $0x470] sm:$0xf]
      %v2762 = vld [vmem:[%s333 + $0x474] sm:$0xf]
      %v2763 = vld [vmem:[%s333 + $0x478] sm:$0xf]
      %v2764 = vld [vmem:[%s333 + $0x47c] sm:$0xf]
      %v2765 = vld [vmem:[%s333 + $0x480] sm:$0xf]
      %v2766 = vld [vmem:[%s333 + $0x484] sm:$0xf]
      %v2767 = vld [vmem:[%s333 + $0x488] sm:$0xf]
      %v2768 = vld [vmem:[%s333 + $0x48c] sm:$0xf]
      %v2769 = vld [vmem:[%s333 + $0x490] sm:$0xf]
      %v2770 = vld [vmem:[%s333 + $0x494] sm:$0xf]
      %v2771 = vld [vmem:[%s333 + $0x498] sm:$0xf]
      %v2772 = vld [vmem:[%s333 + $0x49c] sm:$0xf]
      %v2773 = vld [vmem:[%s333 + $0x4a0] sm:$0xf]
      %v2774 = vld [vmem:[%s333 + $0x4a4] sm:$0xf]
      %v2775 = vld [vmem:[%s333 + $0x4a8] sm:$0xf]
      %v2776 = vld [vmem:[%s333 + $0x4ac] sm:$0xf]
      %v2777 = vld [vmem:[%s333 + $0x4b0] sm:$0xf]
      %v2778 = vld [vmem:[%s333 + $0x4b4] sm:$0xf]
      %v2779 = vld [vmem:[%s333 + $0x4b8] sm:$0xf]
      %v2780 = vld [vmem:[%s333 + $0x4bc] sm:$0xf]
      %v2781 = vld [vmem:[%s333 + $0x4c0] sm:$0xf]
      %v2782 = vld [vmem:[%s333 + $0x4c4] sm:$0xf]
      %v2783 = vld [vmem:[%s333 + $0x4c8] sm:$0xf]
      %v2784 = vld [vmem:[%s333 + $0x4cc] sm:$0xf]
      %v2785 = vld [vmem:[%s333 + $0x4d0] sm:$0xf]
      %v2786 = vld [vmem:[%s333 + $0x4d4] sm:$0xf]
      %v2787 = vld [vmem:[%s333 + $0x4d8] sm:$0xf]
      %v2788 = vld [vmem:[%s333 + $0x4dc] sm:$0xf]
      %v2789 = vld [vmem:[%s333 + $0x4e0] sm:$0xf]
      %v2790 = vld [vmem:[%s333 + $0x4e4] sm:$0xf]
      %v2791 = vld [vmem:[%s333 + $0x4e8] sm:$0xf]
      %v2792 = vld [vmem:[%s333 + $0x4ec] sm:$0xf]
      %v2793 = vld [vmem:[%s333 + $0x4f0] sm:$0xf]
      %v2794 = vld [vmem:[%s333 + $0x4f4] sm:$0xf]
      %v2795 = vld [vmem:[%s333 + $0x4f8] sm:$0xf]
      %v2796 = vld [vmem:[%s333 + $0x4fc] sm:$0xf]
      %v2797 = vld [vmem:[%s333 + $0x500] sm:$0xf]
      %v2798 = vld [vmem:[%s333 + $0x504] sm:$0xf]
      %v2799 = vld [vmem:[%s333 + $0x508] sm:$0xf]
      %v2800 = vld [vmem:[%s333 + $0x50c] sm:$0xf]
      %v2801 = vld [vmem:[%s333 + $0x510] sm:$0xf]
      %v2802 = vld [vmem:[%s333 + $0x514] sm:$0xf]
      %v2803 = vld [vmem:[%s333 + $0x518] sm:$0xf]
      %v2804 = vld [vmem:[%s333 + $0x51c] sm:$0xf]
      %v2805 = vld [vmem:[%s333 + $0x520] sm:$0xf]
      %v2806 = vld [vmem:[%s333 + $0x524] sm:$0xf]
      %v2807 = vld [vmem:[%s333 + $0x528] sm:$0xf]
      %v2808 = vld [vmem:[%s333 + $0x52c] sm:$0xf]
      %v2809 = vld [vmem:[%s333 + $0x530] sm:$0xf]
      %v2810 = vld [vmem:[%s333 + $0x534] sm:$0xf]
      %v2811 = vld [vmem:[%s333 + $0x538] sm:$0xf]
      %v2812 = vld [vmem:[%s333 + $0x53c] sm:$0xf]
      %v2813 = vld [vmem:[%s333 + $0x540] sm:$0xf]
      %v2814 = vld [vmem:[%s333 + $0x544] sm:$0xf]
      %v2815 = vld [vmem:[%s333 + $0x548] sm:$0xf]
      %v2816 = vld [vmem:[%s333 + $0x54c] sm:$0xf]
      %v2817 = vld [vmem:[%s333 + $0x550] sm:$0xf]
      %v2818 = vld [vmem:[%s333 + $0x554] sm:$0xf]
      %v2819 = vld [vmem:[%s333 + $0x558] sm:$0xf]
      %v2820 = vld [vmem:[%s333 + $0x55c] sm:$0xf]
      %v2821 = vld [vmem:[%s333 + $0x560] sm:$0xf]
      %v2822 = vld [vmem:[%s333 + $0x564] sm:$0xf]
      %v2823 = vld [vmem:[%s333 + $0x568] sm:$0xf]
      %v2824 = vld [vmem:[%s333 + $0x56c] sm:$0xf]
      %v2825 = vld [vmem:[%s333 + $0x570] sm:$0xf]
      %v2826 = vld [vmem:[%s333 + $0x574] sm:$0xf]
      %v2827 = vld [vmem:[%s333 + $0x578] sm:$0xf]
      %v2828 = vld [vmem:[%s333 + $0x57c] sm:$0xf]
      %v2829 = vld [vmem:[%s333 + $0x580] sm:$0xf]
      %v2830 = vld [vmem:[%s333 + $0x584] sm:$0xf]
      %v2831 = vld [vmem:[%s333 + $0x588] sm:$0xf]
      %v2832 = vld [vmem:[%s333 + $0x58c] sm:$0xf]
      %v2833 = vld [vmem:[%s333 + $0x590] sm:$0xf]
      %v2834 = vld [vmem:[%s333 + $0x594] sm:$0xf]
      %v2835 = vld [vmem:[%s333 + $0x598] sm:$0xf]
      %v2836 = vld [vmem:[%s333 + $0x59c] sm:$0xf]
      %v2837 = vld [vmem:[%s333 + $0x5a0] sm:$0xf]
      %v2838 = vld [vmem:[%s333 + $0x5a4] sm:$0xf]
      %v2839 = vld [vmem:[%s333 + $0x5a8] sm:$0xf]
      %v2840 = vld [vmem:[%s333 + $0x5ac] sm:$0xf]
      %v2841 = vld [vmem:[%s333 + $0x5b0] sm:$0xf]
      %v2842 = vld [vmem:[%s333 + $0x5b4] sm:$0xf]
      %v2843 = vld [vmem:[%s333 + $0x5b8] sm:$0xf]
      %v2844 = vld [vmem:[%s333 + $0x5bc] sm:$0xf]
      %v2845 = vld [vmem:[%s333 + $0x5c0] sm:$0xf]
      %v2846 = vld [vmem:[%s333 + $0x5c4] sm:$0xf]
      %v2847 = vld [vmem:[%s333 + $0x5c8] sm:$0xf]
      %v2848 = vld [vmem:[%s333 + $0x5cc] sm:$0xf]
      %v2849 = vld [vmem:[%s333 + $0x5d0] sm:$0xf]
      %v2850 = vld [vmem:[%s333 + $0x5d4] sm:$0xf]
      %v2851 = vld [vmem:[%s333 + $0x5d8] sm:$0xf]
      %v2852 = vld [vmem:[%s333 + $0x5dc] sm:$0xf]
      %v2853 = vld [vmem:[%s333 + $0x5e0] sm:$0xf]
      %v2854 = vld [vmem:[%s333 + $0x5e4] sm:$0xf]
      %v2855 = vld [vmem:[%s333 + $0x5e8] sm:$0xf]
      %v2856 = vld [vmem:[%s333 + $0x5ec] sm:$0xf]
      %v2857 = vld [vmem:[%s333 + $0x5f0] sm:$0xf]
      %v2858 = vld [vmem:[%s333 + $0x5f4] sm:$0xf]
      %v2859 = vld [vmem:[%s333 + $0x5f8] sm:$0xf]
      %v2860 = vld [vmem:[%s333 + $0x5fc] sm:$0xf]
      %v2861 = vld [vmem:[%s333 + $0x600] sm:$0xf]
      %v2862 = vld [vmem:[%s333 + $0x604] sm:$0xf]
      %v2863 = vld [vmem:[%s333 + $0x608] sm:$0xf]
      %v2864 = vld [vmem:[%s333 + $0x60c] sm:$0xf]
      %v2865 = vld [vmem:[%s333 + $0x610] sm:$0xf]
      %v2866 = vld [vmem:[%s333 + $0x614] sm:$0xf]
      %v2867 = vld [vmem:[%s333 + $0x618] sm:$0xf]
      %v2868 = vld [vmem:[%s333 + $0x61c] sm:$0xf]
      %v2869 = vld [vmem:[%s333 + $0x620] sm:$0xf]
      %v2870 = vld [vmem:[%s333 + $0x624] sm:$0xf]
      %v2871 = vld [vmem:[%s333 + $0x628] sm:$0xf]
      %v2872 = vld [vmem:[%s333 + $0x62c] sm:$0xf]
      %v2873 = vld [vmem:[%s333 + $0x630] sm:$0xf]
      %v2874 = vld [vmem:[%s333 + $0x634] sm:$0xf]
      %v2875 = vld [vmem:[%s333 + $0x638] sm:$0xf]
      %v2876 = vld [vmem:[%s333 + $0x63c] sm:$0xf]
      %v2877 = vld [vmem:[%s333 + $0x640] sm:$0xf]
      %v2878 = vld [vmem:[%s333 + $0x644] sm:$0xf]
      %v2879 = vld [vmem:[%s333 + $0x648] sm:$0xf]
      %v2880 = vld [vmem:[%s333 + $0x64c] sm:$0xf]
      %v2881 = vld [vmem:[%s333 + $0x650] sm:$0xf]
      %v2882 = vld [vmem:[%s333 + $0x654] sm:$0xf]
      %v2883 = vld [vmem:[%s333 + $0x658] sm:$0xf]
      %v2884 = vld [vmem:[%s333 + $0x65c] sm:$0xf]
      %v2885 = vld [vmem:[%s333 + $0x660] sm:$0xf]
      %v2886 = vld [vmem:[%s333 + $0x664] sm:$0xf]
      %v2887 = vld [vmem:[%s333 + $0x668] sm:$0xf]
      %v2888 = vld [vmem:[%s333 + $0x66c] sm:$0xf]
      %v2889 = vld [vmem:[%s333 + $0x670] sm:$0xf]
      %v2890 = vld [vmem:[%s333 + $0x674] sm:$0xf]
      %v2891 = vld [vmem:[%s333 + $0x678] sm:$0xf]
      %v2892 = vld [vmem:[%s333 + $0x67c] sm:$0xf]
      %v2893 = vld [vmem:[%s333 + $0x680] sm:$0xf]
      %v2894 = vld [vmem:[%s333 + $0x684] sm:$0xf]
      %v2895 = vld [vmem:[%s333 + $0x688] sm:$0xf]
      %v2896 = vld [vmem:[%s333 + $0x68c] sm:$0xf]
      %v2897 = vld [vmem:[%s333 + $0x690] sm:$0xf]
      %v2898 = vld [vmem:[%s333 + $0x694] sm:$0xf]
      %v2899 = vld [vmem:[%s333 + $0x698] sm:$0xf]
      %v2900 = vld [vmem:[%s333 + $0x69c] sm:$0xf]
      %v2901 = vld [vmem:[%s333 + $0x6a0] sm:$0xf]
      %v2902 = vld [vmem:[%s333 + $0x6a4] sm:$0xf]
      %v2903 = vld [vmem:[%s333 + $0x6a8] sm:$0xf]
      %v2904 = vld [vmem:[%s333 + $0x6ac] sm:$0xf]
      %v2905 = vld [vmem:[%s333 + $0x6b0] sm:$0xf]
      %v2906 = vld [vmem:[%s333 + $0x6b4] sm:$0xf]
      %v2907 = vld [vmem:[%s333 + $0x6b8] sm:$0xf]
      %v2908 = vld [vmem:[%s333 + $0x6bc] sm:$0xf]
      %v2909 = vld [vmem:[%s333 + $0x6c0] sm:$0xf]
      %v2910 = vld [vmem:[%s333 + $0x6c4] sm:$0xf]
      %v2911 = vld [vmem:[%s333 + $0x6c8] sm:$0xf]
      %v2912 = vld [vmem:[%s333 + $0x6cc] sm:$0xf]
      %v2913 = vld [vmem:[%s333 + $0x6d0] sm:$0xf]
      %v2914 = vld [vmem:[%s333 + $0x6d4] sm:$0xf]
      %v2915 = vld [vmem:[%s333 + $0x6d8] sm:$0xf]
      %v2916 = vld [vmem:[%s333 + $0x6dc] sm:$0xf]
      %v2917 = vld [vmem:[%s333 + $0x6e0] sm:$0xf]
      %v2918 = vld [vmem:[%s333 + $0x6e4] sm:$0xf]
      %v2919 = vld [vmem:[%s333 + $0x6e8] sm:$0xf]
      %v2920 = vld [vmem:[%s333 + $0x6ec] sm:$0xf]
      %v2921 = vld [vmem:[%s333 + $0x6f0] sm:$0xf]
      %v2922 = vld [vmem:[%s333 + $0x6f4] sm:$0xf]
      %v2923 = vld [vmem:[%s333 + $0x6f8] sm:$0xf]
      %v2924 = vld [vmem:[%s333 + $0x6fc] sm:$0xf]
      %v2925 = vld [vmem:[%s333 + $0x700] sm:$0xf]
      %v2926 = vld [vmem:[%s333 + $0x704] sm:$0xf]
      %v2927 = vld [vmem:[%s333 + $0x708] sm:$0xf]
      %v2928 = vld [vmem:[%s333 + $0x70c] sm:$0xf]
      %v2929 = vld [vmem:[%s333 + $0x710] sm:$0xf]
      %v2930 = vld [vmem:[%s333 + $0x714] sm:$0xf]
      %v2931 = vld [vmem:[%s333 + $0x718] sm:$0xf]
      %v2932 = vld [vmem:[%s333 + $0x71c] sm:$0xf]
      %v2933 = vld [vmem:[%s333 + $0x720] sm:$0xf]
      %v2934 = vld [vmem:[%s333 + $0x724] sm:$0xf]
      %v2935 = vld [vmem:[%s333 + $0x728] sm:$0xf]
      %v2936 = vld [vmem:[%s333 + $0x72c] sm:$0xf]
      %v2937 = vld [vmem:[%s333 + $0x730] sm:$0xf]
      %v2938 = vld [vmem:[%s333 + $0x734] sm:$0xf]
      %v2939 = vld [vmem:[%s333 + $0x738] sm:$0xf]
      %v2940 = vld [vmem:[%s333 + $0x73c] sm:$0xf]
      %v2941 = vld [vmem:[%s333 + $0x740] sm:$0xf]
      %v2942 = vld [vmem:[%s333 + $0x744] sm:$0xf]
      %v2943 = vld [vmem:[%s333 + $0x748] sm:$0xf]
      %v2944 = vld [vmem:[%s333 + $0x74c] sm:$0xf]
      %v2945 = vld [vmem:[%s333 + $0x750] sm:$0xf]
      %v2946 = vld [vmem:[%s333 + $0x754] sm:$0xf]
      %v2947 = vld [vmem:[%s333 + $0x758] sm:$0xf]
      %v2948 = vld [vmem:[%s333 + $0x75c] sm:$0xf]
      %v2949 = vld [vmem:[%s333 + $0x760] sm:$0xf]
      %v2950 = vld [vmem:[%s333 + $0x764] sm:$0xf]
      %v2951 = vld [vmem:[%s333 + $0x768] sm:$0xf]
      %v2952 = vld [vmem:[%s333 + $0x76c] sm:$0xf]
      %v2953 = vld [vmem:[%s333 + $0x770] sm:$0xf]
      %v2954 = vld [vmem:[%s333 + $0x774] sm:$0xf]
      %v2955 = vld [vmem:[%s333 + $0x778] sm:$0xf]
      %v2956 = vld [vmem:[%s333 + $0x77c] sm:$0xf]
      %v2957 = vld [vmem:[%s333 + $0x780] sm:$0xf]
      %v2958 = vld [vmem:[%s333 + $0x784] sm:$0xf]
      %v2959 = vld [vmem:[%s333 + $0x788] sm:$0xf]
      %v2960 = vld [vmem:[%s333 + $0x78c] sm:$0xf]
      %v2961 = vld [vmem:[%s333 + $0x790] sm:$0xf]
      %v2962 = vld [vmem:[%s333 + $0x794] sm:$0xf]
      %v2963 = vld [vmem:[%s333 + $0x798] sm:$0xf]
      %v2964 = vld [vmem:[%s333 + $0x79c] sm:$0xf]
      %v2965 = vld [vmem:[%s333 + $0x7a0] sm:$0xf]
      %v2966 = vld [vmem:[%s333 + $0x7a4] sm:$0xf]
      %v2967 = vld [vmem:[%s333 + $0x7a8] sm:$0xf]
      %v2968 = vld [vmem:[%s333 + $0x7ac] sm:$0xf]
      %v2969 = vld [vmem:[%s333 + $0x7b0] sm:$0xf]
      %v2970 = vld [vmem:[%s333 + $0x7b4] sm:$0xf]
      %v2971 = vld [vmem:[%s333 + $0x7b8] sm:$0xf]
      %v2972 = vld [vmem:[%s333 + $0x7bc] sm:$0xf]
      %v2973 = vld [vmem:[%s333 + $0x7c0] sm:$0xf]
      %v2974 = vld [vmem:[%s333 + $0x7c4] sm:$0xf]
      %v2975 = vld [vmem:[%s333 + $0x7c8] sm:$0xf]
      %v2976 = vld [vmem:[%s333 + $0x7cc] sm:$0xf]
      %v2977 = vld [vmem:[%s333 + $0x7d0] sm:$0xf]
      %v2978 = vld [vmem:[%s333 + $0x7d4] sm:$0xf]
      %v2979 = vld [vmem:[%s333 + $0x7d8] sm:$0xf]
      %v2980 = vld [vmem:[%s333 + $0x7dc] sm:$0xf]
      %v2981 = vld [vmem:[%s333 + $0x7e0] sm:$0xf]
      %v2982 = vld [vmem:[%s333 + $0x7e4] sm:$0xf]
      %v2983 = vld [vmem:[%s333 + $0x7e8] sm:$0xf]
      %v2984 = vld [vmem:[%s333 + $0x7ec] sm:$0xf]
      %v2985 = vld [vmem:[%s333 + $0x7f0] sm:$0xf]
      %v2986 = vld [vmem:[%s333 + $0x7f4] sm:$0xf]
      %v2987 = vld [vmem:[%s333 + $0x7f8] sm:$0xf]
      %v2988 = vld [vmem:[%s333 + $0x7fc] sm:$0xf]
      %v2989 = vld [vmem:[%s336] sm:$0x1]
      %v2991 = vlaneseq
      %v2992 = vshrl.u32 %v2991, 7
      %v2993 = vsub.s32 0, %v2992
      %v2994 = vrot.slane %v2989, %v2993
      %v3508 = vunpack.c.l.b16 %v2477
      %v3509 = vunpack.c.l.b16 %v2478
      %v3510 = vunpack.c.l.b16 %v2479
      %v3511 = vunpack.c.l.b16 %v2480
      %v3512 = vunpack.c.l.b16 %v2481
      %v3513 = vunpack.c.l.b16 %v2482
      %v3514 = vunpack.c.l.b16 %v2483
      %v3515 = vunpack.c.l.b16 %v2484
      %v3516 = vunpack.c.l.b16 %v2485
      %v3517 = vunpack.c.l.b16 %v2486
      %v3518 = vunpack.c.l.b16 %v2487
      %v3519 = vunpack.c.l.b16 %v2488
      %v3520 = vunpack.c.l.b16 %v2489
      %v3521 = vunpack.c.l.b16 %v2490
      %v3522 = vunpack.c.l.b16 %v2491
      %v3523 = vunpack.c.l.b16 %v2492
      %v3524 = vunpack.c.l.b16 %v2493
      %v3525 = vunpack.c.l.b16 %v2494
      %v3526 = vunpack.c.l.b16 %v2495
      %v3527 = vunpack.c.l.b16 %v2496
      %v3528 = vunpack.c.l.b16 %v2497
      %v3529 = vunpack.c.l.b16 %v2498
      %v3530 = vunpack.c.l.b16 %v2499
      %v3531 = vunpack.c.l.b16 %v2500
      %v3532 = vunpack.c.l.b16 %v2501
      %v3533 = vunpack.c.l.b16 %v2502
      %v3534 = vunpack.c.l.b16 %v2503
      %v3535 = vunpack.c.l.b16 %v2504
      %v3536 = vunpack.c.l.b16 %v2505
      %v3537 = vunpack.c.l.b16 %v2506
      %v3538 = vunpack.c.l.b16 %v2507
      %v3539 = vunpack.c.l.b16 %v2508
      %v3540 = vunpack.c.l.b16 %v2509
      %v3541 = vunpack.c.l.b16 %v2510
      %v3542 = vunpack.c.l.b16 %v2511
      %v3543 = vunpack.c.l.b16 %v2512
      %v3544 = vunpack.c.l.b16 %v2513
      %v3545 = vunpack.c.l.b16 %v2514
      %v3546 = vunpack.c.l.b16 %v2515
      %v3547 = vunpack.c.l.b16 %v2516
      %v3548 = vunpack.c.l.b16 %v2517
      %v3549 = vunpack.c.l.b16 %v2518
      %v3550 = vunpack.c.l.b16 %v2519
      %v3551 = vunpack.c.l.b16 %v2520
      %v3552 = vunpack.c.l.b16 %v2521
      %v3553 = vunpack.c.l.b16 %v2522
      %v3554 = vunpack.c.l.b16 %v2523
      %v3555 = vunpack.c.l.b16 %v2524
      %v3556 = vunpack.c.l.b16 %v2525
      %v3557 = vunpack.c.l.b16 %v2526
      %v3558 = vunpack.c.l.b16 %v2527
      %v3559 = vunpack.c.l.b16 %v2528
      %v3560 = vunpack.c.l.b16 %v2529
      %v3561 = vunpack.c.l.b16 %v2530
      %v3562 = vunpack.c.l.b16 %v2531
      %v3563 = vunpack.c.l.b16 %v2532
      %v3564 = vunpack.c.l.b16 %v2533
      %v3565 = vunpack.c.l.b16 %v2534
      %v3566 = vunpack.c.l.b16 %v2535
      %v3567 = vunpack.c.l.b16 %v2536
      %v3568 = vunpack.c.l.b16 %v2537
      %v3569 = vunpack.c.l.b16 %v2538
      %v3570 = vunpack.c.l.b16 %v2539
      %v3571 = vunpack.c.l.b16 %v2540
      %v3572 = vunpack.c.l.b16 %v2541
      %v3573 = vunpack.c.l.b16 %v2542
      %v3574 = vunpack.c.l.b16 %v2543
      %v3575 = vunpack.c.l.b16 %v2544
      %v3576 = vunpack.c.l.b16 %v2545
      %v3577 = vunpack.c.l.b16 %v2546
      %v3578 = vunpack.c.l.b16 %v2547
      %v3579 = vunpack.c.l.b16 %v2548
      %v3580 = vunpack.c.l.b16 %v2549
      %v3581 = vunpack.c.l.b16 %v2550
      %v3582 = vunpack.c.l.b16 %v2551
      %v3583 = vunpack.c.l.b16 %v2552
      %v3584 = vunpack.c.l.b16 %v2553
      %v3585 = vunpack.c.l.b16 %v2554
      %v3586 = vunpack.c.l.b16 %v2555
      %v3587 = vunpack.c.l.b16 %v2556
      %v3588 = vunpack.c.l.b16 %v2557
      %v3589 = vunpack.c.l.b16 %v2558
      %v3590 = vunpack.c.l.b16 %v2559
      %v3591 = vunpack.c.l.b16 %v2560
      %v3592 = vunpack.c.l.b16 %v2561
      %v3593 = vunpack.c.l.b16 %v2562
      %v3594 = vunpack.c.l.b16 %v2563
      %v3595 = vunpack.c.l.b16 %v2564
      %v3596 = vunpack.c.l.b16 %v2565
      %v3597 = vunpack.c.l.b16 %v2566
      %v3598 = vunpack.c.l.b16 %v2567
      %v3599 = vunpack.c.l.b16 %v2568
      %v3600 = vunpack.c.l.b16 %v2569
      %v3601 = vunpack.c.l.b16 %v2570
      %v3602 = vunpack.c.l.b16 %v2571
      %v3603 = vunpack.c.l.b16 %v2572
      %v3604 = vunpack.c.l.b16 %v2573
      %v3605 = vunpack.c.l.b16 %v2574
      %v3606 = vunpack.c.l.b16 %v2575
      %v3607 = vunpack.c.l.b16 %v2576
      %v3608 = vunpack.c.l.b16 %v2577
      %v3609 = vunpack.c.l.b16 %v2578
      %v3610 = vunpack.c.l.b16 %v2579
      %v3611 = vunpack.c.l.b16 %v2580
      %v3612 = vunpack.c.l.b16 %v2581
      %v3613 = vunpack.c.l.b16 %v2582
      %v3614 = vunpack.c.l.b16 %v2583
      %v3615 = vunpack.c.l.b16 %v2584
      %v3616 = vunpack.c.l.b16 %v2585
      %v3617 = vunpack.c.l.b16 %v2586
      %v3618 = vunpack.c.l.b16 %v2587
      %v3619 = vunpack.c.l.b16 %v2588
      %v3620 = vunpack.c.l.b16 %v2589
      %v3621 = vunpack.c.l.b16 %v2590
      %v3622 = vunpack.c.l.b16 %v2591
      %v3623 = vunpack.c.l.b16 %v2592
      %v3624 = vunpack.c.l.b16 %v2593
      %v3625 = vunpack.c.l.b16 %v2594
      %v3626 = vunpack.c.l.b16 %v2595
      %v3627 = vunpack.c.l.b16 %v2596
      %v3628 = vunpack.c.l.b16 %v2597
      %v3629 = vunpack.c.l.b16 %v2598
      %v3630 = vunpack.c.l.b16 %v2599
      %v3631 = vunpack.c.l.b16 %v2600
      %v3632 = vunpack.c.l.b16 %v2601
      %v3633 = vunpack.c.l.b16 %v2602
      %v3634 = vunpack.c.l.b16 %v2603
      %v3635 = vunpack.c.l.b16 %v2604
      %v3636 = vunpack.c.l.b16 %v2605
      %v3637 = vunpack.c.l.b16 %v2606
      %v3638 = vunpack.c.l.b16 %v2607
      %v3639 = vunpack.c.l.b16 %v2608
      %v3640 = vunpack.c.l.b16 %v2609
      %v3641 = vunpack.c.l.b16 %v2610
      %v3642 = vunpack.c.l.b16 %v2611
      %v3643 = vunpack.c.l.b16 %v2612
      %v3644 = vunpack.c.l.b16 %v2613
      %v3645 = vunpack.c.l.b16 %v2614
      %v3646 = vunpack.c.l.b16 %v2615
      %v3647 = vunpack.c.l.b16 %v2616
      %v3648 = vunpack.c.l.b16 %v2617
      %v3649 = vunpack.c.l.b16 %v2618
      %v3650 = vunpack.c.l.b16 %v2619
      %v3651 = vunpack.c.l.b16 %v2620
      %v3652 = vunpack.c.l.b16 %v2621
      %v3653 = vunpack.c.l.b16 %v2622
      %v3654 = vunpack.c.l.b16 %v2623
      %v3655 = vunpack.c.l.b16 %v2624
      %v3656 = vunpack.c.l.b16 %v2625
      %v3657 = vunpack.c.l.b16 %v2626
      %v3658 = vunpack.c.l.b16 %v2627
      %v3659 = vunpack.c.l.b16 %v2628
      %v3660 = vunpack.c.l.b16 %v2629
      %v3661 = vunpack.c.l.b16 %v2630
      %v3662 = vunpack.c.l.b16 %v2631
      %v3663 = vunpack.c.l.b16 %v2632
      %v3664 = vunpack.c.l.b16 %v2633
      %v3665 = vunpack.c.l.b16 %v2634
      %v3666 = vunpack.c.l.b16 %v2635
      %v3667 = vunpack.c.l.b16 %v2636
      %v3668 = vunpack.c.l.b16 %v2637
      %v3669 = vunpack.c.l.b16 %v2638
      %v3670 = vunpack.c.l.b16 %v2639
      %v3671 = vunpack.c.l.b16 %v2640
      %v3672 = vunpack.c.l.b16 %v2641
      %v3673 = vunpack.c.l.b16 %v2642
      %v3674 = vunpack.c.l.b16 %v2643
      %v3675 = vunpack.c.l.b16 %v2644
      %v3676 = vunpack.c.l.b16 %v2645
      %v3677 = vunpack.c.l.b16 %v2646
      %v3678 = vunpack.c.l.b16 %v2647
      %v3679 = vunpack.c.l.b16 %v2648
      %v3680 = vunpack.c.l.b16 %v2649
      %v3681 = vunpack.c.l.b16 %v2650
      %v3682 = vunpack.c.l.b16 %v2651
      %v3683 = vunpack.c.l.b16 %v2652
      %v3684 = vunpack.c.l.b16 %v2653
      %v3685 = vunpack.c.l.b16 %v2654
      %v3686 = vunpack.c.l.b16 %v2655
      %v3687 = vunpack.c.l.b16 %v2656
      %v3688 = vunpack.c.l.b16 %v2657
      %v3689 = vunpack.c.l.b16 %v2658
      %v3690 = vunpack.c.l.b16 %v2659
      %v3691 = vunpack.c.l.b16 %v2660
      %v3692 = vunpack.c.l.b16 %v2661
      %v3693 = vunpack.c.l.b16 %v2662
      %v3694 = vunpack.c.l.b16 %v2663
      %v3695 = vunpack.c.l.b16 %v2664
      %v3696 = vunpack.c.l.b16 %v2665
      %v3697 = vunpack.c.l.b16 %v2666
      %v3698 = vunpack.c.l.b16 %v2667
      %v3699 = vunpack.c.l.b16 %v2668
      %v3700 = vunpack.c.l.b16 %v2669
      %v3701 = vunpack.c.l.b16 %v2670
      %v3702 = vunpack.c.l.b16 %v2671
      %v3703 = vunpack.c.l.b16 %v2672
      %v3704 = vunpack.c.l.b16 %v2673
      %v3705 = vunpack.c.l.b16 %v2674
      %v3706 = vunpack.c.l.b16 %v2675
      %v3707 = vunpack.c.l.b16 %v2676
      %v3708 = vunpack.c.l.b16 %v2677
      %v3709 = vunpack.c.l.b16 %v2678
      %v3710 = vunpack.c.l.b16 %v2679
      %v3711 = vunpack.c.l.b16 %v2680
      %v3712 = vunpack.c.l.b16 %v2681
      %v3713 = vunpack.c.l.b16 %v2682
      %v3714 = vunpack.c.l.b16 %v2683
      %v3715 = vunpack.c.l.b16 %v2684
      %v3716 = vunpack.c.l.b16 %v2685
      %v3717 = vunpack.c.l.b16 %v2686
      %v3718 = vunpack.c.l.b16 %v2687
      %v3719 = vunpack.c.l.b16 %v2688
      %v3720 = vunpack.c.l.b16 %v2689
      %v3721 = vunpack.c.l.b16 %v2690
      %v3722 = vunpack.c.l.b16 %v2691
      %v3723 = vunpack.c.l.b16 %v2692
      %v3724 = vunpack.c.l.b16 %v2693
      %v3725 = vunpack.c.l.b16 %v2694
      %v3726 = vunpack.c.l.b16 %v2695
      %v3727 = vunpack.c.l.b16 %v2696
      %v3728 = vunpack.c.l.b16 %v2697
      %v3729 = vunpack.c.l.b16 %v2698
      %v3730 = vunpack.c.l.b16 %v2699
      %v3731 = vunpack.c.l.b16 %v2700
      %v3732 = vunpack.c.l.b16 %v2701
      %v3733 = vunpack.c.l.b16 %v2702
      %v3734 = vunpack.c.l.b16 %v2703
      %v3735 = vunpack.c.l.b16 %v2704
      %v3736 = vunpack.c.l.b16 %v2705
      %v3737 = vunpack.c.l.b16 %v2706
      %v3738 = vunpack.c.l.b16 %v2707
      %v3739 = vunpack.c.l.b16 %v2708
      %v3740 = vunpack.c.l.b16 %v2709
      %v3741 = vunpack.c.l.b16 %v2710
      %v3742 = vunpack.c.l.b16 %v2711
      %v3743 = vunpack.c.l.b16 %v2712
      %v3744 = vunpack.c.l.b16 %v2713
      %v3745 = vunpack.c.l.b16 %v2714
      %v3746 = vunpack.c.l.b16 %v2715
      %v3747 = vunpack.c.l.b16 %v2716
      %v3748 = vunpack.c.l.b16 %v2717
      %v3749 = vunpack.c.l.b16 %v2718
      %v3750 = vunpack.c.l.b16 %v2719
      %v3751 = vunpack.c.l.b16 %v2720
      %v3752 = vunpack.c.l.b16 %v2721
      %v3753 = vunpack.c.l.b16 %v2722
      %v3754 = vunpack.c.l.b16 %v2723
      %v3755 = vunpack.c.l.b16 %v2724
      %v3756 = vunpack.c.l.b16 %v2725
      %v3757 = vunpack.c.l.b16 %v2726
      %v3758 = vunpack.c.l.b16 %v2727
      %v3759 = vunpack.c.l.b16 %v2728
      %v3760 = vunpack.c.l.b16 %v2729
      %v3761 = vunpack.c.l.b16 %v2730
      %v3762 = vunpack.c.l.b16 %v2731
      %v3763 = vunpack.c.l.b16 %v2732
      %v3764 = vunpack.c.l.b16 %v2733
      %v3765 = vunpack.c.l.b16 %v2734
      %v3766 = vunpack.c.l.b16 %v2735
      %v3767 = vunpack.c.l.b16 %v2736
      %v3768 = vunpack.c.l.b16 %v2737
      %v3769 = vunpack.c.l.b16 %v2738
      %v3770 = vunpack.c.l.b16 %v2739
      %v3771 = vunpack.c.l.b16 %v2740
      %v3772 = vunpack.c.l.b16 %v2741
      %v3773 = vunpack.c.l.b16 %v2742
      %v3774 = vunpack.c.l.b16 %v2743
      %v3775 = vunpack.c.l.b16 %v2744
      %v3776 = vunpack.c.l.b16 %v2745
      %v3777 = vunpack.c.l.b16 %v2746
      %v3778 = vunpack.c.l.b16 %v2747
      %v3779 = vunpack.c.l.b16 %v2748
      %v3780 = vunpack.c.l.b16 %v2749
      %v3781 = vunpack.c.l.b16 %v2750
      %v3782 = vunpack.c.l.b16 %v2751
      %v3783 = vunpack.c.l.b16 %v2752
      %v3784 = vunpack.c.l.b16 %v2753
      %v3785 = vunpack.c.l.b16 %v2754
      %v3786 = vunpack.c.l.b16 %v2755
      %v3787 = vunpack.c.l.b16 %v2756
      %v3788 = vunpack.c.l.b16 %v2757
      %v3789 = vunpack.c.l.b16 %v2758
      %v3790 = vunpack.c.l.b16 %v2759
      %v3791 = vunpack.c.l.b16 %v2760
      %v3792 = vunpack.c.l.b16 %v2761
      %v3793 = vunpack.c.l.b16 %v2762
      %v3794 = vunpack.c.l.b16 %v2763
      %v3795 = vunpack.c.l.b16 %v2764
      %v3796 = vunpack.c.l.b16 %v2765
      %v3797 = vunpack.c.l.b16 %v2766
      %v3798 = vunpack.c.l.b16 %v2767
      %v3799 = vunpack.c.l.b16 %v2768
      %v3800 = vunpack.c.l.b16 %v2769
      %v3801 = vunpack.c.l.b16 %v2770
      %v3802 = vunpack.c.l.b16 %v2771
      %v3803 = vunpack.c.l.b16 %v2772
      %v3804 = vunpack.c.l.b16 %v2773
      %v3805 = vunpack.c.l.b16 %v2774
      %v3806 = vunpack.c.l.b16 %v2775
      %v3807 = vunpack.c.l.b16 %v2776
      %v3808 = vunpack.c.l.b16 %v2777
      %v3809 = vunpack.c.l.b16 %v2778
      %v3810 = vunpack.c.l.b16 %v2779
      %v3811 = vunpack.c.l.b16 %v2780
      %v3812 = vunpack.c.l.b16 %v2781
      %v3813 = vunpack.c.l.b16 %v2782
      %v3814 = vunpack.c.l.b16 %v2783
      %v3815 = vunpack.c.l.b16 %v2784
      %v3816 = vunpack.c.l.b16 %v2785
      %v3817 = vunpack.c.l.b16 %v2786
      %v3818 = vunpack.c.l.b16 %v2787
      %v3819 = vunpack.c.l.b16 %v2788
      %v3820 = vunpack.c.l.b16 %v2789
      %v3821 = vunpack.c.l.b16 %v2790
      %v3822 = vunpack.c.l.b16 %v2791
      %v3823 = vunpack.c.l.b16 %v2792
      %v3824 = vunpack.c.l.b16 %v2793
      %v3825 = vunpack.c.l.b16 %v2794
      %v3826 = vunpack.c.l.b16 %v2795
      %v3827 = vunpack.c.l.b16 %v2796
      %v3828 = vunpack.c.l.b16 %v2797
      %v3829 = vunpack.c.l.b16 %v2798
      %v3830 = vunpack.c.l.b16 %v2799
      %v3831 = vunpack.c.l.b16 %v2800
      %v3832 = vunpack.c.l.b16 %v2801
      %v3833 = vunpack.c.l.b16 %v2802
      %v3834 = vunpack.c.l.b16 %v2803
      %v3835 = vunpack.c.l.b16 %v2804
      %v3836 = vunpack.c.l.b16 %v2805
      %v3837 = vunpack.c.l.b16 %v2806
      %v3838 = vunpack.c.l.b16 %v2807
      %v3839 = vunpack.c.l.b16 %v2808
      %v3840 = vunpack.c.l.b16 %v2809
      %v3841 = vunpack.c.l.b16 %v2810
      %v3842 = vunpack.c.l.b16 %v2811
      %v3843 = vunpack.c.l.b16 %v2812
      %v3844 = vunpack.c.l.b16 %v2813
      %v3845 = vunpack.c.l.b16 %v2814
      %v3846 = vunpack.c.l.b16 %v2815
      %v3847 = vunpack.c.l.b16 %v2816
      %v3848 = vunpack.c.l.b16 %v2817
      %v3849 = vunpack.c.l.b16 %v2818
      %v3850 = vunpack.c.l.b16 %v2819
      %v3851 = vunpack.c.l.b16 %v2820
      %v3852 = vunpack.c.l.b16 %v2821
      %v3853 = vunpack.c.l.b16 %v2822
      %v3854 = vunpack.c.l.b16 %v2823
      %v3855 = vunpack.c.l.b16 %v2824
      %v3856 = vunpack.c.l.b16 %v2825
      %v3857 = vunpack.c.l.b16 %v2826
      %v3858 = vunpack.c.l.b16 %v2827
      %v3859 = vunpack.c.l.b16 %v2828
      %v3860 = vunpack.c.l.b16 %v2829
      %v3861 = vunpack.c.l.b16 %v2830
      %v3862 = vunpack.c.l.b16 %v2831
      %v3863 = vunpack.c.l.b16 %v2832
      %v3864 = vunpack.c.l.b16 %v2833
      %v3865 = vunpack.c.l.b16 %v2834
      %v3866 = vunpack.c.l.b16 %v2835
      %v3867 = vunpack.c.l.b16 %v2836
      %v3868 = vunpack.c.l.b16 %v2837
      %v3869 = vunpack.c.l.b16 %v2838
      %v3870 = vunpack.c.l.b16 %v2839
      %v3871 = vunpack.c.l.b16 %v2840
      %v3872 = vunpack.c.l.b16 %v2841
      %v3873 = vunpack.c.l.b16 %v2842
      %v3874 = vunpack.c.l.b16 %v2843
      %v3875 = vunpack.c.l.b16 %v2844
      %v3876 = vunpack.c.l.b16 %v2845
      %v3877 = vunpack.c.l.b16 %v2846
      %v3878 = vunpack.c.l.b16 %v2847
      %v3879 = vunpack.c.l.b16 %v2848
      %v3880 = vunpack.c.l.b16 %v2849
      %v3881 = vunpack.c.l.b16 %v2850
      %v3882 = vunpack.c.l.b16 %v2851
      %v3883 = vunpack.c.l.b16 %v2852
      %v3884 = vunpack.c.l.b16 %v2853
      %v3885 = vunpack.c.l.b16 %v2854
      %v3886 = vunpack.c.l.b16 %v2855
      %v3887 = vunpack.c.l.b16 %v2856
      %v3888 = vunpack.c.l.b16 %v2857
      %v3889 = vunpack.c.l.b16 %v2858
      %v3890 = vunpack.c.l.b16 %v2859
      %v3891 = vunpack.c.l.b16 %v2860
      %v3892 = vunpack.c.l.b16 %v2861
      %v3893 = vunpack.c.l.b16 %v2862
      %v3894 = vunpack.c.l.b16 %v2863
      %v3895 = vunpack.c.l.b16 %v2864
      %v3896 = vunpack.c.l.b16 %v2865
      %v3897 = vunpack.c.l.b16 %v2866
      %v3898 = vunpack.c.l.b16 %v2867
      %v3899 = vunpack.c.l.b16 %v2868
      %v3900 = vunpack.c.l.b16 %v2869
      %v3901 = vunpack.c.l.b16 %v2870
      %v3902 = vunpack.c.l.b16 %v2871
      %v3903 = vunpack.c.l.b16 %v2872
      %v3904 = vunpack.c.l.b16 %v2873
      %v3905 = vunpack.c.l.b16 %v2874
      %v3906 = vunpack.c.l.b16 %v2875
      %v3907 = vunpack.c.l.b16 %v2876
      %v3908 = vunpack.c.l.b16 %v2877
      %v3909 = vunpack.c.l.b16 %v2878
      %v3910 = vunpack.c.l.b16 %v2879
      %v3911 = vunpack.c.l.b16 %v2880
      %v3912 = vunpack.c.l.b16 %v2881
      %v3913 = vunpack.c.l.b16 %v2882
      %v3914 = vunpack.c.l.b16 %v2883
      %v3915 = vunpack.c.l.b16 %v2884
      %v3916 = vunpack.c.l.b16 %v2885
      %v3917 = vunpack.c.l.b16 %v2886
      %v3918 = vunpack.c.l.b16 %v2887
      %v3919 = vunpack.c.l.b16 %v2888
      %v3920 = vunpack.c.l.b16 %v2889
      %v3921 = vunpack.c.l.b16 %v2890
      %v3922 = vunpack.c.l.b16 %v2891
      %v3923 = vunpack.c.l.b16 %v2892
      %v3924 = vunpack.c.l.b16 %v2893
      %v3925 = vunpack.c.l.b16 %v2894
      %v3926 = vunpack.c.l.b16 %v2895
      %v3927 = vunpack.c.l.b16 %v2896
      %v3928 = vunpack.c.l.b16 %v2897
      %v3929 = vunpack.c.l.b16 %v2898
      %v3930 = vunpack.c.l.b16 %v2899
      %v3931 = vunpack.c.l.b16 %v2900
      %v3932 = vunpack.c.l.b16 %v2901
      %v3933 = vunpack.c.l.b16 %v2902
      %v3934 = vunpack.c.l.b16 %v2903
      %v3935 = vunpack.c.l.b16 %v2904
      %v3936 = vunpack.c.l.b16 %v2905
      %v3937 = vunpack.c.l.b16 %v2906
      %v3938 = vunpack.c.l.b16 %v2907
      %v3939 = vunpack.c.l.b16 %v2908
      %v3940 = vunpack.c.l.b16 %v2909
      %v3941 = vunpack.c.l.b16 %v2910
      %v3942 = vunpack.c.l.b16 %v2911
      %v3943 = vunpack.c.l.b16 %v2912
      %v3944 = vunpack.c.l.b16 %v2913
      %v3945 = vunpack.c.l.b16 %v2914
      %v3946 = vunpack.c.l.b16 %v2915
      %v3947 = vunpack.c.l.b16 %v2916
      %v3948 = vunpack.c.l.b16 %v2917
      %v3949 = vunpack.c.l.b16 %v2918
      %v3950 = vunpack.c.l.b16 %v2919
      %v3951 = vunpack.c.l.b16 %v2920
      %v3952 = vunpack.c.l.b16 %v2921
      %v3953 = vunpack.c.l.b16 %v2922
      %v3954 = vunpack.c.l.b16 %v2923
      %v3955 = vunpack.c.l.b16 %v2924
      %v3956 = vunpack.c.l.b16 %v2925
      %v3957 = vunpack.c.l.b16 %v2926
      %v3958 = vunpack.c.l.b16 %v2927
      %v3959 = vunpack.c.l.b16 %v2928
      %v3960 = vunpack.c.l.b16 %v2929
      %v3961 = vunpack.c.l.b16 %v2930
      %v3962 = vunpack.c.l.b16 %v2931
      %v3963 = vunpack.c.l.b16 %v2932
      %v3964 = vunpack.c.l.b16 %v2933
      %v3965 = vunpack.c.l.b16 %v2934
      %v3966 = vunpack.c.l.b16 %v2935
      %v3967 = vunpack.c.l.b16 %v2936
      %v3968 = vunpack.c.l.b16 %v2937
      %v3969 = vunpack.c.l.b16 %v2938
      %v3970 = vunpack.c.l.b16 %v2939
      %v3971 = vunpack.c.l.b16 %v2940
      %v3972 = vunpack.c.l.b16 %v2941
      %v3973 = vunpack.c.l.b16 %v2942
      %v3974 = vunpack.c.l.b16 %v2943
      %v3975 = vunpack.c.l.b16 %v2944
      %v3976 = vunpack.c.l.b16 %v2945
      %v3977 = vunpack.c.l.b16 %v2946
      %v3978 = vunpack.c.l.b16 %v2947
      %v3979 = vunpack.c.l.b16 %v2948
      %v3980 = vunpack.c.l.b16 %v2949
      %v3981 = vunpack.c.l.b16 %v2950
      %v3982 = vunpack.c.l.b16 %v2951
      %v3983 = vunpack.c.l.b16 %v2952
      %v3984 = vunpack.c.l.b16 %v2953
      %v3985 = vunpack.c.l.b16 %v2954
      %v3986 = vunpack.c.l.b16 %v2955
      %v3987 = vunpack.c.l.b16 %v2956
      %v3988 = vunpack.c.l.b16 %v2957
      %v3989 = vunpack.c.l.b16 %v2958
      %v3990 = vunpack.c.l.b16 %v2959
      %v3991 = vunpack.c.l.b16 %v2960
      %v3992 = vunpack.c.l.b16 %v2961
      %v3993 = vunpack.c.l.b16 %v2962
      %v3994 = vunpack.c.l.b16 %v2963
      %v3995 = vunpack.c.l.b16 %v2964
      %v3996 = vunpack.c.l.b16 %v2965
      %v3997 = vunpack.c.l.b16 %v2966
      %v3998 = vunpack.c.l.b16 %v2967
      %v3999 = vunpack.c.l.b16 %v2968
      %v4000 = vunpack.c.l.b16 %v2969
      %v4001 = vunpack.c.l.b16 %v2970
      %v4002 = vunpack.c.l.b16 %v2971
      %v4003 = vunpack.c.l.b16 %v2972
      %v4004 = vunpack.c.l.b16 %v2973
      %v4005 = vunpack.c.l.b16 %v2974
      %v4006 = vunpack.c.l.b16 %v2975
      %v4007 = vunpack.c.l.b16 %v2976
      %v4008 = vunpack.c.l.b16 %v2977
      %v4009 = vunpack.c.l.b16 %v2978
      %v4010 = vunpack.c.l.b16 %v2979
      %v4011 = vunpack.c.l.b16 %v2980
      %v4012 = vunpack.c.l.b16 %v2981
      %v4013 = vunpack.c.l.b16 %v2982
      %v4014 = vunpack.c.l.b16 %v2983
      %v4015 = vunpack.c.l.b16 %v2984
      %v4016 = vunpack.c.l.b16 %v2985
      %v4017 = vunpack.c.l.b16 %v2986
      %v4018 = vunpack.c.l.b16 %v2987
      %v4019 = vunpack.c.l.b16 %v2988
      %v4020 = vpack.c.b16 %v3509, %v3508
      %v4021 = vpack.c.b16 %v3511, %v3510
      %v4022 = vpack.c.b16 %v3513, %v3512
      %v4023 = vpack.c.b16 %v3515, %v3514
      %v4024 = vpack.c.b16 %v3517, %v3516
      %v4025 = vpack.c.b16 %v3519, %v3518
      %v4026 = vpack.c.b16 %v3521, %v3520
      %v4027 = vpack.c.b16 %v3523, %v3522
      %v4028 = vpack.c.b16 %v3525, %v3524
      %v4029 = vpack.c.b16 %v3527, %v3526
      %v4030 = vpack.c.b16 %v3529, %v3528
      %v4031 = vpack.c.b16 %v3531, %v3530
      %v4032 = vpack.c.b16 %v3533, %v3532
      %v4033 = vpack.c.b16 %v3535, %v3534
      %v4034 = vpack.c.b16 %v3537, %v3536
      %v4035 = vpack.c.b16 %v3539, %v3538
      %v4036 = vpack.c.b16 %v3541, %v3540
      %v4037 = vpack.c.b16 %v3543, %v3542
      %v4038 = vpack.c.b16 %v3545, %v3544
      %v4039 = vpack.c.b16 %v3547, %v3546
      %v4040 = vpack.c.b16 %v3549, %v3548
      %v4041 = vpack.c.b16 %v3551, %v3550
      %v4042 = vpack.c.b16 %v3553, %v3552
      %v4043 = vpack.c.b16 %v3555, %v3554
      %v4044 = vpack.c.b16 %v3557, %v3556
      %v4045 = vpack.c.b16 %v3559, %v3558
      %v4046 = vpack.c.b16 %v3561, %v3560
      %v4047 = vpack.c.b16 %v3563, %v3562
      %v4048 = vpack.c.b16 %v3565, %v3564
      %v4049 = vpack.c.b16 %v3567, %v3566
      %v4050 = vpack.c.b16 %v3569, %v3568
      %v4051 = vpack.c.b16 %v3571, %v3570
      %v4052 = vpack.c.b16 %v3573, %v3572
      %v4053 = vpack.c.b16 %v3575, %v3574
      %v4054 = vpack.c.b16 %v3577, %v3576
      %v4055 = vpack.c.b16 %v3579, %v3578
      %v4056 = vpack.c.b16 %v3581, %v3580
      %v4057 = vpack.c.b16 %v3583, %v3582
      %v4058 = vpack.c.b16 %v3585, %v3584
      %v4059 = vpack.c.b16 %v3587, %v3586
      %v4060 = vpack.c.b16 %v3589, %v3588
      %v4061 = vpack.c.b16 %v3591, %v3590
      %v4062 = vpack.c.b16 %v3593, %v3592
      %v4063 = vpack.c.b16 %v3595, %v3594
      %v4064 = vpack.c.b16 %v3597, %v3596
      %v4065 = vpack.c.b16 %v3599, %v3598
      %v4066 = vpack.c.b16 %v3601, %v3600
      %v4067 = vpack.c.b16 %v3603, %v3602
      %v4068 = vpack.c.b16 %v3605, %v3604
      %v4069 = vpack.c.b16 %v3607, %v3606
      %v4070 = vpack.c.b16 %v3609, %v3608
      %v4071 = vpack.c.b16 %v3611, %v3610
      %v4072 = vpack.c.b16 %v3613, %v3612
      %v4073 = vpack.c.b16 %v3615, %v3614
      %v4074 = vpack.c.b16 %v3617, %v3616
      %v4075 = vpack.c.b16 %v3619, %v3618
      %v4076 = vpack.c.b16 %v3621, %v3620
      %v4077 = vpack.c.b16 %v3623, %v3622
      %v4078 = vpack.c.b16 %v3625, %v3624
      %v4079 = vpack.c.b16 %v3627, %v3626
      %v4080 = vpack.c.b16 %v3629, %v3628
      %v4081 = vpack.c.b16 %v3631, %v3630
      %v4082 = vpack.c.b16 %v3633, %v3632
      %v4083 = vpack.c.b16 %v3635, %v3634
      %v4084 = vpack.c.b16 %v3637, %v3636
      %v4085 = vpack.c.b16 %v3639, %v3638
      %v4086 = vpack.c.b16 %v3641, %v3640
      %v4087 = vpack.c.b16 %v3643, %v3642
      %v4088 = vpack.c.b16 %v3645, %v3644
      %v4089 = vpack.c.b16 %v3647, %v3646
      %v4090 = vpack.c.b16 %v3649, %v3648
      %v4091 = vpack.c.b16 %v3651, %v3650
      %v4092 = vpack.c.b16 %v3653, %v3652
      %v4093 = vpack.c.b16 %v3655, %v3654
      %v4094 = vpack.c.b16 %v3657, %v3656
      %v4095 = vpack.c.b16 %v3659, %v3658
      %v4096 = vpack.c.b16 %v3661, %v3660
      %v4097 = vpack.c.b16 %v3663, %v3662
      %v4098 = vpack.c.b16 %v3665, %v3664
      %v4099 = vpack.c.b16 %v3667, %v3666
      %v4100 = vpack.c.b16 %v3669, %v3668
      %v4101 = vpack.c.b16 %v3671, %v3670
      %v4102 = vpack.c.b16 %v3673, %v3672
      %v4103 = vpack.c.b16 %v3675, %v3674
      %v4104 = vpack.c.b16 %v3677, %v3676
      %v4105 = vpack.c.b16 %v3679, %v3678
      %v4106 = vpack.c.b16 %v3681, %v3680
      %v4107 = vpack.c.b16 %v3683, %v3682
      %v4108 = vpack.c.b16 %v3685, %v3684
      %v4109 = vpack.c.b16 %v3687, %v3686
      %v4110 = vpack.c.b16 %v3689, %v3688
      %v4111 = vpack.c.b16 %v3691, %v3690
      %v4112 = vpack.c.b16 %v3693, %v3692
      %v4113 = vpack.c.b16 %v3695, %v3694
      %v4114 = vpack.c.b16 %v3697, %v3696
      %v4115 = vpack.c.b16 %v3699, %v3698
      %v4116 = vpack.c.b16 %v3701, %v3700
      %v4117 = vpack.c.b16 %v3703, %v3702
      %v4118 = vpack.c.b16 %v3705, %v3704
      %v4119 = vpack.c.b16 %v3707, %v3706
      %v4120 = vpack.c.b16 %v3709, %v3708
      %v4121 = vpack.c.b16 %v3711, %v3710
      %v4122 = vpack.c.b16 %v3713, %v3712
      %v4123 = vpack.c.b16 %v3715, %v3714
      %v4124 = vpack.c.b16 %v3717, %v3716
      %v4125 = vpack.c.b16 %v3719, %v3718
      %v4126 = vpack.c.b16 %v3721, %v3720
      %v4127 = vpack.c.b16 %v3723, %v3722
      %v4128 = vpack.c.b16 %v3725, %v3724
      %v4129 = vpack.c.b16 %v3727, %v3726
      %v4130 = vpack.c.b16 %v3729, %v3728
      %v4131 = vpack.c.b16 %v3731, %v3730
      %v4132 = vpack.c.b16 %v3733, %v3732
      %v4133 = vpack.c.b16 %v3735, %v3734
      %v4134 = vpack.c.b16 %v3737, %v3736
      %v4135 = vpack.c.b16 %v3739, %v3738
      %v4136 = vpack.c.b16 %v3741, %v3740
      %v4137 = vpack.c.b16 %v3743, %v3742
      %v4138 = vpack.c.b16 %v3745, %v3744
      %v4139 = vpack.c.b16 %v3747, %v3746
      %v4140 = vpack.c.b16 %v3749, %v3748
      %v4141 = vpack.c.b16 %v3751, %v3750
      %v4142 = vpack.c.b16 %v3753, %v3752
      %v4143 = vpack.c.b16 %v3755, %v3754
      %v4144 = vpack.c.b16 %v3757, %v3756
      %v4145 = vpack.c.b16 %v3759, %v3758
      %v4146 = vpack.c.b16 %v3761, %v3760
      %v4147 = vpack.c.b16 %v3763, %v3762
      %v4148 = vpack.c.b16 %v3765, %v3764
      %v4149 = vpack.c.b16 %v3767, %v3766
      %v4150 = vpack.c.b16 %v3769, %v3768
      %v4151 = vpack.c.b16 %v3771, %v3770
      %v4152 = vpack.c.b16 %v3773, %v3772
      %v4153 = vpack.c.b16 %v3775, %v3774
      %v4154 = vpack.c.b16 %v3777, %v3776
      %v4155 = vpack.c.b16 %v3779, %v3778
      %v4156 = vpack.c.b16 %v3781, %v3780
      %v4157 = vpack.c.b16 %v3783, %v3782
      %v4158 = vpack.c.b16 %v3785, %v3784
      %v4159 = vpack.c.b16 %v3787, %v3786
      %v4160 = vpack.c.b16 %v3789, %v3788
      %v4161 = vpack.c.b16 %v3791, %v3790
      %v4162 = vpack.c.b16 %v3793, %v3792
      %v4163 = vpack.c.b16 %v3795, %v3794
      %v4164 = vpack.c.b16 %v3797, %v3796
      %v4165 = vpack.c.b16 %v3799, %v3798
      %v4166 = vpack.c.b16 %v3801, %v3800
      %v4167 = vpack.c.b16 %v3803, %v3802
      %v4168 = vpack.c.b16 %v3805, %v3804
      %v4169 = vpack.c.b16 %v3807, %v3806
      %v4170 = vpack.c.b16 %v3809, %v3808
      %v4171 = vpack.c.b16 %v3811, %v3810
      %v4172 = vpack.c.b16 %v3813, %v3812
      %v4173 = vpack.c.b16 %v3815, %v3814
      %v4174 = vpack.c.b16 %v3817, %v3816
      %v4175 = vpack.c.b16 %v3819, %v3818
      %v4176 = vpack.c.b16 %v3821, %v3820
      %v4177 = vpack.c.b16 %v3823, %v3822
      %v4178 = vpack.c.b16 %v3825, %v3824
      %v4179 = vpack.c.b16 %v3827, %v3826
      %v4180 = vpack.c.b16 %v3829, %v3828
      %v4181 = vpack.c.b16 %v3831, %v3830
      %v4182 = vpack.c.b16 %v3833, %v3832
      %v4183 = vpack.c.b16 %v3835, %v3834
      %v4184 = vpack.c.b16 %v3837, %v3836
      %v4185 = vpack.c.b16 %v3839, %v3838
      %v4186 = vpack.c.b16 %v3841, %v3840
      %v4187 = vpack.c.b16 %v3843, %v3842
      %v4188 = vpack.c.b16 %v3845, %v3844
      %v4189 = vpack.c.b16 %v3847, %v3846
      %v4190 = vpack.c.b16 %v3849, %v3848
      %v4191 = vpack.c.b16 %v3851, %v3850
      %v4192 = vpack.c.b16 %v3853, %v3852
      %v4193 = vpack.c.b16 %v3855, %v3854
      %v4194 = vpack.c.b16 %v3857, %v3856
      %v4195 = vpack.c.b16 %v3859, %v3858
      %v4196 = vpack.c.b16 %v3861, %v3860
      %v4197 = vpack.c.b16 %v3863, %v3862
      %v4198 = vpack.c.b16 %v3865, %v3864
      %v4199 = vpack.c.b16 %v3867, %v3866
      %v4200 = vpack.c.b16 %v3869, %v3868
      %v4201 = vpack.c.b16 %v3871, %v3870
      %v4202 = vpack.c.b16 %v3873, %v3872
      %v4203 = vpack.c.b16 %v3875, %v3874
      %v4204 = vpack.c.b16 %v3877, %v3876
      %v4205 = vpack.c.b16 %v3879, %v3878
      %v4206 = vpack.c.b16 %v3881, %v3880
      %v4207 = vpack.c.b16 %v3883, %v3882
      %v4208 = vpack.c.b16 %v3885, %v3884
      %v4209 = vpack.c.b16 %v3887, %v3886
      %v4210 = vpack.c.b16 %v3889, %v3888
      %v4211 = vpack.c.b16 %v3891, %v3890
      %v4212 = vpack.c.b16 %v3893, %v3892
      %v4213 = vpack.c.b16 %v3895, %v3894
      %v4214 = vpack.c.b16 %v3897, %v3896
      %v4215 = vpack.c.b16 %v3899, %v3898
      %v4216 = vpack.c.b16 %v3901, %v3900
      %v4217 = vpack.c.b16 %v3903, %v3902
      %v4218 = vpack.c.b16 %v3905, %v3904
      %v4219 = vpack.c.b16 %v3907, %v3906
      %v4220 = vpack.c.b16 %v3909, %v3908
      %v4221 = vpack.c.b16 %v3911, %v3910
      %v4222 = vpack.c.b16 %v3913, %v3912
      %v4223 = vpack.c.b16 %v3915, %v3914
      %v4224 = vpack.c.b16 %v3917, %v3916
      %v4225 = vpack.c.b16 %v3919, %v3918
      %v4226 = vpack.c.b16 %v3921, %v3920
      %v4227 = vpack.c.b16 %v3923, %v3922
      %v4228 = vpack.c.b16 %v3925, %v3924
      %v4229 = vpack.c.b16 %v3927, %v3926
      %v4230 = vpack.c.b16 %v3929, %v3928
      %v4231 = vpack.c.b16 %v3931, %v3930
      %v4232 = vpack.c.b16 %v3933, %v3932
      %v4233 = vpack.c.b16 %v3935, %v3934
      %v4234 = vpack.c.b16 %v3937, %v3936
      %v4235 = vpack.c.b16 %v3939, %v3938
      %v4236 = vpack.c.b16 %v3941, %v3940
      %v4237 = vpack.c.b16 %v3943, %v3942
      %v4238 = vpack.c.b16 %v3945, %v3944
      %v4239 = vpack.c.b16 %v3947, %v3946
      %v4240 = vpack.c.b16 %v3949, %v3948
      %v4241 = vpack.c.b16 %v3951, %v3950
      %v4242 = vpack.c.b16 %v3953, %v3952
      %v4243 = vpack.c.b16 %v3955, %v3954
      %v4244 = vpack.c.b16 %v3957, %v3956
      %v4245 = vpack.c.b16 %v3959, %v3958
      %v4246 = vpack.c.b16 %v3961, %v3960
      %v4247 = vpack.c.b16 %v3963, %v3962
      %v4248 = vpack.c.b16 %v3965, %v3964
      %v4249 = vpack.c.b16 %v3967, %v3966
      %v4250 = vpack.c.b16 %v3969, %v3968
      %v4251 = vpack.c.b16 %v3971, %v3970
      %v4252 = vpack.c.b16 %v3973, %v3972
      %v4253 = vpack.c.b16 %v3975, %v3974
      %v4254 = vpack.c.b16 %v3977, %v3976
      %v4255 = vpack.c.b16 %v3979, %v3978
      %v4256 = vpack.c.b16 %v3981, %v3980
      %v4257 = vpack.c.b16 %v3983, %v3982
      %v4258 = vpack.c.b16 %v3985, %v3984
      %v4259 = vpack.c.b16 %v3987, %v3986
      %v4260 = vpack.c.b16 %v3989, %v3988
      %v4261 = vpack.c.b16 %v3991, %v3990
      %v4262 = vpack.c.b16 %v3993, %v3992
      %v4263 = vpack.c.b16 %v3995, %v3994
      %v4264 = vpack.c.b16 %v3997, %v3996
      %v4265 = vpack.c.b16 %v3999, %v3998
      %v4266 = vpack.c.b16 %v4001, %v4000
      %v4267 = vpack.c.b16 %v4003, %v4002
      %v4268 = vpack.c.b16 %v4005, %v4004
      %v4269 = vpack.c.b16 %v4007, %v4006
      %v4270 = vpack.c.b16 %v4009, %v4008
      %v4271 = vpack.c.b16 %v4011, %v4010
      %v4272 = vpack.c.b16 %v4013, %v4012
      %v4273 = vpack.c.b16 %v4015, %v4014
      %v4274 = vpack.c.b16 %v4017, %v4016
      %v4275 = vpack.c.b16 %v4019, %v4018
      %4532 = vmatprep.subr.bf16.mxu0 0
      %4533 = vmatpush1.bf16.msra.mxu0 %v4020
      %4534 = vmatprep.subr.bf16.mxu0 0
      %4535 = vmatpush1.bf16.msra.mxu0 %v4021
      %4536 = vmatprep.subr.bf16.mxu0 0
      %4537 = vmatpush1.bf16.msra.mxu0 %v4022
      %4538 = vmatprep.subr.bf16.mxu0 0
      %4539 = vmatpush1.bf16.msra.mxu0 %v4023
      %4540 = vmatprep.subr.bf16.mxu0 0
      %4541 = vmatpush1.bf16.msra.mxu0 %v4024
      %4542 = vmatprep.subr.bf16.mxu0 0
      %4543 = vmatpush1.bf16.msra.mxu0 %v4025
      %4544 = vmatprep.subr.bf16.mxu0 0
      %4545 = vmatpush1.bf16.msra.mxu0 %v4026
      %4546 = vmatprep.subr.bf16.mxu0 0
      %4547 = vmatpush1.bf16.msra.mxu0 %v4027
      %4548 = vmatprep.subr.bf16.mxu0 0
      %4549 = vmatpush1.bf16.msra.mxu0 %v4028
      %4550 = vmatprep.subr.bf16.mxu0 0
      %4551 = vmatpush1.bf16.msra.mxu0 %v4029
      %4552 = vmatprep.subr.bf16.mxu0 0
      %4553 = vmatpush1.bf16.msra.mxu0 %v4030
      %4554 = vmatprep.subr.bf16.mxu0 0
      %4555 = vmatpush1.bf16.msra.mxu0 %v4031
      %4556 = vmatprep.subr.bf16.mxu0 0
      %4557 = vmatpush1.bf16.msra.mxu0 %v4032
      %4558 = vmatprep.subr.bf16.mxu0 0
      %4559 = vmatpush1.bf16.msra.mxu0 %v4033
      %4560 = vmatprep.subr.bf16.mxu0 0
      %4561 = vmatpush1.bf16.msra.mxu0 %v4034
      %4562 = vmatprep.subr.bf16.mxu0 0
      %4563 = vmatpush1.bf16.msra.mxu0 %v4035
      %4564 = vmatprep.mubr.bf16.mxu0 %v2446
      %4565 = vmatmul.mubr.bf16.gmra.mrb[0].mxu0 %v2445
      %v4566 = vpop.f32.mrb[0].mxu0
      %v4567 = vadd.f32 %v2994, %v4566
      %v4568 = vpop.f32.mrb[0].mxu0
      %v4569 = vpop.f32.mrb[0].mxu0
      %v4570 = vpop.f32.mrb[0].mxu0
      %4571 = vdwg.mxu0
      %4572 = vmatprep.subr.bf16.mxu0 0
      %4573 = vmatpush1.bf16.msra.mxu0 %v4036
      %4574 = vmatprep.subr.bf16.mxu0 0
      %4575 = vmatpush1.bf16.msra.mxu0 %v4037
      %4576 = vmatprep.subr.bf16.mxu0 0
      %4577 = vmatpush1.bf16.msra.mxu0 %v4038
      %4578 = vmatprep.subr.bf16.mxu0 0
      %4579 = vmatpush1.bf16.msra.mxu0 %v4039
      %4580 = vmatprep.subr.bf16.mxu0 0
      %4581 = vmatpush1.bf16.msra.mxu0 %v4040
      %4582 = vmatprep.subr.bf16.mxu0 0
      %4583 = vmatpush1.bf16.msra.mxu0 %v4041
      %4584 = vmatprep.subr.bf16.mxu0 0
      %4585 = vmatpush1.bf16.msra.mxu0 %v4042
      %4586 = vmatprep.subr.bf16.mxu0 0
      %4587 = vmatpush1.bf16.msra.mxu0 %v4043
      %4588 = vmatprep.subr.bf16.mxu0 0
      %4589 = vmatpush1.bf16.msra.mxu0 %v4044
      %4590 = vmatprep.subr.bf16.mxu0 0
      %4591 = vmatpush1.bf16.msra.mxu0 %v4045
      %4592 = vmatprep.subr.bf16.mxu0 0
      %4593 = vmatpush1.bf16.msra.mxu0 %v4046
      %4594 = vmatprep.subr.bf16.mxu0 0
      %4595 = vmatpush1.bf16.msra.mxu0 %v4047
      %4596 = vmatprep.subr.bf16.mxu0 0
      %4597 = vmatpush1.bf16.msra.mxu0 %v4048
      %4598 = vmatprep.subr.bf16.mxu0 0
      %4599 = vmatpush1.bf16.msra.mxu0 %v4049
      %4600 = vmatprep.subr.bf16.mxu0 0
      %4601 = vmatpush1.bf16.msra.mxu0 %v4050
      %4602 = vmatprep.subr.bf16.mxu0 0
      %4603 = vmatpush1.bf16.msra.mxu0 %v4051
      %4604 = vmatprep.mubr.bf16.mxu0 %v2448
      %4605 = vmatmul.mubr.bf16.gmra.mrb[0].mxu0 %v2447
      %v4606 = vpop.f32.mrb[0].mxu0
      %v4607 = vadd.f32 %v4567, %v4606
      %v4608 = vpop.f32.mrb[0].mxu0
      %v4609 = vpop.f32.mrb[0].mxu0
      %v4610 = vpop.f32.mrb[0].mxu0
      %4611 = vdwg.mxu0
      %4612 = vmatprep.subr.bf16.mxu0 0
      %4613 = vmatpush1.bf16.msra.mxu0 %v4052
      %4614 = vmatprep.subr.bf16.mxu0 0
      %4615 = vmatpush1.bf16.msra.mxu0 %v4053
      %4616 = vmatprep.subr.bf16.mxu0 0
      %4617 = vmatpush1.bf16.msra.mxu0 %v4054
      %4618 = vmatprep.subr.bf16.mxu0 0
      %4619 = vmatpush1.bf16.msra.mxu0 %v4055
      %4620 = vmatprep.subr.bf16.mxu0 0
      %4621 = vmatpush1.bf16.msra.mxu0 %v4056
      %4622 = vmatprep.subr.bf16.mxu0 0
      %4623 = vmatpush1.bf16.msra.mxu0 %v4057
      %4624 = vmatprep.subr.bf16.mxu0 0
      %4625 = vmatpush1.bf16.msra.mxu0 %v4058
      %4626 = vmatprep.subr.bf16.mxu0 0
      %4627 = vmatpush1.bf16.msra.mxu0 %v4059
      %4628 = vmatprep.subr.bf16.mxu0 0
      %4629 = vmatpush1.bf16.msra.mxu0 %v4060
      %4630 = vmatprep.subr.bf16.mxu0 0
      %4631 = vmatpush1.bf16.msra.mxu0 %v4061
      %4632 = vmatprep.subr.bf16.mxu0 0
      %4633 = vmatpush1.bf16.msra.mxu0 %v4062
      %4634 = vmatprep.subr.bf16.mxu0 0
      %4635 = vmatpush1.bf16.msra.mxu0 %v4063
      %4636 = vmatprep.subr.bf16.mxu0 0
      %4637 = vmatpush1.bf16.msra.mxu0 %v4064
      %4638 = vmatprep.subr.bf16.mxu0 0
      %4639 = vmatpush1.bf16.msra.mxu0 %v4065
      %4640 = vmatprep.subr.bf16.mxu0 0
      %4641 = vmatpush1.bf16.msra.mxu0 %v4066
      %4642 = vmatprep.subr.bf16.mxu0 0
      %4643 = vmatpush1.bf16.msra.mxu0 %v4067
      %4644 = vmatprep.mubr.bf16.mxu0 %v2450
      %4645 = vmatmul.mubr.bf16.gmra.mrb[0].mxu0 %v2449
      %v4646 = vpop.f32.mrb[0].mxu0
      %v4647 = vadd.f32 %v4607, %v4646
      %v4648 = vpop.f32.mrb[0].mxu0
      %v4649 = vpop.f32.mrb[0].mxu0
      %v4650 = vpop.f32.mrb[0].mxu0
      %4651 = vdwg.mxu0
      %4652 = vmatprep.subr.bf16.mxu0 0
      %4653 = vmatpush1.bf16.msra.mxu0 %v4068
      %4654 = vmatprep.subr.bf16.mxu0 0
      %4655 = vmatpush1.bf16.msra.mxu0 %v4069
      %4656 = vmatprep.subr.bf16.mxu0 0
      %4657 = vmatpush1.bf16.msra.mxu0 %v4070
      %4658 = vmatprep.subr.bf16.mxu0 0
      %4659 = vmatpush1.bf16.msra.mxu0 %v4071
      %4660 = vmatprep.subr.bf16.mxu0 0
      %4661 = vmatpush1.bf16.msra.mxu0 %v4072
      %4662 = vmatprep.subr.bf16.mxu0 0
      %4663 = vmatpush1.bf16.msra.mxu0 %v4073
      %4664 = vmatprep.subr.bf16.mxu0 0
      %4665 = vmatpush1.bf16.msra.mxu0 %v4074
      %4666 = vmatprep.subr.bf16.mxu0 0
      %4667 = vmatpush1.bf16.msra.mxu0 %v4075
      %4668 = vmatprep.subr.bf16.mxu0 0
      %4669 = vmatpush1.bf16.msra.mxu0 %v4076
      %4670 = vmatprep.subr.bf16.mxu0 0
      %4671 = vmatpush1.bf16.msra.mxu0 %v4077
      %4672 = vmatprep.subr.bf16.mxu0 0
      %4673 = vmatpush1.bf16.msra.mxu0 %v4078
      %4674 = vmatprep.subr.bf16.mxu0 0
      %4675 = vmatpush1.bf16.msra.mxu0 %v4079
      %4676 = vmatprep.subr.bf16.mxu0 0
      %4677 = vmatpush1.bf16.msra.mxu0 %v4080
      %4678 = vmatprep.subr.bf16.mxu0 0
      %4679 = vmatpush1.bf16.msra.mxu0 %v4081
      %4680 = vmatprep.subr.bf16.mxu0 0
      %4681 = vmatpush1.bf16.msra.mxu0 %v4082
      %4682 = vmatprep.subr.bf16.mxu0 0
      %4683 = vmatpush1.bf16.msra.mxu0 %v4083
      %4684 = vmatprep.mubr.bf16.mxu0 %v2452
      %4685 = vmatmul.mubr.bf16.gmra.mrb[0].mxu0 %v2451
      %v4686 = vpop.f32.mrb[0].mxu0
      %v4687 = vadd.f32 %v4647, %v4686
      %v4688 = vpop.f32.mrb[0].mxu0
      %v4689 = vpop.f32.mrb[0].mxu0
      %v4690 = vpop.f32.mrb[0].mxu0
      %4691 = vdwg.mxu0
      %4692 = vmatprep.subr.bf16.mxu0 0
      %4693 = vmatpush1.bf16.msra.mxu0 %v4084
      %4694 = vmatprep.subr.bf16.mxu0 0
      %4695 = vmatpush1.bf16.msra.mxu0 %v4085
      %4696 = vmatprep.subr.bf16.mxu0 0
      %4697 = vmatpush1.bf16.msra.mxu0 %v4086
      %4698 = vmatprep.subr.bf16.mxu0 0
      %4699 = vmatpush1.bf16.msra.mxu0 %v4087
      %4700 = vmatprep.subr.bf16.mxu0 0
      %4701 = vmatpush1.bf16.msra.mxu0 %v4088
      %4702 = vmatprep.subr.bf16.mxu0 0
      %4703 = vmatpush1.bf16.msra.mxu0 %v4089
      %4704 = vmatprep.subr.bf16.mxu0 0
      %4705 = vmatpush1.bf16.msra.mxu0 %v4090
      %4706 = vmatprep.subr.bf16.mxu0 0
      %4707 = vmatpush1.bf16.msra.mxu0 %v4091
      %4708 = vmatprep.subr.bf16.mxu0 0
      %4709 = vmatpush1.bf16.msra.mxu0 %v4092
      %4710 = vmatprep.subr.bf16.mxu0 0
      %4711 = vmatpush1.bf16.msra.mxu0 %v4093
      %4712 = vmatprep.subr.bf16.mxu0 0
      %4713 = vmatpush1.bf16.msra.mxu0 %v4094
      %4714 = vmatprep.subr.bf16.mxu0 0
      %4715 = vmatpush1.bf16.msra.mxu0 %v4095
      %4716 = vmatprep.subr.bf16.mxu0 0
      %4717 = vmatpush1.bf16.msra.mxu0 %v4096
      %4718 = vmatprep.subr.bf16.mxu0 0
      %4719 = vmatpush1.bf16.msra.mxu0 %v4097
      %4720 = vmatprep.subr.bf16.mxu0 0
      %4721 = vmatpush1.bf16.msra.mxu0 %v4098
      %4722 = vmatprep.subr.bf16.mxu0 0
      %4723 = vmatpush1.bf16.msra.mxu0 %v4099
      %4724 = vmatprep.mubr.bf16.mxu0 %v2454
      %4725 = vmatmul.mubr.bf16.gmra.mrb[0].mxu0 %v2453
      %v4726 = vpop.f32.mrb[0].mxu0
      %v4727 = vadd.f32 %v4687, %v4726
      %v4728 = vpop.f32.mrb[0].mxu0
      %v4729 = vpop.f32.mrb[0].mxu0
      %v4730 = vpop.f32.mrb[0].mxu0
      %4731 = vdwg.mxu0
      %4732 = vmatprep.subr.bf16.mxu0 0
      %4733 = vmatpush1.bf16.msra.mxu0 %v4100
      %4734 = vmatprep.subr.bf16.mxu0 0
      %4735 = vmatpush1.bf16.msra.mxu0 %v4101
      %4736 = vmatprep.subr.bf16.mxu0 0
      %4737 = vmatpush1.bf16.msra.mxu0 %v4102
      %4738 = vmatprep.subr.bf16.mxu0 0
      %4739 = vmatpush1.bf16.msra.mxu0 %v4103
      %4740 = vmatprep.subr.bf16.mxu0 0
      %4741 = vmatpush1.bf16.msra.mxu0 %v4104
      %4742 = vmatprep.subr.bf16.mxu0 0
      %4743 = vmatpush1.bf16.msra.mxu0 %v4105
      %4744 = vmatprep.subr.bf16.mxu0 0
      %4745 = vmatpush1.bf16.msra.mxu0 %v4106
      %4746 = vmatprep.subr.bf16.mxu0 0
      %4747 = vmatpush1.bf16.msra.mxu0 %v4107
      %4748 = vmatprep.subr.bf16.mxu0 0
      %4749 = vmatpush1.bf16.msra.mxu0 %v4108
      %4750 = vmatprep.subr.bf16.mxu0 0
      %4751 = vmatpush1.bf16.msra.mxu0 %v4109
      %4752 = vmatprep.subr.bf16.mxu0 0
      %4753 = vmatpush1.bf16.msra.mxu0 %v4110
      %4754 = vmatprep.subr.bf16.mxu0 0
      %4755 = vmatpush1.bf16.msra.mxu0 %v4111
      %4756 = vmatprep.subr.bf16.mxu0 0
      %4757 = vmatpush1.bf16.msra.mxu0 %v4112
      %4758 = vmatprep.subr.bf16.mxu0 0
      %4759 = vmatpush1.bf16.msra.mxu0 %v4113
      %4760 = vmatprep.subr.bf16.mxu0 0
      %4761 = vmatpush1.bf16.msra.mxu0 %v4114
      %4762 = vmatprep.subr.bf16.mxu0 0
      %4763 = vmatpush1.bf16.msra.mxu0 %v4115
      %4764 = vmatprep.mubr.bf16.mxu0 %v2456
      %4765 = vmatmul.mubr.bf16.gmra.mrb[0].mxu0 %v2455
      %v4766 = vpop.f32.mrb[0].mxu0
      %v4767 = vadd.f32 %v4727, %v4766
      %v4768 = vpop.f32.mrb[0].mxu0
      %v4769 = vpop.f32.mrb[0].mxu0
      %v4770 = vpop.f32.mrb[0].mxu0
      %4771 = vdwg.mxu0
      %4772 = vmatprep.subr.bf16.mxu0 0
      %4773 = vmatpush1.bf16.msra.mxu0 %v4116
      %4774 = vmatprep.subr.bf16.mxu0 0
      %4775 = vmatpush1.bf16.msra.mxu0 %v4117
      %4776 = vmatprep.subr.bf16.mxu0 0
      %4777 = vmatpush1.bf16.msra.mxu0 %v4118
      %4778 = vmatprep.subr.bf16.mxu0 0
      %4779 = vmatpush1.bf16.msra.mxu0 %v4119
      %4780 = vmatprep.subr.bf16.mxu0 0
      %4781 = vmatpush1.bf16.msra.mxu0 %v4120
      %4782 = vmatprep.subr.bf16.mxu0 0
      %4783 = vmatpush1.bf16.msra.mxu0 %v4121
      %4784 = vmatprep.subr.bf16.mxu0 0
      %4785 = vmatpush1.bf16.msra.mxu0 %v4122
      %4786 = vmatprep.subr.bf16.mxu0 0
      %4787 = vmatpush1.bf16.msra.mxu0 %v4123
      %4788 = vmatprep.subr.bf16.mxu0 0
      %4789 = vmatpush1.bf16.msra.mxu0 %v4124
      %4790 = vmatprep.subr.bf16.mxu0 0
      %4791 = vmatpush1.bf16.msra.mxu0 %v4125
      %4792 = vmatprep.subr.bf16.mxu0 0
      %4793 = vmatpush1.bf16.msra.mxu0 %v4126
      %4794 = vmatprep.subr.bf16.mxu0 0
      %4795 = vmatpush1.bf16.msra.mxu0 %v4127
      %4796 = vmatprep.subr.bf16.mxu0 0
      %4797 = vmatpush1.bf16.msra.mxu0 %v4128
      %4798 = vmatprep.subr.bf16.mxu0 0
      %4799 = vmatpush1.bf16.msra.mxu0 %v4129
      %4800 = vmatprep.subr.bf16.mxu0 0
      %4801 = vmatpush1.bf16.msra.mxu0 %v4130
      %4802 = vmatprep.subr.bf16.mxu0 0
      %4803 = vmatpush1.bf16.msra.mxu0 %v4131
      %4804 = vmatprep.mubr.bf16.mxu0 %v2458
      %4805 = vmatmul.mubr.bf16.gmra.mrb[0].mxu0 %v2457
      %v4806 = vpop.f32.mrb[0].mxu0
      %v4807 = vadd.f32 %v4767, %v4806
      %v4808 = vpop.f32.mrb[0].mxu0
      %v4809 = vpop.f32.mrb[0].mxu0
      %v4810 = vpop.f32.mrb[0].mxu0
      %4811 = vdwg.mxu0
      %4812 = vmatprep.subr.bf16.mxu0 0
      %4813 = vmatpush1.bf16.msra.mxu0 %v4132
      %4814 = vmatprep.subr.bf16.mxu0 0
      %4815 = vmatpush1.bf16.msra.mxu0 %v4133
      %4816 = vmatprep.subr.bf16.mxu0 0
      %4817 = vmatpush1.bf16.msra.mxu0 %v4134
      %4818 = vmatprep.subr.bf16.mxu0 0
      %4819 = vmatpush1.bf16.msra.mxu0 %v4135
      %4820 = vmatprep.subr.bf16.mxu0 0
      %4821 = vmatpush1.bf16.msra.mxu0 %v4136
      %4822 = vmatprep.subr.bf16.mxu0 0
      %4823 = vmatpush1.bf16.msra.mxu0 %v4137
      %4824 = vmatprep.subr.bf16.mxu0 0
      %4825 = vmatpush1.bf16.msra.mxu0 %v4138
      %4826 = vmatprep.subr.bf16.mxu0 0
      %4827 = vmatpush1.bf16.msra.mxu0 %v4139
      %4828 = vmatprep.subr.bf16.mxu0 0
      %4829 = vmatpush1.bf16.msra.mxu0 %v4140
      %4830 = vmatprep.subr.bf16.mxu0 0
      %4831 = vmatpush1.bf16.msra.mxu0 %v4141
      %4832 = vmatprep.subr.bf16.mxu0 0
      %4833 = vmatpush1.bf16.msra.mxu0 %v4142
      %4834 = vmatprep.subr.bf16.mxu0 0
      %4835 = vmatpush1.bf16.msra.mxu0 %v4143
      %4836 = vmatprep.subr.bf16.mxu0 0
      %4837 = vmatpush1.bf16.msra.mxu0 %v4144
      %4838 = vmatprep.subr.bf16.mxu0 0
      %4839 = vmatpush1.bf16.msra.mxu0 %v4145
      %4840 = vmatprep.subr.bf16.mxu0 0
      %4841 = vmatpush1.bf16.msra.mxu0 %v4146
      %4842 = vmatprep.subr.bf16.mxu0 0
      %4843 = vmatpush1.bf16.msra.mxu0 %v4147
      %4844 = vmatprep.mubr.bf16.mxu0 %v2460
      %4845 = vmatmul.mubr.bf16.gmra.mrb[0].mxu0 %v2459
      %v4846 = vpop.f32.mrb[0].mxu0
      %v4847 = vadd.f32 %v4807, %v4846
      %v4848 = vpop.f32.mrb[0].mxu0
      %v4849 = vpop.f32.mrb[0].mxu0
      %v4850 = vpop.f32.mrb[0].mxu0
      %4851 = vdwg.mxu0
      %4852 = vmatprep.subr.bf16.mxu0 0
      %4853 = vmatpush1.bf16.msra.mxu0 %v4148
      %4854 = vmatprep.subr.bf16.mxu0 0
      %4855 = vmatpush1.bf16.msra.mxu0 %v4149
      %4856 = vmatprep.subr.bf16.mxu0 0
      %4857 = vmatpush1.bf16.msra.mxu0 %v4150
      %4858 = vmatprep.subr.bf16.mxu0 0
      %4859 = vmatpush1.bf16.msra.mxu0 %v4151
      %4860 = vmatprep.subr.bf16.mxu0 0
      %4861 = vmatpush1.bf16.msra.mxu0 %v4152
      %4862 = vmatprep.subr.bf16.mxu0 0
      %4863 = vmatpush1.bf16.msra.mxu0 %v4153
      %4864 = vmatprep.subr.bf16.mxu0 0
      %4865 = vmatpush1.bf16.msra.mxu0 %v4154
      %4866 = vmatprep.subr.bf16.mxu0 0
      %4867 = vmatpush1.bf16.msra.mxu0 %v4155
      %4868 = vmatprep.subr.bf16.mxu0 0
      %4869 = vmatpush1.bf16.msra.mxu0 %v4156
      %4870 = vmatprep.subr.bf16.mxu0 0
      %4871 = vmatpush1.bf16.msra.mxu0 %v4157
      %4872 = vmatprep.subr.bf16.mxu0 0
      %4873 = vmatpush1.bf16.msra.mxu0 %v4158
      %4874 = vmatprep.subr.bf16.mxu0 0
      %4875 = vmatpush1.bf16.msra.mxu0 %v4159
      %4876 = vmatprep.subr.bf16.mxu0 0
      %4877 = vmatpush1.bf16.msra.mxu0 %v4160
      %4878 = vmatprep.subr.bf16.mxu0 0
      %4879 = vmatpush1.bf16.msra.mxu0 %v4161
      %4880 = vmatprep.subr.bf16.mxu0 0
      %4881 = vmatpush1.bf16.msra.mxu0 %v4162
      %4882 = vmatprep.subr.bf16.mxu0 0
      %4883 = vmatpush1.bf16.msra.mxu0 %v4163
      %4884 = vmatprep.mubr.bf16.mxu0 %v2462
      %4885 = vmatmul.mubr.bf16.gmra.mrb[0].mxu0 %v2461
      %v4886 = vpop.f32.mrb[0].mxu0
      %v4887 = vadd.f32 %v4847, %v4886
      %v4888 = vpop.f32.mrb[0].mxu0
      %v4889 = vpop.f32.mrb[0].mxu0
      %v4890 = vpop.f32.mrb[0].mxu0
      %4891 = vdwg.mxu0
      %4892 = vmatprep.subr.bf16.mxu0 0
      %4893 = vmatpush1.bf16.msra.mxu0 %v4164
      %4894 = vmatprep.subr.bf16.mxu0 0
      %4895 = vmatpush1.bf16.msra.mxu0 %v4165
      %4896 = vmatprep.subr.bf16.mxu0 0
      %4897 = vmatpush1.bf16.msra.mxu0 %v4166
      %4898 = vmatprep.subr.bf16.mxu0 0
      %4899 = vmatpush1.bf16.msra.mxu0 %v4167
      %4900 = vmatprep.subr.bf16.mxu0 0
      %4901 = vmatpush1.bf16.msra.mxu0 %v4168
      %4902 = vmatprep.subr.bf16.mxu0 0
      %4903 = vmatpush1.bf16.msra.mxu0 %v4169
      %4904 = vmatprep.subr.bf16.mxu0 0
      %4905 = vmatpush1.bf16.msra.mxu0 %v4170
      %4906 = vmatprep.subr.bf16.mxu0 0
      %4907 = vmatpush1.bf16.msra.mxu0 %v4171
      %4908 = vmatprep.subr.bf16.mxu0 0
      %4909 = vmatpush1.bf16.msra.mxu0 %v4172
      %4910 = vmatprep.subr.bf16.mxu0 0
      %4911 = vmatpush1.bf16.msra.mxu0 %v4173
      %4912 = vmatprep.subr.bf16.mxu0 0
      %4913 = vmatpush1.bf16.msra.mxu0 %v4174
      %4914 = vmatprep.subr.bf16.mxu0 0
      %4915 = vmatpush1.bf16.msra.mxu0 %v4175
      %4916 = vmatprep.subr.bf16.mxu0 0
      %4917 = vmatpush1.bf16.msra.mxu0 %v4176
      %4918 = vmatprep.subr.bf16.mxu0 0
      %4919 = vmatpush1.bf16.msra.mxu0 %v4177
      %4920 = vmatprep.subr.bf16.mxu0 0
      %4921 = vmatpush1.bf16.msra.mxu0 %v4178
      %4922 = vmatprep.subr.bf16.mxu0 0
      %4923 = vmatpush1.bf16.msra.mxu0 %v4179
      %4924 = vmatprep.mubr.bf16.mxu0 %v2464
      %4925 = vmatmul.mubr.bf16.gmra.mrb[0].mxu0 %v2463
      %v4926 = vpop.f32.mrb[0].mxu0
      %v4927 = vadd.f32 %v4887, %v4926
      %v4928 = vpop.f32.mrb[0].mxu0
      %v4929 = vpop.f32.mrb[0].mxu0
      %v4930 = vpop.f32.mrb[0].mxu0
      %4931 = vdwg.mxu0
      %4932 = vmatprep.subr.bf16.mxu0 0
      %4933 = vmatpush1.bf16.msra.mxu0 %v4180
      %4934 = vmatprep.subr.bf16.mxu0 0
      %4935 = vmatpush1.bf16.msra.mxu0 %v4181
      %4936 = vmatprep.subr.bf16.mxu0 0
      %4937 = vmatpush1.bf16.msra.mxu0 %v4182
      %4938 = vmatprep.subr.bf16.mxu0 0
      %4939 = vmatpush1.bf16.msra.mxu0 %v4183
      %4940 = vmatprep.subr.bf16.mxu0 0
      %4941 = vmatpush1.bf16.msra.mxu0 %v4184
      %4942 = vmatprep.subr.bf16.mxu0 0
      %4943 = vmatpush1.bf16.msra.mxu0 %v4185
      %4944 = vmatprep.subr.bf16.mxu0 0
      %4945 = vmatpush1.bf16.msra.mxu0 %v4186
      %4946 = vmatprep.subr.bf16.mxu0 0
      %4947 = vmatpush1.bf16.msra.mxu0 %v4187
      %4948 = vmatprep.subr.bf16.mxu0 0
      %4949 = vmatpush1.bf16.msra.mxu0 %v4188
      %4950 = vmatprep.subr.bf16.mxu0 0
      %4951 = vmatpush1.bf16.msra.mxu0 %v4189
      %4952 = vmatprep.subr.bf16.mxu0 0
      %4953 = vmatpush1.bf16.msra.mxu0 %v4190
      %4954 = vmatprep.subr.bf16.mxu0 0
      %4955 = vmatpush1.bf16.msra.mxu0 %v4191
      %4956 = vmatprep.subr.bf16.mxu0 0
      %4957 = vmatpush1.bf16.msra.mxu0 %v4192
      %4958 = vmatprep.subr.bf16.mxu0 0
      %4959 = vmatpush1.bf16.msra.mxu0 %v4193
      %4960 = vmatprep.subr.bf16.mxu0 0
      %4961 = vmatpush1.bf16.msra.mxu0 %v4194
      %4962 = vmatprep.subr.bf16.mxu0 0
      %4963 = vmatpush1.bf16.msra.mxu0 %v4195
      %4964 = vmatprep.mubr.bf16.mxu0 %v2466
      %4965 = vmatmul.mubr.bf16.gmra.mrb[0].mxu0 %v2465
      %v4966 = vpop.f32.mrb[0].mxu0
      %v4967 = vadd.f32 %v4927, %v4966
      %v4968 = vpop.f32.mrb[0].mxu0
      %v4969 = vpop.f32.mrb[0].mxu0
      %v4970 = vpop.f32.mrb[0].mxu0
      %4971 = vdwg.mxu0
      %4972 = vmatprep.subr.bf16.mxu0 0
      %4973 = vmatpush1.bf16.msra.mxu0 %v4196
      %4974 = vmatprep.subr.bf16.mxu0 0
      %4975 = vmatpush1.bf16.msra.mxu0 %v4197
      %4976 = vmatprep.subr.bf16.mxu0 0
      %4977 = vmatpush1.bf16.msra.mxu0 %v4198
      %4978 = vmatprep.subr.bf16.mxu0 0
      %4979 = vmatpush1.bf16.msra.mxu0 %v4199
      %4980 = vmatprep.subr.bf16.mxu0 0
      %4981 = vmatpush1.bf16.msra.mxu0 %v4200
      %4982 = vmatprep.subr.bf16.mxu0 0
      %4983 = vmatpush1.bf16.msra.mxu0 %v4201
      %4984 = vmatprep.subr.bf16.mxu0 0
      %4985 = vmatpush1.bf16.msra.mxu0 %v4202
      %4986 = vmatprep.subr.bf16.mxu0 0
      %4987 = vmatpush1.bf16.msra.mxu0 %v4203
      %4988 = vmatprep.subr.bf16.mxu0 0
      %4989 = vmatpush1.bf16.msra.mxu0 %v4204
      %4990 = vmatprep.subr.bf16.mxu0 0
      %4991 = vmatpush1.bf16.msra.mxu0 %v4205
      %4992 = vmatprep.subr.bf16.mxu0 0
      %4993 = vmatpush1.bf16.msra.mxu0 %v4206
      %4994 = vmatprep.subr.bf16.mxu0 0
      %4995 = vmatpush1.bf16.msra.mxu0 %v4207
      %4996 = vmatprep.subr.bf16.mxu0 0
      %4997 = vmatpush1.bf16.msra.mxu0 %v4208
      %4998 = vmatprep.subr.bf16.mxu0 0
      %4999 = vmatpush1.bf16.msra.mxu0 %v4209
      %5000 = vmatprep.subr.bf16.mxu0 0
      %5001 = vmatpush1.bf16.msra.mxu0 %v4210
      %5002 = vmatprep.subr.bf16.mxu0 0
      %5003 = vmatpush1.bf16.msra.mxu0 %v4211
      %5004 = vmatprep.mubr.bf16.mxu0 %v2468
      %5005 = vmatmul.mubr.bf16.gmra.mrb[0].mxu0 %v2467
      %v5006 = vpop.f32.mrb[0].mxu0
      %v5007 = vadd.f32 %v4967, %v5006
      %v5008 = vpop.f32.mrb[0].mxu0
      %v5009 = vpop.f32.mrb[0].mxu0
      %v5010 = vpop.f32.mrb[0].mxu0
      %5011 = vdwg.mxu0
      %5012 = vmatprep.subr.bf16.mxu0 0
      %5013 = vmatpush1.bf16.msra.mxu0 %v4212
      %5014 = vmatprep.subr.bf16.mxu0 0
      %5015 = vmatpush1.bf16.msra.mxu0 %v4213
      %5016 = vmatprep.subr.bf16.mxu0 0
      %5017 = vmatpush1.bf16.msra.mxu0 %v4214
      %5018 = vmatprep.subr.bf16.mxu0 0
      %5019 = vmatpush1.bf16.msra.mxu0 %v4215
      %5020 = vmatprep.subr.bf16.mxu0 0
      %5021 = vmatpush1.bf16.msra.mxu0 %v4216
      %5022 = vmatprep.subr.bf16.mxu0 0
      %5023 = vmatpush1.bf16.msra.mxu0 %v4217
      %5024 = vmatprep.subr.bf16.mxu0 0
      %5025 = vmatpush1.bf16.msra.mxu0 %v4218
      %5026 = vmatprep.subr.bf16.mxu0 0
      %5027 = vmatpush1.bf16.msra.mxu0 %v4219
      %5028 = vmatprep.subr.bf16.mxu0 0
      %5029 = vmatpush1.bf16.msra.mxu0 %v4220
      %5030 = vmatprep.subr.bf16.mxu0 0
      %5031 = vmatpush1.bf16.msra.mxu0 %v4221
      %5032 = vmatprep.subr.bf16.mxu0 0
      %5033 = vmatpush1.bf16.msra.mxu0 %v4222
      %5034 = vmatprep.subr.bf16.mxu0 0
      %5035 = vmatpush1.bf16.msra.mxu0 %v4223
      %5036 = vmatprep.subr.bf16.mxu0 0
      %5037 = vmatpush1.bf16.msra.mxu0 %v4224
      %5038 = vmatprep.subr.bf16.mxu0 0
      %5039 = vmatpush1.bf16.msra.mxu0 %v4225
      %5040 = vmatprep.subr.bf16.mxu0 0
      %5041 = vmatpush1.bf16.msra.mxu0 %v4226
      %5042 = vmatprep.subr.bf16.mxu0 0
      %5043 = vmatpush1.bf16.msra.mxu0 %v4227
      %5044 = vmatprep.mubr.bf16.mxu0 %v2470
      %5045 = vmatmul.mubr.bf16.gmra.mrb[0].mxu0 %v2469
      %v5046 = vpop.f32.mrb[0].mxu0
      %v5047 = vadd.f32 %v5007, %v5046
      %v5048 = vpop.f32.mrb[0].mxu0
      %v5049 = vpop.f32.mrb[0].mxu0
      %v5050 = vpop.f32.mrb[0].mxu0
      %5051 = vdwg.mxu0
      %5052 = vmatprep.subr.bf16.mxu0 0
      %5053 = vmatpush1.bf16.msra.mxu0 %v4228
      %5054 = vmatprep.subr.bf16.mxu0 0
      %5055 = vmatpush1.bf16.msra.mxu0 %v4229
      %5056 = vmatprep.subr.bf16.mxu0 0
      %5057 = vmatpush1.bf16.msra.mxu0 %v4230
      %5058 = vmatprep.subr.bf16.mxu0 0
      %5059 = vmatpush1.bf16.msra.mxu0 %v4231
      %5060 = vmatprep.subr.bf16.mxu0 0
      %5061 = vmatpush1.bf16.msra.mxu0 %v4232
      %5062 = vmatprep.subr.bf16.mxu0 0
      %5063 = vmatpush1.bf16.msra.mxu0 %v4233
      %5064 = vmatprep.subr.bf16.mxu0 0
      %5065 = vmatpush1.bf16.msra.mxu0 %v4234
      %5066 = vmatprep.subr.bf16.mxu0 0
      %5067 = vmatpush1.bf16.msra.mxu0 %v4235
      %5068 = vmatprep.subr.bf16.mxu0 0
      %5069 = vmatpush1.bf16.msra.mxu0 %v4236
      %5070 = vmatprep.subr.bf16.mxu0 0
      %5071 = vmatpush1.bf16.msra.mxu0 %v4237
      %5072 = vmatprep.subr.bf16.mxu0 0
      %5073 = vmatpush1.bf16.msra.mxu0 %v4238
      %5074 = vmatprep.subr.bf16.mxu0 0
      %5075 = vmatpush1.bf16.msra.mxu0 %v4239
      %5076 = vmatprep.subr.bf16.mxu0 0
      %5077 = vmatpush1.bf16.msra.mxu0 %v4240
      %5078 = vmatprep.subr.bf16.mxu0 0
      %5079 = vmatpush1.bf16.msra.mxu0 %v4241
      %5080 = vmatprep.subr.bf16.mxu0 0
      %5081 = vmatpush1.bf16.msra.mxu0 %v4242
      %5082 = vmatprep.subr.bf16.mxu0 0
      %5083 = vmatpush1.bf16.msra.mxu0 %v4243
      %5084 = vmatprep.mubr.bf16.mxu0 %v2472
      %5085 = vmatmul.mubr.bf16.gmra.mrb[0].mxu0 %v2471
      %v5086 = vpop.f32.mrb[0].mxu0
      %v5087 = vadd.f32 %v5047, %v5086
      %v5088 = vpop.f32.mrb[0].mxu0
      %v5089 = vpop.f32.mrb[0].mxu0
      %v5090 = vpop.f32.mrb[0].mxu0
      %5091 = vdwg.mxu0
      %5092 = vmatprep.subr.bf16.mxu0 0
      %5093 = vmatpush1.bf16.msra.mxu0 %v4244
      %5094 = vmatprep.subr.bf16.mxu0 0
      %5095 = vmatpush1.bf16.msra.mxu0 %v4245
      %5096 = vmatprep.subr.bf16.mxu0 0
      %5097 = vmatpush1.bf16.msra.mxu0 %v4246
      %5098 = vmatprep.subr.bf16.mxu0 0
      %5099 = vmatpush1.bf16.msra.mxu0 %v4247
      %5100 = vmatprep.subr.bf16.mxu0 0
      %5101 = vmatpush1.bf16.msra.mxu0 %v4248
      %5102 = vmatprep.subr.bf16.mxu0 0
      %5103 = vmatpush1.bf16.msra.mxu0 %v4249
      %5104 = vmatprep.subr.bf16.mxu0 0
      %5105 = vmatpush1.bf16.msra.mxu0 %v4250
      %5106 = vmatprep.subr.bf16.mxu0 0
      %5107 = vmatpush1.bf16.msra.mxu0 %v4251
      %5108 = vmatprep.subr.bf16.mxu0 0
      %5109 = vmatpush1.bf16.msra.mxu0 %v4252
      %5110 = vmatprep.subr.bf16.mxu0 0
      %5111 = vmatpush1.bf16.msra.mxu0 %v4253
      %5112 = vmatprep.subr.bf16.mxu0 0
      %5113 = vmatpush1.bf16.msra.mxu0 %v4254
      %5114 = vmatprep.subr.bf16.mxu0 0
      %5115 = vmatpush1.bf16.msra.mxu0 %v4255
      %5116 = vmatprep.subr.bf16.mxu0 0
      %5117 = vmatpush1.bf16.msra.mxu0 %v4256
      %5118 = vmatprep.subr.bf16.mxu0 0
      %5119 = vmatpush1.bf16.msra.mxu0 %v4257
      %5120 = vmatprep.subr.bf16.mxu0 0
      %5121 = vmatpush1.bf16.msra.mxu0 %v4258
      %5122 = vmatprep.subr.bf16.mxu0 0
      %5123 = vmatpush1.bf16.msra.mxu0 %v4259
      %5124 = vmatprep.mubr.bf16.mxu0 %v2474
      %5125 = vmatmul.mubr.bf16.gmra.mrb[0].mxu0 %v2473
      %v5126 = vpop.f32.mrb[0].mxu0
      %v5127 = vadd.f32 %v5087, %v5126
      %v5128 = vpop.f32.mrb[0].mxu0
      %v5129 = vpop.f32.mrb[0].mxu0
      %v5130 = vpop.f32.mrb[0].mxu0
      %5131 = vdwg.mxu0
      %5132 = vmatprep.subr.bf16.mxu0 0
      %5133 = vmatpush1.bf16.msra.mxu0 %v4260
      %5134 = vmatprep.subr.bf16.mxu0 0
      %5135 = vmatpush1.bf16.msra.mxu0 %v4261
      %5136 = vmatprep.subr.bf16.mxu0 0
      %5137 = vmatpush1.bf16.msra.mxu0 %v4262
      %5138 = vmatprep.subr.bf16.mxu0 0
      %5139 = vmatpush1.bf16.msra.mxu0 %v4263
      %5140 = vmatprep.subr.bf16.mxu0 0
      %5141 = vmatpush1.bf16.msra.mxu0 %v4264
      %5142 = vmatprep.subr.bf16.mxu0 0
      %5143 = vmatpush1.bf16.msra.mxu0 %v4265
      %5144 = vmatprep.subr.bf16.mxu0 0
      %5145 = vmatpush1.bf16.msra.mxu0 %v4266
      %5146 = vmatprep.subr.bf16.mxu0 0
      %5147 = vmatpush1.bf16.msra.mxu0 %v4267
      %5148 = vmatprep.subr.bf16.mxu0 0
      %5149 = vmatpush1.bf16.msra.mxu0 %v4268
      %5150 = vmatprep.subr.bf16.mxu0 0
      %5151 = vmatpush1.bf16.msra.mxu0 %v4269
      %5152 = vmatprep.subr.bf16.mxu0 0
      %5153 = vmatpush1.bf16.msra.mxu0 %v4270
      %5154 = vmatprep.subr.bf16.mxu0 0
      %5155 = vmatpush1.bf16.msra.mxu0 %v4271
      %5156 = vmatprep.subr.bf16.mxu0 0
      %5157 = vmatpush1.bf16.msra.mxu0 %v4272
      %5158 = vmatprep.subr.bf16.mxu0 0
      %5159 = vmatpush1.bf16.msra.mxu0 %v4273
      %5160 = vmatprep.subr.bf16.mxu0 0
      %5161 = vmatpush1.bf16.msra.mxu0 %v4274
      %5162 = vmatprep.subr.bf16.mxu0 0
      %5163 = vmatpush1.bf16.msra.mxu0 %v4275
      %5164 = vmatprep.mubr.bf16.mxu0 %v2476
      %5165 = vmatmul.mubr.bf16.gmra.mrb[0].mxu0 %v2475
      %v5166 = vpop.f32.mrb[0].mxu0
      %v5167 = vadd.f32 %v5127, %v5166
      %v5168 = vpop.f32.mrb[0].mxu0
      %v5169 = vpop.f32.mrb[0].mxu0
      %v5170 = vpop.f32.mrb[0].mxu0
      %5171 = vdwg.mxu0
      %5172 = vst [vmem:[%s340] sm:$0xff] %v5167
      %p5173 = scmp.lt.s32.totalorder %s17, 1
      %s5174 = scalar_select %p5173, %s17, 1
      %s5175 = smul.addr %s5174, 8
      %s5176 = scalar_lea.vmem %s6, %s5175
      // Predicated region
      $region45: #{forward.2} parent=43 // pred_check
        %p5177 = pneg %p191
      $region46: #{forward.2} parent=43 // pred_check_branch
        %5179 = sbr.rel (%p5177) target = $region48
      $region47: #{forward.2} parent=43 // pred_region
        _
      $region48: #{forward.2} parent=43 // pred_fallthru
        _
    $region44: #{forward.2} parent=5 // pred_fallthru
      _
    %p5180 = scmp.le.s32.totalorder 2, %s12
    // Predicated region
    $region49: #{forward.2} parent=5 // pred_check
      %p5181 = pneg %p5180
    $region50: #{forward.2} parent=5 // pred_check_branch
      %5183 = sbr.rel (%p5181) target = $region52
    $region51: #{forward.2} parent=5 // pred_region
      %s5184 = ssub.s32 %s12, 2
      // Predicated region
      $region53: #{forward.2} parent=51 // pred_check
        %p5185 = pneg %p197
      $region54: #{forward.2} parent=51 // pred_check_branch
        %5187 = sbr.rel (%p5185) target = $region56
      $region55: #{forward.2} parent=51 // pred_region
        %p5188 = scmp.lt.s32.totalorder %s18, 1
        %s5189 = scalar_select %p5188, %s18, 1
        %s5190 = smul.addr %s5189, 8
        %s5191 = scalar_lea.vmem %s6, %s5190
      $region56: #{forward.2} parent=51 // pred_fallthru
        _
    $region52: #{forward.2} parent=5 // pred_fallthru
      _
  $region6: #{forward.2} parent=0 // loop_footer
    %s16 = sadd.s32 1, %s12
  $region7: #{forward.2} parent=0 // loop_footer_branch
    %11 = sbr.rel target = $region3
  $region8: #{forward.2} parent=0 // loop_exit
    _

// kernel: forward.3
$region0: #{forward.3}
  #allocation0 [shape = 'u32[]', space=smem, size = 0x4, offset = 0x4, fixed_abs, tag = 'smem constant byte address 0x4 - core index']
  #allocation1 [shape = 'u32[144,128]{1,0:T(1,128)}', space=vmem, size = 0x12000, scoped, tag = 'internal scratch']
  %s0 = inlined_call_operand.vmem [shape: f32[2,8,128], index: 0, kind: input, shape index: {}]
  %s1 = inlined_call_operand.vmem [shape: f32[2,4,128], index: 1, kind: input, shape index: {}]
  %s2 = inlined_call_operand.vmem [shape: bf16[2,32,40], index: 2, kind: input, shape index: {}]
  %s3 = inlined_call_operand.vmem [shape: f32[2,32,1], index: 3, kind: input, shape index: {}]
  %s4 = inlined_call_operand.vmem [shape: bf16[2,8,160], index: 4, kind: input, shape index: {}]
  %s5 = inlined_call_operand.vmem [shape: f32[2,8,1], index: 5, kind: input, shape index: {}]
  %s6 = inlined_call_operand.vmem [shape: bf16[2,640,256], index: 6, kind: input, shape index: {}]
  %s7 = inlined_call_operand.vmem [shape: f32[2,1,256], index: 7, kind: input, shape index: {}]
  %s8 = inlined_call_operand.vmem [shape: bf16[2,1280,128], index: 8, kind: input, shape index: {}]
  %s9 = inlined_call_operand.vmem [shape: f32[2,1,128], index: 9, kind: input, shape index: {}]
  %s10 = inlined_call_operand.vmem [shape: f32[2,128], index: 10, kind: input, shape index: {}]
  %s11 = inlined_call_operand.vmem [shape: bf16[128,128], index: 11, kind: input, shape index: {}]
  %s12 = inlined_call_operand.vmem [shape: f32[1,128], index: 12, kind: input, shape index: {}]
  %s13 = inlined_call_operand.vmem [shape: f32[2,8,128], index: 13, kind: output, shape index: {}]
  %s14 = sld [smem:[#allocation0]]
  $region85: #{forward.3} parent=0
    _
  %s16 = ssub.s32 1, %s14
  %s17 = scalar_select 0, %s16, %s14
  loop: start=0, step=1, limit=4
  $region2: #{forward.3} parent=0 // loop_pre_header
    _
  $region3: #{forward.3} parent=0 // loop_header
    %s19 = sphi 0, %s23
    %p20 = scmp.ge.s32.totalorder %s19, 4
    %s29 = sphi 0, %s31
    %s32 = sphi 0, %s29
    %s33 = sphi 0, %s32
    %s49 = sphi 0, %s33
    %s53 = sphi 0, %s53
    %s55 = sphi 0, %s53
    %s56 = sphi 0, %s55
    %s70 = sphi 0, %s56
    %s74 = sphi 0, %s74
    %s76 = sphi 0, %s74
    %s77 = sphi 0, %s76
    %s91 = sphi 0, %s77
    %s95 = sphi 0, %s95
    %s97 = sphi 0, %s95
    %s98 = sphi 0, %s97
    %s112 = sphi 0, %s98
    %s116 = sphi 0, %s116
    %s118 = sphi 0, %s116
    %s119 = sphi 0, %s118
    %s133 = sphi 0, %s119
    %s137 = sphi 0, %s137
    %s139 = sphi 0, %s137
    %s140 = sphi 0, %s139
    %s154 = sphi 0, %s140
    %s158 = sphi 0, %s158
    %s160 = sphi 0, %s158
    %s161 = sphi 0, %s160
    %s175 = sphi 0, %s161
    %s179 = sphi 0, %s179
    %s181 = sphi 0, %s179
    %s182 = sphi 0, %s181
    %s196 = sphi 0, %s182
    %s200 = sphi 0, %s200
    %s202 = sphi 0, %s200
    %s203 = sphi 0, %s202
    %s217 = sphi 0, %s203
    %s221 = sphi 0, %s221
    %s223 = sphi 0, %s221
    %s224 = sphi 0, %s223
    %s238 = sphi 0, %s224
    %s242 = sphi 0, %s242
    %s244 = sphi 0, %s242
    %s245 = sphi 0, %s244
    %s259 = sphi 0, %s245
    %s263 = sphi 0, %s263
    %s265 = sphi 0, %s263
    %s266 = sphi 0, %s265
    %s280 = sphi 0, %s266
    %s284 = sphi 0, %s284
    %s286 = sphi 0, %s284
    %s287 = sphi 0, %s286
    %s301 = sphi 0, %s287
    %s307 = sphi 0, %s309
    %s310 = sphi 0, %s307
    %s311 = sphi 0, %s310
    %s327 = sphi 0, %s311
  $region4: #{forward.3} parent=0 // loop_header_branch
    %22 = sbr.rel (%p20) target = $region8
  $region5: #{forward.3} parent=0 // loop_body
    %s24 = ssub.s32 %s19, 1
    %s25 = ssub.s32 %s19, 2
    %s26 = sadd.s32 %s19, 1
    %s27 = ssub.s32 %s19, %s26
    %p28 = scmp.eq.s32.totalorder %s27, 0
    %s30 = sadd.s32 %s29, 1
    %s31 = scalar_select %p28, %s29, %s30
    %p34 = pneg %p28
    %p35 = scmp.eq.s32.totalorder %s19, 1
    %p36 = por %p34, %p35
    %p37 = scmp.ne.s32.totalorder %s29, %s32
    %p38 = scmp.eq.s32.totalorder %s19, 0
    %p39 = por %p37, %p38
    %p40 = scmp.ne.s32.totalorder %s29, %s32
    %p41 = scmp.eq.s32.totalorder %s24, 1
    %p42 = por %p40, %p41
    %p43 = scmp.ne.s32.totalorder %s32, %s33
    %p44 = scmp.eq.s32.totalorder %s24, 0
    %p45 = por %p43, %p44
    %p46 = scmp.ne.s32.totalorder %s32, %s33
    %p47 = scmp.eq.s32.totalorder %s25, 1
    %p48 = por %p46, %p47
    %p50 = scmp.ne.s32.totalorder %s33, %s49
    %p51 = scmp.eq.s32.totalorder %s25, 0
    %p52 = por %p50, %p51
    %s54 = sadd.s32 %s53, 1
    %p57 = scmp.eq.s32.totalorder %s19, 1
    %p58 = scmp.ne.s32.totalorder %s53, %s55
    %p59 = scmp.eq.s32.totalorder %s19, 0
    %p60 = por %p58, %p59
    %p61 = scmp.ne.s32.totalorder %s53, %s55
    %p62 = scmp.eq.s32.totalorder %s24, 1
    %p63 = por %p61, %p62
    %p64 = scmp.ne.s32.totalorder %s55, %s56
    %p65 = scmp.eq.s32.totalorder %s24, 0
    %p66 = por %p64, %p65
    %p67 = scmp.ne.s32.totalorder %s55, %s56
    %p68 = scmp.eq.s32.totalorder %s25, 1
    %p69 = por %p67, %p68
    %p71 = scmp.ne.s32.totalorder %s56, %s70
    %p72 = scmp.eq.s32.totalorder %s25, 0
    %p73 = por %p71, %p72
    %s75 = sadd.s32 %s74, 1
    %p78 = scmp.eq.s32.totalorder %s19, 1
    %p79 = scmp.ne.s32.totalorder %s74, %s76
    %p80 = scmp.eq.s32.totalorder %s19, 0
    %p81 = por %p79, %p80
    %p82 = scmp.ne.s32.totalorder %s74, %s76
    %p83 = scmp.eq.s32.totalorder %s24, 1
    %p84 = por %p82, %p83
    %p85 = scmp.ne.s32.totalorder %s76, %s77
    %p86 = scmp.eq.s32.totalorder %s24, 0
    %p87 = por %p85, %p86
    %p88 = scmp.ne.s32.totalorder %s76, %s77
    %p89 = scmp.eq.s32.totalorder %s25, 1
    %p90 = por %p88, %p89
    %p92 = scmp.ne.s32.totalorder %s77, %s91
    %p93 = scmp.eq.s32.totalorder %s25, 0
    %p94 = por %p92, %p93
    %s96 = sadd.s32 %s95, 1
    %p99 = scmp.eq.s32.totalorder %s19, 1
    %p100 = scmp.ne.s32.totalorder %s95, %s97
    %p101 = scmp.eq.s32.totalorder %s19, 0
    %p102 = por %p100, %p101
    %p103 = scmp.ne.s32.totalorder %s95, %s97
    %p104 = scmp.eq.s32.totalorder %s24, 1
    %p105 = por %p103, %p104
    %p106 = scmp.ne.s32.totalorder %s97, %s98
    %p107 = scmp.eq.s32.totalorder %s24, 0
    %p108 = por %p106, %p107
    %p109 = scmp.ne.s32.totalorder %s97, %s98
    %p110 = scmp.eq.s32.totalorder %s25, 1
    %p111 = por %p109, %p110
    %p113 = scmp.ne.s32.totalorder %s98, %s112
    %p114 = scmp.eq.s32.totalorder %s25, 0
    %p115 = por %p113, %p114
    %s117 = sadd.s32 %s116, 1
    %p120 = scmp.eq.s32.totalorder %s19, 1
    %p121 = scmp.ne.s32.totalorder %s116, %s118
    %p122 = scmp.eq.s32.totalorder %s19, 0
    %p123 = por %p121, %p122
    %p124 = scmp.ne.s32.totalorder %s116, %s118
    %p125 = scmp.eq.s32.totalorder %s24, 1
    %p126 = por %p124, %p125
    %p127 = scmp.ne.s32.totalorder %s118, %s119
    %p128 = scmp.eq.s32.totalorder %s24, 0
    %p129 = por %p127, %p128
    %p130 = scmp.ne.s32.totalorder %s118, %s119
    %p131 = scmp.eq.s32.totalorder %s25, 1
    %p132 = por %p130, %p131
    %p134 = scmp.ne.s32.totalorder %s119, %s133
    %p135 = scmp.eq.s32.totalorder %s25, 0
    %p136 = por %p134, %p135
    %s138 = sadd.s32 %s137, 1
    %p141 = scmp.eq.s32.totalorder %s19, 1
    %p142 = scmp.ne.s32.totalorder %s137, %s139
    %p143 = scmp.eq.s32.totalorder %s19, 0
    %p144 = por %p142, %p143
    %p145 = scmp.ne.s32.totalorder %s137, %s139
    %p146 = scmp.eq.s32.totalorder %s24, 1
    %p147 = por %p145, %p146
    %p148 = scmp.ne.s32.totalorder %s139, %s140
    %p149 = scmp.eq.s32.totalorder %s24, 0
    %p150 = por %p148, %p149
    %p151 = scmp.ne.s32.totalorder %s139, %s140
    %p152 = scmp.eq.s32.totalorder %s25, 1
    %p153 = por %p151, %p152
    %p155 = scmp.ne.s32.totalorder %s140, %s154
    %p156 = scmp.eq.s32.totalorder %s25, 0
    %p157 = por %p155, %p156
    %s159 = sadd.s32 %s158, 1
    %p162 = scmp.eq.s32.totalorder %s19, 1
    %p163 = scmp.ne.s32.totalorder %s158, %s160
    %p164 = scmp.eq.s32.totalorder %s19, 0
    %p165 = por %p163, %p164
    %p166 = scmp.ne.s32.totalorder %s158, %s160
    %p167 = scmp.eq.s32.totalorder %s24, 1
    %p168 = por %p166, %p167
    %p169 = scmp.ne.s32.totalorder %s160, %s161
    %p170 = scmp.eq.s32.totalorder %s24, 0
    %p171 = por %p169, %p170
    %p172 = scmp.ne.s32.totalorder %s160, %s161
    %p173 = scmp.eq.s32.totalorder %s25, 1
    %p174 = por %p172, %p173
    %p176 = scmp.ne.s32.totalorder %s161, %s175
    %p177 = scmp.eq.s32.totalorder %s25, 0
    %p178 = por %p176, %p177
    %s180 = sadd.s32 %s179, 1
    %p183 = scmp.eq.s32.totalorder %s19, 1
    %p184 = scmp.ne.s32.totalorder %s179, %s181
    %p185 = scmp.eq.s32.totalorder %s19, 0
    %p186 = por %p184, %p185
    %p187 = scmp.ne.s32.totalorder %s179, %s181
    %p188 = scmp.eq.s32.totalorder %s24, 1
    %p189 = por %p187, %p188
    %p190 = scmp.ne.s32.totalorder %s181, %s182
    %p191 = scmp.eq.s32.totalorder %s24, 0
    %p192 = por %p190, %p191
    %p193 = scmp.ne.s32.totalorder %s181, %s182
    %p194 = scmp.eq.s32.totalorder %s25, 1
    %p195 = por %p193, %p194
    %p197 = scmp.ne.s32.totalorder %s182, %s196
    %p198 = scmp.eq.s32.totalorder %s25, 0
    %p199 = por %p197, %p198
    %s201 = sadd.s32 %s200, 1
    %p204 = scmp.eq.s32.totalorder %s19, 1
    %p205 = scmp.ne.s32.totalorder %s200, %s202
    %p206 = scmp.eq.s32.totalorder %s19, 0
    %p207 = por %p205, %p206
    %p208 = scmp.ne.s32.totalorder %s200, %s202
    %p209 = scmp.eq.s32.totalorder %s24, 1
    %p210 = por %p208, %p209
    %p211 = scmp.ne.s32.totalorder %s202, %s203
    %p212 = scmp.eq.s32.totalorder %s24, 0
    %p213 = por %p211, %p212
    %p214 = scmp.ne.s32.totalorder %s202, %s203
    %p215 = scmp.eq.s32.totalorder %s25, 1
    %p216 = por %p214, %p215
    %p218 = scmp.ne.s32.totalorder %s203, %s217
    %p219 = scmp.eq.s32.totalorder %s25, 0
    %p220 = por %p218, %p219
    %s222 = sadd.s32 %s221, 1
    %p225 = scmp.eq.s32.totalorder %s19, 1
    %p226 = scmp.ne.s32.totalorder %s221, %s223
    %p227 = scmp.eq.s32.totalorder %s19, 0
    %p228 = por %p226, %p227
    %p229 = scmp.ne.s32.totalorder %s221, %s223
    %p230 = scmp.eq.s32.totalorder %s24, 1
    %p231 = por %p229, %p230
    %p232 = scmp.ne.s32.totalorder %s223, %s224
    %p233 = scmp.eq.s32.totalorder %s24, 0
    %p234 = por %p232, %p233
    %p235 = scmp.ne.s32.totalorder %s223, %s224
    %p236 = scmp.eq.s32.totalorder %s25, 1
    %p237 = por %p235, %p236
    %p239 = scmp.ne.s32.totalorder %s224, %s238
    %p240 = scmp.eq.s32.totalorder %s25, 0
    %p241 = por %p239, %p240
    %s243 = sadd.s32 %s242, 1
    %p246 = scmp.eq.s32.totalorder %s19, 1
    %p247 = scmp.ne.s32.totalorder %s242, %s244
    %p248 = scmp.eq.s32.totalorder %s19, 0
    %p249 = por %p247, %p248
    %p250 = scmp.ne.s32.totalorder %s242, %s244
    %p251 = scmp.eq.s32.totalorder %s24, 1
    %p252 = por %p250, %p251
    %p253 = scmp.ne.s32.totalorder %s244, %s245
    %p254 = scmp.eq.s32.totalorder %s24, 0
    %p255 = por %p253, %p254
    %p256 = scmp.ne.s32.totalorder %s244, %s245
    %p257 = scmp.eq.s32.totalorder %s25, 1
    %p258 = por %p256, %p257
    %p260 = scmp.ne.s32.totalorder %s245, %s259
    %p261 = scmp.eq.s32.totalorder %s25, 0
    %p262 = por %p260, %p261
    %s264 = sadd.s32 %s263, 1
    %p267 = scmp.eq.s32.totalorder %s19, 1
    %p268 = scmp.ne.s32.totalorder %s263, %s265
    %p269 = scmp.eq.s32.totalorder %s19, 0
    %p270 = por %p268, %p269
    %p271 = scmp.ne.s32.totalorder %s263, %s265
    %p272 = scmp.eq.s32.totalorder %s24, 1
    %p273 = por %p271, %p272
    %p274 = scmp.ne.s32.totalorder %s265, %s266
    %p275 = scmp.eq.s32.totalorder %s24, 0
    %p276 = por %p274, %p275
    %p277 = scmp.ne.s32.totalorder %s265, %s266
    %p278 = scmp.eq.s32.totalorder %s25, 1
    %p279 = por %p277, %p278
    %p281 = scmp.ne.s32.totalorder %s266, %s280
    %p282 = scmp.eq.s32.totalorder %s25, 0
    %p283 = por %p281, %p282
    %s285 = sadd.s32 %s284, 1
    %p288 = scmp.eq.s32.totalorder %s19, 1
    %p289 = scmp.ne.s32.totalorder %s284, %s286
    %p290 = scmp.eq.s32.totalorder %s19, 0
    %p291 = por %p289, %p290
    %p292 = scmp.ne.s32.totalorder %s284, %s286
    %p293 = scmp.eq.s32.totalorder %s24, 1
    %p294 = por %p292, %p293
    %p295 = scmp.ne.s32.totalorder %s286, %s287
    %p296 = scmp.eq.s32.totalorder %s24, 0
    %p297 = por %p295, %p296
    %p298 = scmp.ne.s32.totalorder %s286, %s287
    %p299 = scmp.eq.s32.totalorder %s25, 1
    %p300 = por %p298, %p299
    %p302 = scmp.ne.s32.totalorder %s287, %s301
    %p303 = scmp.eq.s32.totalorder %s25, 0
    %p304 = por %p302, %p303
    %s305 = ssub.s32 %s19, %s26
    %p306 = scmp.eq.s32.totalorder %s305, 0
    %s308 = sadd.s32 %s307, 1
    %s309 = scalar_select %p306, %s307, %s308
    %p312 = pneg %p306
    %p313 = scmp.eq.s32.totalorder %s19, 1
    %p314 = por %p312, %p313
    %p315 = scmp.ne.s32.totalorder %s307, %s310
    %p316 = scmp.eq.s32.totalorder %s19, 0
    %p317 = por %p315, %p316
    %p318 = scmp.ne.s32.totalorder %s307, %s310
    %p319 = scmp.eq.s32.totalorder %s24, 1
    %p320 = por %p318, %p319
    %p321 = scmp.ne.s32.totalorder %s310, %s311
    %p322 = scmp.eq.s32.totalorder %s24, 0
    %p323 = por %p321, %p322
    %p324 = scmp.ne.s32.totalorder %s310, %s311
    %p325 = scmp.eq.s32.totalorder %s25, 1
    %p326 = por %p324, %p325
    %p328 = scmp.ne.s32.totalorder %s311, %s327
    %p329 = scmp.eq.s32.totalorder %s25, 0
    %p330 = por %p328, %p329
    %p331 = scmp.le.s32.totalorder 1, %s19
    %p332 = scmp.lt.s32.totalorder %s19, 3
    %p333 = pnand %p331, %p332
    %p334 = pneg %p333
    // Predicated region
    $region9: #{forward.3} parent=5 // pred_check
      _
    $region10: #{forward.3} parent=5 // pred_check_branch
      %336 = sbr.rel (%p333) target = $region12
    $region11: #{forward.3} parent=5 // pred_region
      %s337 = ssub.s32 %s19, 1
      // Predicated region
      $region13: #{forward.3} parent=11 // pred_check
        %p338 = pneg %p66
      $region14: #{forward.3} parent=11 // pred_check_branch
        %340 = sbr.rel (%p338) target = $region16
      $region15: #{forward.3} parent=11 // pred_region
        _
      $region16: #{forward.3} parent=11 // pred_fallthru
        _
      // Predicated region
      $region17: #{forward.3} parent=11 // pred_check
        %p341 = pneg %p87
      $region18: #{forward.3} parent=11 // pred_check_branch
        %343 = sbr.rel (%p341) target = $region20
      $region19: #{forward.3} parent=11 // pred_region
        _
      $region20: #{forward.3} parent=11 // pred_fallthru
        _
      // Predicated region
      $region21: #{forward.3} parent=11 // pred_check
        %p344 = pneg %p108
      $region22: #{forward.3} parent=11 // pred_check_branch
        %346 = sbr.rel (%p344) target = $region24
      $region23: #{forward.3} parent=11 // pred_region
        _
      $region24: #{forward.3} parent=11 // pred_fallthru
        _
      // Predicated region
      $region25: #{forward.3} parent=11 // pred_check
        %p347 = pneg %p129
      $region26: #{forward.3} parent=11 // pred_check_branch
        %349 = sbr.rel (%p347) target = $region28
      $region27: #{forward.3} parent=11 // pred_region
        _
      $region28: #{forward.3} parent=11 // pred_fallthru
        _
      // Predicated region
      $region29: #{forward.3} parent=11 // pred_check
        %p350 = pneg %p150
      $region30: #{forward.3} parent=11 // pred_check_branch
        %352 = sbr.rel (%p350) target = $region32
      $region31: #{forward.3} parent=11 // pred_region
        _
      $region32: #{forward.3} parent=11 // pred_fallthru
        _
      // Predicated region
      $region33: #{forward.3} parent=11 // pred_check
        %p353 = pneg %p171
      $region34: #{forward.3} parent=11 // pred_check_branch
        %355 = sbr.rel (%p353) target = $region36
      $region35: #{forward.3} parent=11 // pred_region
        _
      $region36: #{forward.3} parent=11 // pred_fallthru
        _
      // Predicated region
      $region37: #{forward.3} parent=11 // pred_check
        %p356 = pneg %p192
      $region38: #{forward.3} parent=11 // pred_check_branch
        %358 = sbr.rel (%p356) target = $region40
      $region39: #{forward.3} parent=11 // pred_region
        _
      $region40: #{forward.3} parent=11 // pred_fallthru
        _
      // Predicated region
      $region41: #{forward.3} parent=11 // pred_check
        %p359 = pneg %p213
      $region42: #{forward.3} parent=11 // pred_check_branch
        %361 = sbr.rel (%p359) target = $region44
      $region43: #{forward.3} parent=11 // pred_region
        _
      $region44: #{forward.3} parent=11 // pred_fallthru
        _
      // Predicated region
      $region45: #{forward.3} parent=11 // pred_check
        %p362 = pneg %p234
      $region46: #{forward.3} parent=11 // pred_check_branch
        %364 = sbr.rel (%p362) target = $region48
      $region47: #{forward.3} parent=11 // pred_region
        _
      $region48: #{forward.3} parent=11 // pred_fallthru
        _
      // Predicated region
      $region49: #{forward.3} parent=11 // pred_check
        %p365 = pneg %p255
      $region50: #{forward.3} parent=11 // pred_check_branch
        %367 = sbr.rel (%p365) target = $region52
      $region51: #{forward.3} parent=11 // pred_region
        _
      $region52: #{forward.3} parent=11 // pred_fallthru
        _
      // Predicated region
      $region53: #{forward.3} parent=11 // pred_check
        %p368 = pneg %p276
      $region54: #{forward.3} parent=11 // pred_check_branch
        %370 = sbr.rel (%p368) target = $region56
      $region55: #{forward.3} parent=11 // pred_region
        _
      $region56: #{forward.3} parent=11 // pred_fallthru
        _
      // Predicated region
      $region57: #{forward.3} parent=11 // pred_check
        %p371 = pneg %p297
      $region58: #{forward.3} parent=11 // pred_check_branch
        %373 = sbr.rel (%p371) target = $region60
      $region59: #{forward.3} parent=11 // pred_region
        _
      $region60: #{forward.3} parent=11 // pred_fallthru
        _
    $region12: #{forward.3} parent=5 // pred_fallthru
      _
    %p374 = scmp.lt.s32.totalorder %s19, 2
    // Predicated region
    $region61: #{forward.3} parent=5 // pred_check
      %p375 = pneg %p374
    $region62: #{forward.3} parent=5 // pred_check_branch
      %377 = sbr.rel (%p375) target = $region64
    $region63: #{forward.3} parent=5 // pred_region
      // Predicated region
      $region65: #{forward.3} parent=63 // pred_check
        %p378 = pneg %p39
      $region66: #{forward.3} parent=63 // pred_check_branch
        %380 = sbr.rel (%p378) target = $region68
      $region67: #{forward.3} parent=63 // pred_region
        %p381 = scmp.lt.s32.totalorder %s19, 1
        %s382 = scalar_select %p381, %s19, 1
        %s383 = smul.addr %s382, 8
        %s384 = scalar_lea.vmem %s0, %s383
      $region68: #{forward.3} parent=63 // pred_fallthru
        _
    $region64: #{forward.3} parent=5 // pred_fallthru
      _
    %p385 = scmp.le.s32.totalorder 1, %s19
    %p386 = scmp.lt.s32.totalorder %s19, 3
    %p387 = pnand %p385, %p386
    %p388 = pneg %p387
    // Predicated region
    $region69: #{forward.3} parent=5 // pred_check
      _
    $region70: #{forward.3} parent=5 // pred_check_branch
      %390 = sbr.rel (%p387) target = $region72
    $region71: #{forward.3} parent=5 // pred_region
      %s391 = ssub.s32 %s19, 1
      %p392 = scmp.lt.s32.totalorder %s24, 1
      %s393 = scalar_select %p392, %s24, 1
      %s394 = smul.addr %s393, 8
      %s395 = scalar_lea.vmem %s0, %s394
      %p396 = pneg %p45
      %p397 = pneg %p42
      %p398 = pneg %p66
      %p399 = pneg %p63
      %p400 = pneg %p87
      %p401 = pneg %p84
      %p402 = pneg %p108
      %p403 = pneg %p105
      %p404 = pneg %p129
      %p405 = pneg %p126
      %p406 = pneg %p150
      %p407 = pneg %p147
      %p408 = pneg %p171
      %p409 = pneg %p168
      %p410 = pneg %p192
      %p411 = pneg %p189
      %p412 = pneg %p213
      %p413 = pneg %p210
      %p414 = pneg %p234
      %p415 = pneg %p231
      %p416 = pneg %p255
      %p417 = pneg %p252
      %p418 = pneg %p276
      %p419 = pneg %p273
      %p420 = pneg %p297
      %p421 = pneg %p294
      %p422 = pneg %p323
      %p423 = pneg %p320
      %p424 = scmp.lt.s32.totalorder %s24, 1
      %s425 = scalar_select %p424, %s24, 1
      %s426 = smul.addr %s425, 8
      %s427 = scalar_lea.vmem %s13, %s426
      %p428 = scmp.lt.s32.totalorder %s24, 1
      %s429 = scalar_select %p428, %s24, 1
      %s430 = smul.addr %s429, 8
      %s431 = scalar_lea.vmem %s0, %s430
      %p432 = scmp.lt.s32.totalorder %s24, 1
      %s433 = scalar_select %p432, %s24, 1
      %s434 = smul.addr %s433, 8
      %s435 = scalar_lea.vmem %s13, %s434
      %v437 = vld [vmem:[%s431] sm:$0xff]
      %v438 = vld [vmem:[%s1] sm:$0x1]
      %v439 = vld [vmem:[%s1 + $0x1] sm:$0x1]
      %440 = vadd.xlane.f32.xlu0 %v437
      %v441 = vpop.xlane.xlu0 %440
      %v442 = vrcp.pop 128.0
      %v443 = vmul.f32 %v441, %v442
      %v444 = vsub.f32 %v437, %v443
      %v445 = vmul.f32 %v444, %v444
      %446 = vadd.xlane.f32.xlu0 %v445
      %v447 = vpop.xlane.xlu0 %446
      %v448 = vmul.f32 %v447, %v442
      %v449 = vadd.f32 %v448, 1e-05
      %v450 = vrsqrt.pop %v449
      %v451 = vmul.f32 %v444, %v450
      %v452 = vlaneseq
      %v453 = vshrl.u32 %v452, 7
      %v454 = vsub.s32 0, %v453
      %v455 = vrot.slane %v438, %v454
      %v456 = vmul.f32 %v451, %v455
      %v457 = vlaneseq
      %v458 = vshrl.u32 %v457, 7
      %v459 = vsub.s32 0, %v458
      %v460 = vrot.slane %v439, %v459
      %v461 = vadd.f32 %v456, %v460
      %v462 = vmul.f32 %v461, 0.5
      %v463 = vtanh.pop %v462
      %v464 = vadd.f32 %v463, 1.0
      %v465 = vmul.f32 %v464, 0.5
      %v466 = vmul.f32 %v461, %v465
      %v467 = vsub.f32 %v461, -1.5
      %v468 = vmul.f32 %v467, %v467
      %v469 = vsub.f32 0.0, %v468
      %v470 = vmul.f32 %v469, 1.442695
      %v471 = vpow.pop %v470
      %v472 = vsub.f32 %v461, -0.5
      %v473 = vmul.f32 %v472, %v472
      %v474 = vsub.f32 0.0, %v473
      %v475 = vmul.f32 %v474, 1.442695
      %v476 = vpow.pop %v475
      %v477 = vsub.f32 %v461, 0.5
      %v478 = vmul.f32 %v477, %v477
      %v479 = vsub.f32 0.0, %v478
      %v480 = vmul.f32 %v479, 1.442695
      %v481 = vpow.pop %v480
      %v482 = vsub.f32 %v461, 1.5
      %v483 = vmul.f32 %v482, %v482
      %v484 = vsub.f32 0.0, %v483
      %v485 = vmul.f32 %v484, 1.442695
      %v486 = vpow.pop %v485
      %v487 = vpack.c.bf16 %v471, %v466
      %v488 = vpack.c.bf16 %v481, %v476
      %v489 = vpack.c.bf16 %v486, %v486
      %v490 = vld [vmem:[%s2] sm:$0xf]
      %v491 = vld [vmem:[%s2 + $0x4] sm:$0xf]
      %v492 = vld [vmem:[%s2 + $0x8] sm:$0xf]
      %v493 = vld [vmem:[%s2 + $0xc] sm:$0xf]
      %v494 = vld [vmem:[%s3] sm:$0xff]
      %v495 = vld [vmem:[%s3 + $0x8] sm:$0xff]
      %v496 = vld [vmem:[%s3 + $0x10] sm:$0xff]
      %v497 = vld [vmem:[%s3 + $0x18] sm:$0xff]
      %499 = vset.pattern.permute.xlu0 0
      %500 = vperm.xlu0 %499, %v494
      %v501 = vpop.permute.xlu0 %500
      %504 = vset.pattern.permute.xlu0 0
      %505 = vperm.xlu0 %504, %v495
      %v506 = vpop.permute.xlu0 %505
      %509 = vset.pattern.permute.xlu0 0
      %510 = vperm.xlu0 %509, %v496
      %v511 = vpop.permute.xlu0 %510
      %514 = vset.pattern.permute.xlu0 0
      %515 = vperm.xlu0 %514, %v497
      %v516 = vpop.permute.xlu0 %515
      %v522 = vunpack.c.l.b16 %v490
      %v523 = vunpack.c.l.b16 %v491
      %v524 = vunpack.c.l.b16 %v492
      %v525 = vunpack.c.l.b16 %v493
      %v526 = vpack.c.b16 %v523, %v522
      %v527 = vpack.c.b16 %v525, %v524
      %vm528 = vcmask 326656
      %v530 = vsel %vm528, %v526, 0
      %v533 = vsel %vm528, %v527, 0
      %vm535 = vcmask 1043456
      %v537 = vsel %vm535, %v489, 0
      %539 = vmatprep.subr.bf16.mxu0 0
      %540 = vmatpush1.bf16.msra.mxu0 %v487
      %541 = vmatprep.subr.bf16.mxu0 0
      %542 = vmatpush1.bf16.msra.mxu0 %v488
      %543 = vmatprep.subr.bf16.mxu0 0
      %544 = vmatpush1.bf16.msra.mxu0 %v537
      %545 = vmatprep.subr.bf16.mxu0 0
      %546 = vmatpush1.bf16.msra.mxu0 0
      %547 = vmatprep.subr.bf16.mxu0 0
      %548 = vmatpush1.bf16.msra.mxu0 0
      %549 = vmatprep.subr.bf16.mxu0 0
      %550 = vmatpush1.bf16.msra.mxu0 0
      %551 = vmatprep.subr.bf16.mxu0 0
      %552 = vmatpush1.bf16.msra.mxu0 0
      %553 = vmatprep.subr.bf16.mxu0 0
      %554 = vmatpush1.bf16.msra.mxu0 0
      %555 = vmatprep.subr.bf16.mxu0 0
      %556 = vmatpush1.bf16.msra.mxu0 0
      %557 = vmatprep.subr.bf16.mxu0 0
      %558 = vmatpush1.bf16.msra.mxu0 0
      %559 = vmatprep.subr.bf16.mxu0 0
      %560 = vmatpush1.bf16.msra.mxu0 0
      %561 = vmatprep.subr.bf16.mxu0 0
      %562 = vmatpush1.bf16.msra.mxu0 0
      %563 = vmatprep.subr.bf16.mxu0 0
      %564 = vmatpush1.bf16.msra.mxu0 0
      %565 = vmatprep.subr.bf16.mxu0 0
      %566 = vmatpush1.bf16.msra.mxu0 0
      %567 = vmatprep.subr.bf16.mxu0 0
      %568 = vmatpush1.bf16.msra.mxu0 0
      %569 = vmatprep.subr.bf16.mxu0 0
      %570 = vmatpush1.bf16.msra.mxu0 0
      %571 = vmatprep.mubr.bf16.mxu0 0
      %572 = vmatmul.mubr.bf16.gmra.mrb[0].mxu0 %v530
      %v573 = vpop.f32.mrb[0].mxu0
      %v574 = vadd.f32 %v501, %v573
      %v575 = vpop.f32.mrb[0].mxu0
      %v576 = vpop.f32.mrb[0].mxu0
      %v577 = vadd.f32 %v506, %v576
      %v578 = vpop.f32.mrb[0].mxu0
      %579 = vmatprep.mubr.bf16.mxu0 0
      %580 = vmatmul.mubr.bf16.gmra.mrb[0].mxu0 %v533
      %v581 = vpop.f32.mrb[0].mxu0
      %v582 = vadd.f32 %v511, %v581
      %v583 = vpop.f32.mrb[0].mxu0
      %v584 = vpop.f32.mrb[0].mxu0
      %v585 = vadd.f32 %v516, %v584
      %v586 = vpop.f32.mrb[0].mxu0
      %587 = vdwg.mxu0
      %v588 = vmul.f32 %v574, 0.5
      %v589 = vmul.f32 %v577, 0.5
      %v590 = vmul.f32 %v582, 0.5
      %v591 = vmul.f32 %v585, 0.5
      %v592 = vtanh.pop %v588
      %v593 = vtanh.pop %v589
      %v594 = vtanh.pop %v590
      %v595 = vtanh.pop %v591
      %v596 = vadd.f32 %v592, 1.0
      %v597 = vadd.f32 %v593, 1.0
      %v598 = vadd.f32 %v594, 1.0
      %v599 = vadd.f32 %v595, 1.0
      %v600 = vmul.f32 %v596, 0.5
      %v601 = vmul.f32 %v597, 0.5
      %v602 = vmul.f32 %v598, 0.5
      %v603 = vmul.f32 %v599, 0.5
      %v604 = vmul.f32 %v574, %v600
      %v605 = vmul.f32 %v577, %v601
      %v606 = vmul.f32 %v582, %v602
      %v607 = vmul.f32 %v585, %v603
      %v608 = vsub.f32 %v574, -1.5
      %v609 = vsub.f32 %v577, -1.5
      %v610 = vsub.f32 %v582, -1.5
      %v611 = vsub.f32 %v585, -1.5
      %v612 = vmul.f32 %v608, %v608
      %v613 = vmul.f32 %v609, %v609
      %v614 = vmul.f32 %v610, %v610
      %v615 = vmul.f32 %v611, %v611
      %v616 = vsub.f32 0.0, %v612
      %v617 = vsub.f32 0.0, %v613
      %v618 = vsub.f32 0.0, %v614
      %v619 = vsub.f32 0.0, %v615
      %v620 = vmul.f32 %v616, 1.442695
      %v621 = vpow.pop %v620
      %v622 = vmul.f32 %v617, 1.442695
      %v623 = vpow.pop %v622
      %v624 = vmul.f32 %v618, 1.442695
      %v625 = vpow.pop %v624
      %v626 = vmul.f32 %v619, 1.442695
      %v627 = vpow.pop %v626
      %v628 = vsub.f32 %v574, -0.5
      %v629 = vsub.f32 %v577, -0.5
      %v630 = vsub.f32 %v582, -0.5
      %v631 = vsub.f32 %v585, -0.5
      %v632 = vmul.f32 %v628, %v628
      %v633 = vmul.f32 %v629, %v629
      %v634 = vmul.f32 %v630, %v630
      %v635 = vmul.f32 %v631, %v631
      %v636 = vsub.f32 0.0, %v632
      %v637 = vsub.f32 0.0, %v633
      %v638 = vsub.f32 0.0, %v634
      %v639 = vsub.f32 0.0, %v635
      %v640 = vmul.f32 %v636, 1.442695
      %v641 = vpow.pop %v640
      %v642 = vmul.f32 %v637, 1.442695
      %v643 = vpow.pop %v642
      %v644 = vmul.f32 %v638, 1.442695
      %v645 = vpow.pop %v644
      %v646 = vmul.f32 %v639, 1.442695
      %v647 = vpow.pop %v646
      %v648 = vsub.f32 %v574, 0.5
      %v649 = vsub.f32 %v577, 0.5
      %v650 = vsub.f32 %v582, 0.5
      %v651 = vsub.f32 %v585, 0.5
      %v652 = vmul.f32 %v648, %v648
      %v653 = vmul.f32 %v649, %v649
      %v654 = vmul.f32 %v650, %v650
      %v655 = vmul.f32 %v651, %v651
      %v656 = vsub.f32 0.0, %v652
      %v657 = vsub.f32 0.0, %v653
      %v658 = vsub.f32 0.0, %v654
      %v659 = vsub.f32 0.0, %v655
      %v660 = vmul.f32 %v656, 1.442695
      %v661 = vpow.pop %v660
      %v662 = vmul.f32 %v657, 1.442695
      %v663 = vpow.pop %v662
      %v664 = vmul.f32 %v658, 1.442695
      %v665 = vpow.pop %v664
      %v666 = vmul.f32 %v659, 1.442695
      %v667 = vpow.pop %v666
      %v668 = vsub.f32 %v574, 1.5
      %v669 = vsub.f32 %v577, 1.5
      %v670 = vsub.f32 %v582, 1.5
      %v671 = vsub.f32 %v585, 1.5
      %v672 = vmul.f32 %v668, %v668
      %v673 = vmul.f32 %v669, %v669
      %v674 = vmul.f32 %v670, %v670
      %v675 = vmul.f32 %v671, %v671
      %v676 = vsub.f32 0.0, %v672
      %v677 = vsub.f32 0.0, %v673
      %v678 = vsub.f32 0.0, %v674
      %v679 = vsub.f32 0.0, %v675
      %v680 = vmul.f32 %v676, 1.442695
      %v681 = vpow.pop %v680
      %v682 = vmul.f32 %v677, 1.442695
      %v683 = vpow.pop %v682
      %v684 = vmul.f32 %v678, 1.442695
      %v685 = vpow.pop %v684
      %v686 = vmul.f32 %v679, 1.442695
      %v687 = vpow.pop %v686
      %v688 = vpack.c.bf16 %v605, %v604
      %v689 = vpack.c.bf16 %v607, %v606
      %v690 = vpack.c.bf16 %v623, %v621
      %v691 = vpack.c.bf16 %v627, %v625
      %v692 = vpack.c.bf16 %v643, %v641
      %v693 = vpack.c.bf16 %v647, %v645
      %v694 = vpack.c.bf16 %v663, %v661
      %v695 = vpack.c.bf16 %v667, %v665
      %v696 = vpack.c.bf16 %v683, %v681
      %v697 = vpack.c.bf16 %v687, %v685
      %v698 = vld [vmem:[%s4] sm:$0xff]
      %v699 = vld [vmem:[%s5] sm:$0xff]
      %701 = vset.pattern.permute.xlu0 0
      %702 = vperm.xlu0 %701, %v699
      %v703 = vpop.permute.xlu0 %702
      %v706 = vunpack.c.l.b16 %v698
      %v707 = vunpack.c.h.b16 %v698
      %v708 = vpack.c.b16 %v706, %v706
      %v709 = vpack.c.b16 %v707, %v707
      %vm711 = vcmask 261120
      %v713 = vsel %vm711, %v709, 0
      %715 = vmatprep.subr.bf16.mxu0 0
      %716 = vmatpush1.bf16.msra.mxu0 %v688
      %717 = vmatprep.subr.bf16.mxu0 0
      %718 = vmatpush1.bf16.msra.mxu0 %v689
      %719 = vmatprep.subr.bf16.mxu0 0
      %720 = vmatpush1.bf16.msra.mxu0 %v690
      %721 = vmatprep.subr.bf16.mxu0 0
      %722 = vmatpush1.bf16.msra.mxu0 %v691
      %723 = vmatprep.subr.bf16.mxu0 0
      %724 = vmatpush1.bf16.msra.mxu0 %v692
      %725 = vmatprep.subr.bf16.mxu0 0
      %726 = vmatpush1.bf16.msra.mxu0 %v693
      %727 = vmatprep.subr.bf16.mxu0 0
      %728 = vmatpush1.bf16.msra.mxu0 %v694
      %729 = vmatprep.subr.bf16.mxu0 0
      %730 = vmatpush1.bf16.msra.mxu0 %v695
      %731 = vmatprep.subr.bf16.mxu0 0
      %732 = vmatpush1.bf16.msra.mxu0 %v696
      %733 = vmatprep.subr.bf16.mxu0 0
      %734 = vmatpush1.bf16.msra.mxu0 %v697
      %735 = vmatprep.subr.bf16.mxu0 0
      %736 = vmatpush1.bf16.msra.mxu0 0
      %737 = vmatprep.subr.bf16.mxu0 0
      %738 = vmatpush1.bf16.msra.mxu0 0
      %739 = vmatprep.subr.bf16.mxu0 0
      %740 = vmatpush1.bf16.msra.mxu0 0
      %741 = vmatprep.subr.bf16.mxu0 0
      %742 = vmatpush1.bf16.msra.mxu0 0
      %743 = vmatprep.subr.bf16.mxu0 0
      %744 = vmatpush1.bf16.msra.mxu0 0
      %745 = vmatprep.subr.bf16.mxu0 0
      %746 = vmatpush1.bf16.msra.mxu0 0
      %747 = vmatprep.mubr.bf16.mxu0 %v713
      %748 = vmatmul.mubr.bf16.gmra.mrb[0].mxu0 %v708
      %v749 = vpop.f32.mrb[0].mxu0
      %v750 = vadd.f32 %v703, %v749
      %v751 = vpop.f32.mrb[0].mxu0
      %v752 = vpop.f32.mrb[0].mxu0
      %v753 = vpop.f32.mrb[0].mxu0
      %754 = vdwg.mxu0
      %v755 = vadd.f32 %v437, %v750
      %v756 = vld [vmem:[%s1 + $0x2] sm:$0x1]
      %v757 = vld [vmem:[%s1 + $0x3] sm:$0x1]
      %758 = vadd.xlane.f32.xlu0 %v755
      %v759 = vpop.xlane.xlu0 %758
      %v760 = vmul.f32 %v759, %v442
      %v761 = vsub.f32 %v755, %v760
      %v762 = vmul.f32 %v761, %v761
      %763 = vadd.xlane.f32.xlu0 %v762
      %v764 = vpop.xlane.xlu0 %763
      %v765 = vmul.f32 %v764, %v442
      %v766 = vadd.f32 %v765, 1e-05
      %v767 = vrsqrt.pop %v766
      %v768 = vmul.f32 %v761, %v767
      %v769 = vlaneseq
      %v770 = vshrl.u32 %v769, 7
      %v771 = vsub.s32 0, %v770
      %v772 = vrot.slane %v756, %v771
      %v773 = vmul.f32 %v768, %v772
      %v774 = vlaneseq
      %v775 = vshrl.u32 %v774, 7
      %v776 = vsub.s32 0, %v775
      %v777 = vrot.slane %v757, %v776
      %v778 = vadd.f32 %v773, %v777
      %v779 = vmul.f32 %v778, 0.5
      %v780 = vtanh.pop %v779
      %v781 = vadd.f32 %v780, 1.0
      %v782 = vmul.f32 %v781, 0.5
      %v783 = vmul.f32 %v778, %v782
      %v784 = vsub.f32 %v778, -1.5
      %v785 = vmul.f32 %v784, %v784
      %v786 = vsub.f32 0.0, %v785
      %v787 = vmul.f32 %v786, 1.442695
      %v788 = vpow.pop %v787
      %v789 = vsub.f32 %v778, -0.5
      %v790 = vmul.f32 %v789, %v789
      %v791 = vsub.f32 0.0, %v790
      %v792 = vmul.f32 %v791, 1.442695
      %v793 = vpow.pop %v792
      %v794 = vsub.f32 %v778, 0.5
      %v795 = vmul.f32 %v794, %v794
      %v796 = vsub.f32 0.0, %v795
      %v797 = vmul.f32 %v796, 1.442695
      %v798 = vpow.pop %v797
      %v799 = vsub.f32 %v778, 1.5
      %v800 = vmul.f32 %v799, %v799
      %v801 = vsub.f32 0.0, %v800
      %v802 = vmul.f32 %v801, 1.442695
      %v803 = vpow.pop %v802
      %v804 = vpack.c.bf16 %v783, %v783
      %v805 = vpack.c.bf16 %v788, %v788
      %v806 = vpack.c.bf16 %v793, %v793
      %v807 = vpack.c.bf16 %v798, %v798
      %v808 = vpack.c.bf16 %v803, %v803
      %v809 = vld [vmem:[%s6] sm:$0xff]
      %v810 = vld [vmem:[%s6 + $0x8] sm:$0xff]
      %v811 = vld [vmem:[%s6 + $0x10] sm:$0xff]
      %v812 = vld [vmem:[%s6 + $0x18] sm:$0xff]
      %v813 = vld [vmem:[%s6 + $0x20] sm:$0xff]
      %v814 = vld [vmem:[%s6 + $0x28] sm:$0xff]
      %v815 = vld [vmem:[%s6 + $0x30] sm:$0xff]
      %v816 = vld [vmem:[%s6 + $0x38] sm:$0xff]
      %v817 = vld [vmem:[%s6 + $0x40] sm:$0xff]
      %v818 = vld [vmem:[%s6 + $0x48] sm:$0xff]
      %v819 = vld [vmem:[%s6 + $0x50] sm:$0xff]
      %v820 = vld [vmem:[%s6 + $0x58] sm:$0xff]
      %v821 = vld [vmem:[%s6 + $0x60] sm:$0xff]
      %v822 = vld [vmem:[%s6 + $0x68] sm:$0xff]
      %v823 = vld [vmem:[%s6 + $0x70] sm:$0xff]
      %v824 = vld [vmem:[%s6 + $0x78] sm:$0xff]
      %v825 = vld [vmem:[%s6 + $0x80] sm:$0xff]
      %v826 = vld [vmem:[%s6 + $0x88] sm:$0xff]
      %v827 = vld [vmem:[%s6 + $0x90] sm:$0xff]
      %v828 = vld [vmem:[%s6 + $0x98] sm:$0xff]
      %v829 = vld [vmem:[%s6 + $0xa0] sm:$0xff]
      %v830 = vld [vmem:[%s6 + $0xa8] sm:$0xff]
      %v831 = vld [vmem:[%s6 + $0xb0] sm:$0xff]
      %v832 = vld [vmem:[%s6 + $0xb8] sm:$0xff]
      %v833 = vld [vmem:[%s6 + $0xc0] sm:$0xff]
      %v834 = vld [vmem:[%s6 + $0xc8] sm:$0xff]
      %v835 = vld [vmem:[%s6 + $0xd0] sm:$0xff]
      %v836 = vld [vmem:[%s6 + $0xd8] sm:$0xff]
      %v837 = vld [vmem:[%s6 + $0xe0] sm:$0xff]
      %v838 = vld [vmem:[%s6 + $0xe8] sm:$0xff]
      %v839 = vld [vmem:[%s6 + $0xf0] sm:$0xff]
      %v840 = vld [vmem:[%s6 + $0xf8] sm:$0xff]
      %v841 = vld [vmem:[%s6 + $0x100] sm:$0xff]
      %v842 = vld [vmem:[%s6 + $0x108] sm:$0xff]
      %v843 = vld [vmem:[%s6 + $0x110] sm:$0xff]
      %v844 = vld [vmem:[%s6 + $0x118] sm:$0xff]
      %v845 = vld [vmem:[%s6 + $0x120] sm:$0xff]
      %v846 = vld [vmem:[%s6 + $0x128] sm:$0xff]
      %v847 = vld [vmem:[%s6 + $0x130] sm:$0xff]
      %v848 = vld [vmem:[%s6 + $0x138] sm:$0xff]
      %v849 = vld [vmem:[%s6 + $0x140] sm:$0xff]
      %v850 = vld [vmem:[%s6 + $0x148] sm:$0xff]
      %v851 = vld [vmem:[%s6 + $0x150] sm:$0xff]
      %v852 = vld [vmem:[%s6 + $0x158] sm:$0xff]
      %v853 = vld [vmem:[%s6 + $0x160] sm:$0xff]
      %v854 = vld [vmem:[%s6 + $0x168] sm:$0xff]
      %v855 = vld [vmem:[%s6 + $0x170] sm:$0xff]
      %v856 = vld [vmem:[%s6 + $0x178] sm:$0xff]
      %v857 = vld [vmem:[%s6 + $0x180] sm:$0xff]
      %v858 = vld [vmem:[%s6 + $0x188] sm:$0xff]
      %v859 = vld [vmem:[%s6 + $0x190] sm:$0xff]
      %v860 = vld [vmem:[%s6 + $0x198] sm:$0xff]
      %v861 = vld [vmem:[%s6 + $0x1a0] sm:$0xff]
      %v862 = vld [vmem:[%s6 + $0x1a8] sm:$0xff]
      %v863 = vld [vmem:[%s6 + $0x1b0] sm:$0xff]
      %v864 = vld [vmem:[%s6 + $0x1b8] sm:$0xff]
      %v865 = vld [vmem:[%s6 + $0x1c0] sm:$0xff]
      %v866 = vld [vmem:[%s6 + $0x1c8] sm:$0xff]
      %v867 = vld [vmem:[%s6 + $0x1d0] sm:$0xff]
      %v868 = vld [vmem:[%s6 + $0x1d8] sm:$0xff]
      %v869 = vld [vmem:[%s6 + $0x1e0] sm:$0xff]
      %v870 = vld [vmem:[%s6 + $0x1e8] sm:$0xff]
      %v871 = vld [vmem:[%s6 + $0x1f0] sm:$0xff]
      %v872 = vld [vmem:[%s6 + $0x1f8] sm:$0xff]
      %v873 = vld [vmem:[%s6 + $0x200] sm:$0xff]
      %v874 = vld [vmem:[%s6 + $0x208] sm:$0xff]
      %v875 = vld [vmem:[%s6 + $0x210] sm:$0xff]
      %v876 = vld [vmem:[%s6 + $0x218] sm:$0xff]
      %v877 = vld [vmem:[%s6 + $0x220] sm:$0xff]
      %v878 = vld [vmem:[%s6 + $0x228] sm:$0xff]
      %v879 = vld [vmem:[%s6 + $0x230] sm:$0xff]
      %v880 = vld [vmem:[%s6 + $0x238] sm:$0xff]
      %v881 = vld [vmem:[%s6 + $0x240] sm:$0xff]
      %v882 = vld [vmem:[%s6 + $0x248] sm:$0xff]
      %v883 = vld [vmem:[%s6 + $0x250] sm:$0xff]
      %v884 = vld [vmem:[%s6 + $0x258] sm:$0xff]
      %v885 = vld [vmem:[%s6 + $0x260] sm:$0xff]
      %v886 = vld [vmem:[%s6 + $0x268] sm:$0xff]
      %v887 = vld [vmem:[%s6 + $0x270] sm:$0xff]
      %v888 = vld [vmem:[%s6 + $0x278] sm:$0xff]
      %v889 = vld [vmem:[%s7] sm:$0x3]
      %v891 = vlaneseq
      %v892 = vshrl.u32 %v891, 7
      %v893 = vsub.s32 0, %v892
      %v894 = vrot.slane %v889, %v893
      %v895 = vlaneseq
      %v896 = vshrl.u32 %v895, 7
      %v897 = vsub.s32 1, %v896
      %v898 = vrot.slane %v889, %v897
      %v981 = vunpack.c.l.b16 %v809
      %v982 = vunpack.c.h.b16 %v809
      %v983 = vunpack.c.l.b16 %v810
      %v984 = vunpack.c.h.b16 %v810
      %v985 = vunpack.c.l.b16 %v811
      %v986 = vunpack.c.h.b16 %v811
      %v987 = vunpack.c.l.b16 %v812
      %v988 = vunpack.c.h.b16 %v812
      %v989 = vunpack.c.l.b16 %v813
      %v990 = vunpack.c.h.b16 %v813
      %v991 = vunpack.c.l.b16 %v814
      %v992 = vunpack.c.h.b16 %v814
      %v993 = vunpack.c.l.b16 %v815
      %v994 = vunpack.c.h.b16 %v815
      %v995 = vunpack.c.l.b16 %v816
      %v996 = vunpack.c.h.b16 %v816
      %v997 = vunpack.c.l.b16 %v817
      %v998 = vunpack.c.h.b16 %v817
      %v999 = vunpack.c.l.b16 %v818
      %v1000 = vunpack.c.h.b16 %v818
      %v1001 = vunpack.c.l.b16 %v819
      %v1002 = vunpack.c.h.b16 %v819
      %v1003 = vunpack.c.l.b16 %v820
      %v1004 = vunpack.c.h.b16 %v820
      %v1005 = vunpack.c.l.b16 %v821
      %v1006 = vunpack.c.h.b16 %v821
      %v1007 = vunpack.c.l.b16 %v822
      %v1008 = vunpack.c.h.b16 %v822
      %v1009 = vunpack.c.l.b16 %v823
      %v1010 = vunpack.c.h.b16 %v823
      %v1011 = vunpack.c.l.b16 %v824
      %v1012 = vunpack.c.h.b16 %v824
      %v1013 = vunpack.c.l.b16 %v825
      %v1014 = vunpack.c.h.b16 %v825
      %v1015 = vunpack.c.l.b16 %v826
      %v1016 = vunpack.c.h.b16 %v826
      %v1017 = vunpack.c.l.b16 %v827
      %v1018 = vunpack.c.h.b16 %v827
      %v1019 = vunpack.c.l.b16 %v828
      %v1020 = vunpack.c.h.b16 %v828
      %v1021 = vunpack.c.l.b16 %v829
      %v1022 = vunpack.c.h.b16 %v829
      %v1023 = vunpack.c.l.b16 %v830
      %v1024 = vunpack.c.h.b16 %v830
      %v1025 = vunpack.c.l.b16 %v831
      %v1026 = vunpack.c.h.b16 %v831
      %v1027 = vunpack.c.l.b16 %v832
      %v1028 = vunpack.c.h.b16 %v832
      %v1029 = vunpack.c.l.b16 %v833
      %v1030 = vunpack.c.h.b16 %v833
      %v1031 = vunpack.c.l.b16 %v834
      %v1032 = vunpack.c.h.b16 %v834
      %v1033 = vunpack.c.l.b16 %v835
      %v1034 = vunpack.c.h.b16 %v835
      %v1035 = vunpack.c.l.b16 %v836
      %v1036 = vunpack.c.h.b16 %v836
      %v1037 = vunpack.c.l.b16 %v837
      %v1038 = vunpack.c.h.b16 %v837
      %v1039 = vunpack.c.l.b16 %v838
      %v1040 = vunpack.c.h.b16 %v838
      %v1041 = vunpack.c.l.b16 %v839
      %v1042 = vunpack.c.h.b16 %v839
      %v1043 = vunpack.c.l.b16 %v840
      %v1044 = vunpack.c.h.b16 %v840
      %v1045 = vunpack.c.l.b16 %v841
      %v1046 = vunpack.c.h.b16 %v841
      %v1047 = vunpack.c.l.b16 %v842
      %v1048 = vunpack.c.h.b16 %v842
      %v1049 = vunpack.c.l.b16 %v843
      %v1050 = vunpack.c.h.b16 %v843
      %v1051 = vunpack.c.l.b16 %v844
      %v1052 = vunpack.c.h.b16 %v844
      %v1053 = vunpack.c.l.b16 %v845
      %v1054 = vunpack.c.h.b16 %v845
      %v1055 = vunpack.c.l.b16 %v846
      %v1056 = vunpack.c.h.b16 %v846
      %v1057 = vunpack.c.l.b16 %v847
      %v1058 = vunpack.c.h.b16 %v847
      %v1059 = vunpack.c.l.b16 %v848
      %v1060 = vunpack.c.h.b16 %v848
      %v1061 = vunpack.c.l.b16 %v849
      %v1062 = vunpack.c.h.b16 %v849
      %v1063 = vunpack.c.l.b16 %v850
      %v1064 = vunpack.c.h.b16 %v850
      %v1065 = vunpack.c.l.b16 %v851
      %v1066 = vunpack.c.h.b16 %v851
      %v1067 = vunpack.c.l.b16 %v852
      %v1068 = vunpack.c.h.b16 %v852
      %v1069 = vunpack.c.l.b16 %v853
      %v1070 = vunpack.c.h.b16 %v853
      %v1071 = vunpack.c.l.b16 %v854
      %v1072 = vunpack.c.h.b16 %v854
      %v1073 = vunpack.c.l.b16 %v855
      %v1074 = vunpack.c.h.b16 %v855
      %v1075 = vunpack.c.l.b16 %v856
      %v1076 = vunpack.c.h.b16 %v856
      %v1077 = vunpack.c.l.b16 %v857
      %v1078 = vunpack.c.h.b16 %v857
      %v1079 = vunpack.c.l.b16 %v858
      %v1080 = vunpack.c.h.b16 %v858
      %v1081 = vunpack.c.l.b16 %v859
      %v1082 = vunpack.c.h.b16 %v859
      %v1083 = vunpack.c.l.b16 %v860
      %v1084 = vunpack.c.h.b16 %v860
      %v1085 = vunpack.c.l.b16 %v861
      %v1086 = vunpack.c.h.b16 %v861
      %v1087 = vunpack.c.l.b16 %v862
      %v1088 = vunpack.c.h.b16 %v862
      %v1089 = vunpack.c.l.b16 %v863
      %v1090 = vunpack.c.h.b16 %v863
      %v1091 = vunpack.c.l.b16 %v864
      %v1092 = vunpack.c.h.b16 %v864
      %v1093 = vunpack.c.l.b16 %v865
      %v1094 = vunpack.c.h.b16 %v865
      %v1095 = vunpack.c.l.b16 %v866
      %v1096 = vunpack.c.h.b16 %v866
      %v1097 = vunpack.c.l.b16 %v867
      %v1098 = vunpack.c.h.b16 %v867
      %v1099 = vunpack.c.l.b16 %v868
      %v1100 = vunpack.c.h.b16 %v868
      %v1101 = vunpack.c.l.b16 %v869
      %v1102 = vunpack.c.h.b16 %v869
      %v1103 = vunpack.c.l.b16 %v870
      %v1104 = vunpack.c.h.b16 %v870
      %v1105 = vunpack.c.l.b16 %v871
      %v1106 = vunpack.c.h.b16 %v871
      %v1107 = vunpack.c.l.b16 %v872
      %v1108 = vunpack.c.h.b16 %v872
      %v1109 = vunpack.c.l.b16 %v873
      %v1110 = vunpack.c.h.b16 %v873
      %v1111 = vunpack.c.l.b16 %v874
      %v1112 = vunpack.c.h.b16 %v874
      %v1113 = vunpack.c.l.b16 %v875
      %v1114 = vunpack.c.h.b16 %v875
      %v1115 = vunpack.c.l.b16 %v876
      %v1116 = vunpack.c.h.b16 %v876
      %v1117 = vunpack.c.l.b16 %v877
      %v1118 = vunpack.c.h.b16 %v877
      %v1119 = vunpack.c.l.b16 %v878
      %v1120 = vunpack.c.h.b16 %v878
      %v1121 = vunpack.c.l.b16 %v879
      %v1122 = vunpack.c.h.b16 %v879
      %v1123 = vunpack.c.l.b16 %v880
      %v1124 = vunpack.c.h.b16 %v880
      %v1125 = vunpack.c.l.b16 %v881
      %v1126 = vunpack.c.h.b16 %v881
      %v1127 = vunpack.c.l.b16 %v882
      %v1128 = vunpack.c.h.b16 %v882
      %v1129 = vunpack.c.l.b16 %v883
      %v1130 = vunpack.c.h.b16 %v883
      %v1131 = vunpack.c.l.b16 %v884
      %v1132 = vunpack.c.h.b16 %v884
      %v1133 = vunpack.c.l.b16 %v885
      %v1134 = vunpack.c.h.b16 %v885
      %v1135 = vunpack.c.l.b16 %v886
      %v1136 = vunpack.c.h.b16 %v886
      %v1137 = vunpack.c.l.b16 %v887
      %v1138 = vunpack.c.h.b16 %v887
      %v1139 = vunpack.c.l.b16 %v888
      %v1140 = vunpack.c.h.b16 %v888
      %v1141 = vpack.c.b16 %v983, %v981
      %v1142 = vpack.c.b16 %v984, %v982
      %v1143 = vpack.c.b16 %v987, %v985
      %v1144 = vpack.c.b16 %v988, %v986
      %v1145 = vpack.c.b16 %v991, %v989
      %v1146 = vpack.c.b16 %v992, %v990
      %v1147 = vpack.c.b16 %v995, %v993
      %v1148 = vpack.c.b16 %v996, %v994
      %v1149 = vpack.c.b16 %v999, %v997
      %v1150 = vpack.c.b16 %v1000, %v998
      %v1151 = vpack.c.b16 %v1003, %v1001
      %v1152 = vpack.c.b16 %v1004, %v1002
      %v1153 = vpack.c.b16 %v1007, %v1005
      %v1154 = vpack.c.b16 %v1008, %v1006
      %v1155 = vpack.c.b16 %v1011, %v1009
      %v1156 = vpack.c.b16 %v1012, %v1010
      %v1157 = vpack.c.b16 %v1015, %v1013
      %v1158 = vpack.c.b16 %v1016, %v1014
      %v1159 = vpack.c.b16 %v1019, %v1017
      %v1160 = vpack.c.b16 %v1020, %v1018
      %v1161 = vpack.c.b16 %v1023, %v1021
      %v1162 = vpack.c.b16 %v1024, %v1022
      %v1163 = vpack.c.b16 %v1027, %v1025
      %v1164 = vpack.c.b16 %v1028, %v1026
      %v1165 = vpack.c.b16 %v1031, %v1029
      %v1166 = vpack.c.b16 %v1032, %v1030
      %v1167 = vpack.c.b16 %v1035, %v1033
      %v1168 = vpack.c.b16 %v1036, %v1034
      %v1169 = vpack.c.b16 %v1039, %v1037
      %v1170 = vpack.c.b16 %v1040, %v1038
      %v1171 = vpack.c.b16 %v1043, %v1041
      %v1172 = vpack.c.b16 %v1044, %v1042
      %v1173 = vpack.c.b16 %v1047, %v1045
      %v1174 = vpack.c.b16 %v1048, %v1046
      %v1175 = vpack.c.b16 %v1051, %v1049
      %v1176 = vpack.c.b16 %v1052, %v1050
      %v1177 = vpack.c.b16 %v1055, %v1053
      %v1178 = vpack.c.b16 %v1056, %v1054
      %v1179 = vpack.c.b16 %v1059, %v1057
      %v1180 = vpack.c.b16 %v1060, %v1058
      %v1181 = vpack.c.b16 %v1063, %v1061
      %v1182 = vpack.c.b16 %v1064, %v1062
      %v1183 = vpack.c.b16 %v1067, %v1065
      %v1184 = vpack.c.b16 %v1068, %v1066
      %v1185 = vpack.c.b16 %v1071, %v1069
      %v1186 = vpack.c.b16 %v1072, %v1070
      %v1187 = vpack.c.b16 %v1075, %v1073
      %v1188 = vpack.c.b16 %v1076, %v1074
      %v1189 = vpack.c.b16 %v1079, %v1077
      %v1190 = vpack.c.b16 %v1080, %v1078
      %v1191 = vpack.c.b16 %v1083, %v1081
      %v1192 = vpack.c.b16 %v1084, %v1082
      %v1193 = vpack.c.b16 %v1087, %v1085
      %v1194 = vpack.c.b16 %v1088, %v1086
      %v1195 = vpack.c.b16 %v1091, %v1089
      %v1196 = vpack.c.b16 %v1092, %v1090
      %v1197 = vpack.c.b16 %v1095, %v1093
      %v1198 = vpack.c.b16 %v1096, %v1094
      %v1199 = vpack.c.b16 %v1099, %v1097
      %v1200 = vpack.c.b16 %v1100, %v1098
      %v1201 = vpack.c.b16 %v1103, %v1101
      %v1202 = vpack.c.b16 %v1104, %v1102
      %v1203 = vpack.c.b16 %v1107, %v1105
      %v1204 = vpack.c.b16 %v1108, %v1106
      %v1205 = vpack.c.b16 %v1111, %v1109
      %v1206 = vpack.c.b16 %v1112, %v1110
      %v1207 = vpack.c.b16 %v1115, %v1113
      %v1208 = vpack.c.b16 %v1116, %v1114
      %v1209 = vpack.c.b16 %v1119, %v1117
      %v1210 = vpack.c.b16 %v1120, %v1118
      %v1211 = vpack.c.b16 %v1123, %v1121
      %v1212 = vpack.c.b16 %v1124, %v1122
      %v1213 = vpack.c.b16 %v1127, %v1125
      %v1214 = vpack.c.b16 %v1128, %v1126
      %v1215 = vpack.c.b16 %v1131, %v1129
      %v1216 = vpack.c.b16 %v1132, %v1130
      %v1217 = vpack.c.b16 %v1135, %v1133
      %v1218 = vpack.c.b16 %v1136, %v1134
      %v1219 = vpack.c.b16 %v1139, %v1137
      %v1220 = vpack.c.b16 %v1140, %v1138
      %1301 = vmatprep.subr.bf16.mxu0 %v1142
      %1302 = vmatpush1.bf16.msra.mxu0 %v1141
      %1303 = vmatprep.subr.bf16.mxu0 %v1144
      %1304 = vmatpush1.bf16.msra.mxu0 %v1143
      %1305 = vmatprep.subr.bf16.mxu0 %v1146
      %1306 = vmatpush1.bf16.msra.mxu0 %v1145
      %1307 = vmatprep.subr.bf16.mxu0 %v1148
      %1308 = vmatpush1.bf16.msra.mxu0 %v1147
      %1309 = vmatprep.subr.bf16.mxu0 %v1150
      %1310 = vmatpush1.bf16.msra.mxu0 %v1149
      %1311 = vmatprep.subr.bf16.mxu0 %v1152
      %1312 = vmatpush1.bf16.msra.mxu0 %v1151
      %1313 = vmatprep.subr.bf16.mxu0 %v1154
      %1314 = vmatpush1.bf16.msra.mxu0 %v1153
      %1315 = vmatprep.subr.bf16.mxu0 %v1156
      %1316 = vmatpush1.bf16.msra.mxu0 %v1155
      %1317 = vmatprep.subr.bf16.mxu0 %v1158
      %1318 = vmatpush1.bf16.msra.mxu0 %v1157
      %1319 = vmatprep.subr.bf16.mxu0 %v1160
      %1320 = vmatpush1.bf16.msra.mxu0 %v1159
      %1321 = vmatprep.subr.bf16.mxu0 %v1162
      %1322 = vmatpush1.bf16.msra.mxu0 %v1161
      %1323 = vmatprep.subr.bf16.mxu0 %v1164
      %1324 = vmatpush1.bf16.msra.mxu0 %v1163
      %1325 = vmatprep.subr.bf16.mxu0 %v1166
      %1326 = vmatpush1.bf16.msra.mxu0 %v1165
      %1327 = vmatprep.subr.bf16.mxu0 %v1168
      %1328 = vmatpush1.bf16.msra.mxu0 %v1167
      %1329 = vmatprep.subr.bf16.mxu0 %v1170
      %1330 = vmatpush1.bf16.msra.mxu0 %v1169
      %1331 = vmatprep.subr.bf16.mxu0 %v1172
      %1332 = vmatpush1.bf16.msra.mxu0 %v1171
      %1333 = vmatprep.mubr.bf16.mxu0 %v805
      %1334 = vmatmul.mubr.bf16.gmra.mrb[0].mxu0 %v804
      %v1335 = vpop.f32.mrb[0].mxu0
      %v1336 = vadd.f32 %v894, %v1335
      %v1337 = vpop.f32.mrb[0].mxu0
      %v1338 = vadd.f32 %v898, %v1337
      %v1339 = vpop.f32.mrb[0].mxu0
      %v1340 = vpop.f32.mrb[0].mxu0
      %1341 = vdwg.mxu0
      %1342 = vmatprep.subr.bf16.mxu0 %v1174
      %1343 = vmatpush1.bf16.msra.mxu0 %v1173
      %1344 = vmatprep.subr.bf16.mxu0 %v1176
      %1345 = vmatpush1.bf16.msra.mxu0 %v1175
      %1346 = vmatprep.subr.bf16.mxu0 %v1178
      %1347 = vmatpush1.bf16.msra.mxu0 %v1177
      %1348 = vmatprep.subr.bf16.mxu0 %v1180
      %1349 = vmatpush1.bf16.msra.mxu0 %v1179
      %1350 = vmatprep.subr.bf16.mxu0 %v1182
      %1351 = vmatpush1.bf16.msra.mxu0 %v1181
      %1352 = vmatprep.subr.bf16.mxu0 %v1184
      %1353 = vmatpush1.bf16.msra.mxu0 %v1183
      %1354 = vmatprep.subr.bf16.mxu0 %v1186
      %1355 = vmatpush1.bf16.msra.mxu0 %v1185
      %1356 = vmatprep.subr.bf16.mxu0 %v1188
      %1357 = vmatpush1.bf16.msra.mxu0 %v1187
      %1358 = vmatprep.subr.bf16.mxu0 %v1190
      %1359 = vmatpush1.bf16.msra.mxu0 %v1189
      %1360 = vmatprep.subr.bf16.mxu0 %v1192
      %1361 = vmatpush1.bf16.msra.mxu0 %v1191
      %1362 = vmatprep.subr.bf16.mxu0 %v1194
      %1363 = vmatpush1.bf16.msra.mxu0 %v1193
      %1364 = vmatprep.subr.bf16.mxu0 %v1196
      %1365 = vmatpush1.bf16.msra.mxu0 %v1195
      %1366 = vmatprep.subr.bf16.mxu0 %v1198
      %1367 = vmatpush1.bf16.msra.mxu0 %v1197
      %1368 = vmatprep.subr.bf16.mxu0 %v1200
      %1369 = vmatpush1.bf16.msra.mxu0 %v1199
      %1370 = vmatprep.subr.bf16.mxu0 %v1202
      %1371 = vmatpush1.bf16.msra.mxu0 %v1201
      %1372 = vmatprep.subr.bf16.mxu0 %v1204
      %1373 = vmatpush1.bf16.msra.mxu0 %v1203
      %1374 = vmatprep.mubr.bf16.mxu0 %v807
      %1375 = vmatmul.mubr.bf16.gmra.mrb[0].mxu0 %v806
      %v1376 = vpop.f32.mrb[0].mxu0
      %v1377 = vadd.f32 %v1336, %v1376
      %v1378 = vpop.f32.mrb[0].mxu0
      %v1379 = vadd.f32 %v1338, %v1378
      %v1380 = vpop.f32.mrb[0].mxu0
      %v1381 = vpop.f32.mrb[0].mxu0
      %1382 = vdwg.mxu0
      %1383 = vmatprep.subr.bf16.mxu0 %v1206
      %1384 = vmatpush1.bf16.msra.mxu0 %v1205
      %1385 = vmatprep.subr.bf16.mxu0 %v1208
      %1386 = vmatpush1.bf16.msra.mxu0 %v1207
      %1387 = vmatprep.subr.bf16.mxu0 %v1210
      %1388 = vmatpush1.bf16.msra.mxu0 %v1209
      %1389 = vmatprep.subr.bf16.mxu0 %v1212
      %1390 = vmatpush1.bf16.msra.mxu0 %v1211
      %1391 = vmatprep.subr.bf16.mxu0 %v1214
      %1392 = vmatpush1.bf16.msra.mxu0 %v1213
      %1393 = vmatprep.subr.bf16.mxu0 %v1216
      %1394 = vmatpush1.bf16.msra.mxu0 %v1215
      %1395 = vmatprep.subr.bf16.mxu0 %v1218
      %1396 = vmatpush1.bf16.msra.mxu0 %v1217
      %1397 = vmatprep.subr.bf16.mxu0 %v1220
      %1398 = vmatpush1.bf16.msra.mxu0 %v1219
      %1399 = vmatprep.subr.bf16.mxu0 0
      %1400 = vmatpush1.bf16.msra.mxu0 0
      %1401 = vmatprep.subr.bf16.mxu0 0
      %1402 = vmatpush1.bf16.msra.mxu0 0
      %1403 = vmatprep.subr.bf16.mxu0 0
      %1404 = vmatpush1.bf16.msra.mxu0 0
      %1405 = vmatprep.subr.bf16.mxu0 0
      %1406 = vmatpush1.bf16.msra.mxu0 0
      %1407 = vmatprep.subr.bf16.mxu0 0
      %1408 = vmatpush1.bf16.msra.mxu0 0
      %1409 = vmatprep.subr.bf16.mxu0 0
      %1410 = vmatpush1.bf16.msra.mxu0 0
      %1411 = vmatprep.subr.bf16.mxu0 0
      %1412 = vmatpush1.bf16.msra.mxu0 0
      %1413 = vmatprep.subr.bf16.mxu0 0
      %1414 = vmatpush1.bf16.msra.mxu0 0
      %1415 = vmatprep.mubr.bf16.mxu0 0
      %1416 = vmatmul.mubr.bf16.gmra.mrb[0].mxu0 %v808
      %v1417 = vpop.f32.mrb[0].mxu0
      %v1418 = vadd.f32 %v1377, %v1417
      %v1419 = vpop.f32.mrb[0].mxu0
      %v1420 = vadd.f32 %v1379, %v1419
      %v1421 = vpop.f32.mrb[0].mxu0
      %v1422 = vpop.f32.mrb[0].mxu0
      %1423 = vdwg.mxu0
      %v1424 = vmul.f32 %v1418, 0.5
      %v1425 = vmul.f32 %v1420, 0.5
      %v1426 = vtanh.pop %v1424
      %v1427 = vtanh.pop %v1425
      %v1428 = vadd.f32 %v1426, 1.0
      %v1429 = vadd.f32 %v1427, 1.0
      %v1430 = vmul.f32 %v1428, 0.5
      %v1431 = vmul.f32 %v1429, 0.5
      %v1432 = vmul.f32 %v1418, %v1430
      %v1433 = vmul.f32 %v1420, %v1431
      %v1434 = vsub.f32 %v1418, -1.5
      %v1435 = vsub.f32 %v1420, -1.5
      %v1436 = vmul.f32 %v1434, %v1434
      %v1437 = vmul.f32 %v1435, %v1435
      %v1438 = vsub.f32 0.0, %v1436
      %v1439 = vsub.f32 0.0, %v1437
      %v1440 = vmul.f32 %v1438, 1.442695
      %v1441 = vpow.pop %v1440
      %v1442 = vmul.f32 %v1439, 1.442695
      %v1443 = vpow.pop %v1442
      %v1444 = vsub.f32 %v1418, -0.5
      %v1445 = vsub.f32 %v1420, -0.5
      %v1446 = vmul.f32 %v1444, %v1444
      %v1447 = vmul.f32 %v1445, %v1445
      %v1448 = vsub.f32 0.0, %v1446
      %v1449 = vsub.f32 0.0, %v1447
      %v1450 = vmul.f32 %v1448, 1.442695
      %v1451 = vpow.pop %v1450
      %v1452 = vmul.f32 %v1449, 1.442695
      %v1453 = vpow.pop %v1452
      %v1454 = vsub.f32 %v1418, 0.5
      %v1455 = vsub.f32 %v1420, 0.5
      %v1456 = vmul.f32 %v1454, %v1454
      %v1457 = vmul.f32 %v1455, %v1455
      %v1458 = vsub.f32 0.0, %v1456
      %v1459 = vsub.f32 0.0, %v1457
      %v1460 = vmul.f32 %v1458, 1.442695
      %v1461 = vpow.pop %v1460
      %v1462 = vmul.f32 %v1459, 1.442695
      %v1463 = vpow.pop %v1462
      %v1464 = vsub.f32 %v1418, 1.5
      %v1465 = vsub.f32 %v1420, 1.5
      %v1466 = vmul.f32 %v1464, %v1464
      %v1467 = vmul.f32 %v1465, %v1465
      %v1468 = vsub.f32 0.0, %v1466
      %v1469 = vsub.f32 0.0, %v1467
      %v1470 = vmul.f32 %v1468, 1.442695
      %v1471 = vpow.pop %v1470
      %v1472 = vmul.f32 %v1469, 1.442695
      %v1473 = vpow.pop %v1472
      %v1474 = vpack.c.bf16 %v1432, %v1432
      %v1475 = vpack.c.bf16 %v1433, %v1433
      %v1476 = vpack.c.bf16 %v1441, %v1441
      %v1477 = vpack.c.bf16 %v1443, %v1443
      %v1478 = vpack.c.bf16 %v1451, %v1451
      %v1479 = vpack.c.bf16 %v1453, %v1453
      %v1480 = vpack.c.bf16 %v1461, %v1461
      %v1481 = vpack.c.bf16 %v1463, %v1463
      %v1482 = vpack.c.bf16 %v1471, %v1471
      %v1483 = vpack.c.bf16 %v1473, %v1473
      %v1484 = vld [vmem:[%s8] sm:$0xf]
      %v1485 = vld [vmem:[%s8 + $0x4] sm:$0xf]
      %v1486 = vld [vmem:[%s8 + $0x8] sm:$0xf]
      %v1487 = vld [vmem:[%s8 + $0xc] sm:$0xf]
      %v1488 = vld [vmem:[%s8 + $0x10] sm:$0xf]
      %v1489 = vld [vmem:[%s8 + $0x14] sm:$0xf]
      %v1490 = vld [vmem:[%s8 + $0x18] sm:$0xf]
      %v1491 = vld [vmem:[%s8 + $0x1c] sm:$0xf]
      %v1492 = vld [vmem:[%s8 + $0x20] sm:$0xf]
      %v1493 = vld [vmem:[%s8 + $0x24] sm:$0xf]
      %v1494 = vld [vmem:[%s8 + $0x28] sm:$0xf]
      %v1495 = vld [vmem:[%s8 + $0x2c] sm:$0xf]
      %v1496 = vld [vmem:[%s8 + $0x30] sm:$0xf]
      %v1497 = vld [vmem:[%s8 + $0x34] sm:$0xf]
      %v1498 = vld [vmem:[%s8 + $0x38] sm:$0xf]
      %v1499 = vld [vmem:[%s8 + $0x3c] sm:$0xf]
      %v1500 = vld [vmem:[%s8 + $0x40] sm:$0xf]
      %v1501 = vld [vmem:[%s8 + $0x44] sm:$0xf]
      %v1502 = vld [vmem:[%s8 + $0x48] sm:$0xf]
      %v1503 = vld [vmem:[%s8 + $0x4c] sm:$0xf]
      %v1504 = vld [vmem:[%s8 + $0x50] sm:$0xf]
      %v1505 = vld [vmem:[%s8 + $0x54] sm:$0xf]
      %v1506 = vld [vmem:[%s8 + $0x58] sm:$0xf]
      %v1507 = vld [vmem:[%s8 + $0x5c] sm:$0xf]
      %v1508 = vld [vmem:[%s8 + $0x60] sm:$0xf]
      %v1509 = vld [vmem:[%s8 + $0x64] sm:$0xf]
      %v1510 = vld [vmem:[%s8 + $0x68] sm:$0xf]
      %v1511 = vld [vmem:[%s8 + $0x6c] sm:$0xf]
      %v1512 = vld [vmem:[%s8 + $0x70] sm:$0xf]
      %v1513 = vld [vmem:[%s8 + $0x74] sm:$0xf]
      %v1514 = vld [vmem:[%s8 + $0x78] sm:$0xf]
      %v1515 = vld [vmem:[%s8 + $0x7c] sm:$0xf]
      %v1516 = vld [vmem:[%s8 + $0x80] sm:$0xf]
      %v1517 = vld [vmem:[%s8 + $0x84] sm:$0xf]
      %v1518 = vld [vmem:[%s8 + $0x88] sm:$0xf]
      %v1519 = vld [vmem:[%s8 + $0x8c] sm:$0xf]
      %v1520 = vld [vmem:[%s8 + $0x90] sm:$0xf]
      %v1521 = vld [vmem:[%s8 + $0x94] sm:$0xf]
      %v1522 = vld [vmem:[%s8 + $0x98] sm:$0xf]
      %v1523 = vld [vmem:[%s8 + $0x9c] sm:$0xf]
      %v1524 = vld [vmem:[%s8 + $0xa0] sm:$0xf]
      %v1525 = vld [vmem:[%s8 + $0xa4] sm:$0xf]
      %v1526 = vld [vmem:[%s8 + $0xa8] sm:$0xf]
      %v1527 = vld [vmem:[%s8 + $0xac] sm:$0xf]
      %v1528 = vld [vmem:[%s8 + $0xb0] sm:$0xf]
      %v1529 = vld [vmem:[%s8 + $0xb4] sm:$0xf]
      %v1530 = vld [vmem:[%s8 + $0xb8] sm:$0xf]
      %v1531 = vld [vmem:[%s8 + $0xbc] sm:$0xf]
      %v1532 = vld [vmem:[%s8 + $0xc0] sm:$0xf]
      %v1533 = vld [vmem:[%s8 + $0xc4] sm:$0xf]
      %v1534 = vld [vmem:[%s8 + $0xc8] sm:$0xf]
      %v1535 = vld [vmem:[%s8 + $0xcc] sm:$0xf]
      %v1536 = vld [vmem:[%s8 + $0xd0] sm:$0xf]
      %v1537 = vld [vmem:[%s8 + $0xd4] sm:$0xf]
      %v1538 = vld [vmem:[%s8 + $0xd8] sm:$0xf]
      %v1539 = vld [vmem:[%s8 + $0xdc] sm:$0xf]
      %v1540 = vld [vmem:[%s8 + $0xe0] sm:$0xf]
      %v1541 = vld [vmem:[%s8 + $0xe4] sm:$0xf]
      %v1542 = vld [vmem:[%s8 + $0xe8] sm:$0xf]
      %v1543 = vld [vmem:[%s8 + $0xec] sm:$0xf]
      %v1544 = vld [vmem:[%s8 + $0xf0] sm:$0xf]
      %v1545 = vld [vmem:[%s8 + $0xf4] sm:$0xf]
      %v1546 = vld [vmem:[%s8 + $0xf8] sm:$0xf]
      %v1547 = vld [vmem:[%s8 + $0xfc] sm:$0xf]
      %v1548 = vld [vmem:[%s8 + $0x100] sm:$0xf]
      %v1549 = vld [vmem:[%s8 + $0x104] sm:$0xf]
      %v1550 = vld [vmem:[%s8 + $0x108] sm:$0xf]
      %v1551 = vld [vmem:[%s8 + $0x10c] sm:$0xf]
      %v1552 = vld [vmem:[%s8 + $0x110] sm:$0xf]
      %v1553 = vld [vmem:[%s8 + $0x114] sm:$0xf]
      %v1554 = vld [vmem:[%s8 + $0x118] sm:$0xf]
      %v1555 = vld [vmem:[%s8 + $0x11c] sm:$0xf]
      %v1556 = vld [vmem:[%s8 + $0x120] sm:$0xf]
      %v1557 = vld [vmem:[%s8 + $0x124] sm:$0xf]
      %v1558 = vld [vmem:[%s8 + $0x128] sm:$0xf]
      %v1559 = vld [vmem:[%s8 + $0x12c] sm:$0xf]
      %v1560 = vld [vmem:[%s8 + $0x130] sm:$0xf]
      %v1561 = vld [vmem:[%s8 + $0x134] sm:$0xf]
      %v1562 = vld [vmem:[%s8 + $0x138] sm:$0xf]
      %v1563 = vld [vmem:[%s8 + $0x13c] sm:$0xf]
      %v1564 = vld [vmem:[%s8 + $0x140] sm:$0xf]
      %v1565 = vld [vmem:[%s8 + $0x144] sm:$0xf]
      %v1566 = vld [vmem:[%s8 + $0x148] sm:$0xf]
      %v1567 = vld [vmem:[%s8 + $0x14c] sm:$0xf]
      %v1568 = vld [vmem:[%s8 + $0x150] sm:$0xf]
      %v1569 = vld [vmem:[%s8 + $0x154] sm:$0xf]
      %v1570 = vld [vmem:[%s8 + $0x158] sm:$0xf]
      %v1571 = vld [vmem:[%s8 + $0x15c] sm:$0xf]
      %v1572 = vld [vmem:[%s8 + $0x160] sm:$0xf]
      %v1573 = vld [vmem:[%s8 + $0x164] sm:$0xf]
      %v1574 = vld [vmem:[%s8 + $0x168] sm:$0xf]
      %v1575 = vld [vmem:[%s8 + $0x16c] sm:$0xf]
      %v1576 = vld [vmem:[%s8 + $0x170] sm:$0xf]
      %v1577 = vld [vmem:[%s8 + $0x174] sm:$0xf]
      %v1578 = vld [vmem:[%s8 + $0x178] sm:$0xf]
      %v1579 = vld [vmem:[%s8 + $0x17c] sm:$0xf]
      %v1580 = vld [vmem:[%s8 + $0x180] sm:$0xf]
      %v1581 = vld [vmem:[%s8 + $0x184] sm:$0xf]
      %v1582 = vld [vmem:[%s8 + $0x188] sm:$0xf]
      %v1583 = vld [vmem:[%s8 + $0x18c] sm:$0xf]
      %v1584 = vld [vmem:[%s8 + $0x190] sm:$0xf]
      %v1585 = vld [vmem:[%s8 + $0x194] sm:$0xf]
      %v1586 = vld [vmem:[%s8 + $0x198] sm:$0xf]
      %v1587 = vld [vmem:[%s8 + $0x19c] sm:$0xf]
      %v1588 = vld [vmem:[%s8 + $0x1a0] sm:$0xf]
      %v1589 = vld [vmem:[%s8 + $0x1a4] sm:$0xf]
      %v1590 = vld [vmem:[%s8 + $0x1a8] sm:$0xf]
      %v1591 = vld [vmem:[%s8 + $0x1ac] sm:$0xf]
      %v1592 = vld [vmem:[%s8 + $0x1b0] sm:$0xf]
      %v1593 = vld [vmem:[%s8 + $0x1b4] sm:$0xf]
      %v1594 = vld [vmem:[%s8 + $0x1b8] sm:$0xf]
      %v1595 = vld [vmem:[%s8 + $0x1bc] sm:$0xf]
      %v1596 = vld [vmem:[%s8 + $0x1c0] sm:$0xf]
      %v1597 = vld [vmem:[%s8 + $0x1c4] sm:$0xf]
      %v1598 = vld [vmem:[%s8 + $0x1c8] sm:$0xf]
      %v1599 = vld [vmem:[%s8 + $0x1cc] sm:$0xf]
      %v1600 = vld [vmem:[%s8 + $0x1d0] sm:$0xf]
      %v1601 = vld [vmem:[%s8 + $0x1d4] sm:$0xf]
      %v1602 = vld [vmem:[%s8 + $0x1d8] sm:$0xf]
      %v1603 = vld [vmem:[%s8 + $0x1dc] sm:$0xf]
      %v1604 = vld [vmem:[%s8 + $0x1e0] sm:$0xf]
      %v1605 = vld [vmem:[%s8 + $0x1e4] sm:$0xf]
      %v1606 = vld [vmem:[%s8 + $0x1e8] sm:$0xf]
      %v1607 = vld [vmem:[%s8 + $0x1ec] sm:$0xf]
      %v1608 = vld [vmem:[%s8 + $0x1f0] sm:$0xf]
      %v1609 = vld [vmem:[%s8 + $0x1f4] sm:$0xf]
      %v1610 = vld [vmem:[%s8 + $0x1f8] sm:$0xf]
      %v1611 = vld [vmem:[%s8 + $0x1fc] sm:$0xf]
      %v1612 = vld [vmem:[%s8 + $0x200] sm:$0xf]
      %v1613 = vld [vmem:[%s8 + $0x204] sm:$0xf]
      %v1614 = vld [vmem:[%s8 + $0x208] sm:$0xf]
      %v1615 = vld [vmem:[%s8 + $0x20c] sm:$0xf]
      %v1616 = vld [vmem:[%s8 + $0x210] sm:$0xf]
      %v1617 = vld [vmem:[%s8 + $0x214] sm:$0xf]
      %v1618 = vld [vmem:[%s8 + $0x218] sm:$0xf]
      %v1619 = vld [vmem:[%s8 + $0x21c] sm:$0xf]
      %v1620 = vld [vmem:[%s8 + $0x220] sm:$0xf]
      %v1621 = vld [vmem:[%s8 + $0x224] sm:$0xf]
      %v1622 = vld [vmem:[%s8 + $0x228] sm:$0xf]
      %v1623 = vld [vmem:[%s8 + $0x22c] sm:$0xf]
      %v1624 = vld [vmem:[%s8 + $0x230] sm:$0xf]
      %v1625 = vld [vmem:[%s8 + $0x234] sm:$0xf]
      %v1626 = vld [vmem:[%s8 + $0x238] sm:$0xf]
      %v1627 = vld [vmem:[%s8 + $0x23c] sm:$0xf]
      %v1628 = vld [vmem:[%s8 + $0x240] sm:$0xf]
      %v1629 = vld [vmem:[%s8 + $0x244] sm:$0xf]
      %v1630 = vld [vmem:[%s8 + $0x248] sm:$0xf]
      %v1631 = vld [vmem:[%s8 + $0x24c] sm:$0xf]
      %v1632 = vld [vmem:[%s8 + $0x250] sm:$0xf]
      %v1633 = vld [vmem:[%s8 + $0x254] sm:$0xf]
      %v1634 = vld [vmem:[%s8 + $0x258] sm:$0xf]
      %v1635 = vld [vmem:[%s8 + $0x25c] sm:$0xf]
      %v1636 = vld [vmem:[%s8 + $0x260] sm:$0xf]
      %v1637 = vld [vmem:[%s8 + $0x264] sm:$0xf]
      %v1638 = vld [vmem:[%s8 + $0x268] sm:$0xf]
      %v1639 = vld [vmem:[%s8 + $0x26c] sm:$0xf]
      %v1640 = vld [vmem:[%s8 + $0x270] sm:$0xf]
      %v1641 = vld [vmem:[%s8 + $0x274] sm:$0xf]
      %v1642 = vld [vmem:[%s8 + $0x278] sm:$0xf]
      %v1643 = vld [vmem:[%s8 + $0x27c] sm:$0xf]
      %v1644 = vld [vmem:[%s9] sm:$0x1]
      %v1646 = vlaneseq
      %v1647 = vshrl.u32 %v1646, 7
      %v1648 = vsub.s32 0, %v1647
      %v1649 = vrot.slane %v1644, %v1648
      %v1811 = vunpack.c.l.b16 %v1484
      %v1812 = vunpack.c.l.b16 %v1485
      %v1813 = vunpack.c.l.b16 %v1486
      %v1814 = vunpack.c.l.b16 %v1487
      %v1815 = vunpack.c.l.b16 %v1488
      %v1816 = vunpack.c.l.b16 %v1489
      %v1817 = vunpack.c.l.b16 %v1490
      %v1818 = vunpack.c.l.b16 %v1491
      %v1819 = vunpack.c.l.b16 %v1492
      %v1820 = vunpack.c.l.b16 %v1493
      %v1821 = vunpack.c.l.b16 %v1494
      %v1822 = vunpack.c.l.b16 %v1495
      %v1823 = vunpack.c.l.b16 %v1496
      %v1824 = vunpack.c.l.b16 %v1497
      %v1825 = vunpack.c.l.b16 %v1498
      %v1826 = vunpack.c.l.b16 %v1499
      %v1827 = vunpack.c.l.b16 %v1500
      %v1828 = vunpack.c.l.b16 %v1501
      %v1829 = vunpack.c.l.b16 %v1502
      %v1830 = vunpack.c.l.b16 %v1503
      %v1831 = vunpack.c.l.b16 %v1504
      %v1832 = vunpack.c.l.b16 %v1505
      %v1833 = vunpack.c.l.b16 %v1506
      %v1834 = vunpack.c.l.b16 %v1507
      %v1835 = vunpack.c.l.b16 %v1508
      %v1836 = vunpack.c.l.b16 %v1509
      %v1837 = vunpack.c.l.b16 %v1510
      %v1838 = vunpack.c.l.b16 %v1511
      %v1839 = vunpack.c.l.b16 %v1512
      %v1840 = vunpack.c.l.b16 %v1513
      %v1841 = vunpack.c.l.b16 %v1514
      %v1842 = vunpack.c.l.b16 %v1515
      %v1843 = vunpack.c.l.b16 %v1516
      %v1844 = vunpack.c.l.b16 %v1517
      %v1845 = vunpack.c.l.b16 %v1518
      %v1846 = vunpack.c.l.b16 %v1519
      %v1847 = vunpack.c.l.b16 %v1520
      %v1848 = vunpack.c.l.b16 %v1521
      %v1849 = vunpack.c.l.b16 %v1522
      %v1850 = vunpack.c.l.b16 %v1523
      %v1851 = vunpack.c.l.b16 %v1524
      %v1852 = vunpack.c.l.b16 %v1525
      %v1853 = vunpack.c.l.b16 %v1526
      %v1854 = vunpack.c.l.b16 %v1527
      %v1855 = vunpack.c.l.b16 %v1528
      %v1856 = vunpack.c.l.b16 %v1529
      %v1857 = vunpack.c.l.b16 %v1530
      %v1858 = vunpack.c.l.b16 %v1531
      %v1859 = vunpack.c.l.b16 %v1532
      %v1860 = vunpack.c.l.b16 %v1533
      %v1861 = vunpack.c.l.b16 %v1534
      %v1862 = vunpack.c.l.b16 %v1535
      %v1863 = vunpack.c.l.b16 %v1536
      %v1864 = vunpack.c.l.b16 %v1537
      %v1865 = vunpack.c.l.b16 %v1538
      %v1866 = vunpack.c.l.b16 %v1539
      %v1867 = vunpack.c.l.b16 %v1540
      %v1868 = vunpack.c.l.b16 %v1541
      %v1869 = vunpack.c.l.b16 %v1542
      %v1870 = vunpack.c.l.b16 %v1543
      %v1871 = vunpack.c.l.b16 %v1544
      %v1872 = vunpack.c.l.b16 %v1545
      %v1873 = vunpack.c.l.b16 %v1546
      %v1874 = vunpack.c.l.b16 %v1547
      %v1875 = vunpack.c.l.b16 %v1548
      %v1876 = vunpack.c.l.b16 %v1549
      %v1877 = vunpack.c.l.b16 %v1550
      %v1878 = vunpack.c.l.b16 %v1551
      %v1879 = vunpack.c.l.b16 %v1552
      %v1880 = vunpack.c.l.b16 %v1553
      %v1881 = vunpack.c.l.b16 %v1554
      %v1882 = vunpack.c.l.b16 %v1555
      %v1883 = vunpack.c.l.b16 %v1556
      %v1884 = vunpack.c.l.b16 %v1557
      %v1885 = vunpack.c.l.b16 %v1558
      %v1886 = vunpack.c.l.b16 %v1559
      %v1887 = vunpack.c.l.b16 %v1560
      %v1888 = vunpack.c.l.b16 %v1561
      %v1889 = vunpack.c.l.b16 %v1562
      %v1890 = vunpack.c.l.b16 %v1563
      %v1891 = vunpack.c.l.b16 %v1564
      %v1892 = vunpack.c.l.b16 %v1565
      %v1893 = vunpack.c.l.b16 %v1566
      %v1894 = vunpack.c.l.b16 %v1567
      %v1895 = vunpack.c.l.b16 %v1568
      %v1896 = vunpack.c.l.b16 %v1569
      %v1897 = vunpack.c.l.b16 %v1570
      %v1898 = vunpack.c.l.b16 %v1571
      %v1899 = vunpack.c.l.b16 %v1572
      %v1900 = vunpack.c.l.b16 %v1573
      %v1901 = vunpack.c.l.b16 %v1574
      %v1902 = vunpack.c.l.b16 %v1575
      %v1903 = vunpack.c.l.b16 %v1576
      %v1904 = vunpack.c.l.b16 %v1577
      %v1905 = vunpack.c.l.b16 %v1578
      %v1906 = vunpack.c.l.b16 %v1579
      %v1907 = vunpack.c.l.b16 %v1580
      %v1908 = vunpack.c.l.b16 %v1581
      %v1909 = vunpack.c.l.b16 %v1582
      %v1910 = vunpack.c.l.b16 %v1583
      %v1911 = vunpack.c.l.b16 %v1584
      %v1912 = vunpack.c.l.b16 %v1585
      %v1913 = vunpack.c.l.b16 %v1586
      %v1914 = vunpack.c.l.b16 %v1587
      %v1915 = vunpack.c.l.b16 %v1588
      %v1916 = vunpack.c.l.b16 %v1589
      %v1917 = vunpack.c.l.b16 %v1590
      %v1918 = vunpack.c.l.b16 %v1591
      %v1919 = vunpack.c.l.b16 %v1592
      %v1920 = vunpack.c.l.b16 %v1593
      %v1921 = vunpack.c.l.b16 %v1594
      %v1922 = vunpack.c.l.b16 %v1595
      %v1923 = vunpack.c.l.b16 %v1596
      %v1924 = vunpack.c.l.b16 %v1597
      %v1925 = vunpack.c.l.b16 %v1598
      %v1926 = vunpack.c.l.b16 %v1599
      %v1927 = vunpack.c.l.b16 %v1600
      %v1928 = vunpack.c.l.b16 %v1601
      %v1929 = vunpack.c.l.b16 %v1602
      %v1930 = vunpack.c.l.b16 %v1603
      %v1931 = vunpack.c.l.b16 %v1604
      %v1932 = vunpack.c.l.b16 %v1605
      %v1933 = vunpack.c.l.b16 %v1606
      %v1934 = vunpack.c.l.b16 %v1607
      %v1935 = vunpack.c.l.b16 %v1608
      %v1936 = vunpack.c.l.b16 %v1609
      %v1937 = vunpack.c.l.b16 %v1610
      %v1938 = vunpack.c.l.b16 %v1611
      %v1939 = vunpack.c.l.b16 %v1612
      %v1940 = vunpack.c.l.b16 %v1613
      %v1941 = vunpack.c.l.b16 %v1614
      %v1942 = vunpack.c.l.b16 %v1615
      %v1943 = vunpack.c.l.b16 %v1616
      %v1944 = vunpack.c.l.b16 %v1617
      %v1945 = vunpack.c.l.b16 %v1618
      %v1946 = vunpack.c.l.b16 %v1619
      %v1947 = vunpack.c.l.b16 %v1620
      %v1948 = vunpack.c.l.b16 %v1621
      %v1949 = vunpack.c.l.b16 %v1622
      %v1950 = vunpack.c.l.b16 %v1623
      %v1951 = vunpack.c.l.b16 %v1624
      %v1952 = vunpack.c.l.b16 %v1625
      %v1953 = vunpack.c.l.b16 %v1626
      %v1954 = vunpack.c.l.b16 %v1627
      %v1955 = vunpack.c.l.b16 %v1628
      %v1956 = vunpack.c.l.b16 %v1629
      %v1957 = vunpack.c.l.b16 %v1630
      %v1958 = vunpack.c.l.b16 %v1631
      %v1959 = vunpack.c.l.b16 %v1632
      %v1960 = vunpack.c.l.b16 %v1633
      %v1961 = vunpack.c.l.b16 %v1634
      %v1962 = vunpack.c.l.b16 %v1635
      %v1963 = vunpack.c.l.b16 %v1636
      %v1964 = vunpack.c.l.b16 %v1637
      %v1965 = vunpack.c.l.b16 %v1638
      %v1966 = vunpack.c.l.b16 %v1639
      %v1967 = vunpack.c.l.b16 %v1640
      %v1968 = vunpack.c.l.b16 %v1641
      %v1969 = vunpack.c.l.b16 %v1642
      %v1970 = vunpack.c.l.b16 %v1643
      %v1971 = vpack.c.b16 %v1812, %v1811
      %v1972 = vpack.c.b16 %v1814, %v1813
      %v1973 = vpack.c.b16 %v1816, %v1815
      %v1974 = vpack.c.b16 %v1818, %v1817
      %v1975 = vpack.c.b16 %v1820, %v1819
      %v1976 = vpack.c.b16 %v1822, %v1821
      %v1977 = vpack.c.b16 %v1824, %v1823
      %v1978 = vpack.c.b16 %v1826, %v1825
      %v1979 = vpack.c.b16 %v1828, %v1827
      %v1980 = vpack.c.b16 %v1830, %v1829
      %v1981 = vpack.c.b16 %v1832, %v1831
      %v1982 = vpack.c.b16 %v1834, %v1833
      %v1983 = vpack.c.b16 %v1836, %v1835
      %v1984 = vpack.c.b16 %v1838, %v1837
      %v1985 = vpack.c.b16 %v1840, %v1839
      %v1986 = vpack.c.b16 %v1842, %v1841
      %v1987 = vpack.c.b16 %v1844, %v1843
      %v1988 = vpack.c.b16 %v1846, %v1845
      %v1989 = vpack.c.b16 %v1848, %v1847
      %v1990 = vpack.c.b16 %v1850, %v1849
      %v1991 = vpack.c.b16 %v1852, %v1851
      %v1992 = vpack.c.b16 %v1854, %v1853
      %v1993 = vpack.c.b16 %v1856, %v1855
      %v1994 = vpack.c.b16 %v1858, %v1857
      %v1995 = vpack.c.b16 %v1860, %v1859
      %v1996 = vpack.c.b16 %v1862, %v1861
      %v1997 = vpack.c.b16 %v1864, %v1863
      %v1998 = vpack.c.b16 %v1866, %v1865
      %v1999 = vpack.c.b16 %v1868, %v1867
      %v2000 = vpack.c.b16 %v1870, %v1869
      %v2001 = vpack.c.b16 %v1872, %v1871
      %v2002 = vpack.c.b16 %v1874, %v1873
      %v2003 = vpack.c.b16 %v1876, %v1875
      %v2004 = vpack.c.b16 %v1878, %v1877
      %v2005 = vpack.c.b16 %v1880, %v1879
      %v2006 = vpack.c.b16 %v1882, %v1881
      %v2007 = vpack.c.b16 %v1884, %v1883
      %v2008 = vpack.c.b16 %v1886, %v1885
      %v2009 = vpack.c.b16 %v1888, %v1887
      %v2010 = vpack.c.b16 %v1890, %v1889
      %v2011 = vpack.c.b16 %v1892, %v1891
      %v2012 = vpack.c.b16 %v1894, %v1893
      %v2013 = vpack.c.b16 %v1896, %v1895
      %v2014 = vpack.c.b16 %v1898, %v1897
      %v2015 = vpack.c.b16 %v1900, %v1899
      %v2016 = vpack.c.b16 %v1902, %v1901
      %v2017 = vpack.c.b16 %v1904, %v1903
      %v2018 = vpack.c.b16 %v1906, %v1905
      %v2019 = vpack.c.b16 %v1908, %v1907
      %v2020 = vpack.c.b16 %v1910, %v1909
      %v2021 = vpack.c.b16 %v1912, %v1911
      %v2022 = vpack.c.b16 %v1914, %v1913
      %v2023 = vpack.c.b16 %v1916, %v1915
      %v2024 = vpack.c.b16 %v1918, %v1917
      %v2025 = vpack.c.b16 %v1920, %v1919
      %v2026 = vpack.c.b16 %v1922, %v1921
      %v2027 = vpack.c.b16 %v1924, %v1923
      %v2028 = vpack.c.b16 %v1926, %v1925
      %v2029 = vpack.c.b16 %v1928, %v1927
      %v2030 = vpack.c.b16 %v1930, %v1929
      %v2031 = vpack.c.b16 %v1932, %v1931
      %v2032 = vpack.c.b16 %v1934, %v1933
      %v2033 = vpack.c.b16 %v1936, %v1935
      %v2034 = vpack.c.b16 %v1938, %v1937
      %v2035 = vpack.c.b16 %v1940, %v1939
      %v2036 = vpack.c.b16 %v1942, %v1941
      %v2037 = vpack.c.b16 %v1944, %v1943
      %v2038 = vpack.c.b16 %v1946, %v1945
      %v2039 = vpack.c.b16 %v1948, %v1947
      %v2040 = vpack.c.b16 %v1950, %v1949
      %v2041 = vpack.c.b16 %v1952, %v1951
      %v2042 = vpack.c.b16 %v1954, %v1953
      %v2043 = vpack.c.b16 %v1956, %v1955
      %v2044 = vpack.c.b16 %v1958, %v1957
      %v2045 = vpack.c.b16 %v1960, %v1959
      %v2046 = vpack.c.b16 %v1962, %v1961
      %v2047 = vpack.c.b16 %v1964, %v1963
      %v2048 = vpack.c.b16 %v1966, %v1965
      %v2049 = vpack.c.b16 %v1968, %v1967
      %v2050 = vpack.c.b16 %v1970, %v1969
      %2131 = vmatprep.subr.bf16.mxu0 0
      %2132 = vmatpush1.bf16.msra.mxu0 %v1971
      %2133 = vmatprep.subr.bf16.mxu0 0
      %2134 = vmatpush1.bf16.msra.mxu0 %v1972
      %2135 = vmatprep.subr.bf16.mxu0 0
      %2136 = vmatpush1.bf16.msra.mxu0 %v1973
      %2137 = vmatprep.subr.bf16.mxu0 0
      %2138 = vmatpush1.bf16.msra.mxu0 %v1974
      %2139 = vmatprep.subr.bf16.mxu0 0
      %2140 = vmatpush1.bf16.msra.mxu0 %v1975
      %2141 = vmatprep.subr.bf16.mxu0 0
      %2142 = vmatpush1.bf16.msra.mxu0 %v1976
      %2143 = vmatprep.subr.bf16.mxu0 0
      %2144 = vmatpush1.bf16.msra.mxu0 %v1977
      %2145 = vmatprep.subr.bf16.mxu0 0
      %2146 = vmatpush1.bf16.msra.mxu0 %v1978
      %2147 = vmatprep.subr.bf16.mxu0 0
      %2148 = vmatpush1.bf16.msra.mxu0 %v1979
      %2149 = vmatprep.subr.bf16.mxu0 0
      %2150 = vmatpush1.bf16.msra.mxu0 %v1980
      %2151 = vmatprep.subr.bf16.mxu0 0
      %2152 = vmatpush1.bf16.msra.mxu0 %v1981
      %2153 = vmatprep.subr.bf16.mxu0 0
      %2154 = vmatpush1.bf16.msra.mxu0 %v1982
      %2155 = vmatprep.subr.bf16.mxu0 0
      %2156 = vmatpush1.bf16.msra.mxu0 %v1983
      %2157 = vmatprep.subr.bf16.mxu0 0
      %2158 = vmatpush1.bf16.msra.mxu0 %v1984
      %2159 = vmatprep.subr.bf16.mxu0 0
      %2160 = vmatpush1.bf16.msra.mxu0 %v1985
      %2161 = vmatprep.subr.bf16.mxu0 0
      %2162 = vmatpush1.bf16.msra.mxu0 %v1986
      %2163 = vmatprep.mubr.bf16.mxu0 %v1475
      %2164 = vmatmul.mubr.bf16.gmra.mrb[0].mxu0 %v1474
      %v2165 = vpop.f32.mrb[0].mxu0
      %v2166 = vadd.f32 %v1649, %v2165
      %v2167 = vpop.f32.mrb[0].mxu0
      %v2168 = vpop.f32.mrb[0].mxu0
      %v2169 = vpop.f32.mrb[0].mxu0
      %2170 = vdwg.mxu0
      %2171 = vmatprep.subr.bf16.mxu0 0
      %2172 = vmatpush1.bf16.msra.mxu0 %v1987
      %2173 = vmatprep.subr.bf16.mxu0 0
      %2174 = vmatpush1.bf16.msra.mxu0 %v1988
      %2175 = vmatprep.subr.bf16.mxu0 0
      %2176 = vmatpush1.bf16.msra.mxu0 %v1989
      %2177 = vmatprep.subr.bf16.mxu0 0
      %2178 = vmatpush1.bf16.msra.mxu0 %v1990
      %2179 = vmatprep.subr.bf16.mxu0 0
      %2180 = vmatpush1.bf16.msra.mxu0 %v1991
      %2181 = vmatprep.subr.bf16.mxu0 0
      %2182 = vmatpush1.bf16.msra.mxu0 %v1992
      %2183 = vmatprep.subr.bf16.mxu0 0
      %2184 = vmatpush1.bf16.msra.mxu0 %v1993
      %2185 = vmatprep.subr.bf16.mxu0 0
      %2186 = vmatpush1.bf16.msra.mxu0 %v1994
      %2187 = vmatprep.subr.bf16.mxu0 0
      %2188 = vmatpush1.bf16.msra.mxu0 %v1995
      %2189 = vmatprep.subr.bf16.mxu0 0
      %2190 = vmatpush1.bf16.msra.mxu0 %v1996
      %2191 = vmatprep.subr.bf16.mxu0 0
      %2192 = vmatpush1.bf16.msra.mxu0 %v1997
      %2193 = vmatprep.subr.bf16.mxu0 0
      %2194 = vmatpush1.bf16.msra.mxu0 %v1998
      %2195 = vmatprep.subr.bf16.mxu0 0
      %2196 = vmatpush1.bf16.msra.mxu0 %v1999
      %2197 = vmatprep.subr.bf16.mxu0 0
      %2198 = vmatpush1.bf16.msra.mxu0 %v2000
      %2199 = vmatprep.subr.bf16.mxu0 0
      %2200 = vmatpush1.bf16.msra.mxu0 %v2001
      %2201 = vmatprep.subr.bf16.mxu0 0
      %2202 = vmatpush1.bf16.msra.mxu0 %v2002
      %2203 = vmatprep.mubr.bf16.mxu0 %v1477
      %2204 = vmatmul.mubr.bf16.gmra.mrb[0].mxu0 %v1476
      %v2205 = vpop.f32.mrb[0].mxu0
      %v2206 = vadd.f32 %v2166, %v2205
      %v2207 = vpop.f32.mrb[0].mxu0
      %v2208 = vpop.f32.mrb[0].mxu0
      %v2209 = vpop.f32.mrb[0].mxu0
      %2210 = vdwg.mxu0
      %2211 = vmatprep.subr.bf16.mxu0 0
      %2212 = vmatpush1.bf16.msra.mxu0 %v2003
      %2213 = vmatprep.subr.bf16.mxu0 0
      %2214 = vmatpush1.bf16.msra.mxu0 %v2004
      %2215 = vmatprep.subr.bf16.mxu0 0
      %2216 = vmatpush1.bf16.msra.mxu0 %v2005
      %2217 = vmatprep.subr.bf16.mxu0 0
      %2218 = vmatpush1.bf16.msra.mxu0 %v2006
      %2219 = vmatprep.subr.bf16.mxu0 0
      %2220 = vmatpush1.bf16.msra.mxu0 %v2007
      %2221 = vmatprep.subr.bf16.mxu0 0
      %2222 = vmatpush1.bf16.msra.mxu0 %v2008
      %2223 = vmatprep.subr.bf16.mxu0 0
      %2224 = vmatpush1.bf16.msra.mxu0 %v2009
      %2225 = vmatprep.subr.bf16.mxu0 0
      %2226 = vmatpush1.bf16.msra.mxu0 %v2010
      %2227 = vmatprep.subr.bf16.mxu0 0
      %2228 = vmatpush1.bf16.msra.mxu0 %v2011
      %2229 = vmatprep.subr.bf16.mxu0 0
      %2230 = vmatpush1.bf16.msra.mxu0 %v2012
      %2231 = vmatprep.subr.bf16.mxu0 0
      %2232 = vmatpush1.bf16.msra.mxu0 %v2013
      %2233 = vmatprep.subr.bf16.mxu0 0
      %2234 = vmatpush1.bf16.msra.mxu0 %v2014
      %2235 = vmatprep.subr.bf16.mxu0 0
      %2236 = vmatpush1.bf16.msra.mxu0 %v2015
      %2237 = vmatprep.subr.bf16.mxu0 0
      %2238 = vmatpush1.bf16.msra.mxu0 %v2016
      %2239 = vmatprep.subr.bf16.mxu0 0
      %2240 = vmatpush1.bf16.msra.mxu0 %v2017
      %2241 = vmatprep.subr.bf16.mxu0 0
      %2242 = vmatpush1.bf16.msra.mxu0 %v2018
      %2243 = vmatprep.mubr.bf16.mxu0 %v1479
      %2244 = vmatmul.mubr.bf16.gmra.mrb[0].mxu0 %v1478
      %v2245 = vpop.f32.mrb[0].mxu0
      %v2246 = vadd.f32 %v2206, %v2245
      %v2247 = vpop.f32.mrb[0].mxu0
      %v2248 = vpop.f32.mrb[0].mxu0
      %v2249 = vpop.f32.mrb[0].mxu0
      %2250 = vdwg.mxu0
      %2251 = vmatprep.subr.bf16.mxu0 0
      %2252 = vmatpush1.bf16.msra.mxu0 %v2019
      %2253 = vmatprep.subr.bf16.mxu0 0
      %2254 = vmatpush1.bf16.msra.mxu0 %v2020
      %2255 = vmatprep.subr.bf16.mxu0 0
      %2256 = vmatpush1.bf16.msra.mxu0 %v2021
      %2257 = vmatprep.subr.bf16.mxu0 0
      %2258 = vmatpush1.bf16.msra.mxu0 %v2022
      %2259 = vmatprep.subr.bf16.mxu0 0
      %2260 = vmatpush1.bf16.msra.mxu0 %v2023
      %2261 = vmatprep.subr.bf16.mxu0 0
      %2262 = vmatpush1.bf16.msra.mxu0 %v2024
      %2263 = vmatprep.subr.bf16.mxu0 0
      %2264 = vmatpush1.bf16.msra.mxu0 %v2025
      %2265 = vmatprep.subr.bf16.mxu0 0
      %2266 = vmatpush1.bf16.msra.mxu0 %v2026
      %2267 = vmatprep.subr.bf16.mxu0 0
      %2268 = vmatpush1.bf16.msra.mxu0 %v2027
      %2269 = vmatprep.subr.bf16.mxu0 0
      %2270 = vmatpush1.bf16.msra.mxu0 %v2028
      %2271 = vmatprep.subr.bf16.mxu0 0
      %2272 = vmatpush1.bf16.msra.mxu0 %v2029
      %2273 = vmatprep.subr.bf16.mxu0 0
      %2274 = vmatpush1.bf16.msra.mxu0 %v2030
      %2275 = vmatprep.subr.bf16.mxu0 0
      %2276 = vmatpush1.bf16.msra.mxu0 %v2031
      %2277 = vmatprep.subr.bf16.mxu0 0
      %2278 = vmatpush1.bf16.msra.mxu0 %v2032
      %2279 = vmatprep.subr.bf16.mxu0 0
      %2280 = vmatpush1.bf16.msra.mxu0 %v2033
      %2281 = vmatprep.subr.bf16.mxu0 0
      %2282 = vmatpush1.bf16.msra.mxu0 %v2034
      %2283 = vmatprep.mubr.bf16.mxu0 %v1481
      %2284 = vmatmul.mubr.bf16.gmra.mrb[0].mxu0 %v1480
      %v2285 = vpop.f32.mrb[0].mxu0
      %v2286 = vadd.f32 %v2246, %v2285
      %v2287 = vpop.f32.mrb[0].mxu0
      %v2288 = vpop.f32.mrb[0].mxu0
      %v2289 = vpop.f32.mrb[0].mxu0
      %2290 = vdwg.mxu0
      %2291 = vmatprep.subr.bf16.mxu0 0
      %2292 = vmatpush1.bf16.msra.mxu0 %v2035
      %2293 = vmatprep.subr.bf16.mxu0 0
      %2294 = vmatpush1.bf16.msra.mxu0 %v2036
      %2295 = vmatprep.subr.bf16.mxu0 0
      %2296 = vmatpush1.bf16.msra.mxu0 %v2037
      %2297 = vmatprep.subr.bf16.mxu0 0
      %2298 = vmatpush1.bf16.msra.mxu0 %v2038
      %2299 = vmatprep.subr.bf16.mxu0 0
      %2300 = vmatpush1.bf16.msra.mxu0 %v2039
      %2301 = vmatprep.subr.bf16.mxu0 0
      %2302 = vmatpush1.bf16.msra.mxu0 %v2040
      %2303 = vmatprep.subr.bf16.mxu0 0
      %2304 = vmatpush1.bf16.msra.mxu0 %v2041
      %2305 = vmatprep.subr.bf16.mxu0 0
      %2306 = vmatpush1.bf16.msra.mxu0 %v2042
      %2307 = vmatprep.subr.bf16.mxu0 0
      %2308 = vmatpush1.bf16.msra.mxu0 %v2043
      %2309 = vmatprep.subr.bf16.mxu0 0
      %2310 = vmatpush1.bf16.msra.mxu0 %v2044
      %2311 = vmatprep.subr.bf16.mxu0 0
      %2312 = vmatpush1.bf16.msra.mxu0 %v2045
      %2313 = vmatprep.subr.bf16.mxu0 0
      %2314 = vmatpush1.bf16.msra.mxu0 %v2046
      %2315 = vmatprep.subr.bf16.mxu0 0
      %2316 = vmatpush1.bf16.msra.mxu0 %v2047
      %2317 = vmatprep.subr.bf16.mxu0 0
      %2318 = vmatpush1.bf16.msra.mxu0 %v2048
      %2319 = vmatprep.subr.bf16.mxu0 0
      %2320 = vmatpush1.bf16.msra.mxu0 %v2049
      %2321 = vmatprep.subr.bf16.mxu0 0
      %2322 = vmatpush1.bf16.msra.mxu0 %v2050
      %2323 = vmatprep.mubr.bf16.mxu0 %v1483
      %2324 = vmatmul.mubr.bf16.gmra.mrb[0].mxu0 %v1482
      %v2325 = vpop.f32.mrb[0].mxu0
      %v2326 = vadd.f32 %v2286, %v2325
      %v2327 = vpop.f32.mrb[0].mxu0
      %v2328 = vpop.f32.mrb[0].mxu0
      %v2329 = vpop.f32.mrb[0].mxu0
      %2330 = vdwg.mxu0
      %v2331 = vadd.f32 %v755, %v2326
      %s2332 = scalar_lea.vmem %s1, 4
      %v2333 = vld [vmem:[%s2332] sm:$0x1]
      %v2334 = vld [vmem:[%s2332 + $0x1] sm:$0x1]
      %2335 = vadd.xlane.f32.xlu0 %v2331
      %v2336 = vpop.xlane.xlu0 %2335
      %v2337 = vmul.f32 %v2336, %v442
      %v2338 = vsub.f32 %v2331, %v2337
      %v2339 = vmul.f32 %v2338, %v2338
      %2340 = vadd.xlane.f32.xlu0 %v2339
      %v2341 = vpop.xlane.xlu0 %2340
      %v2342 = vmul.f32 %v2341, %v442
      %v2343 = vadd.f32 %v2342, 1e-05
      %v2344 = vrsqrt.pop %v2343
      %v2345 = vmul.f32 %v2338, %v2344
      %v2346 = vlaneseq
      %v2347 = vshrl.u32 %v2346, 7
      %v2348 = vsub.s32 0, %v2347
      %v2349 = vrot.slane %v2333, %v2348
      %v2350 = vmul.f32 %v2345, %v2349
      %v2351 = vlaneseq
      %v2352 = vshrl.u32 %v2351, 7
      %v2353 = vsub.s32 0, %v2352
      %v2354 = vrot.slane %v2334, %v2353
      %v2355 = vadd.f32 %v2350, %v2354
      %v2356 = vmul.f32 %v2355, 0.5
      %v2357 = vtanh.pop %v2356
      %v2358 = vadd.f32 %v2357, 1.0
      %v2359 = vmul.f32 %v2358, 0.5
      %v2360 = vmul.f32 %v2355, %v2359
      %v2361 = vsub.f32 %v2355, -1.5
      %v2362 = vmul.f32 %v2361, %v2361
      %v2363 = vsub.f32 0.0, %v2362
      %v2364 = vmul.f32 %v2363, 1.442695
      %v2365 = vpow.pop %v2364
      %v2366 = vsub.f32 %v2355, -0.5
      %v2367 = vmul.f32 %v2366, %v2366
      %v2368 = vsub.f32 0.0, %v2367
      %v2369 = vmul.f32 %v2368, 1.442695
      %v2370 = vpow.pop %v2369
      %v2371 = vsub.f32 %v2355, 0.5
      %v2372 = vmul.f32 %v2371, %v2371
      %v2373 = vsub.f32 0.0, %v2372
      %v2374 = vmul.f32 %v2373, 1.442695
      %v2375 = vpow.pop %v2374
      %v2376 = vsub.f32 %v2355, 1.5
      %v2377 = vmul.f32 %v2376, %v2376
      %v2378 = vsub.f32 0.0, %v2377
      %v2379 = vmul.f32 %v2378, 1.442695
      %v2380 = vpow.pop %v2379
      %v2381 = vpack.c.bf16 %v2365, %v2360
      %v2382 = vpack.c.bf16 %v2375, %v2370
      %v2383 = vpack.c.bf16 %v2380, %v2380
      %s2384 = scalar_lea.vmem %s2, 16
      %v2385 = vld [vmem:[%s2384] sm:$0xf]
      %v2386 = vld [vmem:[%s2384 + $0x4] sm:$0xf]
      %v2387 = vld [vmem:[%s2384 + $0x8] sm:$0xf]
      %v2388 = vld [vmem:[%s2384 + $0xc] sm:$0xf]
      %s2389 = scalar_lea.vmem %s3, 32
      %v2390 = vld [vmem:[%s2389] sm:$0xff]
      %v2391 = vld [vmem:[%s2389 + $0x8] sm:$0xff]
      %v2392 = vld [vmem:[%s2389 + $0x10] sm:$0xff]
      %v2393 = vld [vmem:[%s2389 + $0x18] sm:$0xff]
      %2395 = vset.pattern.permute.xlu0 0
      %2396 = vperm.xlu0 %2395, %v2390
      %v2397 = vpop.permute.xlu0 %2396
      %2400 = vset.pattern.permute.xlu0 0
      %2401 = vperm.xlu0 %2400, %v2391
      %v2402 = vpop.permute.xlu0 %2401
      %2405 = vset.pattern.permute.xlu0 0
      %2406 = vperm.xlu0 %2405, %v2392
      %v2407 = vpop.permute.xlu0 %2406
      %2410 = vset.pattern.permute.xlu0 0
      %2411 = vperm.xlu0 %2410, %v2393
      %v2412 = vpop.permute.xlu0 %2411
      %v2418 = vunpack.c.l.b16 %v2385
      %v2419 = vunpack.c.l.b16 %v2386
      %v2420 = vunpack.c.l.b16 %v2387
      %v2421 = vunpack.c.l.b16 %v2388
      %v2422 = vpack.c.b16 %v2419, %v2418
      %v2423 = vpack.c.b16 %v2421, %v2420
      %v2425 = vsel %vm528, %v2422, 0
      %v2428 = vsel %vm528, %v2423, 0
      %v2431 = vsel %vm535, %v2383, 0
      %2433 = vmatprep.subr.bf16.mxu0 0
      %2434 = vmatpush1.bf16.msra.mxu0 %v2381
      %2435 = vmatprep.subr.bf16.mxu0 0
      %2436 = vmatpush1.bf16.msra.mxu0 %v2382
      %2437 = vmatprep.subr.bf16.mxu0 0
      %2438 = vmatpush1.bf16.msra.mxu0 %v2431
      %2439 = vmatprep.subr.bf16.mxu0 0
      %2440 = vmatpush1.bf16.msra.mxu0 0
      %2441 = vmatprep.subr.bf16.mxu0 0
      %2442 = vmatpush1.bf16.msra.mxu0 0
      %2443 = vmatprep.subr.bf16.mxu0 0
      %2444 = vmatpush1.bf16.msra.mxu0 0
      %2445 = vmatprep.subr.bf16.mxu0 0
      %2446 = vmatpush1.bf16.msra.mxu0 0
      %2447 = vmatprep.subr.bf16.mxu0 0
      %2448 = vmatpush1.bf16.msra.mxu0 0
      %2449 = vmatprep.subr.bf16.mxu0 0
      %2450 = vmatpush1.bf16.msra.mxu0 0
      %2451 = vmatprep.subr.bf16.mxu0 0
      %2452 = vmatpush1.bf16.msra.mxu0 0
      %2453 = vmatprep.subr.bf16.mxu0 0
      %2454 = vmatpush1.bf16.msra.mxu0 0
      %2455 = vmatprep.subr.bf16.mxu0 0
      %2456 = vmatpush1.bf16.msra.mxu0 0
      %2457 = vmatprep.subr.bf16.mxu0 0
      %2458 = vmatpush1.bf16.msra.mxu0 0
      %2459 = vmatprep.subr.bf16.mxu0 0
      %2460 = vmatpush1.bf16.msra.mxu0 0
      %2461 = vmatprep.subr.bf16.mxu0 0
      %2462 = vmatpush1.bf16.msra.mxu0 0
      %2463 = vmatprep.subr.bf16.mxu0 0
      %2464 = vmatpush1.bf16.msra.mxu0 0
      %2465 = vmatprep.mubr.bf16.mxu0 0
      %2466 = vmatmul.mubr.bf16.gmra.mrb[0].mxu0 %v2425
      %v2467 = vpop.f32.mrb[0].mxu0
      %v2468 = vadd.f32 %v2397, %v2467
      %v2469 = vpop.f32.mrb[0].mxu0
      %v2470 = vpop.f32.mrb[0].mxu0
      %v2471 = vadd.f32 %v2402, %v2470
      %v2472 = vpop.f32.mrb[0].mxu0
      %2473 = vmatprep.mubr.bf16.mxu0 0
      %2474 = vmatmul.mubr.bf16.gmra.mrb[0].mxu0 %v2428
      %v2475 = vpop.f32.mrb[0].mxu0
      %v2476 = vadd.f32 %v2407, %v2475
      %v2477 = vpop.f32.mrb[0].mxu0
      %v2478 = vpop.f32.mrb[0].mxu0
      %v2479 = vadd.f32 %v2412, %v2478
      %v2480 = vpop.f32.mrb[0].mxu0
      %2481 = vdwg.mxu0
      %v2482 = vmul.f32 %v2468, 0.5
      %v2483 = vmul.f32 %v2471, 0.5
      %v2484 = vmul.f32 %v2476, 0.5
      %v2485 = vmul.f32 %v2479, 0.5
      %v2486 = vtanh.pop %v2482
      %v2487 = vtanh.pop %v2483
      %v2488 = vtanh.pop %v2484
      %v2489 = vtanh.pop %v2485
      %v2490 = vadd.f32 %v2486, 1.0
      %v2491 = vadd.f32 %v2487, 1.0
      %v2492 = vadd.f32 %v2488, 1.0
      %v2493 = vadd.f32 %v2489, 1.0
      %v2494 = vmul.f32 %v2490, 0.5
      %v2495 = vmul.f32 %v2491, 0.5
      %v2496 = vmul.f32 %v2492, 0.5
      %v2497 = vmul.f32 %v2493, 0.5
      %v2498 = vmul.f32 %v2468, %v2494
      %v2499 = vmul.f32 %v2471, %v2495
      %v2500 = vmul.f32 %v2476, %v2496
      %v2501 = vmul.f32 %v2479, %v2497
      %v2502 = vsub.f32 %v2468, -1.5
      %v2503 = vsub.f32 %v2471, -1.5
      %v2504 = vsub.f32 %v2476, -1.5
      %v2505 = vsub.f32 %v2479, -1.5
      %v2506 = vmul.f32 %v2502, %v2502
      %v2507 = vmul.f32 %v2503, %v2503
      %v2508 = vmul.f32 %v2504, %v2504
      %v2509 = vmul.f32 %v2505, %v2505
      %v2510 = vsub.f32 0.0, %v2506
      %v2511 = vsub.f32 0.0, %v2507
      %v2512 = vsub.f32 0.0, %v2508
      %v2513 = vsub.f32 0.0, %v2509
      %v2514 = vmul.f32 %v2510, 1.442695
      %v2515 = vpow.pop %v2514
      %v2516 = vmul.f32 %v2511, 1.442695
      %v2517 = vpow.pop %v2516
      %v2518 = vmul.f32 %v2512, 1.442695
      %v2519 = vpow.pop %v2518
      %v2520 = vmul.f32 %v2513, 1.442695
      %v2521 = vpow.pop %v2520
      %v2522 = vsub.f32 %v2468, -0.5
      %v2523 = vsub.f32 %v2471, -0.5
      %v2524 = vsub.f32 %v2476, -0.5
      %v2525 = vsub.f32 %v2479, -0.5
      %v2526 = vmul.f32 %v2522, %v2522
      %v2527 = vmul.f32 %v2523, %v2523
      %v2528 = vmul.f32 %v2524, %v2524
      %v2529 = vmul.f32 %v2525, %v2525
      %v2530 = vsub.f32 0.0, %v2526
      %v2531 = vsub.f32 0.0, %v2527
      %v2532 = vsub.f32 0.0, %v2528
      %v2533 = vsub.f32 0.0, %v2529
      %v2534 = vmul.f32 %v2530, 1.442695
      %v2535 = vpow.pop %v2534
      %v2536 = vmul.f32 %v2531, 1.442695
      %v2537 = vpow.pop %v2536
      %v2538 = vmul.f32 %v2532, 1.442695
      %v2539 = vpow.pop %v2538
      %v2540 = vmul.f32 %v2533, 1.442695
      %v2541 = vpow.pop %v2540
      %v2542 = vsub.f32 %v2468, 0.5
      %v2543 = vsub.f32 %v2471, 0.5
      %v2544 = vsub.f32 %v2476, 0.5
      %v2545 = vsub.f32 %v2479, 0.5
      %v2546 = vmul.f32 %v2542, %v2542
      %v2547 = vmul.f32 %v2543, %v2543
      %v2548 = vmul.f32 %v2544, %v2544
      %v2549 = vmul.f32 %v2545, %v2545
      %v2550 = vsub.f32 0.0, %v2546
      %v2551 = vsub.f32 0.0, %v2547
      %v2552 = vsub.f32 0.0, %v2548
      %v2553 = vsub.f32 0.0, %v2549
      %v2554 = vmul.f32 %v2550, 1.442695
      %v2555 = vpow.pop %v2554
      %v2556 = vmul.f32 %v2551, 1.442695
      %v2557 = vpow.pop %v2556
      %v2558 = vmul.f32 %v2552, 1.442695
      %v2559 = vpow.pop %v2558
      %v2560 = vmul.f32 %v2553, 1.442695
      %v2561 = vpow.pop %v2560
      %v2562 = vsub.f32 %v2468, 1.5
      %v2563 = vsub.f32 %v2471, 1.5
      %v2564 = vsub.f32 %v2476, 1.5
      %v2565 = vsub.f32 %v2479, 1.5
      %v2566 = vmul.f32 %v2562, %v2562
      %v2567 = vmul.f32 %v2563, %v2563
      %v2568 = vmul.f32 %v2564, %v2564
      %v2569 = vmul.f32 %v2565, %v2565
      %v2570 = vsub.f32 0.0, %v2566
      %v2571 = vsub.f32 0.0, %v2567
      %v2572 = vsub.f32 0.0, %v2568
      %v2573 = vsub.f32 0.0, %v2569
      %v2574 = vmul.f32 %v2570, 1.442695
      %v2575 = vpow.pop %v2574
      %v2576 = vmul.f32 %v2571, 1.442695
      %v2577 = vpow.pop %v2576
      %v2578 = vmul.f32 %v2572, 1.442695
      %v2579 = vpow.pop %v2578
      %v2580 = vmul.f32 %v2573, 1.442695
      %v2581 = vpow.pop %v2580
      %v2582 = vpack.c.bf16 %v2499, %v2498
      %v2583 = vpack.c.bf16 %v2501, %v2500
      %v2584 = vpack.c.bf16 %v2517, %v2515
      %v2585 = vpack.c.bf16 %v2521, %v2519
      %v2586 = vpack.c.bf16 %v2537, %v2535
      %v2587 = vpack.c.bf16 %v2541, %v2539
      %v2588 = vpack.c.bf16 %v2557, %v2555
      %v2589 = vpack.c.bf16 %v2561, %v2559
      %v2590 = vpack.c.bf16 %v2577, %v2575
      %v2591 = vpack.c.bf16 %v2581, %v2579
      %s2592 = scalar_lea.vmem %s4, 8
      %v2593 = vld [vmem:[%s2592] sm:$0xff]
      %s2594 = scalar_lea.vmem %s5, 8
      %v2595 = vld [vmem:[%s2594] sm:$0xff]
      %2597 = vset.pattern.permute.xlu0 0
      %2598 = vperm.xlu0 %2597, %v2595
      %v2599 = vpop.permute.xlu0 %2598
      %v2602 = vunpack.c.l.b16 %v2593
      %v2603 = vunpack.c.h.b16 %v2593
      %v2604 = vpack.c.b16 %v2602, %v2602
      %v2605 = vpack.c.b16 %v2603, %v2603
      %v2608 = vsel %vm711, %v2605, 0
      %2610 = vmatprep.subr.bf16.mxu0 0
      %2611 = vmatpush1.bf16.msra.mxu0 %v2582
      %2612 = vmatprep.subr.bf16.mxu0 0
      %2613 = vmatpush1.bf16.msra.mxu0 %v2583
      %2614 = vmatprep.subr.bf16.mxu0 0
      %2615 = vmatpush1.bf16.msra.mxu0 %v2584
      %2616 = vmatprep.subr.bf16.mxu0 0
      %2617 = vmatpush1.bf16.msra.mxu0 %v2585
      %2618 = vmatprep.subr.bf16.mxu0 0
      %2619 = vmatpush1.bf16.msra.mxu0 %v2586
      %2620 = vmatprep.subr.bf16.mxu0 0
      %2621 = vmatpush1.bf16.msra.mxu0 %v2587
      %2622 = vmatprep.subr.bf16.mxu0 0
      %2623 = vmatpush1.bf16.msra.mxu0 %v2588
      %2624 = vmatprep.subr.bf16.mxu0 0
      %2625 = vmatpush1.bf16.msra.mxu0 %v2589
      %2626 = vmatprep.subr.bf16.mxu0 0
      %2627 = vmatpush1.bf16.msra.mxu0 %v2590
      %2628 = vmatprep.subr.bf16.mxu0 0
      %2629 = vmatpush1.bf16.msra.mxu0 %v2591
      %2630 = vmatprep.subr.bf16.mxu0 0
      %2631 = vmatpush1.bf16.msra.mxu0 0
      %2632 = vmatprep.subr.bf16.mxu0 0
      %2633 = vmatpush1.bf16.msra.mxu0 0
      %2634 = vmatprep.subr.bf16.mxu0 0
      %2635 = vmatpush1.bf16.msra.mxu0 0
      %2636 = vmatprep.subr.bf16.mxu0 0
      %2637 = vmatpush1.bf16.msra.mxu0 0
      %2638 = vmatprep.subr.bf16.mxu0 0
      %2639 = vmatpush1.bf16.msra.mxu0 0
      %2640 = vmatprep.subr.bf16.mxu0 0
      %2641 = vmatpush1.bf16.msra.mxu0 0
      %2642 = vmatprep.mubr.bf16.mxu0 %v2608
      %2643 = vmatmul.mubr.bf16.gmra.mrb[0].mxu0 %v2604
      %v2644 = vpop.f32.mrb[0].mxu0
      %v2645 = vadd.f32 %v2599, %v2644
      %v2646 = vpop.f32.mrb[0].mxu0
      %v2647 = vpop.f32.mrb[0].mxu0
      %v2648 = vpop.f32.mrb[0].mxu0
      %2649 = vdwg.mxu0
      %v2650 = vadd.f32 %v2331, %v2645
      %v2651 = vld [vmem:[%s2332 + $0x2] sm:$0x1]
      %v2652 = vld [vmem:[%s2332 + $0x3] sm:$0x1]
      %2653 = vadd.xlane.f32.xlu0 %v2650
      %v2654 = vpop.xlane.xlu0 %2653
      %v2655 = vmul.f32 %v2654, %v442
      %v2656 = vsub.f32 %v2650, %v2655
      %v2657 = vmul.f32 %v2656, %v2656
      %2658 = vadd.xlane.f32.xlu0 %v2657
      %v2659 = vpop.xlane.xlu0 %2658
      %v2660 = vmul.f32 %v2659, %v442
      %v2661 = vadd.f32 %v2660, 1e-05
      %v2662 = vrsqrt.pop %v2661
      %v2663 = vmul.f32 %v2656, %v2662
      %v2664 = vlaneseq
      %v2665 = vshrl.u32 %v2664, 7
      %v2666 = vsub.s32 0, %v2665
      %v2667 = vrot.slane %v2651, %v2666
      %v2668 = vmul.f32 %v2663, %v2667
      %v2669 = vlaneseq
      %v2670 = vshrl.u32 %v2669, 7
      %v2671 = vsub.s32 0, %v2670
      %v2672 = vrot.slane %v2652, %v2671
      %v2673 = vadd.f32 %v2668, %v2672
      %v2674 = vmul.f32 %v2673, 0.5
      %v2675 = vtanh.pop %v2674
      %v2676 = vadd.f32 %v2675, 1.0
      %v2677 = vmul.f32 %v2676, 0.5
      %v2678 = vmul.f32 %v2673, %v2677
      %v2679 = vsub.f32 %v2673, -1.5
      %v2680 = vmul.f32 %v2679, %v2679
      %v2681 = vsub.f32 0.0, %v2680
      %v2682 = vmul.f32 %v2681, 1.442695
      %v2683 = vpow.pop %v2682
      %v2684 = vsub.f32 %v2673, -0.5
      %v2685 = vmul.f32 %v2684, %v2684
      %v2686 = vsub.f32 0.0, %v2685
      %v2687 = vmul.f32 %v2686, 1.442695
      %v2688 = vpow.pop %v2687
      %v2689 = vsub.f32 %v2673, 0.5
      %v2690 = vmul.f32 %v2689, %v2689
      %v2691 = vsub.f32 0.0, %v2690
      %v2692 = vmul.f32 %v2691, 1.442695
      %v2693 = vpow.pop %v2692
      %v2694 = vsub.f32 %v2673, 1.5
      %v2695 = vmul.f32 %v2694, %v2694
      %v2696 = vsub.f32 0.0, %v2695
      %v2697 = vmul.f32 %v2696, 1.442695
      %v2698 = vpow.pop %v2697
      %v2699 = vpack.c.bf16 %v2678, %v2678
      %v2700 = vpack.c.bf16 %v2683, %v2683
      %v2701 = vpack.c.bf16 %v2688, %v2688
      %v2702 = vpack.c.bf16 %v2693, %v2693
      %v2703 = vpack.c.bf16 %v2698, %v2698
      %s2704 = scalar_lea.vmem %s6, 640
      %v2705 = vld [vmem:[%s2704] sm:$0xff]
      %v2706 = vld [vmem:[%s2704 + $0x8] sm:$0xff]
      %v2707 = vld [vmem:[%s2704 + $0x10] sm:$0xff]
      %v2708 = vld [vmem:[%s2704 + $0x18] sm:$0xff]
      %v2709 = vld [vmem:[%s2704 + $0x20] sm:$0xff]
      %v2710 = vld [vmem:[%s2704 + $0x28] sm:$0xff]
      %v2711 = vld [vmem:[%s2704 + $0x30] sm:$0xff]
      %v2712 = vld [vmem:[%s2704 + $0x38] sm:$0xff]
      %v2713 = vld [vmem:[%s2704 + $0x40] sm:$0xff]
      %v2714 = vld [vmem:[%s2704 + $0x48] sm:$0xff]
      %v2715 = vld [vmem:[%s2704 + $0x50] sm:$0xff]
      %v2716 = vld [vmem:[%s2704 + $0x58] sm:$0xff]
      %v2717 = vld [vmem:[%s2704 + $0x60] sm:$0xff]
      %v2718 = vld [vmem:[%s2704 + $0x68] sm:$0xff]
      %v2719 = vld [vmem:[%s2704 + $0x70] sm:$0xff]
      %v2720 = vld [vmem:[%s2704 + $0x78] sm:$0xff]
      %v2721 = vld [vmem:[%s2704 + $0x80] sm:$0xff]
      %v2722 = vld [vmem:[%s2704 + $0x88] sm:$0xff]
      %v2723 = vld [vmem:[%s2704 + $0x90] sm:$0xff]
      %v2724 = vld [vmem:[%s2704 + $0x98] sm:$0xff]
      %v2725 = vld [vmem:[%s2704 + $0xa0] sm:$0xff]
      %v2726 = vld [vmem:[%s2704 + $0xa8] sm:$0xff]
      %v2727 = vld [vmem:[%s2704 + $0xb0] sm:$0xff]
      %v2728 = vld [vmem:[%s2704 + $0xb8] sm:$0xff]
      %v2729 = vld [vmem:[%s2704 + $0xc0] sm:$0xff]
      %v2730 = vld [vmem:[%s2704 + $0xc8] sm:$0xff]
      %v2731 = vld [vmem:[%s2704 + $0xd0] sm:$0xff]
      %v2732 = vld [vmem:[%s2704 + $0xd8] sm:$0xff]
      %v2733 = vld [vmem:[%s2704 + $0xe0] sm:$0xff]
      %v2734 = vld [vmem:[%s2704 + $0xe8] sm:$0xff]
      %v2735 = vld [vmem:[%s2704 + $0xf0] sm:$0xff]
      %v2736 = vld [vmem:[%s2704 + $0xf8] sm:$0xff]
      %v2737 = vld [vmem:[%s2704 + $0x100] sm:$0xff]
      %v2738 = vld [vmem:[%s2704 + $0x108] sm:$0xff]
      %v2739 = vld [vmem:[%s2704 + $0x110] sm:$0xff]
      %v2740 = vld [vmem:[%s2704 + $0x118] sm:$0xff]
      %v2741 = vld [vmem:[%s2704 + $0x120] sm:$0xff]
      %v2742 = vld [vmem:[%s2704 + $0x128] sm:$0xff]
      %v2743 = vld [vmem:[%s2704 + $0x130] sm:$0xff]
      %v2744 = vld [vmem:[%s2704 + $0x138] sm:$0xff]
      %v2745 = vld [vmem:[%s2704 + $0x140] sm:$0xff]
      %v2746 = vld [vmem:[%s2704 + $0x148] sm:$0xff]
      %v2747 = vld [vmem:[%s2704 + $0x150] sm:$0xff]
      %v2748 = vld [vmem:[%s2704 + $0x158] sm:$0xff]
      %v2749 = vld [vmem:[%s2704 + $0x160] sm:$0xff]
      %v2750 = vld [vmem:[%s2704 + $0x168] sm:$0xff]
      %v2751 = vld [vmem:[%s2704 + $0x170] sm:$0xff]
      %v2752 = vld [vmem:[%s2704 + $0x178] sm:$0xff]
      %v2753 = vld [vmem:[%s2704 + $0x180] sm:$0xff]
      %v2754 = vld [vmem:[%s2704 + $0x188] sm:$0xff]
      %v2755 = vld [vmem:[%s2704 + $0x190] sm:$0xff]
      %v2756 = vld [vmem:[%s2704 + $0x198] sm:$0xff]
      %v2757 = vld [vmem:[%s2704 + $0x1a0] sm:$0xff]
      %v2758 = vld [vmem:[%s2704 + $0x1a8] sm:$0xff]
      %v2759 = vld [vmem:[%s2704 + $0x1b0] sm:$0xff]
      %v2760 = vld [vmem:[%s2704 + $0x1b8] sm:$0xff]
      %v2761 = vld [vmem:[%s2704 + $0x1c0] sm:$0xff]
      %v2762 = vld [vmem:[%s2704 + $0x1c8] sm:$0xff]
      %v2763 = vld [vmem:[%s2704 + $0x1d0] sm:$0xff]
      %v2764 = vld [vmem:[%s2704 + $0x1d8] sm:$0xff]
      %v2765 = vld [vmem:[%s2704 + $0x1e0] sm:$0xff]
      %v2766 = vld [vmem:[%s2704 + $0x1e8] sm:$0xff]
      %v2767 = vld [vmem:[%s2704 + $0x1f0] sm:$0xff]
      %v2768 = vld [vmem:[%s2704 + $0x1f8] sm:$0xff]
      %v2769 = vld [vmem:[%s2704 + $0x200] sm:$0xff]
      %v2770 = vld [vmem:[%s2704 + $0x208] sm:$0xff]
      %v2771 = vld [vmem:[%s2704 + $0x210] sm:$0xff]
      %v2772 = vld [vmem:[%s2704 + $0x218] sm:$0xff]
      %v2773 = vld [vmem:[%s2704 + $0x220] sm:$0xff]
      %v2774 = vld [vmem:[%s2704 + $0x228] sm:$0xff]
      %v2775 = vld [vmem:[%s2704 + $0x230] sm:$0xff]
      %v2776 = vld [vmem:[%s2704 + $0x238] sm:$0xff]
      %v2777 = vld [vmem:[%s2704 + $0x240] sm:$0xff]
      %v2778 = vld [vmem:[%s2704 + $0x248] sm:$0xff]
      %v2779 = vld [vmem:[%s2704 + $0x250] sm:$0xff]
      %v2780 = vld [vmem:[%s2704 + $0x258] sm:$0xff]
      %v2781 = vld [vmem:[%s2704 + $0x260] sm:$0xff]
      %v2782 = vld [vmem:[%s2704 + $0x268] sm:$0xff]
      %v2783 = vld [vmem:[%s2704 + $0x270] sm:$0xff]
      %v2784 = vld [vmem:[%s2704 + $0x278] sm:$0xff]
      %s2785 = scalar_lea.vmem %s7, 2
      %v2786 = vld [vmem:[%s2785] sm:$0x3]
      %v2788 = vlaneseq
      %v2789 = vshrl.u32 %v2788, 7
      %v2790 = vsub.s32 0, %v2789
      %v2791 = vrot.slane %v2786, %v2790
      %v2792 = vlaneseq
      %v2793 = vshrl.u32 %v2792, 7
      %v2794 = vsub.s32 1, %v2793
      %v2795 = vrot.slane %v2786, %v2794
      %v2878 = vunpack.c.l.b16 %v2705
      %v2879 = vunpack.c.h.b16 %v2705
      %v2880 = vunpack.c.l.b16 %v2706
      %v2881 = vunpack.c.h.b16 %v2706
      %v2882 = vunpack.c.l.b16 %v2707
      %v2883 = vunpack.c.h.b16 %v2707
      %v2884 = vunpack.c.l.b16 %v2708
      %v2885 = vunpack.c.h.b16 %v2708
      %v2886 = vunpack.c.l.b16 %v2709
      %v2887 = vunpack.c.h.b16 %v2709
      %v2888 = vunpack.c.l.b16 %v2710
      %v2889 = vunpack.c.h.b16 %v2710
      %v2890 = vunpack.c.l.b16 %v2711
      %v2891 = vunpack.c.h.b16 %v2711
      %v2892 = vunpack.c.l.b16 %v2712
      %v2893 = vunpack.c.h.b16 %v2712
      %v2894 = vunpack.c.l.b16 %v2713
      %v2895 = vunpack.c.h.b16 %v2713
      %v2896 = vunpack.c.l.b16 %v2714
      %v2897 = vunpack.c.h.b16 %v2714
      %v2898 = vunpack.c.l.b16 %v2715
      %v2899 = vunpack.c.h.b16 %v2715
      %v2900 = vunpack.c.l.b16 %v2716
      %v2901 = vunpack.c.h.b16 %v2716
      %v2902 = vunpack.c.l.b16 %v2717
      %v2903 = vunpack.c.h.b16 %v2717
      %v2904 = vunpack.c.l.b16 %v2718
      %v2905 = vunpack.c.h.b16 %v2718
      %v2906 = vunpack.c.l.b16 %v2719
      %v2907 = vunpack.c.h.b16 %v2719
      %v2908 = vunpack.c.l.b16 %v2720
      %v2909 = vunpack.c.h.b16 %v2720
      %v2910 = vunpack.c.l.b16 %v2721
      %v2911 = vunpack.c.h.b16 %v2721
      %v2912 = vunpack.c.l.b16 %v2722
      %v2913 = vunpack.c.h.b16 %v2722
      %v2914 = vunpack.c.l.b16 %v2723
      %v2915 = vunpack.c.h.b16 %v2723
      %v2916 = vunpack.c.l.b16 %v2724
      %v2917 = vunpack.c.h.b16 %v2724
      %v2918 = vunpack.c.l.b16 %v2725
      %v2919 = vunpack.c.h.b16 %v2725
      %v2920 = vunpack.c.l.b16 %v2726
      %v2921 = vunpack.c.h.b16 %v2726
      %v2922 = vunpack.c.l.b16 %v2727
      %v2923 = vunpack.c.h.b16 %v2727
      %v2924 = vunpack.c.l.b16 %v2728
      %v2925 = vunpack.c.h.b16 %v2728
      %v2926 = vunpack.c.l.b16 %v2729
      %v2927 = vunpack.c.h.b16 %v2729
      %v2928 = vunpack.c.l.b16 %v2730
      %v2929 = vunpack.c.h.b16 %v2730
      %v2930 = vunpack.c.l.b16 %v2731
      %v2931 = vunpack.c.h.b16 %v2731
      %v2932 = vunpack.c.l.b16 %v2732
      %v2933 = vunpack.c.h.b16 %v2732
      %v2934 = vunpack.c.l.b16 %v2733
      %v2935 = vunpack.c.h.b16 %v2733
      %v2936 = vunpack.c.l.b16 %v2734
      %v2937 = vunpack.c.h.b16 %v2734
      %v2938 = vunpack.c.l.b16 %v2735
      %v2939 = vunpack.c.h.b16 %v2735
      %v2940 = vunpack.c.l.b16 %v2736
      %v2941 = vunpack.c.h.b16 %v2736
      %v2942 = vunpack.c.l.b16 %v2737
      %v2943 = vunpack.c.h.b16 %v2737
      %v2944 = vunpack.c.l.b16 %v2738
      %v2945 = vunpack.c.h.b16 %v2738
      %v2946 = vunpack.c.l.b16 %v2739
      %v2947 = vunpack.c.h.b16 %v2739
      %v2948 = vunpack.c.l.b16 %v2740
      %v2949 = vunpack.c.h.b16 %v2740
      %v2950 = vunpack.c.l.b16 %v2741
      %v2951 = vunpack.c.h.b16 %v2741
      %v2952 = vunpack.c.l.b16 %v2742
      %v2953 = vunpack.c.h.b16 %v2742
      %v2954 = vunpack.c.l.b16 %v2743
      %v2955 = vunpack.c.h.b16 %v2743
      %v2956 = vunpack.c.l.b16 %v2744
      %v2957 = vunpack.c.h.b16 %v2744
      %v2958 = vunpack.c.l.b16 %v2745
      %v2959 = vunpack.c.h.b16 %v2745
      %v2960 = vunpack.c.l.b16 %v2746
      %v2961 = vunpack.c.h.b16 %v2746
      %v2962 = vunpack.c.l.b16 %v2747
      %v2963 = vunpack.c.h.b16 %v2747
      %v2964 = vunpack.c.l.b16 %v2748
      %v2965 = vunpack.c.h.b16 %v2748
      %v2966 = vunpack.c.l.b16 %v2749
      %v2967 = vunpack.c.h.b16 %v2749
      %v2968 = vunpack.c.l.b16 %v2750
      %v2969 = vunpack.c.h.b16 %v2750
      %v2970 = vunpack.c.l.b16 %v2751
      %v2971 = vunpack.c.h.b16 %v2751
      %v2972 = vunpack.c.l.b16 %v2752
      %v2973 = vunpack.c.h.b16 %v2752
      %v2974 = vunpack.c.l.b16 %v2753
      %v2975 = vunpack.c.h.b16 %v2753
      %v2976 = vunpack.c.l.b16 %v2754
      %v2977 = vunpack.c.h.b16 %v2754
      %v2978 = vunpack.c.l.b16 %v2755
      %v2979 = vunpack.c.h.b16 %v2755
      %v2980 = vunpack.c.l.b16 %v2756
      %v2981 = vunpack.c.h.b16 %v2756
      %v2982 = vunpack.c.l.b16 %v2757
      %v2983 = vunpack.c.h.b16 %v2757
      %v2984 = vunpack.c.l.b16 %v2758
      %v2985 = vunpack.c.h.b16 %v2758
      %v2986 = vunpack.c.l.b16 %v2759
      %v2987 = vunpack.c.h.b16 %v2759
      %v2988 = vunpack.c.l.b16 %v2760
      %v2989 = vunpack.c.h.b16 %v2760
      %v2990 = vunpack.c.l.b16 %v2761
      %v2991 = vunpack.c.h.b16 %v2761
      %v2992 = vunpack.c.l.b16 %v2762
      %v2993 = vunpack.c.h.b16 %v2762
      %v2994 = vunpack.c.l.b16 %v2763
      %v2995 = vunpack.c.h.b16 %v2763
      %v2996 = vunpack.c.l.b16 %v2764
      %v2997 = vunpack.c.h.b16 %v2764
      %v2998 = vunpack.c.l.b16 %v2765
      %v2999 = vunpack.c.h.b16 %v2765
      %v3000 = vunpack.c.l.b16 %v2766
      %v3001 = vunpack.c.h.b16 %v2766
      %v3002 = vunpack.c.l.b16 %v2767
      %v3003 = vunpack.c.h.b16 %v2767
      %v3004 = vunpack.c.l.b16 %v2768
      %v3005 = vunpack.c.h.b16 %v2768
      %v3006 = vunpack.c.l.b16 %v2769
      %v3007 = vunpack.c.h.b16 %v2769
      %v3008 = vunpack.c.l.b16 %v2770
      %v3009 = vunpack.c.h.b16 %v2770
      %v3010 = vunpack.c.l.b16 %v2771
      %v3011 = vunpack.c.h.b16 %v2771
      %v3012 = vunpack.c.l.b16 %v2772
      %v3013 = vunpack.c.h.b16 %v2772
      %v3014 = vunpack.c.l.b16 %v2773
      %v3015 = vunpack.c.h.b16 %v2773
      %v3016 = vunpack.c.l.b16 %v2774
      %v3017 = vunpack.c.h.b16 %v2774
      %v3018 = vunpack.c.l.b16 %v2775
      %v3019 = vunpack.c.h.b16 %v2775
      %v3020 = vunpack.c.l.b16 %v2776
      %v3021 = vunpack.c.h.b16 %v2776
      %v3022 = vunpack.c.l.b16 %v2777
      %v3023 = vunpack.c.h.b16 %v2777
      %v3024 = vunpack.c.l.b16 %v2778
      %v3025 = vunpack.c.h.b16 %v2778
      %v3026 = vunpack.c.l.b16 %v2779
      %v3027 = vunpack.c.h.b16 %v2779
      %v3028 = vunpack.c.l.b16 %v2780
      %v3029 = vunpack.c.h.b16 %v2780
      %v3030 = vunpack.c.l.b16 %v2781
      %v3031 = vunpack.c.h.b16 %v2781
      %v3032 = vunpack.c.l.b16 %v2782
      %v3033 = vunpack.c.h.b16 %v2782
      %v3034 = vunpack.c.l.b16 %v2783
      %v3035 = vunpack.c.h.b16 %v2783
      %v3036 = vunpack.c.l.b16 %v2784
      %v3037 = vunpack.c.h.b16 %v2784
      %v3038 = vpack.c.b16 %v2880, %v2878
      %v3039 = vpack.c.b16 %v2881, %v2879
      %v3040 = vpack.c.b16 %v2884, %v2882
      %v3041 = vpack.c.b16 %v2885, %v2883
      %v3042 = vpack.c.b16 %v2888, %v2886
      %v3043 = vpack.c.b16 %v2889, %v2887
      %v3044 = vpack.c.b16 %v2892, %v2890
      %v3045 = vpack.c.b16 %v2893, %v2891
      %v3046 = vpack.c.b16 %v2896, %v2894
      %v3047 = vpack.c.b16 %v2897, %v2895
      %v3048 = vpack.c.b16 %v2900, %v2898
      %v3049 = vpack.c.b16 %v2901, %v2899
      %v3050 = vpack.c.b16 %v2904, %v2902
      %v3051 = vpack.c.b16 %v2905, %v2903
      %v3052 = vpack.c.b16 %v2908, %v2906
      %v3053 = vpack.c.b16 %v2909, %v2907
      %v3054 = vpack.c.b16 %v2912, %v2910
      %v3055 = vpack.c.b16 %v2913, %v2911
      %v3056 = vpack.c.b16 %v2916, %v2914
      %v3057 = vpack.c.b16 %v2917, %v2915
      %v3058 = vpack.c.b16 %v2920, %v2918
      %v3059 = vpack.c.b16 %v2921, %v2919
      %v3060 = vpack.c.b16 %v2924, %v2922
      %v3061 = vpack.c.b16 %v2925, %v2923
      %v3062 = vpack.c.b16 %v2928, %v2926
      %v3063 = vpack.c.b16 %v2929, %v2927
      %v3064 = vpack.c.b16 %v2932, %v2930
      %v3065 = vpack.c.b16 %v2933, %v2931
      %v3066 = vpack.c.b16 %v2936, %v2934
      %v3067 = vpack.c.b16 %v2937, %v2935
      %v3068 = vpack.c.b16 %v2940, %v2938
      %v3069 = vpack.c.b16 %v2941, %v2939
      %v3070 = vpack.c.b16 %v2944, %v2942
      %v3071 = vpack.c.b16 %v2945, %v2943
      %v3072 = vpack.c.b16 %v2948, %v2946
      %v3073 = vpack.c.b16 %v2949, %v2947
      %v3074 = vpack.c.b16 %v2952, %v2950
      %v3075 = vpack.c.b16 %v2953, %v2951
      %v3076 = vpack.c.b16 %v2956, %v2954
      %v3077 = vpack.c.b16 %v2957, %v2955
      %v3078 = vpack.c.b16 %v2960, %v2958
      %v3079 = vpack.c.b16 %v2961, %v2959
      %v3080 = vpack.c.b16 %v2964, %v2962
      %v3081 = vpack.c.b16 %v2965, %v2963
      %v3082 = vpack.c.b16 %v2968, %v2966
      %v3083 = vpack.c.b16 %v2969, %v2967
      %v3084 = vpack.c.b16 %v2972, %v2970
      %v3085 = vpack.c.b16 %v2973, %v2971
      %v3086 = vpack.c.b16 %v2976, %v2974
      %v3087 = vpack.c.b16 %v2977, %v2975
      %v3088 = vpack.c.b16 %v2980, %v2978
      %v3089 = vpack.c.b16 %v2981, %v2979
      %v3090 = vpack.c.b16 %v2984, %v2982
      %v3091 = vpack.c.b16 %v2985, %v2983
      %v3092 = vpack.c.b16 %v2988, %v2986
      %v3093 = vpack.c.b16 %v2989, %v2987
      %v3094 = vpack.c.b16 %v2992, %v2990
      %v3095 = vpack.c.b16 %v2993, %v2991
      %v3096 = vpack.c.b16 %v2996, %v2994
      %v3097 = vpack.c.b16 %v2997, %v2995
      %v3098 = vpack.c.b16 %v3000, %v2998
      %v3099 = vpack.c.b16 %v3001, %v2999
      %v3100 = vpack.c.b16 %v3004, %v3002
      %v3101 = vpack.c.b16 %v3005, %v3003
      %v3102 = vpack.c.b16 %v3008, %v3006
      %v3103 = vpack.c.b16 %v3009, %v3007
      %v3104 = vpack.c.b16 %v3012, %v3010
      %v3105 = vpack.c.b16 %v3013, %v3011
      %v3106 = vpack.c.b16 %v3016, %v3014
      %v3107 = vpack.c.b16 %v3017, %v3015
      %v3108 = vpack.c.b16 %v3020, %v3018
      %v3109 = vpack.c.b16 %v3021, %v3019
      %v3110 = vpack.c.b16 %v3024, %v3022
      %v3111 = vpack.c.b16 %v3025, %v3023
      %v3112 = vpack.c.b16 %v3028, %v3026
      %v3113 = vpack.c.b16 %v3029, %v3027
      %v3114 = vpack.c.b16 %v3032, %v3030
      %v3115 = vpack.c.b16 %v3033, %v3031
      %v3116 = vpack.c.b16 %v3036, %v3034
      %v3117 = vpack.c.b16 %v3037, %v3035
      %3198 = vmatprep.subr.bf16.mxu0 %v3039
      %3199 = vmatpush1.bf16.msra.mxu0 %v3038
      %3200 = vmatprep.subr.bf16.mxu0 %v3041
      %3201 = vmatpush1.bf16.msra.mxu0 %v3040
      %3202 = vmatprep.subr.bf16.mxu0 %v3043
      %3203 = vmatpush1.bf16.msra.mxu0 %v3042
      %3204 = vmatprep.subr.bf16.mxu0 %v3045
      %3205 = vmatpush1.bf16.msra.mxu0 %v3044
      %3206 = vmatprep.subr.bf16.mxu0 %v3047
      %3207 = vmatpush1.bf16.msra.mxu0 %v3046
      %3208 = vmatprep.subr.bf16.mxu0 %v3049
      %3209 = vmatpush1.bf16.msra.mxu0 %v3048
      %3210 = vmatprep.subr.bf16.mxu0 %v3051
      %3211 = vmatpush1.bf16.msra.mxu0 %v3050
      %3212 = vmatprep.subr.bf16.mxu0 %v3053
      %3213 = vmatpush1.bf16.msra.mxu0 %v3052
      %3214 = vmatprep.subr.bf16.mxu0 %v3055
      %3215 = vmatpush1.bf16.msra.mxu0 %v3054
      %3216 = vmatprep.subr.bf16.mxu0 %v3057
      %3217 = vmatpush1.bf16.msra.mxu0 %v3056
      %3218 = vmatprep.subr.bf16.mxu0 %v3059
      %3219 = vmatpush1.bf16.msra.mxu0 %v3058
      %3220 = vmatprep.subr.bf16.mxu0 %v3061
      %3221 = vmatpush1.bf16.msra.mxu0 %v3060
      %3222 = vmatprep.subr.bf16.mxu0 %v3063
      %3223 = vmatpush1.bf16.msra.mxu0 %v3062
      %3224 = vmatprep.subr.bf16.mxu0 %v3065
      %3225 = vmatpush1.bf16.msra.mxu0 %v3064
      %3226 = vmatprep.subr.bf16.mxu0 %v3067
      %3227 = vmatpush1.bf16.msra.mxu0 %v3066
      %3228 = vmatprep.subr.bf16.mxu0 %v3069
      %3229 = vmatpush1.bf16.msra.mxu0 %v3068
      %3230 = vmatprep.mubr.bf16.mxu0 %v2700
      %3231 = vmatmul.mubr.bf16.gmra.mrb[0].mxu0 %v2699
      %v3232 = vpop.f32.mrb[0].mxu0
      %v3233 = vadd.f32 %v2791, %v3232
      %v3234 = vpop.f32.mrb[0].mxu0
      %v3235 = vadd.f32 %v2795, %v3234
      %v3236 = vpop.f32.mrb[0].mxu0
      %v3237 = vpop.f32.mrb[0].mxu0
      %3238 = vdwg.mxu0
      %3239 = vmatprep.subr.bf16.mxu0 %v3071
      %3240 = vmatpush1.bf16.msra.mxu0 %v3070
      %3241 = vmatprep.subr.bf16.mxu0 %v3073
      %3242 = vmatpush1.bf16.msra.mxu0 %v3072
      %3243 = vmatprep.subr.bf16.mxu0 %v3075
      %3244 = vmatpush1.bf16.msra.mxu0 %v3074
      %3245 = vmatprep.subr.bf16.mxu0 %v3077
      %3246 = vmatpush1.bf16.msra.mxu0 %v3076
      %3247 = vmatprep.subr.bf16.mxu0 %v3079
      %3248 = vmatpush1.bf16.msra.mxu0 %v3078
      %3249 = vmatprep.subr.bf16.mxu0 %v3081
      %3250 = vmatpush1.bf16.msra.mxu0 %v3080
      %3251 = vmatprep.subr.bf16.mxu0 %v3083
      %3252 = vmatpush1.bf16.msra.mxu0 %v3082
      %3253 = vmatprep.subr.bf16.mxu0 %v3085
      %3254 = vmatpush1.bf16.msra.mxu0 %v3084
      %3255 = vmatprep.subr.bf16.mxu0 %v3087
      %3256 = vmatpush1.bf16.msra.mxu0 %v3086
      %3257 = vmatprep.subr.bf16.mxu0 %v3089
      %3258 = vmatpush1.bf16.msra.mxu0 %v3088
      %3259 = vmatprep.subr.bf16.mxu0 %v3091
      %3260 = vmatpush1.bf16.msra.mxu0 %v3090
      %3261 = vmatprep.subr.bf16.mxu0 %v3093
      %3262 = vmatpush1.bf16.msra.mxu0 %v3092
      %3263 = vmatprep.subr.bf16.mxu0 %v3095
      %3264 = vmatpush1.bf16.msra.mxu0 %v3094
      %3265 = vmatprep.subr.bf16.mxu0 %v3097
      %3266 = vmatpush1.bf16.msra.mxu0 %v3096
      %3267 = vmatprep.subr.bf16.mxu0 %v3099
      %3268 = vmatpush1.bf16.msra.mxu0 %v3098
      %3269 = vmatprep.subr.bf16.mxu0 %v3101
      %3270 = vmatpush1.bf16.msra.mxu0 %v3100
      %3271 = vmatprep.mubr.bf16.mxu0 %v2702
      %3272 = vmatmul.mubr.bf16.gmra.mrb[0].mxu0 %v2701
      %v3273 = vpop.f32.mrb[0].mxu0
      %v3274 = vadd.f32 %v3233, %v3273
      %v3275 = vpop.f32.mrb[0].mxu0
      %v3276 = vadd.f32 %v3235, %v3275
      %v3277 = vpop.f32.mrb[0].mxu0
      %v3278 = vpop.f32.mrb[0].mxu0
      %3279 = vdwg.mxu0
      %3280 = vmatprep.subr.bf16.mxu0 %v3103
      %3281 = vmatpush1.bf16.msra.mxu0 %v3102
      %3282 = vmatprep.subr.bf16.mxu0 %v3105
      %3283 = vmatpush1.bf16.msra.mxu0 %v3104
      %3284 = vmatprep.subr.bf16.mxu0 %v3107
      %3285 = vmatpush1.bf16.msra.mxu0 %v3106
      %3286 = vmatprep.subr.bf16.mxu0 %v3109
      %3287 = vmatpush1.bf16.msra.mxu0 %v3108
      %3288 = vmatprep.subr.bf16.mxu0 %v3111
      %3289 = vmatpush1.bf16.msra.mxu0 %v3110
      %3290 = vmatprep.subr.bf16.mxu0 %v3113
      %3291 = vmatpush1.bf16.msra.mxu0 %v3112
      %3292 = vmatprep.subr.bf16.mxu0 %v3115
      %3293 = vmatpush1.bf16.msra.mxu0 %v3114
      %3294 = vmatprep.subr.bf16.mxu0 %v3117
      %3295 = vmatpush1.bf16.msra.mxu0 %v3116
      %3296 = vmatprep.subr.bf16.mxu0 0
      %3297 = vmatpush1.bf16.msra.mxu0 0
      %3298 = vmatprep.subr.bf16.mxu0 0
      %3299 = vmatpush1.bf16.msra.mxu0 0
      %3300 = vmatprep.subr.bf16.mxu0 0
      %3301 = vmatpush1.bf16.msra.mxu0 0
      %3302 = vmatprep.subr.bf16.mxu0 0
      %3303 = vmatpush1.bf16.msra.mxu0 0
      %3304 = vmatprep.subr.bf16.mxu0 0
      %3305 = vmatpush1.bf16.msra.mxu0 0
      %3306 = vmatprep.subr.bf16.mxu0 0
      %3307 = vmatpush1.bf16.msra.mxu0 0
      %3308 = vmatprep.subr.bf16.mxu0 0
      %3309 = vmatpush1.bf16.msra.mxu0 0
      %3310 = vmatprep.subr.bf16.mxu0 0
      %3311 = vmatpush1.bf16.msra.mxu0 0
      %3312 = vmatprep.mubr.bf16.mxu0 0
      %3313 = vmatmul.mubr.bf16.gmra.mrb[0].mxu0 %v2703
      %v3314 = vpop.f32.mrb[0].mxu0
      %v3315 = vadd.f32 %v3274, %v3314
      %v3316 = vpop.f32.mrb[0].mxu0
      %v3317 = vadd.f32 %v3276, %v3316
      %v3318 = vpop.f32.mrb[0].mxu0
      %v3319 = vpop.f32.mrb[0].mxu0
      %3320 = vdwg.mxu0
      %v3321 = vmul.f32 %v3315, 0.5
      %v3322 = vmul.f32 %v3317, 0.5
      %v3323 = vtanh.pop %v3321
      %v3324 = vtanh.pop %v3322
      %v3325 = vadd.f32 %v3323, 1.0
      %v3326 = vadd.f32 %v3324, 1.0
      %v3327 = vmul.f32 %v3325, 0.5
      %v3328 = vmul.f32 %v3326, 0.5
      %v3329 = vmul.f32 %v3315, %v3327
      %v3330 = vmul.f32 %v3317, %v3328
      %v3331 = vsub.f32 %v3315, -1.5
      %v3332 = vsub.f32 %v3317, -1.5
      %v3333 = vmul.f32 %v3331, %v3331
      %v3334 = vmul.f32 %v3332, %v3332
      %v3335 = vsub.f32 0.0, %v3333
      %v3336 = vsub.f32 0.0, %v3334
      %v3337 = vmul.f32 %v3335, 1.442695
      %v3338 = vpow.pop %v3337
      %v3339 = vmul.f32 %v3336, 1.442695
      %v3340 = vpow.pop %v3339
      %v3341 = vsub.f32 %v3315, -0.5
      %v3342 = vsub.f32 %v3317, -0.5
      %v3343 = vmul.f32 %v3341, %v3341
      %v3344 = vmul.f32 %v3342, %v3342
      %v3345 = vsub.f32 0.0, %v3343
      %v3346 = vsub.f32 0.0, %v3344
      %v3347 = vmul.f32 %v3345, 1.442695
      %v3348 = vpow.pop %v3347
      %v3349 = vmul.f32 %v3346, 1.442695
      %v3350 = vpow.pop %v3349
      %v3351 = vsub.f32 %v3315, 0.5
      %v3352 = vsub.f32 %v3317, 0.5
      %v3353 = vmul.f32 %v3351, %v3351
      %v3354 = vmul.f32 %v3352, %v3352
      %v3355 = vsub.f32 0.0, %v3353
      %v3356 = vsub.f32 0.0, %v3354
      %v3357 = vmul.f32 %v3355, 1.442695
      %v3358 = vpow.pop %v3357
      %v3359 = vmul.f32 %v3356, 1.442695
      %v3360 = vpow.pop %v3359
      %v3361 = vsub.f32 %v3315, 1.5
      %v3362 = vsub.f32 %v3317, 1.5
      %v3363 = vmul.f32 %v3361, %v3361
      %v3364 = vmul.f32 %v3362, %v3362
      %v3365 = vsub.f32 0.0, %v3363
      %v3366 = vsub.f32 0.0, %v3364
      %v3367 = vmul.f32 %v3365, 1.442695
      %v3368 = vpow.pop %v3367
      %v3369 = vmul.f32 %v3366, 1.442695
      %v3370 = vpow.pop %v3369
      %v3371 = vpack.c.bf16 %v3329, %v3329
      %v3372 = vpack.c.bf16 %v3330, %v3330
      %v3373 = vpack.c.bf16 %v3338, %v3338
      %v3374 = vpack.c.bf16 %v3340, %v3340
      %v3375 = vpack.c.bf16 %v3348, %v3348
      %v3376 = vpack.c.bf16 %v3350, %v3350
      %v3377 = vpack.c.bf16 %v3358, %v3358
      %v3378 = vpack.c.bf16 %v3360, %v3360
      %v3379 = vpack.c.bf16 %v3368, %v3368
      %v3380 = vpack.c.bf16 %v3370, %v3370
      %s3381 = scalar_lea.vmem %s8, 640
      %v3382 = vld [vmem:[%s3381] sm:$0xf]
      %v3383 = vld [vmem:[%s3381 + $0x4] sm:$0xf]
      %v3384 = vld [vmem:[%s3381 + $0x8] sm:$0xf]
      %v3385 = vld [vmem:[%s3381 + $0xc] sm:$0xf]
      %v3386 = vld [vmem:[%s3381 + $0x10] sm:$0xf]
      %v3387 = vld [vmem:[%s3381 + $0x14] sm:$0xf]
      %v3388 = vld [vmem:[%s3381 + $0x18] sm:$0xf]
      %v3389 = vld [vmem:[%s3381 + $0x1c] sm:$0xf]
      %v3390 = vld [vmem:[%s3381 + $0x20] sm:$0xf]
      %v3391 = vld [vmem:[%s3381 + $0x24] sm:$0xf]
      %v3392 = vld [vmem:[%s3381 + $0x28] sm:$0xf]
      %v3393 = vld [vmem:[%s3381 + $0x2c] sm:$0xf]
      %v3394 = vld [vmem:[%s3381 + $0x30] sm:$0xf]
      %v3395 = vld [vmem:[%s3381 + $0x34] sm:$0xf]
      %v3396 = vld [vmem:[%s3381 + $0x38] sm:$0xf]
      %v3397 = vld [vmem:[%s3381 + $0x3c] sm:$0xf]
      %v3398 = vld [vmem:[%s3381 + $0x40] sm:$0xf]
      %v3399 = vld [vmem:[%s3381 + $0x44] sm:$0xf]
      %v3400 = vld [vmem:[%s3381 + $0x48] sm:$0xf]
      %v3401 = vld [vmem:[%s3381 + $0x4c] sm:$0xf]
      %v3402 = vld [vmem:[%s3381 + $0x50] sm:$0xf]
      %v3403 = vld [vmem:[%s3381 + $0x54] sm:$0xf]
      %v3404 = vld [vmem:[%s3381 + $0x58] sm:$0xf]
      %v3405 = vld [vmem:[%s3381 + $0x5c] sm:$0xf]
      %v3406 = vld [vmem:[%s3381 + $0x60] sm:$0xf]
      %v3407 = vld [vmem:[%s3381 + $0x64] sm:$0xf]
      %v3408 = vld [vmem:[%s3381 + $0x68] sm:$0xf]
      %v3409 = vld [vmem:[%s3381 + $0x6c] sm:$0xf]
      %v3410 = vld [vmem:[%s3381 + $0x70] sm:$0xf]
      %v3411 = vld [vmem:[%s3381 + $0x74] sm:$0xf]
      %v3412 = vld [vmem:[%s3381 + $0x78] sm:$0xf]
      %v3413 = vld [vmem:[%s3381 + $0x7c] sm:$0xf]
      %v3414 = vld [vmem:[%s3381 + $0x80] sm:$0xf]
      %v3415 = vld [vmem:[%s3381 + $0x84] sm:$0xf]
      %v3416 = vld [vmem:[%s3381 + $0x88] sm:$0xf]
      %v3417 = vld [vmem:[%s3381 + $0x8c] sm:$0xf]
      %v3418 = vld [vmem:[%s3381 + $0x90] sm:$0xf]
      %v3419 = vld [vmem:[%s3381 + $0x94] sm:$0xf]
      %v3420 = vld [vmem:[%s3381 + $0x98] sm:$0xf]
      %v3421 = vld [vmem:[%s3381 + $0x9c] sm:$0xf]
      %v3422 = vld [vmem:[%s3381 + $0xa0] sm:$0xf]
      %v3423 = vld [vmem:[%s3381 + $0xa4] sm:$0xf]
      %v3424 = vld [vmem:[%s3381 + $0xa8] sm:$0xf]
      %v3425 = vld [vmem:[%s3381 + $0xac] sm:$0xf]
      %v3426 = vld [vmem:[%s3381 + $0xb0] sm:$0xf]
      %v3427 = vld [vmem:[%s3381 + $0xb4] sm:$0xf]
      %v3428 = vld [vmem:[%s3381 + $0xb8] sm:$0xf]
      %v3429 = vld [vmem:[%s3381 + $0xbc] sm:$0xf]
      %v3430 = vld [vmem:[%s3381 + $0xc0] sm:$0xf]
      %v3431 = vld [vmem:[%s3381 + $0xc4] sm:$0xf]
      %v3432 = vld [vmem:[%s3381 + $0xc8] sm:$0xf]
      %v3433 = vld [vmem:[%s3381 + $0xcc] sm:$0xf]
      %v3434 = vld [vmem:[%s3381 + $0xd0] sm:$0xf]
      %v3435 = vld [vmem:[%s3381 + $0xd4] sm:$0xf]
      %v3436 = vld [vmem:[%s3381 + $0xd8] sm:$0xf]
      %v3437 = vld [vmem:[%s3381 + $0xdc] sm:$0xf]
      %v3438 = vld [vmem:[%s3381 + $0xe0] sm:$0xf]
      %v3439 = vld [vmem:[%s3381 + $0xe4] sm:$0xf]
      %v3440 = vld [vmem:[%s3381 + $0xe8] sm:$0xf]
      %v3441 = vld [vmem:[%s3381 + $0xec] sm:$0xf]
      %v3442 = vld [vmem:[%s3381 + $0xf0] sm:$0xf]
      %v3443 = vld [vmem:[%s3381 + $0xf4] sm:$0xf]
      %v3444 = vld [vmem:[%s3381 + $0xf8] sm:$0xf]
      %v3445 = vld [vmem:[%s3381 + $0xfc] sm:$0xf]
      %v3446 = vld [vmem:[%s3381 + $0x100] sm:$0xf]
      %v3447 = vld [vmem:[%s3381 + $0x104] sm:$0xf]
      %v3448 = vld [vmem:[%s3381 + $0x108] sm:$0xf]
      %v3449 = vld [vmem:[%s3381 + $0x10c] sm:$0xf]
      %v3450 = vld [vmem:[%s3381 + $0x110] sm:$0xf]
      %v3451 = vld [vmem:[%s3381 + $0x114] sm:$0xf]
      %v3452 = vld [vmem:[%s3381 + $0x118] sm:$0xf]
      %v3453 = vld [vmem:[%s3381 + $0x11c] sm:$0xf]
      %v3454 = vld [vmem:[%s3381 + $0x120] sm:$0xf]
      %v3455 = vld [vmem:[%s3381 + $0x124] sm:$0xf]
      %v3456 = vld [vmem:[%s3381 + $0x128] sm:$0xf]
      %v3457 = vld [vmem:[%s3381 + $0x12c] sm:$0xf]
      %v3458 = vld [vmem:[%s3381 + $0x130] sm:$0xf]
      %v3459 = vld [vmem:[%s3381 + $0x134] sm:$0xf]
      %v3460 = vld [vmem:[%s3381 + $0x138] sm:$0xf]
      %v3461 = vld [vmem:[%s3381 + $0x13c] sm:$0xf]
      %v3462 = vld [vmem:[%s3381 + $0x140] sm:$0xf]
      %v3463 = vld [vmem:[%s3381 + $0x144] sm:$0xf]
      %v3464 = vld [vmem:[%s3381 + $0x148] sm:$0xf]
      %v3465 = vld [vmem:[%s3381 + $0x14c] sm:$0xf]
      %v3466 = vld [vmem:[%s3381 + $0x150] sm:$0xf]
      %v3467 = vld [vmem:[%s3381 + $0x154] sm:$0xf]
      %v3468 = vld [vmem:[%s3381 + $0x158] sm:$0xf]
      %v3469 = vld [vmem:[%s3381 + $0x15c] sm:$0xf]
      %v3470 = vld [vmem:[%s3381 + $0x160] sm:$0xf]
      %v3471 = vld [vmem:[%s3381 + $0x164] sm:$0xf]
      %v3472 = vld [vmem:[%s3381 + $0x168] sm:$0xf]
      %v3473 = vld [vmem:[%s3381 + $0x16c] sm:$0xf]
      %v3474 = vld [vmem:[%s3381 + $0x170] sm:$0xf]
      %v3475 = vld [vmem:[%s3381 + $0x174] sm:$0xf]
      %v3476 = vld [vmem:[%s3381 + $0x178] sm:$0xf]
      %v3477 = vld [vmem:[%s3381 + $0x17c] sm:$0xf]
      %v3478 = vld [vmem:[%s3381 + $0x180] sm:$0xf]
      %v3479 = vld [vmem:[%s3381 + $0x184] sm:$0xf]
      %v3480 = vld [vmem:[%s3381 + $0x188] sm:$0xf]
      %v3481 = vld [vmem:[%s3381 + $0x18c] sm:$0xf]
      %v3482 = vld [vmem:[%s3381 + $0x190] sm:$0xf]
      %v3483 = vld [vmem:[%s3381 + $0x194] sm:$0xf]
      %v3484 = vld [vmem:[%s3381 + $0x198] sm:$0xf]
      %v3485 = vld [vmem:[%s3381 + $0x19c] sm:$0xf]
      %v3486 = vld [vmem:[%s3381 + $0x1a0] sm:$0xf]
      %v3487 = vld [vmem:[%s3381 + $0x1a4] sm:$0xf]
      %v3488 = vld [vmem:[%s3381 + $0x1a8] sm:$0xf]
      %v3489 = vld [vmem:[%s3381 + $0x1ac] sm:$0xf]
      %v3490 = vld [vmem:[%s3381 + $0x1b0] sm:$0xf]
      %v3491 = vld [vmem:[%s3381 + $0x1b4] sm:$0xf]
      %v3492 = vld [vmem:[%s3381 + $0x1b8] sm:$0xf]
      %v3493 = vld [vmem:[%s3381 + $0x1bc] sm:$0xf]
      %v3494 = vld [vmem:[%s3381 + $0x1c0] sm:$0xf]
      %v3495 = vld [vmem:[%s3381 + $0x1c4] sm:$0xf]
      %v3496 = vld [vmem:[%s3381 + $0x1c8] sm:$0xf]
      %v3497 = vld [vmem:[%s3381 + $0x1cc] sm:$0xf]
      %v3498 = vld [vmem:[%s3381 + $0x1d0] sm:$0xf]
      %v3499 = vld [vmem:[%s3381 + $0x1d4] sm:$0xf]
      %v3500 = vld [vmem:[%s3381 + $0x1d8] sm:$0xf]
      %v3501 = vld [vmem:[%s3381 + $0x1dc] sm:$0xf]
      %v3502 = vld [vmem:[%s3381 + $0x1e0] sm:$0xf]
      %v3503 = vld [vmem:[%s3381 + $0x1e4] sm:$0xf]
      %v3504 = vld [vmem:[%s3381 + $0x1e8] sm:$0xf]
      %v3505 = vld [vmem:[%s3381 + $0x1ec] sm:$0xf]
      %v3506 = vld [vmem:[%s3381 + $0x1f0] sm:$0xf]
      %v3507 = vld [vmem:[%s3381 + $0x1f4] sm:$0xf]
      %v3508 = vld [vmem:[%s3381 + $0x1f8] sm:$0xf]
      %v3509 = vld [vmem:[%s3381 + $0x1fc] sm:$0xf]
      %v3510 = vld [vmem:[%s3381 + $0x200] sm:$0xf]
      %v3511 = vld [vmem:[%s3381 + $0x204] sm:$0xf]
      %v3512 = vld [vmem:[%s3381 + $0x208] sm:$0xf]
      %v3513 = vld [vmem:[%s3381 + $0x20c] sm:$0xf]
      %v3514 = vld [vmem:[%s3381 + $0x210] sm:$0xf]
      %v3515 = vld [vmem:[%s3381 + $0x214] sm:$0xf]
      %v3516 = vld [vmem:[%s3381 + $0x218] sm:$0xf]
      %v3517 = vld [vmem:[%s3381 + $0x21c] sm:$0xf]
      %v3518 = vld [vmem:[%s3381 + $0x220] sm:$0xf]
      %v3519 = vld [vmem:[%s3381 + $0x224] sm:$0xf]
      %v3520 = vld [vmem:[%s3381 + $0x228] sm:$0xf]
      %v3521 = vld [vmem:[%s3381 + $0x22c] sm:$0xf]
      %v3522 = vld [vmem:[%s3381 + $0x230] sm:$0xf]
      %v3523 = vld [vmem:[%s3381 + $0x234] sm:$0xf]
      %v3524 = vld [vmem:[%s3381 + $0x238] sm:$0xf]
      %v3525 = vld [vmem:[%s3381 + $0x23c] sm:$0xf]
      %v3526 = vld [vmem:[%s3381 + $0x240] sm:$0xf]
      %v3527 = vld [vmem:[%s3381 + $0x244] sm:$0xf]
      %v3528 = vld [vmem:[%s3381 + $0x248] sm:$0xf]
      %v3529 = vld [vmem:[%s3381 + $0x24c] sm:$0xf]
      %v3530 = vld [vmem:[%s3381 + $0x250] sm:$0xf]
      %v3531 = vld [vmem:[%s3381 + $0x254] sm:$0xf]
      %v3532 = vld [vmem:[%s3381 + $0x258] sm:$0xf]
      %v3533 = vld [vmem:[%s3381 + $0x25c] sm:$0xf]
      %v3534 = vld [vmem:[%s3381 + $0x260] sm:$0xf]
      %v3535 = vld [vmem:[%s3381 + $0x264] sm:$0xf]
      %v3536 = vld [vmem:[%s3381 + $0x268] sm:$0xf]
      %v3537 = vld [vmem:[%s3381 + $0x26c] sm:$0xf]
      %v3538 = vld [vmem:[%s3381 + $0x270] sm:$0xf]
      %v3539 = vld [vmem:[%s3381 + $0x274] sm:$0xf]
      %v3540 = vld [vmem:[%s3381 + $0x278] sm:$0xf]
      %v3541 = vld [vmem:[%s3381 + $0x27c] sm:$0xf]
      %s3542 = scalar_lea.vmem %s9, 1
      %v3543 = vld [vmem:[%s3542] sm:$0x1]
      %v3545 = vlaneseq
      %v3546 = vshrl.u32 %v3545, 7
      %v3547 = vsub.s32 0, %v3546
      %v3548 = vrot.slane %v3543, %v3547
      %v3710 = vunpack.c.l.b16 %v3382
      %v3711 = vunpack.c.l.b16 %v3383
      %v3712 = vunpack.c.l.b16 %v3384
      %v3713 = vunpack.c.l.b16 %v3385
      %v3714 = vunpack.c.l.b16 %v3386
      %v3715 = vunpack.c.l.b16 %v3387
      %v3716 = vunpack.c.l.b16 %v3388
      %v3717 = vunpack.c.l.b16 %v3389
      %v3718 = vunpack.c.l.b16 %v3390
      %v3719 = vunpack.c.l.b16 %v3391
      %v3720 = vunpack.c.l.b16 %v3392
      %v3721 = vunpack.c.l.b16 %v3393
      %v3722 = vunpack.c.l.b16 %v3394
      %v3723 = vunpack.c.l.b16 %v3395
      %v3724 = vunpack.c.l.b16 %v3396
      %v3725 = vunpack.c.l.b16 %v3397
      %v3726 = vunpack.c.l.b16 %v3398
      %v3727 = vunpack.c.l.b16 %v3399
      %v3728 = vunpack.c.l.b16 %v3400
      %v3729 = vunpack.c.l.b16 %v3401
      %v3730 = vunpack.c.l.b16 %v3402
      %v3731 = vunpack.c.l.b16 %v3403
      %v3732 = vunpack.c.l.b16 %v3404
      %v3733 = vunpack.c.l.b16 %v3405
      %v3734 = vunpack.c.l.b16 %v3406
      %v3735 = vunpack.c.l.b16 %v3407
      %v3736 = vunpack.c.l.b16 %v3408
      %v3737 = vunpack.c.l.b16 %v3409
      %v3738 = vunpack.c.l.b16 %v3410
      %v3739 = vunpack.c.l.b16 %v3411
      %v3740 = vunpack.c.l.b16 %v3412
      %v3741 = vunpack.c.l.b16 %v3413
      %v3742 = vunpack.c.l.b16 %v3414
      %v3743 = vunpack.c.l.b16 %v3415
      %v3744 = vunpack.c.l.b16 %v3416
      %v3745 = vunpack.c.l.b16 %v3417
      %v3746 = vunpack.c.l.b16 %v3418
      %v3747 = vunpack.c.l.b16 %v3419
      %v3748 = vunpack.c.l.b16 %v3420
      %v3749 = vunpack.c.l.b16 %v3421
      %v3750 = vunpack.c.l.b16 %v3422
      %v3751 = vunpack.c.l.b16 %v3423
      %v3752 = vunpack.c.l.b16 %v3424
      %v3753 = vunpack.c.l.b16 %v3425
      %v3754 = vunpack.c.l.b16 %v3426
      %v3755 = vunpack.c.l.b16 %v3427
      %v3756 = vunpack.c.l.b16 %v3428
      %v3757 = vunpack.c.l.b16 %v3429
      %v3758 = vunpack.c.l.b16 %v3430
      %v3759 = vunpack.c.l.b16 %v3431
      %v3760 = vunpack.c.l.b16 %v3432
      %v3761 = vunpack.c.l.b16 %v3433
      %v3762 = vunpack.c.l.b16 %v3434
      %v3763 = vunpack.c.l.b16 %v3435
      %v3764 = vunpack.c.l.b16 %v3436
      %v3765 = vunpack.c.l.b16 %v3437
      %v3766 = vunpack.c.l.b16 %v3438
      %v3767 = vunpack.c.l.b16 %v3439
      %v3768 = vunpack.c.l.b16 %v3440
      %v3769 = vunpack.c.l.b16 %v3441
      %v3770 = vunpack.c.l.b16 %v3442
      %v3771 = vunpack.c.l.b16 %v3443
      %v3772 = vunpack.c.l.b16 %v3444
      %v3773 = vunpack.c.l.b16 %v3445
      %v3774 = vunpack.c.l.b16 %v3446
      %v3775 = vunpack.c.l.b16 %v3447
      %v3776 = vunpack.c.l.b16 %v3448
      %v3777 = vunpack.c.l.b16 %v3449
      %v3778 = vunpack.c.l.b16 %v3450
      %v3779 = vunpack.c.l.b16 %v3451
      %v3780 = vunpack.c.l.b16 %v3452
      %v3781 = vunpack.c.l.b16 %v3453
      %v3782 = vunpack.c.l.b16 %v3454
      %v3783 = vunpack.c.l.b16 %v3455
      %v3784 = vunpack.c.l.b16 %v3456
      %v3785 = vunpack.c.l.b16 %v3457
      %v3786 = vunpack.c.l.b16 %v3458
      %v3787 = vunpack.c.l.b16 %v3459
      %v3788 = vunpack.c.l.b16 %v3460
      %v3789 = vunpack.c.l.b16 %v3461
      %v3790 = vunpack.c.l.b16 %v3462
      %v3791 = vunpack.c.l.b16 %v3463
      %v3792 = vunpack.c.l.b16 %v3464
      %v3793 = vunpack.c.l.b16 %v3465
      %v3794 = vunpack.c.l.b16 %v3466
      %v3795 = vunpack.c.l.b16 %v3467
      %v3796 = vunpack.c.l.b16 %v3468
      %v3797 = vunpack.c.l.b16 %v3469
      %v3798 = vunpack.c.l.b16 %v3470
      %v3799 = vunpack.c.l.b16 %v3471
      %v3800 = vunpack.c.l.b16 %v3472
      %v3801 = vunpack.c.l.b16 %v3473
      %v3802 = vunpack.c.l.b16 %v3474
      %v3803 = vunpack.c.l.b16 %v3475
      %v3804 = vunpack.c.l.b16 %v3476
      %v3805 = vunpack.c.l.b16 %v3477
      %v3806 = vunpack.c.l.b16 %v3478
      %v3807 = vunpack.c.l.b16 %v3479
      %v3808 = vunpack.c.l.b16 %v3480
      %v3809 = vunpack.c.l.b16 %v3481
      %v3810 = vunpack.c.l.b16 %v3482
      %v3811 = vunpack.c.l.b16 %v3483
      %v3812 = vunpack.c.l.b16 %v3484
      %v3813 = vunpack.c.l.b16 %v3485
      %v3814 = vunpack.c.l.b16 %v3486
      %v3815 = vunpack.c.l.b16 %v3487
      %v3816 = vunpack.c.l.b16 %v3488
      %v3817 = vunpack.c.l.b16 %v3489
      %v3818 = vunpack.c.l.b16 %v3490
      %v3819 = vunpack.c.l.b16 %v3491
      %v3820 = vunpack.c.l.b16 %v3492
      %v3821 = vunpack.c.l.b16 %v3493
      %v3822 = vunpack.c.l.b16 %v3494
      %v3823 = vunpack.c.l.b16 %v3495
      %v3824 = vunpack.c.l.b16 %v3496
      %v3825 = vunpack.c.l.b16 %v3497
      %v3826 = vunpack.c.l.b16 %v3498
      %v3827 = vunpack.c.l.b16 %v3499
      %v3828 = vunpack.c.l.b16 %v3500
      %v3829 = vunpack.c.l.b16 %v3501
      %v3830 = vunpack.c.l.b16 %v3502
      %v3831 = vunpack.c.l.b16 %v3503
      %v3832 = vunpack.c.l.b16 %v3504
      %v3833 = vunpack.c.l.b16 %v3505
      %v3834 = vunpack.c.l.b16 %v3506
      %v3835 = vunpack.c.l.b16 %v3507
      %v3836 = vunpack.c.l.b16 %v3508
      %v3837 = vunpack.c.l.b16 %v3509
      %v3838 = vunpack.c.l.b16 %v3510
      %v3839 = vunpack.c.l.b16 %v3511
      %v3840 = vunpack.c.l.b16 %v3512
      %v3841 = vunpack.c.l.b16 %v3513
      %v3842 = vunpack.c.l.b16 %v3514
      %v3843 = vunpack.c.l.b16 %v3515
      %v3844 = vunpack.c.l.b16 %v3516
      %v3845 = vunpack.c.l.b16 %v3517
      %v3846 = vunpack.c.l.b16 %v3518
      %v3847 = vunpack.c.l.b16 %v3519
      %v3848 = vunpack.c.l.b16 %v3520
      %v3849 = vunpack.c.l.b16 %v3521
      %v3850 = vunpack.c.l.b16 %v3522
      %v3851 = vunpack.c.l.b16 %v3523
      %v3852 = vunpack.c.l.b16 %v3524
      %v3853 = vunpack.c.l.b16 %v3525
      %v3854 = vunpack.c.l.b16 %v3526
      %v3855 = vunpack.c.l.b16 %v3527
      %v3856 = vunpack.c.l.b16 %v3528
      %v3857 = vunpack.c.l.b16 %v3529
      %v3858 = vunpack.c.l.b16 %v3530
      %v3859 = vunpack.c.l.b16 %v3531
      %v3860 = vunpack.c.l.b16 %v3532
      %v3861 = vunpack.c.l.b16 %v3533
      %v3862 = vunpack.c.l.b16 %v3534
      %v3863 = vunpack.c.l.b16 %v3535
      %v3864 = vunpack.c.l.b16 %v3536
      %v3865 = vunpack.c.l.b16 %v3537
      %v3866 = vunpack.c.l.b16 %v3538
      %v3867 = vunpack.c.l.b16 %v3539
      %v3868 = vunpack.c.l.b16 %v3540
      %v3869 = vunpack.c.l.b16 %v3541
      %v3870 = vpack.c.b16 %v3711, %v3710
      %v3871 = vpack.c.b16 %v3713, %v3712
      %v3872 = vpack.c.b16 %v3715, %v3714
      %v3873 = vpack.c.b16 %v3717, %v3716
      %v3874 = vpack.c.b16 %v3719, %v3718
      %v3875 = vpack.c.b16 %v3721, %v3720
      %v3876 = vpack.c.b16 %v3723, %v3722
      %v3877 = vpack.c.b16 %v3725, %v3724
      %v3878 = vpack.c.b16 %v3727, %v3726
      %v3879 = vpack.c.b16 %v3729, %v3728
      %v3880 = vpack.c.b16 %v3731, %v3730
      %v3881 = vpack.c.b16 %v3733, %v3732
      %v3882 = vpack.c.b16 %v3735, %v3734
      %v3883 = vpack.c.b16 %v3737, %v3736
      %v3884 = vpack.c.b16 %v3739, %v3738
      %v3885 = vpack.c.b16 %v3741, %v3740
      %v3886 = vpack.c.b16 %v3743, %v3742
      %v3887 = vpack.c.b16 %v3745, %v3744
      %v3888 = vpack.c.b16 %v3747, %v3746
      %v3889 = vpack.c.b16 %v3749, %v3748
      %v3890 = vpack.c.b16 %v3751, %v3750
      %v3891 = vpack.c.b16 %v3753, %v3752
      %v3892 = vpack.c.b16 %v3755, %v3754
      %v3893 = vpack.c.b16 %v3757, %v3756
      %v3894 = vpack.c.b16 %v3759, %v3758
      %v3895 = vpack.c.b16 %v3761, %v3760
      %v3896 = vpack.c.b16 %v3763, %v3762
      %v3897 = vpack.c.b16 %v3765, %v3764
      %v3898 = vpack.c.b16 %v3767, %v3766
      %v3899 = vpack.c.b16 %v3769, %v3768
      %v3900 = vpack.c.b16 %v3771, %v3770
      %v3901 = vpack.c.b16 %v3773, %v3772
      %v3902 = vpack.c.b16 %v3775, %v3774
      %v3903 = vpack.c.b16 %v3777, %v3776
      %v3904 = vpack.c.b16 %v3779, %v3778
      %v3905 = vpack.c.b16 %v3781, %v3780
      %v3906 = vpack.c.b16 %v3783, %v3782
      %v3907 = vpack.c.b16 %v3785, %v3784
      %v3908 = vpack.c.b16 %v3787, %v3786
      %v3909 = vpack.c.b16 %v3789, %v3788
      %v3910 = vpack.c.b16 %v3791, %v3790
      %v3911 = vpack.c.b16 %v3793, %v3792
      %v3912 = vpack.c.b16 %v3795, %v3794
      %v3913 = vpack.c.b16 %v3797, %v3796
      %v3914 = vpack.c.b16 %v3799, %v3798
      %v3915 = vpack.c.b16 %v3801, %v3800
      %v3916 = vpack.c.b16 %v3803, %v3802
      %v3917 = vpack.c.b16 %v3805, %v3804
      %v3918 = vpack.c.b16 %v3807, %v3806
      %v3919 = vpack.c.b16 %v3809, %v3808
      %v3920 = vpack.c.b16 %v3811, %v3810
      %v3921 = vpack.c.b16 %v3813, %v3812
      %v3922 = vpack.c.b16 %v3815, %v3814
      %v3923 = vpack.c.b16 %v3817, %v3816
      %v3924 = vpack.c.b16 %v3819, %v3818
      %v3925 = vpack.c.b16 %v3821, %v3820
      %v3926 = vpack.c.b16 %v3823, %v3822
      %v3927 = vpack.c.b16 %v3825, %v3824
      %v3928 = vpack.c.b16 %v3827, %v3826
      %v3929 = vpack.c.b16 %v3829, %v3828
      %v3930 = vpack.c.b16 %v3831, %v3830
      %v3931 = vpack.c.b16 %v3833, %v3832
      %v3932 = vpack.c.b16 %v3835, %v3834
      %v3933 = vpack.c.b16 %v3837, %v3836
      %v3934 = vpack.c.b16 %v3839, %v3838
      %v3935 = vpack.c.b16 %v3841, %v3840
      %v3936 = vpack.c.b16 %v3843, %v3842
      %v3937 = vpack.c.b16 %v3845, %v3844
      %v3938 = vpack.c.b16 %v3847, %v3846
      %v3939 = vpack.c.b16 %v3849, %v3848
      %v3940 = vpack.c.b16 %v3851, %v3850
      %v3941 = vpack.c.b16 %v3853, %v3852
      %v3942 = vpack.c.b16 %v3855, %v3854
      %v3943 = vpack.c.b16 %v3857, %v3856
      %v3944 = vpack.c.b16 %v3859, %v3858
      %v3945 = vpack.c.b16 %v3861, %v3860
      %v3946 = vpack.c.b16 %v3863, %v3862
      %v3947 = vpack.c.b16 %v3865, %v3864
      %v3948 = vpack.c.b16 %v3867, %v3866
      %v3949 = vpack.c.b16 %v3869, %v3868
      %4030 = vmatprep.subr.bf16.mxu0 0
      %4031 = vmatpush1.bf16.msra.mxu0 %v3870
      %4032 = vmatprep.subr.bf16.mxu0 0
      %4033 = vmatpush1.bf16.msra.mxu0 %v3871
      %4034 = vmatprep.subr.bf16.mxu0 0
      %4035 = vmatpush1.bf16.msra.mxu0 %v3872
      %4036 = vmatprep.subr.bf16.mxu0 0
      %4037 = vmatpush1.bf16.msra.mxu0 %v3873
      %4038 = vmatprep.subr.bf16.mxu0 0
      %4039 = vmatpush1.bf16.msra.mxu0 %v3874
      %4040 = vmatprep.subr.bf16.mxu0 0
      %4041 = vmatpush1.bf16.msra.mxu0 %v3875
      %4042 = vmatprep.subr.bf16.mxu0 0
      %4043 = vmatpush1.bf16.msra.mxu0 %v3876
      %4044 = vmatprep.subr.bf16.mxu0 0
      %4045 = vmatpush1.bf16.msra.mxu0 %v3877
      %4046 = vmatprep.subr.bf16.mxu0 0
      %4047 = vmatpush1.bf16.msra.mxu0 %v3878
      %4048 = vmatprep.subr.bf16.mxu0 0
      %4049 = vmatpush1.bf16.msra.mxu0 %v3879
      %4050 = vmatprep.subr.bf16.mxu0 0
      %4051 = vmatpush1.bf16.msra.mxu0 %v3880
      %4052 = vmatprep.subr.bf16.mxu0 0
      %4053 = vmatpush1.bf16.msra.mxu0 %v3881
      %4054 = vmatprep.subr.bf16.mxu0 0
      %4055 = vmatpush1.bf16.msra.mxu0 %v3882
      %4056 = vmatprep.subr.bf16.mxu0 0
      %4057 = vmatpush1.bf16.msra.mxu0 %v3883
      %4058 = vmatprep.subr.bf16.mxu0 0
      %4059 = vmatpush1.bf16.msra.mxu0 %v3884
      %4060 = vmatprep.subr.bf16.mxu0 0
      %4061 = vmatpush1.bf16.msra.mxu0 %v3885
      %4062 = vmatprep.mubr.bf16.mxu0 %v3372
      %4063 = vmatmul.mubr.bf16.gmra.mrb[0].mxu0 %v3371
      %v4064 = vpop.f32.mrb[0].mxu0
      %v4065 = vadd.f32 %v3548, %v4064
      %v4066 = vpop.f32.mrb[0].mxu0
      %v4067 = vpop.f32.mrb[0].mxu0
      %v4068 = vpop.f32.mrb[0].mxu0
      %4069 = vdwg.mxu0
      %4070 = vmatprep.subr.bf16.mxu0 0
      %4071 = vmatpush1.bf16.msra.mxu0 %v3886
      %4072 = vmatprep.subr.bf16.mxu0 0
      %4073 = vmatpush1.bf16.msra.mxu0 %v3887
      %4074 = vmatprep.subr.bf16.mxu0 0
      %4075 = vmatpush1.bf16.msra.mxu0 %v3888
      %4076 = vmatprep.subr.bf16.mxu0 0
      %4077 = vmatpush1.bf16.msra.mxu0 %v3889
      %4078 = vmatprep.subr.bf16.mxu0 0
      %4079 = vmatpush1.bf16.msra.mxu0 %v3890
      %4080 = vmatprep.subr.bf16.mxu0 0
      %4081 = vmatpush1.bf16.msra.mxu0 %v3891
      %4082 = vmatprep.subr.bf16.mxu0 0
      %4083 = vmatpush1.bf16.msra.mxu0 %v3892
      %4084 = vmatprep.subr.bf16.mxu0 0
      %4085 = vmatpush1.bf16.msra.mxu0 %v3893
      %4086 = vmatprep.subr.bf16.mxu0 0
      %4087 = vmatpush1.bf16.msra.mxu0 %v3894
      %4088 = vmatprep.subr.bf16.mxu0 0
      %4089 = vmatpush1.bf16.msra.mxu0 %v3895
      %4090 = vmatprep.subr.bf16.mxu0 0
      %4091 = vmatpush1.bf16.msra.mxu0 %v3896
      %4092 = vmatprep.subr.bf16.mxu0 0
      %4093 = vmatpush1.bf16.msra.mxu0 %v3897
      %4094 = vmatprep.subr.bf16.mxu0 0
      %4095 = vmatpush1.bf16.msra.mxu0 %v3898
      %4096 = vmatprep.subr.bf16.mxu0 0
      %4097 = vmatpush1.bf16.msra.mxu0 %v3899
      %4098 = vmatprep.subr.bf16.mxu0 0
      %4099 = vmatpush1.bf16.msra.mxu0 %v3900
      %4100 = vmatprep.subr.bf16.mxu0 0
      %4101 = vmatpush1.bf16.msra.mxu0 %v3901
      %4102 = vmatprep.mubr.bf16.mxu0 %v3374
      %4103 = vmatmul.mubr.bf16.gmra.mrb[0].mxu0 %v3373
      %v4104 = vpop.f32.mrb[0].mxu0
      %v4105 = vadd.f32 %v4065, %v4104
      %v4106 = vpop.f32.mrb[0].mxu0
      %v4107 = vpop.f32.mrb[0].mxu0
      %v4108 = vpop.f32.mrb[0].mxu0
      %4109 = vdwg.mxu0
      %4110 = vmatprep.subr.bf16.mxu0 0
      %4111 = vmatpush1.bf16.msra.mxu0 %v3902
      %4112 = vmatprep.subr.bf16.mxu0 0
      %4113 = vmatpush1.bf16.msra.mxu0 %v3903
      %4114 = vmatprep.subr.bf16.mxu0 0
      %4115 = vmatpush1.bf16.msra.mxu0 %v3904
      %4116 = vmatprep.subr.bf16.mxu0 0
      %4117 = vmatpush1.bf16.msra.mxu0 %v3905
      %4118 = vmatprep.subr.bf16.mxu0 0
      %4119 = vmatpush1.bf16.msra.mxu0 %v3906
      %4120 = vmatprep.subr.bf16.mxu0 0
      %4121 = vmatpush1.bf16.msra.mxu0 %v3907
      %4122 = vmatprep.subr.bf16.mxu0 0
      %4123 = vmatpush1.bf16.msra.mxu0 %v3908
      %4124 = vmatprep.subr.bf16.mxu0 0
      %4125 = vmatpush1.bf16.msra.mxu0 %v3909
      %4126 = vmatprep.subr.bf16.mxu0 0
      %4127 = vmatpush1.bf16.msra.mxu0 %v3910
      %4128 = vmatprep.subr.bf16.mxu0 0
      %4129 = vmatpush1.bf16.msra.mxu0 %v3911
      %4130 = vmatprep.subr.bf16.mxu0 0
      %4131 = vmatpush1.bf16.msra.mxu0 %v3912
      %4132 = vmatprep.subr.bf16.mxu0 0
      %4133 = vmatpush1.bf16.msra.mxu0 %v3913
      %4134 = vmatprep.subr.bf16.mxu0 0
      %4135 = vmatpush1.bf16.msra.mxu0 %v3914
      %4136 = vmatprep.subr.bf16.mxu0 0
      %4137 = vmatpush1.bf16.msra.mxu0 %v3915
      %4138 = vmatprep.subr.bf16.mxu0 0
      %4139 = vmatpush1.bf16.msra.mxu0 %v3916
      %4140 = vmatprep.subr.bf16.mxu0 0
      %4141 = vmatpush1.bf16.msra.mxu0 %v3917
      %4142 = vmatprep.mubr.bf16.mxu0 %v3376
      %4143 = vmatmul.mubr.bf16.gmra.mrb[0].mxu0 %v3375
      %v4144 = vpop.f32.mrb[0].mxu0
      %v4145 = vadd.f32 %v4105, %v4144
      %v4146 = vpop.f32.mrb[0].mxu0
      %v4147 = vpop.f32.mrb[0].mxu0
      %v4148 = vpop.f32.mrb[0].mxu0
      %4149 = vdwg.mxu0
      %4150 = vmatprep.subr.bf16.mxu0 0
      %4151 = vmatpush1.bf16.msra.mxu0 %v3918
      %4152 = vmatprep.subr.bf16.mxu0 0
      %4153 = vmatpush1.bf16.msra.mxu0 %v3919
      %4154 = vmatprep.subr.bf16.mxu0 0
      %4155 = vmatpush1.bf16.msra.mxu0 %v3920
      %4156 = vmatprep.subr.bf16.mxu0 0
      %4157 = vmatpush1.bf16.msra.mxu0 %v3921
      %4158 = vmatprep.subr.bf16.mxu0 0
      %4159 = vmatpush1.bf16.msra.mxu0 %v3922
      %4160 = vmatprep.subr.bf16.mxu0 0
      %4161 = vmatpush1.bf16.msra.mxu0 %v3923
      %4162 = vmatprep.subr.bf16.mxu0 0
      %4163 = vmatpush1.bf16.msra.mxu0 %v3924
      %4164 = vmatprep.subr.bf16.mxu0 0
      %4165 = vmatpush1.bf16.msra.mxu0 %v3925
      %4166 = vmatprep.subr.bf16.mxu0 0
      %4167 = vmatpush1.bf16.msra.mxu0 %v3926
      %4168 = vmatprep.subr.bf16.mxu0 0
      %4169 = vmatpush1.bf16.msra.mxu0 %v3927
      %4170 = vmatprep.subr.bf16.mxu0 0
      %4171 = vmatpush1.bf16.msra.mxu0 %v3928
      %4172 = vmatprep.subr.bf16.mxu0 0
      %4173 = vmatpush1.bf16.msra.mxu0 %v3929
      %4174 = vmatprep.subr.bf16.mxu0 0
      %4175 = vmatpush1.bf16.msra.mxu0 %v3930
      %4176 = vmatprep.subr.bf16.mxu0 0
      %4177 = vmatpush1.bf16.msra.mxu0 %v3931
      %4178 = vmatprep.subr.bf16.mxu0 0
      %4179 = vmatpush1.bf16.msra.mxu0 %v3932
      %4180 = vmatprep.subr.bf16.mxu0 0
      %4181 = vmatpush1.bf16.msra.mxu0 %v3933
      %4182 = vmatprep.mubr.bf16.mxu0 %v3378
      %4183 = vmatmul.mubr.bf16.gmra.mrb[0].mxu0 %v3377
      %v4184 = vpop.f32.mrb[0].mxu0
      %v4185 = vadd.f32 %v4145, %v4184
      %v4186 = vpop.f32.mrb[0].mxu0
      %v4187 = vpop.f32.mrb[0].mxu0
      %v4188 = vpop.f32.mrb[0].mxu0
      %4189 = vdwg.mxu0
      %4190 = vmatprep.subr.bf16.mxu0 0
      %4191 = vmatpush1.bf16.msra.mxu0 %v3934
      %4192 = vmatprep.subr.bf16.mxu0 0
      %4193 = vmatpush1.bf16.msra.mxu0 %v3935
      %4194 = vmatprep.subr.bf16.mxu0 0
      %4195 = vmatpush1.bf16.msra.mxu0 %v3936
      %4196 = vmatprep.subr.bf16.mxu0 0
      %4197 = vmatpush1.bf16.msra.mxu0 %v3937
      %4198 = vmatprep.subr.bf16.mxu0 0
      %4199 = vmatpush1.bf16.msra.mxu0 %v3938
      %4200 = vmatprep.subr.bf16.mxu0 0
      %4201 = vmatpush1.bf16.msra.mxu0 %v3939
      %4202 = vmatprep.subr.bf16.mxu0 0
      %4203 = vmatpush1.bf16.msra.mxu0 %v3940
      %4204 = vmatprep.subr.bf16.mxu0 0
      %4205 = vmatpush1.bf16.msra.mxu0 %v3941
      %4206 = vmatprep.subr.bf16.mxu0 0
      %4207 = vmatpush1.bf16.msra.mxu0 %v3942
      %4208 = vmatprep.subr.bf16.mxu0 0
      %4209 = vmatpush1.bf16.msra.mxu0 %v3943
      %4210 = vmatprep.subr.bf16.mxu0 0
      %4211 = vmatpush1.bf16.msra.mxu0 %v3944
      %4212 = vmatprep.subr.bf16.mxu0 0
      %4213 = vmatpush1.bf16.msra.mxu0 %v3945
      %4214 = vmatprep.subr.bf16.mxu0 0
      %4215 = vmatpush1.bf16.msra.mxu0 %v3946
      %4216 = vmatprep.subr.bf16.mxu0 0
      %4217 = vmatpush1.bf16.msra.mxu0 %v3947
      %4218 = vmatprep.subr.bf16.mxu0 0
      %4219 = vmatpush1.bf16.msra.mxu0 %v3948
      %4220 = vmatprep.subr.bf16.mxu0 0
      %4221 = vmatpush1.bf16.msra.mxu0 %v3949
      %4222 = vmatprep.mubr.bf16.mxu0 %v3380
      %4223 = vmatmul.mubr.bf16.gmra.mrb[0].mxu0 %v3379
      %v4224 = vpop.f32.mrb[0].mxu0
      %v4225 = vadd.f32 %v4185, %v4224
      %v4226 = vpop.f32.mrb[0].mxu0
      %v4227 = vpop.f32.mrb[0].mxu0
      %v4228 = vpop.f32.mrb[0].mxu0
      %4229 = vdwg.mxu0
      %v4230 = vadd.f32 %v2650, %v4225
      %v4231 = vld [vmem:[%s10] sm:$0x1]
      %v4232 = vld [vmem:[%s10 + $0x1] sm:$0x1]
      %4233 = vadd.xlane.f32.xlu0 %v4230
      %v4234 = vpop.xlane.xlu0 %4233
      %v4235 = vmul.f32 %v4234, %v442
      %v4236 = vsub.f32 %v4230, %v4235
      %v4237 = vmul.f32 %v4236, %v4236
      %4238 = vadd.xlane.f32.xlu0 %v4237
      %v4239 = vpop.xlane.xlu0 %4238
      %v4240 = vmul.f32 %v4239, %v442
      %v4241 = vadd.f32 %v4240, 1e-05
      %v4242 = vrsqrt.pop %v4241
      %v4243 = vmul.f32 %v4236, %v4242
      %v4244 = vlaneseq
      %v4245 = vshrl.u32 %v4244, 7
      %v4246 = vsub.s32 0, %v4245
      %v4247 = vrot.slane %v4231, %v4246
      %v4248 = vmul.f32 %v4243, %v4247
      %v4249 = vlaneseq
      %v4250 = vshrl.u32 %v4249, 7
      %v4251 = vsub.s32 0, %v4250
      %v4252 = vrot.slane %v4232, %v4251
      %v4253 = vadd.f32 %v4248, %v4252
      %v4254 = vpack.c.bf16 %v4253, %v4253
      %v4255 = vld [vmem:[%s11] sm:$0xf]
      %v4256 = vld [vmem:[%s11 + $0x4] sm:$0xf]
      %v4257 = vld [vmem:[%s11 + $0x8] sm:$0xf]
      %v4258 = vld [vmem:[%s11 + $0xc] sm:$0xf]
      %v4259 = vld [vmem:[%s11 + $0x10] sm:$0xf]
      %v4260 = vld [vmem:[%s11 + $0x14] sm:$0xf]
      %v4261 = vld [vmem:[%s11 + $0x18] sm:$0xf]
      %v4262 = vld [vmem:[%s11 + $0x1c] sm:$0xf]
      %v4263 = vld [vmem:[%s11 + $0x20] sm:$0xf]
      %v4264 = vld [vmem:[%s11 + $0x24] sm:$0xf]
      %v4265 = vld [vmem:[%s11 + $0x28] sm:$0xf]
      %v4266 = vld [vmem:[%s11 + $0x2c] sm:$0xf]
      %v4267 = vld [vmem:[%s11 + $0x30] sm:$0xf]
      %v4268 = vld [vmem:[%s11 + $0x34] sm:$0xf]
      %v4269 = vld [vmem:[%s11 + $0x38] sm:$0xf]
      %v4270 = vld [vmem:[%s11 + $0x3c] sm:$0xf]
      %v4287 = vunpack.c.l.b16 %v4255
      %v4288 = vunpack.c.l.b16 %v4256
      %v4289 = vunpack.c.l.b16 %v4257
      %v4290 = vunpack.c.l.b16 %v4258
      %v4291 = vunpack.c.l.b16 %v4259
      %v4292 = vunpack.c.l.b16 %v4260
      %v4293 = vunpack.c.l.b16 %v4261
      %v4294 = vunpack.c.l.b16 %v4262
      %v4295 = vunpack.c.l.b16 %v4263
      %v4296 = vunpack.c.l.b16 %v4264
      %v4297 = vunpack.c.l.b16 %v4265
      %v4298 = vunpack.c.l.b16 %v4266
      %v4299 = vunpack.c.l.b16 %v4267
      %v4300 = vunpack.c.l.b16 %v4268
      %v4301 = vunpack.c.l.b16 %v4269
      %v4302 = vunpack.c.l.b16 %v4270
      %v4303 = vpack.c.b16 %v4288, %v4287
      %v4304 = vpack.c.b16 %v4290, %v4289
      %v4305 = vpack.c.b16 %v4292, %v4291
      %v4306 = vpack.c.b16 %v4294, %v4293
      %v4307 = vpack.c.b16 %v4296, %v4295
      %v4308 = vpack.c.b16 %v4298, %v4297
      %v4309 = vpack.c.b16 %v4300, %v4299
      %v4310 = vpack.c.b16 %v4302, %v4301
      %4319 = vmatprep.subr.bf16.mxu0 0
      %4320 = vmatpush1.bf16.msra.mxu0 %v4303
      %4321 = vmatprep.subr.bf16.mxu0 0
      %4322 = vmatpush1.bf16.msra.mxu0 %v4304
      %4323 = vmatprep.subr.bf16.mxu0 0
      %4324 = vmatpush1.bf16.msra.mxu0 %v4305
      %4325 = vmatprep.subr.bf16.mxu0 0
      %4326 = vmatpush1.bf16.msra.mxu0 %v4306
      %4327 = vmatprep.subr.bf16.mxu0 0
      %4328 = vmatpush1.bf16.msra.mxu0 %v4307
      %4329 = vmatprep.subr.bf16.mxu0 0
      %4330 = vmatpush1.bf16.msra.mxu0 %v4308
      %4331 = vmatprep.subr.bf16.mxu0 0
      %4332 = vmatpush1.bf16.msra.mxu0 %v4309
      %4333 = vmatprep.subr.bf16.mxu0 0
      %4334 = vmatpush1.bf16.msra.mxu0 %v4310
      %4335 = vmatprep.subr.bf16.mxu0 0
      %4336 = vmatpush1.bf16.msra.mxu0 0
      %4337 = vmatprep.subr.bf16.mxu0 0
      %4338 = vmatpush1.bf16.msra.mxu0 0
      %4339 = vmatprep.subr.bf16.mxu0 0
      %4340 = vmatpush1.bf16.msra.mxu0 0
      %4341 = vmatprep.subr.bf16.mxu0 0
      %4342 = vmatpush1.bf16.msra.mxu0 0
      %4343 = vmatprep.subr.bf16.mxu0 0
      %4344 = vmatpush1.bf16.msra.mxu0 0
      %4345 = vmatprep.subr.bf16.mxu0 0
      %4346 = vmatpush1.bf16.msra.mxu0 0
      %4347 = vmatprep.subr.bf16.mxu0 0
      %4348 = vmatpush1.bf16.msra.mxu0 0
      %4349 = vmatprep.subr.bf16.mxu0 0
      %4350 = vmatpush1.bf16.msra.mxu0 0
      %4351 = vmatprep.mubr.bf16.mxu0 0
      %4352 = vmatmul.mubr.bf16.gmra.mrb[0].mxu0 %v4254
      %v4353 = vpop.f32.mrb[0].mxu0
      %v4354 = vadd.f32 0.0, %v4353
      %v4355 = vpop.f32.mrb[0].mxu0
      %v4356 = vpop.f32.mrb[0].mxu0
      %v4357 = vpop.f32.mrb[0].mxu0
      %4358 = vdwg.mxu0
      %v4359 = vrot.slane %v4354, 4
      %v4360 = vadd.f32 %v4354, %v4359
      %v4361 = vrot.slane %v4360, 2
      %v4362 = vadd.f32 %v4360, %v4361
      %v4363 = vrot.slane %v4362, 1
      %v4364 = vadd.f32 %v4362, %v4363
      %v4365 = vrcp.pop 8.0
      %v4366 = vmul.f32 %v4364, %v4365
      %v4367 = vld [vmem:[%s12] sm:$0x1]
      %v4368 = vadd.f32 %v4366, %v4367
      %v4369 = vlaneseq
      %v4370 = vshrl.u32 %v4369, 7
      %v4371 = vsub.s32 0, %v4370
      %v4372 = vrot.slane %v4368, %v4371
      %4373 = vst [vmem:[%s435] sm:$0xff] %v4372
      %p4374 = scmp.lt.s32.totalorder %s24, 1
      %s4375 = scalar_select %p4374, %s24, 1
      %s4376 = smul.addr %s4375, 8
      %s4377 = scalar_lea.vmem %s13, %s4376
      // Predicated region
      $region73: #{forward.3} parent=71 // pred_check
        %p4378 = pneg %p320
      $region74: #{forward.3} parent=71 // pred_check_branch
        %4380 = sbr.rel (%p4378) target = $region76
      $region75: #{forward.3} parent=71 // pred_region
        _
      $region76: #{forward.3} parent=71 // pred_fallthru
        _
    $region72: #{forward.3} parent=5 // pred_fallthru
      _
    %p4381 = scmp.le.s32.totalorder 2, %s19
    // Predicated region
    $region77: #{forward.3} parent=5 // pred_check
      %p4382 = pneg %p4381
    $region78: #{forward.3} parent=5 // pred_check_branch
      %4384 = sbr.rel (%p4382) target = $region80
    $region79: #{forward.3} parent=5 // pred_region
      %s4385 = ssub.s32 %s19, 2
      // Predicated region
      $region81: #{forward.3} parent=79 // pred_check
        %p4386 = pneg %p326
      $region82: #{forward.3} parent=79 // pred_check_branch
        %4388 = sbr.rel (%p4386) target = $region84
      $region83: #{forward.3} parent=79 // pred_region
        %p4389 = scmp.lt.s32.totalorder %s25, 1
        %s4390 = scalar_select %p4389, %s25, 1
        %s4391 = smul.addr %s4390, 8
        %s4392 = scalar_lea.vmem %s13, %s4391
      $region84: #{forward.3} parent=79 // pred_fallthru
        _
    $region80: #{forward.3} parent=5 // pred_fallthru
      _
  $region6: #{forward.3} parent=0 // loop_footer
    %s23 = sadd.s32 1, %s19
  $region7: #{forward.3} parent=0 // loop_footer_branch
    %18 = sbr.rel target = $region3
  $region8: #{forward.3} parent=0 // loop_exit
    _

</llo_original>
